<compile_context>
chip_gen: v5e
topology: v5e:2x2
jax: 0.10.0
libtpu: 0.0.40
codegen_flags: <defaults>
</compile_context>

<pallas_src>
import functools
import math

import jax
import jax.numpy as jnp
from jax.experimental import pallas as pl
from jax.experimental.pallas import tpu as pltpu

IN_CHANNELS = 180            # MossFormer_MaskNet in_channels
OUT_CHANNELS = 512           # MossFormer_MaskNet out_channels
OUT_CHANNELS_FINAL = 961     # MossFormer_MaskNet out_channels_final
OUT_PAD = 1024               # 961 padded to a lane-dense multiple of 128 (MXU N dim)
NUM_SPKS = 1

# MossFormer 'ln' norm is a GlobalLayerNorm-style norm with eps=1e-8
# (NOT torch.nn.GroupNorm's default 1e-5).
_EPS_GN = 1e-8
_EPS_LN = 1e-6               # MossFormerM final LayerNorm eps


# ---------------------------------------------------------------------------
# Device-dependent knobs (tile size / bf16 VALU availability)
# ---------------------------------------------------------------------------
def _device_profile():
    kind = ""
    try:
        kind = jax.devices()[0].device_kind.lower()
    except Exception:
        pass
    modern = ("v6" in kind) or ("v7" in kind)     # bf16 VPU + 2x256 MXU generations
    return {"tm_target": 512 if modern else 256, "bf16_vpu": modern}


# ---------------------------------------------------------------------------
# Pallas kernels
# ---------------------------------------------------------------------------
def _pre_kernel(x_ref, gin_ref, bin_ref, w_enc_ref, pos_ref,
                ln_g_ref, ln_b_ref, gi_g_ref, gi_b_ref, o_ref,
                *, eps_gn, eps_ln):
    """Fused norm/encoder chain for one batch element (full sequence in VMEM).

    GroupNorm(1,180) -> conv1d_encoder (1x1, MXU) -> + scaled sinusoidal pos-emb table
    -> LayerNorm(512) -> GroupNorm(1,512) + residual.
    All norm statistics are single-pass (sum / sum-of-squares).
    """
    x = x_ref[0]                                          # (S, 180) f32
    # --- GroupNorm(num_groups=1) over (S, C), per-channel affine -----------------
    mean = jnp.mean(x)
    var = jnp.maximum(jnp.mean(x * x) - mean * mean, 0.0)
    xn = (x - mean) * jax.lax.rsqrt(var + eps_gn)
    xn = xn * gin_ref[...] + bin_ref[...]
    # --- conv1d_encoder (1x1 conv, no bias): bf16 operands, f32 accumulation -----
    y = jnp.dot(xn.astype(jnp.bfloat16), w_enc_ref[...],
                preferred_element_type=jnp.float32)       # (S, 512) f32
    # --- ScaledSinuEmbedding: precomputed (already scaled) table ------------------
    y = y + pos_ref[...]
    # --- MossFormerM final LayerNorm (per token over channels) -------------------
    mu = jnp.mean(y, axis=-1, keepdims=True)
    v = jnp.maximum(jnp.mean(y * y, axis=-1, keepdims=True) - mu * mu, 0.0)
    intra = (y - mu) * jax.lax.rsqrt(v + eps_ln)
    intra = intra * ln_g_ref[...] + ln_b_ref[...]
    # --- Computation_Block intra GroupNorm(1,512) + skip connection ---------------
    m2 = jnp.mean(intra)
    v2 = jnp.maximum(jnp.mean(intra * intra) - m2 * m2, 0.0)
    z = (intra - m2) * jax.lax.rsqrt(v2 + eps_gn)
    z = z * gi_g_ref[...] + gi_b_ref[...] + y
    o_ref[...] = z.astype(o_ref.dtype)[None]              # bf16 out (halves HBM traffic)


def _head_kernel(x_ref, alpha_ref, w_comb_ref, b_comb_ref, w_dec_t_ref, o_ref,
                 *, bf16_vpu):
    """Fused MaskNet head over one (batch, seq-tile) block.

    PReLU -> folded conv1d_out+[tanh|sigmoid] gate (one 512->1024 matmul)
    -> conv1_decoder via a transposed contraction so the result is already in the
    torch channel-major [961, tm] orientation -> ReLU -> direct store.
    bf16 MXU operands, f32 accumulation; elementwise math in bf16 on v6e/v7x, f32 on v5e.
    """
    x = x_ref[0]                                          # (tm, 512) bf16
    alpha = alpha_ref[0, 0]                               # PReLU slope (SMEM scalar)
    if bf16_vpu:
        h = jnp.where(x > 0, x, alpha.astype(jnp.bfloat16) * x)
    else:
        xf = x.astype(jnp.float32)
        h = jnp.where(xf > 0, xf, alpha * xf).astype(jnp.bfloat16)
    # conv1d_out folded into the gate convs at init: single 512 -> 1024 matmul.
    g = jnp.dot(h, w_comb_ref[...], preferred_element_type=jnp.float32) + b_comb_ref[...]
    t = jnp.tanh(g[:, :OUT_CHANNELS])
    s = jax.nn.sigmoid(g[:, OUT_CHANNELS:])
    if bf16_vpu:
        z = t.astype(jnp.bfloat16) * s.astype(jnp.bfloat16)
    else:
        z = (t * s).astype(jnp.bfloat16)                  # (tm, 512) bf16
    # conv1_decoder, channel-major output: (1024, tm) = w_dec_t (1024,512) . z^T.
    m = jax.lax.dot_general(w_dec_t_ref[...], z,
                            dimension_numbers=(((1,), (1,)), ((), ())),
                            preferred_element_type=jnp.float32)
    m = jnp.maximum(m, 0.0)
    o_ref[...] = m[:OUT_CHANNELS_FINAL, :][None]          # (1, 961, tm) store


# ---------------------------------------------------------------------------
# pallas_call wrappers
# ---------------------------------------------------------------------------
def _shared(shape):
    n = len(shape)
    return pl.BlockSpec(shape, lambda *_, _n=n: (0,) * _n)


def pre_stage(x, pos, p):
    """x: [B, S, 180] f32, pos: [S, 512] f32  ->  [B, S, 512] bf16."""
    B, S, Cin = x.shape
    # TODO(synk): for very long sequences (S ~3k+ on v7x's 64 MiB VMEM) this stage
    # should be retiled over S with two-pass global-norm statistics; whole-sequence
    # residency is fine for typical/short S and keeps a single fused kernel.
    return pl.pallas_call(
        functools.partial(_pre_kernel, eps_gn=_EPS_GN, eps_ln=_EPS_LN),
        out_shape=jax.ShapeDtypeStruct((B, S, OUT_CHANNELS), jnp.bfloat16),
        grid=(B,),
        in_specs=[
            pl.BlockSpec((1, S, Cin), lambda b: (b, 0, 0)),
            _shared((1, Cin)), _shared((1, Cin)),
            _shared((Cin, OUT_CHANNELS)),
            _shared((S, OUT_CHANNELS)),                   # pos-emb table (shared)
            _shared((1, OUT_CHANNELS)), _shared((1, OUT_CHANNELS)),
            _shared((1, OUT_CHANNELS)), _shared((1, OUT_CHANNELS)),
        ],
        out_specs=pl.BlockSpec((1, S, OUT_CHANNELS), lambda b: (b, 0, 0)),
        compiler_params=pltpu.CompilerParams(dimension_semantics=("parallel",)),
    )(x,
      p["norm_in_g"].reshape(1, Cin), p["norm_in_b"].reshape(1, Cin),
      p["w_enc"], pos,
      p["ln_g"].reshape(1, -1), p["ln_b"].reshape(1, -1),
      p["norm_intra_g"].reshape(1, -1), p["norm_intra_b"].reshape(1, -1))


def _pick_tm(S, target):
    """Token-tile size: full extent for small S, else a 128-multiple dividing S."""
    if S <= 128:
        return S
    cap = min(target, S)
    for c in (512, 384, 256, 128):
        if c <= cap and S % c == 0:
            return c
    return (cap // 128) * 128       # ragged last tile handled by Pallas block masking


def masknet_head(y, p, *, tm_target, bf16_vpu):
    """y: [B, S, 512] bf16 -> mask [B, 961, S] f32 (torch layout, no post-transpose)."""
    B, S, _ = y.shape
    tm = _pick_tm(S, tm_target)
    s_tiles = pl.cdiv(S, tm)
    alpha = jnp.full((1, 1), p["prelu_alpha"], jnp.float32)
    # Resident weights ~2 MiB bf16; blocks + temporaries fit the default scoped VMEM
    # at tm=512 (v6e/v7x) and tm=256 (v5e), so no vmem_limit override is needed.
    return pl.pallas_call(
        functools.partial(_head_kernel, bf16_vpu=bf16_vpu),
        out_shape=jax.ShapeDtypeStruct((B, OUT_CHANNELS_FINAL, S), jnp.float32),
        grid=(B, s_tiles),
        in_specs=[
            pl.BlockSpec((1, tm, OUT_CHANNELS), lambda b, si: (b, si, 0)),
            pl.BlockSpec(memory_space=pltpu.MemorySpace.SMEM),   # PReLU alpha scalar
            _shared((OUT_CHANNELS, 2 * OUT_CHANNELS)),           # folded gate weight
            _shared((1, 2 * OUT_CHANNELS)),                      # folded gate bias
            _shared((OUT_PAD, OUT_CHANNELS)),                    # decoder weight (transposed)
        ],
        out_specs=pl.BlockSpec((1, OUT_CHANNELS_FINAL, tm), lambda b, si: (b, 0, si)),
        compiler_params=pltpu.CompilerParams(
            dimension_semantics=("parallel", "parallel")),
    )(y, alpha, p["w_comb"], p["b_comb"].reshape(1, -1), p["w_dec_t"])


# ---------------------------------------------------------------------------
# Parameters / glue (plain JAX)
# ---------------------------------------------------------------------------
def init_params(key):
    ks = jax.random.split(key, 5)

    def wf(k, shape, scale=0.03):
        return jax.random.normal(k, shape, jnp.float32) * scale

    p = {}
    # MaskNet input GroupNorm(1, 180) ("ln" norm)
    p["norm_in_g"] = jnp.ones((IN_CHANNELS,), jnp.float32)
    p["norm_in_b"] = jnp.zeros((IN_CHANNELS,), jnp.float32)
    # conv1d_encoder: Conv1d(180, 512, 1, bias=False) stored as [Cin, Cout] bf16
    p["w_enc"] = wf(ks[0], (IN_CHANNELS, OUT_CHANNELS), 0.05).astype(jnp.bfloat16)
    p["pos_scale"] = jnp.float32(1.0)                    # ScaledSinuEmbedding scale
    # MossFormerM final LayerNorm(512, eps=1e-6)
    p["ln_g"] = jnp.ones((OUT_CHANNELS,), jnp.float32)
    p["ln_b"] = jnp.zeros((OUT_CHANNELS,), jnp.float32)
    # Computation_Block intra_norm: GroupNorm(1, 512)
    p["norm_intra_g"] = jnp.ones((OUT_CHANNELS,), jnp.float32)
    p["norm_intra_b"] = jnp.zeros((OUT_CHANNELS,), jnp.float32)
    # PReLU (single parameter, torch default init 0.25)
    p["prelu_alpha"] = jnp.float32(0.25)

    # conv1d_out (512->512*num_spks, +bias) folded into the tanh/sigmoid gate convs:
    # no nonlinearity sits between them, so w_comb = w_out @ [w_tanh | w_sig] and
    # b_comb = b_out @ [w_tanh | w_sig] + b_gate, folded in f32 and cast once to bf16.
    w_out = wf(ks[1], (OUT_CHANNELS, OUT_CHANNELS * NUM_SPKS))
    b_out = jnp.zeros((OUT_CHANNELS * NUM_SPKS,), jnp.float32)
    w_tanh = wf(ks[2], (OUT_CHANNELS, OUT_CHANNELS))
    w_sig = wf(ks[3], (OUT_CHANNELS, OUT_CHANNELS))
    w_gate = jnp.concatenate([w_tanh, w_sig], axis=1)            # (512, 1024) f32
    b_gate = jnp.zeros((2 * OUT_CHANNELS,), jnp.float32)
    p["w_comb"] = (w_out @ w_gate).astype(jnp.bfloat16)          # (512, 1024) bf16
    p["b_comb"] = b_out @ w_gate + b_gate                        # (1024,) f32

    # conv1_decoder: Conv1d(512, 961, 1, bias=False) zero-padded to 1024 outputs and
    # stored transposed so the head emits the channel-major torch layout directly.
    w_dec = wf(ks[4], (OUT_CHANNELS, OUT_CHANNELS_FINAL))
    w_dec_pad = jnp.pad(w_dec, ((0, 0), (0, OUT_PAD - OUT_CHANNELS_FINAL)))
    p["w_dec_t"] = w_dec_pad.T.astype(jnp.bfloat16)              # (1024, 512) bf16
    return p


def _pos_table(S, D, scale):
    """ScaledSinuEmbedding table [S, D] (sin on first half lanes, cos on second)."""
    half = D // 2
    pos = jnp.arange(S, dtype=jnp.float32)[:, None]
    inv_freq = jnp.exp(jnp.arange(half, dtype=jnp.float32)
                       * (-math.log(10000.0) / half))[None, :]
    angle = pos * inv_freq
    return jnp.concatenate([jnp.sin(angle), jnp.cos(angle)], axis=1) * scale


def _masknet_channels_last(params, x_bsc):
    """MaskNet forward on channels-last [B, S, 180] input -> [B, 961, S] mask."""
    prof = _device_profile()
    _, S, _ = x_bsc.shape
    pos = _pos_table(S, OUT_CHANNELS, params["pos_scale"])
    # TODO(synk): the MossFormerM inner stack (24 MossFormer2 blocks: FLASH_ShareA gated
    # attention, FFConvM, Gated-FSMN) is not reproduced here; only its final LayerNorm
    # plus the Computation_Block GroupNorm + skip are applied.
    y = pre_stage(x_bsc.astype(jnp.float32), pos, params)        # [B, S, 512] bf16
    return masknet_head(y, params, tm_target=prof["tm_target"],
                        bf16_vpu=prof["bf16_vpu"])               # [B, 961, S] f32


def mossformer_masknet(params, x_ncs):
    """MossFormer_MaskNet forward.  x_ncs: [B, 180, S] (torch NCW)."""
    return _masknet_channels_last(params, jnp.transpose(x_ncs, (0, 2, 1)))


def testnet_forward(params, inp):
    """TestNet.forward: inp [B, S, 180] -> list of one mask [B, 961, S].

    The torch wrapper transposes to [B,180,S] and the MaskNet immediately transposes
    back to channels-last; the two transposes cancel, so we consume [B, S, 180] directly.
    """
    return [_masknet_channels_last(params, inp)]


# ---------------------------------------------------------------------------
if __name__ == "__main__":
    key = jax.random.PRNGKey(0)
    pkey, xkey = jax.random.split(key)
    params = init_params(pkey)

    B, S = 2, 64
    inp = jax.random.normal(xkey, (B, S, IN_CHANNELS), jnp.float32)

    out_list = jax.jit(lambda i: testnet_forward(params, i))(inp)
    mask = out_list[0]
    jax.block_until_ready(mask)

    assert mask.shape == (B, OUT_CHANNELS_FINAL, S), mask.shape
    assert bool(jnp.all(jnp.isfinite(mask)))
    assert bool(jnp.all(mask >= 0.0))                    # final ReLU
    print("KERNEL_OK")
</pallas_src>

<mosaic_0001>
module attributes {stable_mosaic.version = 11 : i64} {
  func.func @_pre_kernel(%arg0: i32, %arg1: memref<1x64x180xf32, #tpu.memory_space<vmem>>, %arg2: memref<1x180xf32, #tpu.memory_space<vmem>>, %arg3: memref<1x180xf32, #tpu.memory_space<vmem>>, %arg4: memref<180x512xbf16, #tpu.memory_space<vmem>>, %arg5: memref<64x512xf32, #tpu.memory_space<vmem>>, %arg6: memref<1x512xf32, #tpu.memory_space<vmem>>, %arg7: memref<1x512xf32, #tpu.memory_space<vmem>>, %arg8: memref<1x512xf32, #tpu.memory_space<vmem>>, %arg9: memref<1x512xf32, #tpu.memory_space<vmem>>, %arg10: memref<1x64x512xbf16, #tpu.memory_space<vmem>>) attributes {dimension_semantics = [#tpu.dimension_semantics<parallel>], iteration_bounds = array<i64: 2>, scalar_prefetch = 0 : i64, scratch_operands = 0 : i64, tpu.core_type = #tpu.core_type<tc>, window_params = [{transform_indices = @transform_0, window_bounds = array<i64: 1, 64, 180>}, {pipeline_mode = #tpu.pipeline_mode<synchronous>, transform_indices = @transform_1, window_bounds = array<i64: 1, 180>}, {pipeline_mode = #tpu.pipeline_mode<synchronous>, transform_indices = @transform_2, window_bounds = array<i64: 1, 180>}, {pipeline_mode = #tpu.pipeline_mode<synchronous>, transform_indices = @transform_3, window_bounds = array<i64: 180, 512>}, {pipeline_mode = #tpu.pipeline_mode<synchronous>, transform_indices = @transform_4, window_bounds = array<i64: 64, 512>}, {pipeline_mode = #tpu.pipeline_mode<synchronous>, transform_indices = @transform_5, window_bounds = array<i64: 1, 512>}, {pipeline_mode = #tpu.pipeline_mode<synchronous>, transform_indices = @transform_6, window_bounds = array<i64: 1, 512>}, {pipeline_mode = #tpu.pipeline_mode<synchronous>, transform_indices = @transform_7, window_bounds = array<i64: 1, 512>}, {pipeline_mode = #tpu.pipeline_mode<synchronous>, transform_indices = @transform_8, window_bounds = array<i64: 1, 512>}, {transform_indices = @transform_9, window_bounds = array<i64: 1, 64, 512>}]} {
    %c0 = arith.constant 0 : index
    %c0_0 = arith.constant 0 : index
    %c0_1 = arith.constant 0 : index
    %0 = vector.load %arg1[%c0, %c0_0, %c0_1] : memref<1x64x180xf32, #tpu.memory_space<vmem>>, vector<1x64x180xf32>
    %1 = vector.shape_cast %0 : vector<1x64x180xf32> to vector<64x180xf32>
    %2 = vector.shape_cast %1 : vector<64x180xf32> to vector<1x64x180xf32>
    %cst = arith.constant dense<0.000000e+00> : vector<1xf32>
    %3 = vector.multi_reduction <add>, %2, %cst [1, 2] : vector<1x64x180xf32> to vector<1xf32>
    %4 = vector.shape_cast %3 : vector<1xf32> to vector<1x1x1xf32>
    %5 = vector.extract %4[0, 0, 0] : f32 from vector<1x1x1xf32>
    %cst_2 = arith.constant 1.152000e+04 : f32
    %6 = arith.divf %5, %cst_2 : f32
    %7 = arith.mulf %1, %1 : vector<64x180xf32>
    %8 = vector.shape_cast %7 : vector<64x180xf32> to vector<1x64x180xf32>
    %cst_3 = arith.constant dense<0.000000e+00> : vector<1xf32>
    %9 = vector.multi_reduction <add>, %8, %cst_3 [1, 2] : vector<1x64x180xf32> to vector<1xf32>
    %10 = vector.shape_cast %9 : vector<1xf32> to vector<1x1x1xf32>
    %11 = vector.extract %10[0, 0, 0] : f32 from vector<1x1x1xf32>
    %cst_4 = arith.constant 1.152000e+04 : f32
    %12 = arith.divf %11, %cst_4 : f32
    %13 = arith.mulf %6, %6 : f32
    %14 = arith.subf %12, %13 : f32
    %cst_5 = arith.constant 0.000000e+00 : f32
    %15 = arith.maximumf %14, %cst_5 : f32
    %16 = vector.broadcast %6 : f32 to vector<64x180xf32>
    %17 = arith.subf %1, %16 : vector<64x180xf32>
    %cst_6 = arith.constant 9.99999993E-9 : f32
    %18 = arith.addf %15, %cst_6 : f32
    %19 = math.rsqrt %18 : f32
    %20 = vector.broadcast %19 : f32 to vector<64x180xf32>
    %21 = arith.mulf %17, %20 : vector<64x180xf32>
    %c0_7 = arith.constant 0 : index
    %c0_8 = arith.constant 0 : index
    %22 = vector.load %arg2[%c0_7, %c0_8] : memref<1x180xf32, #tpu.memory_space<vmem>>, vector<1x180xf32>
    %23 = vector.broadcast %22 : vector<1x180xf32> to vector<64x180xf32>
    %24 = arith.mulf %21, %23 : vector<64x180xf32>
    %c0_9 = arith.constant 0 : index
    %c0_10 = arith.constant 0 : index
    %25 = vector.load %arg3[%c0_9, %c0_10] : memref<1x180xf32, #tpu.memory_space<vmem>>, vector<1x180xf32>
    %26 = vector.broadcast %25 : vector<1x180xf32> to vector<64x180xf32>
    %27 = arith.addf %24, %26 : vector<64x180xf32>
    %28 = arith.truncf %27 : vector<64x180xf32> to vector<64x180xbf16>
    %c0_11 = arith.constant 0 : index
    %c0_12 = arith.constant 0 : index
    %29 = vector.load %arg4[%c0_11, %c0_12] : memref<180x512xbf16, #tpu.memory_space<vmem>>, vector<180x512xbf16>
    %cst_13 = arith.constant dense<0.000000e+00> : vector<64x512xf32>
    %30 = tpu.matmul %28, %29, %cst_13 {dimension_numbers = #tpu.dot_dimension_numbers<[1], [0], [0], [1], [0, 0, 1, 1], [], []>} : vector<64x180xbf16>, vector<180x512xbf16>, vector<64x512xf32> -> vector<64x512xf32>
    %c0_14 = arith.constant 0 : index
    %c0_15 = arith.constant 0 : index
    %31 = vector.load %arg5[%c0_14, %c0_15] : memref<64x512xf32, #tpu.memory_space<vmem>>, vector<64x512xf32>
    %32 = arith.addf %30, %31 : vector<64x512xf32>
    %cst_16 = arith.constant dense<0.000000e+00> : vector<64xf32>
    %33 = vector.multi_reduction <add>, %32, %cst_16 [1] : vector<64x512xf32> to vector<64xf32>
    %34 = vector.shape_cast %33 : vector<64xf32> to vector<64x1xf32>
    %cst_17 = arith.constant 5.120000e+02 : f32
    %35 = vector.broadcast %cst_17 : f32 to vector<64x1xf32>
    %36 = arith.divf %34, %35 : vector<64x1xf32>
    %37 = arith.mulf %32, %32 : vector<64x512xf32>
    %cst_18 = arith.constant dense<0.000000e+00> : vector<64xf32>
    %38 = vector.multi_reduction <add>, %37, %cst_18 [1] : vector<64x512xf32> to vector<64xf32>
    %39 = vector.shape_cast %38 : vector<64xf32> to vector<64x1xf32>
    %cst_19 = arith.constant 5.120000e+02 : f32
    %40 = vector.broadcast %cst_19 : f32 to vector<64x1xf32>
    %41 = arith.divf %39, %40 : vector<64x1xf32>
    %42 = arith.mulf %36, %36 : vector<64x1xf32>
    %43 = arith.subf %41, %42 : vector<64x1xf32>
    %cst_20 = arith.constant 0.000000e+00 : f32
    %44 = vector.broadcast %cst_20 : f32 to vector<64x1xf32>
    %45 = arith.maximumf %43, %44 : vector<64x1xf32>
    %46 = vector.broadcast %36 : vector<64x1xf32> to vector<64x512xf32>
    %47 = arith.subf %32, %46 : vector<64x512xf32>
    %cst_21 = arith.constant 9.99999997E-7 : f32
    %48 = vector.broadcast %cst_21 : f32 to vector<64x1xf32>
    %49 = arith.addf %45, %48 : vector<64x1xf32>
    %50 = math.rsqrt %49 : vector<64x1xf32>
    %51 = vector.broadcast %50 : vector<64x1xf32> to vector<64x512xf32>
    %52 = arith.mulf %47, %51 : vector<64x512xf32>
    %c0_22 = arith.constant 0 : index
    %c0_23 = arith.constant 0 : index
    %53 = vector.load %arg6[%c0_22, %c0_23] : memref<1x512xf32, #tpu.memory_space<vmem>>, vector<1x512xf32>
    %54 = vector.broadcast %53 : vector<1x512xf32> to vector<64x512xf32>
    %55 = arith.mulf %52, %54 : vector<64x512xf32>
    %c0_24 = arith.constant 0 : index
    %c0_25 = arith.constant 0 : index
    %56 = vector.load %arg7[%c0_24, %c0_25] : memref<1x512xf32, #tpu.memory_space<vmem>>, vector<1x512xf32>
    %57 = vector.broadcast %56 : vector<1x512xf32> to vector<64x512xf32>
    %58 = arith.addf %55, %57 : vector<64x512xf32>
    %59 = vector.shape_cast %58 : vector<64x512xf32> to vector<1x64x512xf32>
    %cst_26 = arith.constant dense<0.000000e+00> : vector<1xf32>
    %60 = vector.multi_reduction <add>, %59, %cst_26 [1, 2] : vector<1x64x512xf32> to vector<1xf32>
    %61 = vector.shape_cast %60 : vector<1xf32> to vector<1x1x1xf32>
    %62 = vector.extract %61[0, 0, 0] : f32 from vector<1x1x1xf32>
    %cst_27 = arith.constant 3.276800e+04 : f32
    %63 = arith.divf %62, %cst_27 : f32
    %64 = arith.mulf %58, %58 : vector<64x512xf32>
    %65 = vector.shape_cast %64 : vector<64x512xf32> to vector<1x64x512xf32>
    %cst_28 = arith.constant dense<0.000000e+00> : vector<1xf32>
    %66 = vector.multi_reduction <add>, %65, %cst_28 [1, 2] : vector<1x64x512xf32> to vector<1xf32>
    %67 = vector.shape_cast %66 : vector<1xf32> to vector<1x1x1xf32>
    %68 = vector.extract %67[0, 0, 0] : f32 from vector<1x1x1xf32>
    %cst_29 = arith.constant 3.276800e+04 : f32
    %69 = arith.divf %68, %cst_29 : f32
    %70 = arith.mulf %63, %63 : f32
    %71 = arith.subf %69, %70 : f32
    %cst_30 = arith.constant 0.000000e+00 : f32
    %72 = arith.maximumf %71, %cst_30 : f32
    %73 = vector.broadcast %63 : f32 to vector<64x512xf32>
    %74 = arith.subf %58, %73 : vector<64x512xf32>
    %cst_31 = arith.constant 9.99999993E-9 : f32
    %75 = arith.addf %72, %cst_31 : f32
    %76 = math.rsqrt %75 : f32
    %77 = vector.broadcast %76 : f32 to vector<64x512xf32>
    %78 = arith.mulf %74, %77 : vector<64x512xf32>
    %c0_32 = arith.constant 0 : index
    %c0_33 = arith.constant 0 : index
    %79 = vector.load %arg8[%c0_32, %c0_33] : memref<1x512xf32, #tpu.memory_space<vmem>>, vector<1x512xf32>
    %80 = vector.broadcast %79 : vector<1x512xf32> to vector<64x512xf32>
    %81 = arith.mulf %78, %80 : vector<64x512xf32>
    %c0_34 = arith.constant 0 : index
    %c0_35 = arith.constant 0 : index
    %82 = vector.load %arg9[%c0_34, %c0_35] : memref<1x512xf32, #tpu.memory_space<vmem>>, vector<1x512xf32>
    %83 = vector.broadcast %82 : vector<1x512xf32> to vector<64x512xf32>
    %84 = arith.addf %81, %83 : vector<64x512xf32>
    %85 = arith.addf %84, %32 : vector<64x512xf32>
    %86 = arith.truncf %85 : vector<64x512xf32> to vector<64x512xbf16>
    %87 = vector.shape_cast %86 : vector<64x512xbf16> to vector<1x64x512xbf16>
    %c0_36 = arith.constant 0 : index
    %c0_37 = arith.constant 0 : index
    %c0_38 = arith.constant 0 : index
    %88 = vector.load %arg10[%c0_36, %c0_37, %c0_38] : memref<1x64x512xbf16, #tpu.memory_space<vmem>>, vector<1x64x512xbf16>
    tpu.vector_store %arg10[%c0_36, %c0_37, %c0_38], %87 {strides = array<i32>} : memref<1x64x512xbf16, #tpu.memory_space<vmem>>, vector<1x64x512xbf16>,
    return
  }
  func.func @transform_0(%arg0: i32) -> (i32, i32, i32) {
    %c0_i32 = arith.constant 0 : i32
    %c0_i32_0 = arith.constant 0 : i32
    %c0_i32_1 = arith.constant 0 : i32
    return %arg0, %c0_i32, %c0_i32_0 : i32, i32, i32
  }
  func.func @transform_1(%arg0: i32) -> (i32, i32) {
    %c0_i32 = arith.constant 0 : i32
    %c0_i32_0 = arith.constant 0 : i32
    %c0_i32_1 = arith.constant 0 : i32
    return %c0_i32, %c0_i32_0 : i32, i32
  }
  func.func @transform_2(%arg0: i32) -> (i32, i32) {
    %c0_i32 = arith.constant 0 : i32
    %c0_i32_0 = arith.constant 0 : i32
    %c0_i32_1 = arith.constant 0 : i32
    return %c0_i32, %c0_i32_0 : i32, i32
  }
  func.func @transform_3(%arg0: i32) -> (i32, i32) {
    %c0_i32 = arith.constant 0 : i32
    %c0_i32_0 = arith.constant 0 : i32
    %c0_i32_1 = arith.constant 0 : i32
    return %c0_i32, %c0_i32_0 : i32, i32
  }
  func.func @transform_4(%arg0: i32) -> (i32, i32) {
    %c0_i32 = arith.constant 0 : i32
    %c0_i32_0 = arith.constant 0 : i32
    %c0_i32_1 = arith.constant 0 : i32
    return %c0_i32, %c0_i32_0 : i32, i32
  }
  func.func @transform_5(%arg0: i32) -> (i32, i32) {
    %c0_i32 = arith.constant 0 : i32
    %c0_i32_0 = arith.constant 0 : i32
    %c0_i32_1 = arith.constant 0 : i32
    return %c0_i32, %c0_i32_0 : i32, i32
  }
  func.func @transform_6(%arg0: i32) -> (i32, i32) {
    %c0_i32 = arith.constant 0 : i32
    %c0_i32_0 = arith.constant 0 : i32
    %c0_i32_1 = arith.constant 0 : i32
    return %c0_i32, %c0_i32_0 : i32, i32
  }
  func.func @transform_7(%arg0: i32) -> (i32, i32) {
    %c0_i32 = arith.constant 0 : i32
    %c0_i32_0 = arith.constant 0 : i32
    %c0_i32_1 = arith.constant 0 : i32
    return %c0_i32, %c0_i32_0 : i32, i32
  }
  func.func @transform_8(%arg0: i32) -> (i32, i32) {
    %c0_i32 = arith.constant 0 : i32
    %c0_i32_0 = arith.constant 0 : i32
    %c0_i32_1 = arith.constant 0 : i32
    return %c0_i32, %c0_i32_0 : i32, i32
  }
  func.func @transform_9(%arg0: i32) -> (i32, i32, i32) {
    %c0_i32 = arith.constant 0 : i32
    %c0_i32_0 = arith.constant 0 : i32
    %c0_i32_1 = arith.constant 0 : i32
    return %arg0, %c0_i32, %c0_i32_0 : i32, i32, i32
  }
}

module attributes {stable_mosaic.version = 11 : i64} {
  func.func @_head_kernel(%arg0: i32, %arg1: i32, %arg2: memref<1x64x512xbf16, #tpu.memory_space<vmem>>, %arg3: memref<1x1xf32, #tpu.memory_space<smem>>, %arg4: memref<512x1024xbf16, #tpu.memory_space<vmem>>, %arg5: memref<1x1024xf32, #tpu.memory_space<vmem>>, %arg6: memref<1024x512xbf16, #tpu.memory_space<vmem>>, %arg7: memref<1x961x64xf32, #tpu.memory_space<vmem>>) attributes {dimension_semantics = [#tpu.dimension_semantics<parallel>, #tpu.dimension_semantics<parallel>], iteration_bounds = array<i64: 2, 1>, scalar_prefetch = 0 : i64, scratch_operands = 0 : i64, tpu.core_type = #tpu.core_type<tc>, window_params = [{transform_indices = @transform_0, window_bounds = array<i64: 1, 64, 512>}, {transform_indices = @transform_1, window_bounds = array<i64: 1, 1>}, {pipeline_mode = #tpu.pipeline_mode<synchronous>, transform_indices = @transform_2, window_bounds = array<i64: 512, 1024>}, {pipeline_mode = #tpu.pipeline_mode<synchronous>, transform_indices = @transform_3, window_bounds = array<i64: 1, 1024>}, {pipeline_mode = #tpu.pipeline_mode<synchronous>, transform_indices = @transform_4, window_bounds = array<i64: 1024, 512>}, {transform_indices = @transform_5, window_bounds = array<i64: 1, 961, 64>}]} {
    %c0 = arith.constant 0 : index
    %c0_0 = arith.constant 0 : index
    %c0_1 = arith.constant 0 : index
    %0 = vector.load %arg2[%c0, %c0_0, %c0_1] : memref<1x64x512xbf16, #tpu.memory_space<vmem>>, vector<1x64x512xbf16>
    %1 = vector.shape_cast %0 : vector<1x64x512xbf16> to vector<64x512xbf16>
    %c0_2 = arith.constant 0 : index
    %c0_3 = arith.constant 0 : index
    %2 = memref.load %arg3[%c0_2, %c0_3] : memref<1x1xf32, #tpu.memory_space<smem>>
    %3 = arith.extf %1 : vector<64x512xbf16> to vector<64x512xf32>
    %cst = arith.constant 0.000000e+00 : f32
    %4 = vector.broadcast %cst : f32 to vector<64x512xf32>
    %5 = arith.cmpf ogt, %3, %4 : vector<64x512xf32>
    %6 = vector.broadcast %2 : f32 to vector<64x512xf32>
    %7 = arith.mulf %6, %3 : vector<64x512xf32>
    %8 = arith.select %5, %3, %7 : vector<64x512xi1>, vector<64x512xf32>
    %9 = arith.truncf %8 : vector<64x512xf32> to vector<64x512xbf16>
    %c0_4 = arith.constant 0 : index
    %c0_5 = arith.constant 0 : index
    %10 = vector.load %arg4[%c0_4, %c0_5] : memref<512x1024xbf16, #tpu.memory_space<vmem>>, vector<512x1024xbf16>
    %cst_6 = arith.constant dense<0.000000e+00> : vector<64x1024xf32>
    %11 = tpu.matmul %9, %10, %cst_6 {dimension_numbers = #tpu.dot_dimension_numbers<[1], [0], [0], [1], [0, 0, 1, 1], [], []>} : vector<64x512xbf16>, vector<512x1024xbf16>, vector<64x1024xf32> -> vector<64x1024xf32>
    %c0_7 = arith.constant 0 : index
    %c0_8 = arith.constant 0 : index
    %12 = vector.load %arg5[%c0_7, %c0_8] : memref<1x1024xf32, #tpu.memory_space<vmem>>, vector<1x1024xf32>
    %13 = vector.broadcast %12 : vector<1x1024xf32> to vector<64x1024xf32>
    %14 = arith.addf %11, %13 : vector<64x1024xf32>
    %15 = vector.extract_strided_slice %14 {offsets = [0, 0], sizes = [64, 512], strides = [1, 1]} : vector<64x1024xf32> to vector<64x512xf32>
    %16 = math.tanh %15 : vector<64x512xf32>
    %17 = vector.extract_strided_slice %14 {offsets = [0, 512], sizes = [64, 512], strides = [1, 1]} : vector<64x1024xf32> to vector<64x512xf32>
    %18 = arith.negf %17 : vector<64x512xf32>
    %19 = math.exp %18 : vector<64x512xf32>
    %cst_9 = arith.constant 1.000000e+00 : f32
    %20 = vector.broadcast %cst_9 : f32 to vector<64x512xf32>
    %21 = arith.addf %20, %19 : vector<64x512xf32>
    %22 = arith.divf %20, %21 : vector<64x512xf32>
    %23 = arith.mulf %16, %22 : vector<64x512xf32>
    %24 = arith.truncf %23 : vector<64x512xf32> to vector<64x512xbf16>
    %c0_10 = arith.constant 0 : index
    %c0_11 = arith.constant 0 : index
    %25 = vector.load %arg6[%c0_10, %c0_11] : memref<1024x512xbf16, #tpu.memory_space<vmem>>, vector<1024x512xbf16>
    %cst_12 = arith.constant dense<0.000000e+00> : vector<1024x64xf32>
    %26 = tpu.matmul %25, %24, %cst_12 {dimension_numbers = #tpu.dot_dimension_numbers<[1], [1], [0], [0], [0, 0, 1, 0], [], []>} : vector<1024x512xbf16>, vector<64x512xbf16>, vector<1024x64xf32> -> vector<1024x64xf32>
    %cst_13 = arith.constant 0.000000e+00 : f32
    %27 = vector.broadcast %cst_13 : f32 to vector<1024x64xf32>
    %28 = arith.maximumf %26, %27 : vector<1024x64xf32>
    %29 = vector.extract_strided_slice %28 {offsets = [0, 0], sizes = [961, 64], strides = [1, 1]} : vector<1024x64xf32> to vector<961x64xf32>
    %30 = vector.shape_cast %29 : vector<961x64xf32> to vector<1x961x64xf32>
    %c0_14 = arith.constant 0 : index
    %c0_15 = arith.constant 0 : index
    %c0_16 = arith.constant 0 : index
    %31 = vector.load %arg7[%c0_14, %c0_15, %c0_16] : memref<1x961x64xf32, #tpu.memory_space<vmem>>, vector<1x961x64xf32>
    tpu.vector_store %arg7[%c0_14, %c0_15, %c0_16], %30 {strides = array<i32>} : memref<1x961x64xf32, #tpu.memory_space<vmem>>, vector<1x961x64xf32>,
    return
  }
  func.func @transform_0(%arg0: i32, %arg1: i32) -> (i32, i32, i32) {
    %c0_i32 = arith.constant 0 : i32
    %c0_i32_0 = arith.constant 0 : i32
    return %arg0, %arg1, %c0_i32 : i32, i32, i32
  }
  func.func @transform_1(%arg0: i32, %arg1: i32) -> (i32, i32) {
    %c0_i32 = arith.constant 0 : i32
    %c0_i32_0 = arith.constant 0 : i32
    %c0_i32_1 = arith.constant 0 : i32
    return %c0_i32, %c0_i32_0 : i32, i32
  }
  func.func @transform_2(%arg0: i32, %arg1: i32) -> (i32, i32) {
    %c0_i32 = arith.constant 0 : i32
    %c0_i32_0 = arith.constant 0 : i32
    %c0_i32_1 = arith.constant 0 : i32
    return %c0_i32, %c0_i32_0 : i32, i32
  }
  func.func @transform_3(%arg0: i32, %arg1: i32) -> (i32, i32) {
    %c0_i32 = arith.constant 0 : i32
    %c0_i32_0 = arith.constant 0 : i32
    %c0_i32_1 = arith.constant 0 : i32
    return %c0_i32, %c0_i32_0 : i32, i32
  }
  func.func @transform_4(%arg0: i32, %arg1: i32) -> (i32, i32) {
    %c0_i32 = arith.constant 0 : i32
    %c0_i32_0 = arith.constant 0 : i32
    %c0_i32_1 = arith.constant 0 : i32
    return %c0_i32, %c0_i32_0 : i32, i32
  }
  func.func @transform_5(%arg0: i32, %arg1: i32) -> (i32, i32, i32) {
    %c0_i32 = arith.constant 0 : i32
    %c0_i32_0 = arith.constant 0 : i32
    return %arg0, %c0_i32, %arg1 : i32, i32, i32
  }
}

</mosaic_0001>

<llo_original>
// kernel: _lambda_.2
$region0: #{_lambda_.2}
  #allocation0 [shape = 'u32[]', space=smem, size = 0x4, offset = 0x4, fixed_abs, tag = 'smem constant byte address 0x4 - core index']
  #allocation1 [shape = 'u32[72,128]{1,0:T(1,128)}', space=vmem, size = 0x9000, scoped, tag = 'internal scratch']
  %s0 = inlined_call_operand.vmem [shape: f32[2,64,180], index: 0, kind: input, shape index: {}]
  %s1 = inlined_call_operand.vmem [shape: f32[1,180], index: 1, kind: input, shape index: {}]
  %s2 = inlined_call_operand.vmem [shape: f32[1,180], index: 2, kind: input, shape index: {}]
  %s3 = inlined_call_operand.vmem [shape: bf16[180,512], index: 3, kind: input, shape index: {}]
  %s4 = inlined_call_operand.vmem [shape: f32[64,512], index: 4, kind: input, shape index: {}]
  %s5 = inlined_call_operand.vmem [shape: f32[1,512], index: 5, kind: input, shape index: {}, may-alias: {5,7}]
  %s6 = inlined_call_operand.vmem [shape: f32[1,512], index: 6, kind: input, shape index: {}, may-alias: {6,8}]
  %s7 = inlined_call_operand.vmem [shape: f32[1,512], index: 7, kind: input, shape index: {}, may-alias: {5,7}]
  %s8 = inlined_call_operand.vmem [shape: f32[1,512], index: 8, kind: input, shape index: {}, may-alias: {6,8}]
  %s9 = inlined_call_operand.vmem [shape: bf16[2,64,512], index: 9, kind: output, shape index: {}]
  %s10 = sld [smem:[#allocation0]]
  $region69: #{_lambda_.2} parent=0
    _
  %s12 = ssub.s32 1, %s10
  %s13 = scalar_select 0, %s12, %s10
  loop: start=0, step=1, limit=4
  $region2: #{_lambda_.2} parent=0 // loop_pre_header
    _
  $region3: #{_lambda_.2} parent=0 // loop_header
    %s15 = sphi 0, %s19
    %p16 = scmp.ge.s32.totalorder %s15, 4
    %s25 = sphi 0, %s27
    %s28 = sphi 0, %s25
    %s29 = sphi 0, %s28
    %s45 = sphi 0, %s29
    %s49 = sphi 0, %s49
    %s51 = sphi 0, %s49
    %s52 = sphi 0, %s51
    %s66 = sphi 0, %s52
    %s70 = sphi 0, %s70
    %s72 = sphi 0, %s70
    %s73 = sphi 0, %s72
    %s87 = sphi 0, %s73
    %s91 = sphi 0, %s91
    %s93 = sphi 0, %s91
    %s94 = sphi 0, %s93
    %s108 = sphi 0, %s94
    %s112 = sphi 0, %s112
    %s114 = sphi 0, %s112
    %s115 = sphi 0, %s114
    %s129 = sphi 0, %s115
    %s133 = sphi 0, %s133
    %s135 = sphi 0, %s133
    %s136 = sphi 0, %s135
    %s150 = sphi 0, %s136
    %s154 = sphi 0, %s154
    %s156 = sphi 0, %s154
    %s157 = sphi 0, %s156
    %s171 = sphi 0, %s157
    %s175 = sphi 0, %s175
    %s177 = sphi 0, %s175
    %s178 = sphi 0, %s177
    %s192 = sphi 0, %s178
    %s196 = sphi 0, %s196
    %s198 = sphi 0, %s196
    %s199 = sphi 0, %s198
    %s213 = sphi 0, %s199
    %s219 = sphi 0, %s221
    %s222 = sphi 0, %s219
    %s223 = sphi 0, %s222
    %s239 = sphi 0, %s223
  $region4: #{_lambda_.2} parent=0 // loop_header_branch
    %18 = sbr.rel (%p16) target = $region8
  $region5: #{_lambda_.2} parent=0 // loop_body
    %s20 = ssub.s32 %s15, 1
    %s21 = ssub.s32 %s15, 2
    %s22 = sadd.s32 %s15, 1
    %s23 = ssub.s32 %s15, %s22
    %p24 = scmp.eq.s32.totalorder %s23, 0
    %s26 = sadd.s32 %s25, 1
    %s27 = scalar_select %p24, %s25, %s26
    %p30 = pneg %p24
    %p31 = scmp.eq.s32.totalorder %s15, 1
    %p32 = por %p30, %p31
    %p33 = scmp.ne.s32.totalorder %s25, %s28
    %p34 = scmp.eq.s32.totalorder %s15, 0
    %p35 = por %p33, %p34
    %p36 = scmp.ne.s32.totalorder %s25, %s28
    %p37 = scmp.eq.s32.totalorder %s20, 1
    %p38 = por %p36, %p37
    %p39 = scmp.ne.s32.totalorder %s28, %s29
    %p40 = scmp.eq.s32.totalorder %s20, 0
    %p41 = por %p39, %p40
    %p42 = scmp.ne.s32.totalorder %s28, %s29
    %p43 = scmp.eq.s32.totalorder %s21, 1
    %p44 = por %p42, %p43
    %p46 = scmp.ne.s32.totalorder %s29, %s45
    %p47 = scmp.eq.s32.totalorder %s21, 0
    %p48 = por %p46, %p47
    %s50 = sadd.s32 %s49, 1
    %p53 = scmp.eq.s32.totalorder %s15, 1
    %p54 = scmp.ne.s32.totalorder %s49, %s51
    %p55 = scmp.eq.s32.totalorder %s15, 0
    %p56 = por %p54, %p55
    %p57 = scmp.ne.s32.totalorder %s49, %s51
    %p58 = scmp.eq.s32.totalorder %s20, 1
    %p59 = por %p57, %p58
    %p60 = scmp.ne.s32.totalorder %s51, %s52
    %p61 = scmp.eq.s32.totalorder %s20, 0
    %p62 = por %p60, %p61
    %p63 = scmp.ne.s32.totalorder %s51, %s52
    %p64 = scmp.eq.s32.totalorder %s21, 1
    %p65 = por %p63, %p64
    %p67 = scmp.ne.s32.totalorder %s52, %s66
    %p68 = scmp.eq.s32.totalorder %s21, 0
    %p69 = por %p67, %p68
    %s71 = sadd.s32 %s70, 1
    %p74 = scmp.eq.s32.totalorder %s15, 1
    %p75 = scmp.ne.s32.totalorder %s70, %s72
    %p76 = scmp.eq.s32.totalorder %s15, 0
    %p77 = por %p75, %p76
    %p78 = scmp.ne.s32.totalorder %s70, %s72
    %p79 = scmp.eq.s32.totalorder %s20, 1
    %p80 = por %p78, %p79
    %p81 = scmp.ne.s32.totalorder %s72, %s73
    %p82 = scmp.eq.s32.totalorder %s20, 0
    %p83 = por %p81, %p82
    %p84 = scmp.ne.s32.totalorder %s72, %s73
    %p85 = scmp.eq.s32.totalorder %s21, 1
    %p86 = por %p84, %p85
    %p88 = scmp.ne.s32.totalorder %s73, %s87
    %p89 = scmp.eq.s32.totalorder %s21, 0
    %p90 = por %p88, %p89
    %s92 = sadd.s32 %s91, 1
    %p95 = scmp.eq.s32.totalorder %s15, 1
    %p96 = scmp.ne.s32.totalorder %s91, %s93
    %p97 = scmp.eq.s32.totalorder %s15, 0
    %p98 = por %p96, %p97
    %p99 = scmp.ne.s32.totalorder %s91, %s93
    %p100 = scmp.eq.s32.totalorder %s20, 1
    %p101 = por %p99, %p100
    %p102 = scmp.ne.s32.totalorder %s93, %s94
    %p103 = scmp.eq.s32.totalorder %s20, 0
    %p104 = por %p102, %p103
    %p105 = scmp.ne.s32.totalorder %s93, %s94
    %p106 = scmp.eq.s32.totalorder %s21, 1
    %p107 = por %p105, %p106
    %p109 = scmp.ne.s32.totalorder %s94, %s108
    %p110 = scmp.eq.s32.totalorder %s21, 0
    %p111 = por %p109, %p110
    %s113 = sadd.s32 %s112, 1
    %p116 = scmp.eq.s32.totalorder %s15, 1
    %p117 = scmp.ne.s32.totalorder %s112, %s114
    %p118 = scmp.eq.s32.totalorder %s15, 0
    %p119 = por %p117, %p118
    %p120 = scmp.ne.s32.totalorder %s112, %s114
    %p121 = scmp.eq.s32.totalorder %s20, 1
    %p122 = por %p120, %p121
    %p123 = scmp.ne.s32.totalorder %s114, %s115
    %p124 = scmp.eq.s32.totalorder %s20, 0
    %p125 = por %p123, %p124
    %p126 = scmp.ne.s32.totalorder %s114, %s115
    %p127 = scmp.eq.s32.totalorder %s21, 1
    %p128 = por %p126, %p127
    %p130 = scmp.ne.s32.totalorder %s115, %s129
    %p131 = scmp.eq.s32.totalorder %s21, 0
    %p132 = por %p130, %p131
    %s134 = sadd.s32 %s133, 1
    %p137 = scmp.eq.s32.totalorder %s15, 1
    %p138 = scmp.ne.s32.totalorder %s133, %s135
    %p139 = scmp.eq.s32.totalorder %s15, 0
    %p140 = por %p138, %p139
    %p141 = scmp.ne.s32.totalorder %s133, %s135
    %p142 = scmp.eq.s32.totalorder %s20, 1
    %p143 = por %p141, %p142
    %p144 = scmp.ne.s32.totalorder %s135, %s136
    %p145 = scmp.eq.s32.totalorder %s20, 0
    %p146 = por %p144, %p145
    %p147 = scmp.ne.s32.totalorder %s135, %s136
    %p148 = scmp.eq.s32.totalorder %s21, 1
    %p149 = por %p147, %p148
    %p151 = scmp.ne.s32.totalorder %s136, %s150
    %p152 = scmp.eq.s32.totalorder %s21, 0
    %p153 = por %p151, %p152
    %s155 = sadd.s32 %s154, 1
    %p158 = scmp.eq.s32.totalorder %s15, 1
    %p159 = scmp.ne.s32.totalorder %s154, %s156
    %p160 = scmp.eq.s32.totalorder %s15, 0
    %p161 = por %p159, %p160
    %p162 = scmp.ne.s32.totalorder %s154, %s156
    %p163 = scmp.eq.s32.totalorder %s20, 1
    %p164 = por %p162, %p163
    %p165 = scmp.ne.s32.totalorder %s156, %s157
    %p166 = scmp.eq.s32.totalorder %s20, 0
    %p167 = por %p165, %p166
    %p168 = scmp.ne.s32.totalorder %s156, %s157
    %p169 = scmp.eq.s32.totalorder %s21, 1
    %p170 = por %p168, %p169
    %p172 = scmp.ne.s32.totalorder %s157, %s171
    %p173 = scmp.eq.s32.totalorder %s21, 0
    %p174 = por %p172, %p173
    %s176 = sadd.s32 %s175, 1
    %p179 = scmp.eq.s32.totalorder %s15, 1
    %p180 = scmp.ne.s32.totalorder %s175, %s177
    %p181 = scmp.eq.s32.totalorder %s15, 0
    %p182 = por %p180, %p181
    %p183 = scmp.ne.s32.totalorder %s175, %s177
    %p184 = scmp.eq.s32.totalorder %s20, 1
    %p185 = por %p183, %p184
    %p186 = scmp.ne.s32.totalorder %s177, %s178
    %p187 = scmp.eq.s32.totalorder %s20, 0
    %p188 = por %p186, %p187
    %p189 = scmp.ne.s32.totalorder %s177, %s178
    %p190 = scmp.eq.s32.totalorder %s21, 1
    %p191 = por %p189, %p190
    %p193 = scmp.ne.s32.totalorder %s178, %s192
    %p194 = scmp.eq.s32.totalorder %s21, 0
    %p195 = por %p193, %p194
    %s197 = sadd.s32 %s196, 1
    %p200 = scmp.eq.s32.totalorder %s15, 1
    %p201 = scmp.ne.s32.totalorder %s196, %s198
    %p202 = scmp.eq.s32.totalorder %s15, 0
    %p203 = por %p201, %p202
    %p204 = scmp.ne.s32.totalorder %s196, %s198
    %p205 = scmp.eq.s32.totalorder %s20, 1
    %p206 = por %p204, %p205
    %p207 = scmp.ne.s32.totalorder %s198, %s199
    %p208 = scmp.eq.s32.totalorder %s20, 0
    %p209 = por %p207, %p208
    %p210 = scmp.ne.s32.totalorder %s198, %s199
    %p211 = scmp.eq.s32.totalorder %s21, 1
    %p212 = por %p210, %p211
    %p214 = scmp.ne.s32.totalorder %s199, %s213
    %p215 = scmp.eq.s32.totalorder %s21, 0
    %p216 = por %p214, %p215
    %s217 = ssub.s32 %s15, %s22
    %p218 = scmp.eq.s32.totalorder %s217, 0
    %s220 = sadd.s32 %s219, 1
    %s221 = scalar_select %p218, %s219, %s220
    %p224 = pneg %p218
    %p225 = scmp.eq.s32.totalorder %s15, 1
    %p226 = por %p224, %p225
    %p227 = scmp.ne.s32.totalorder %s219, %s222
    %p228 = scmp.eq.s32.totalorder %s15, 0
    %p229 = por %p227, %p228
    %p230 = scmp.ne.s32.totalorder %s219, %s222
    %p231 = scmp.eq.s32.totalorder %s20, 1
    %p232 = por %p230, %p231
    %p233 = scmp.ne.s32.totalorder %s222, %s223
    %p234 = scmp.eq.s32.totalorder %s20, 0
    %p235 = por %p233, %p234
    %p236 = scmp.ne.s32.totalorder %s222, %s223
    %p237 = scmp.eq.s32.totalorder %s21, 1
    %p238 = por %p236, %p237
    %p240 = scmp.ne.s32.totalorder %s223, %s239
    %p241 = scmp.eq.s32.totalorder %s21, 0
    %p242 = por %p240, %p241
    %p243 = scmp.le.s32.totalorder 1, %s15
    %p244 = scmp.lt.s32.totalorder %s15, 3
    %p245 = pnand %p243, %p244
    %p246 = pneg %p245
    // Predicated region
    $region9: #{_lambda_.2} parent=5 // pred_check
      _
    $region10: #{_lambda_.2} parent=5 // pred_check_branch
      %248 = sbr.rel (%p245) target = $region12
    $region11: #{_lambda_.2} parent=5 // pred_region
      %s249 = ssub.s32 %s15, 1
      // Predicated region
      $region13: #{_lambda_.2} parent=11 // pred_check
        %p250 = pneg %p62
      $region14: #{_lambda_.2} parent=11 // pred_check_branch
        %252 = sbr.rel (%p250) target = $region16
      $region15: #{_lambda_.2} parent=11 // pred_region
        _
      $region16: #{_lambda_.2} parent=11 // pred_fallthru
        _
      // Predicated region
      $region17: #{_lambda_.2} parent=11 // pred_check
        %p253 = pneg %p83
      $region18: #{_lambda_.2} parent=11 // pred_check_branch
        %255 = sbr.rel (%p253) target = $region20
      $region19: #{_lambda_.2} parent=11 // pred_region
        _
      $region20: #{_lambda_.2} parent=11 // pred_fallthru
        _
      // Predicated region
      $region21: #{_lambda_.2} parent=11 // pred_check
        %p256 = pneg %p104
      $region22: #{_lambda_.2} parent=11 // pred_check_branch
        %258 = sbr.rel (%p256) target = $region24
      $region23: #{_lambda_.2} parent=11 // pred_region
        _
      $region24: #{_lambda_.2} parent=11 // pred_fallthru
        _
      // Predicated region
      $region25: #{_lambda_.2} parent=11 // pred_check
        %p259 = pneg %p125
      $region26: #{_lambda_.2} parent=11 // pred_check_branch
        %261 = sbr.rel (%p259) target = $region28
      $region27: #{_lambda_.2} parent=11 // pred_region
        _
      $region28: #{_lambda_.2} parent=11 // pred_fallthru
        _
      // Predicated region
      $region29: #{_lambda_.2} parent=11 // pred_check
        %p262 = pneg %p146
      $region30: #{_lambda_.2} parent=11 // pred_check_branch
        %264 = sbr.rel (%p262) target = $region32
      $region31: #{_lambda_.2} parent=11 // pred_region
        _
      $region32: #{_lambda_.2} parent=11 // pred_fallthru
        _
      // Predicated region
      $region33: #{_lambda_.2} parent=11 // pred_check
        %p265 = pneg %p167
      $region34: #{_lambda_.2} parent=11 // pred_check_branch
        %267 = sbr.rel (%p265) target = $region36
      $region35: #{_lambda_.2} parent=11 // pred_region
        _
      $region36: #{_lambda_.2} parent=11 // pred_fallthru
        _
      // Predicated region
      $region37: #{_lambda_.2} parent=11 // pred_check
        %p268 = pneg %p188
      $region38: #{_lambda_.2} parent=11 // pred_check_branch
        %270 = sbr.rel (%p268) target = $region40
      $region39: #{_lambda_.2} parent=11 // pred_region
        _
      $region40: #{_lambda_.2} parent=11 // pred_fallthru
        _
      // Predicated region
      $region41: #{_lambda_.2} parent=11 // pred_check
        %p271 = pneg %p209
      $region42: #{_lambda_.2} parent=11 // pred_check_branch
        %273 = sbr.rel (%p271) target = $region44
      $region43: #{_lambda_.2} parent=11 // pred_region
        _
      $region44: #{_lambda_.2} parent=11 // pred_fallthru
        _
    $region12: #{_lambda_.2} parent=5 // pred_fallthru
      _
    %p274 = scmp.lt.s32.totalorder %s15, 2
    // Predicated region
    $region45: #{_lambda_.2} parent=5 // pred_check
      %p275 = pneg %p274
    $region46: #{_lambda_.2} parent=5 // pred_check_branch
      %277 = sbr.rel (%p275) target = $region48
    $region47: #{_lambda_.2} parent=5 // pred_region
      // Predicated region
      $region49: #{_lambda_.2} parent=47 // pred_check
        %p278 = pneg %p35
      $region50: #{_lambda_.2} parent=47 // pred_check_branch
        %280 = sbr.rel (%p278) target = $region52
      $region51: #{_lambda_.2} parent=47 // pred_region
        %p281 = scmp.lt.s32.totalorder %s15, 1
        %s282 = scalar_select %p281, %s15, 1
        %s283 = smul.addr %s282, 16
        %s284 = smul.addr %s283, 8
        %s285 = scalar_lea.vmem %s0, %s284
      $region52: #{_lambda_.2} parent=47 // pred_fallthru
        _
    $region48: #{_lambda_.2} parent=5 // pred_fallthru
      _
    %p286 = scmp.le.s32.totalorder 1, %s15
    %p287 = scmp.lt.s32.totalorder %s15, 3
    %p288 = pnand %p286, %p287
    %p289 = pneg %p288
    // Predicated region
    $region53: #{_lambda_.2} parent=5 // pred_check
      _
    $region54: #{_lambda_.2} parent=5 // pred_check_branch
      %291 = sbr.rel (%p288) target = $region56
    $region55: #{_lambda_.2} parent=5 // pred_region
      %s292 = ssub.s32 %s15, 1
      %p293 = scmp.lt.s32.totalorder %s20, 1
      %s294 = scalar_select %p293, %s20, 1
      %s295 = smul.addr %s294, 16
      %s296 = smul.addr %s295, 8
      %s297 = scalar_lea.vmem %s0, %s296
      %p298 = pneg %p41
      %p299 = pneg %p38
      %p300 = pneg %p62
      %p301 = pneg %p59
      %p302 = pneg %p83
      %p303 = pneg %p80
      %p304 = pneg %p104
      %p305 = pneg %p101
      %p306 = pneg %p125
      %p307 = pneg %p122
      %p308 = pneg %p146
      %p309 = pneg %p143
      %p310 = pneg %p167
      %p311 = pneg %p164
      %p312 = pneg %p188
      %p313 = pneg %p185
      %p314 = pneg %p209
      %p315 = pneg %p206
      %p316 = pneg %p235
      %p317 = pneg %p232
      %p318 = scmp.lt.s32.totalorder %s20, 1
      %s319 = scalar_select %p318, %s20, 1
      %s320 = smul.addr %s319, 32
      %s321 = smul.addr %s320, 4
      %s322 = scalar_lea.vmem %s9, %s321
      %p323 = scmp.lt.s32.totalorder %s20, 1
      %s324 = scalar_select %p323, %s20, 1
      %s325 = smul.addr %s324, 16
      %s326 = smul.addr %s325, 8
      %s327 = scalar_lea.vmem %s0, %s326
      %p328 = scmp.lt.s32.totalorder %s20, 1
      %s329 = scalar_select %p328, %s20, 1
      %s330 = smul.addr %s329, 32
      %s331 = smul.addr %s330, 4
      %s332 = scalar_lea.vmem %s9, %s331
      %v334 = vld [vmem:[%s327] sm:$0xff]
      %v335 = vld [vmem:[%s327 + $0x8] sm:$0xff]
      %v336 = vld [vmem:[%s327 + $0x10] sm:$0xff]
      %v337 = vld [vmem:[%s327 + $0x18] sm:$0xff]
      %v338 = vld [vmem:[%s327 + $0x20] sm:$0xff]
      %v339 = vld [vmem:[%s327 + $0x28] sm:$0xff]
      %v340 = vld [vmem:[%s327 + $0x30] sm:$0xff]
      %v341 = vld [vmem:[%s327 + $0x38] sm:$0xff]
      %v342 = vld [vmem:[%s327 + $0x40] sm:$0xff]
      %v343 = vld [vmem:[%s327 + $0x48] sm:$0xff]
      %v344 = vld [vmem:[%s327 + $0x50] sm:$0xff]
      %v345 = vld [vmem:[%s327 + $0x58] sm:$0xff]
      %v346 = vld [vmem:[%s327 + $0x60] sm:$0xff]
      %v347 = vld [vmem:[%s327 + $0x68] sm:$0xff]
      %v348 = vld [vmem:[%s327 + $0x70] sm:$0xff]
      %v349 = vld [vmem:[%s327 + $0x78] sm:$0xff]
      %vm350 = vcmask 424960
      %v351 = vsel %vm350, %v335, 0.0
      %v352 = vadd.f32 %v334, %v351
      %v353 = vadd.f32 %v352, %v336
      %v354 = vsel %vm350, %v337, 0.0
      %v355 = vadd.f32 %v353, %v354
      %v356 = vadd.f32 %v355, %v338
      %v357 = vsel %vm350, %v339, 0.0
      %v358 = vadd.f32 %v356, %v357
      %v359 = vadd.f32 %v358, %v340
      %v360 = vsel %vm350, %v341, 0.0
      %v361 = vadd.f32 %v359, %v360
      %v362 = vadd.f32 %v361, %v342
      %v363 = vsel %vm350, %v343, 0.0
      %v364 = vadd.f32 %v362, %v363
      %v365 = vadd.f32 %v364, %v344
      %v366 = vsel %vm350, %v345, 0.0
      %v367 = vadd.f32 %v365, %v366
      %v368 = vadd.f32 %v367, %v346
      %v369 = vsel %vm350, %v347, 0.0
      %v370 = vadd.f32 %v368, %v369
      %v371 = vadd.f32 %v370, %v348
      %v372 = vsel %vm350, %v349, 0.0
      %v373 = vadd.f32 %v371, %v372
      %374 = vadd.xlane.f32.xlu0 %v373
      %v375 = vpop.xlane.xlu0 %374
      %v376 = vrot.slane %v375, 4
      %v377 = vadd.f32 %v375, %v376
      %v378 = vrot.slane %v377, 2
      %v379 = vadd.f32 %v377, %v378
      %v380 = vrot.slane %v379, 1
      %v381 = vadd.f32 %v379, %v380
      %s382 = vtos %v381
      %v383 = vrcp.pop 11520.0
      %v384 = vmul.f32 11520.0, %v383
      %v385 = vsub.f32 1.0, %v384
      %v386 = vmul.f32 %v383, %v385
      %v387 = vadd.f32 %v383, %v386
      %vm388 = vweird.f32 %v383
      %v389 = vsel %vm388, %v383, %v387
      %s390 = vtos %v389
      %s391 = smul.f32 %s382, %s390
      %v392 = vmul.f32 %v334, %v334
      %v393 = vmul.f32 %v335, %v335
      %v394 = vmul.f32 %v336, %v336
      %v395 = vmul.f32 %v337, %v337
      %v396 = vmul.f32 %v338, %v338
      %v397 = vmul.f32 %v339, %v339
      %v398 = vmul.f32 %v340, %v340
      %v399 = vmul.f32 %v341, %v341
      %v400 = vmul.f32 %v342, %v342
      %v401 = vmul.f32 %v343, %v343
      %v402 = vmul.f32 %v344, %v344
      %v403 = vmul.f32 %v345, %v345
      %v404 = vmul.f32 %v346, %v346
      %v405 = vmul.f32 %v347, %v347
      %v406 = vmul.f32 %v348, %v348
      %v407 = vmul.f32 %v349, %v349
      %v408 = vsel %vm350, %v393, 0.0
      %v409 = vadd.f32 %v392, %v408
      %v410 = vadd.f32 %v409, %v394
      %v411 = vsel %vm350, %v395, 0.0
      %v412 = vadd.f32 %v410, %v411
      %v413 = vadd.f32 %v412, %v396
      %v414 = vsel %vm350, %v397, 0.0
      %v415 = vadd.f32 %v413, %v414
      %v416 = vadd.f32 %v415, %v398
      %v417 = vsel %vm350, %v399, 0.0
      %v418 = vadd.f32 %v416, %v417
      %v419 = vadd.f32 %v418, %v400
      %v420 = vsel %vm350, %v401, 0.0
      %v421 = vadd.f32 %v419, %v420
      %v422 = vadd.f32 %v421, %v402
      %v423 = vsel %vm350, %v403, 0.0
      %v424 = vadd.f32 %v422, %v423
      %v425 = vadd.f32 %v424, %v404
      %v426 = vsel %vm350, %v405, 0.0
      %v427 = vadd.f32 %v425, %v426
      %v428 = vadd.f32 %v427, %v406
      %v429 = vsel %vm350, %v407, 0.0
      %v430 = vadd.f32 %v428, %v429
      %431 = vadd.xlane.f32.xlu0 %v430
      %v432 = vpop.xlane.xlu0 %431
      %v433 = vrot.slane %v432, 4
      %v434 = vadd.f32 %v432, %v433
      %v435 = vrot.slane %v434, 2
      %v436 = vadd.f32 %v434, %v435
      %v437 = vrot.slane %v436, 1
      %v438 = vadd.f32 %v436, %v437
      %s439 = vtos %v438
      %v440 = vrcp.pop 11520.0
      %v441 = vmul.f32 11520.0, %v440
      %v442 = vsub.f32 1.0, %v441
      %v443 = vmul.f32 %v440, %v442
      %v444 = vadd.f32 %v440, %v443
      %vm445 = vweird.f32 %v440
      %v446 = vsel %vm445, %v440, %v444
      %s447 = vtos %v446
      %s448 = smul.f32 %s439, %s447
      %s449 = smul.f32 %s391, %s391
      %s450 = ssub.f32 %s448, %s449
      %s451 = smax.f32 %s450, 0.0
      %v452 = vstv %s391
      %v453 = vsub.f32 %v334, %v452
      %v454 = vsub.f32 %v335, %v452
      %v455 = vsub.f32 %v336, %v452
      %v456 = vsub.f32 %v337, %v452
      %v457 = vsub.f32 %v338, %v452
      %v458 = vsub.f32 %v339, %v452
      %v459 = vsub.f32 %v340, %v452
      %v460 = vsub.f32 %v341, %v452
      %v461 = vsub.f32 %v342, %v452
      %v462 = vsub.f32 %v343, %v452
      %v463 = vsub.f32 %v344, %v452
      %v464 = vsub.f32 %v345, %v452
      %v465 = vsub.f32 %v346, %v452
      %v466 = vsub.f32 %v347, %v452
      %v467 = vsub.f32 %v348, %v452
      %v468 = vsub.f32 %v349, %v452
      %s469 = sadd.f32 %s451, 1e-08
      %v470 = vstv %s469
      %v471 = vrsqrt.pop %v470
      %v472 = vmul.f32 %v471, %v470
      %v473 = vmul.f32 %v472, %v471
      %v474 = vmul.f32 0.5, %v473
      %v475 = vsub.f32 1.5, %v474
      %v476 = vmul.f32 %v471, %v475
      %vm477 = vweird.f32 %v470
      %vm478 = vweird.f32 %v471
      %vm479 = vmor %vm477, %vm478
      %v480 = vsel %vm479, %v471, %v476
      %s481 = vtos %v480
      %v482 = vstv %s481
      %v483 = vmul.f32 %v453, %v482
      %v484 = vmul.f32 %v454, %v482
      %v485 = vmul.f32 %v455, %v482
      %v486 = vmul.f32 %v456, %v482
      %v487 = vmul.f32 %v457, %v482
      %v488 = vmul.f32 %v458, %v482
      %v489 = vmul.f32 %v459, %v482
      %v490 = vmul.f32 %v460, %v482
      %v491 = vmul.f32 %v461, %v482
      %v492 = vmul.f32 %v462, %v482
      %v493 = vmul.f32 %v463, %v482
      %v494 = vmul.f32 %v464, %v482
      %v495 = vmul.f32 %v465, %v482
      %v496 = vmul.f32 %v466, %v482
      %v497 = vmul.f32 %v467, %v482
      %v498 = vmul.f32 %v468, %v482
      %v499 = vld [vmem:[%s1] sm:$0x3]
      %v501 = vperm.slane %v499, 0
      %v502 = vperm.slane %v499, 1
      %v505 = vmul.f32 %v483, %v501
      %v506 = vmul.f32 %v484, %v502
      %v507 = vmul.f32 %v485, %v501
      %v508 = vmul.f32 %v486, %v502
      %v509 = vmul.f32 %v487, %v501
      %v510 = vmul.f32 %v488, %v502
      %v511 = vmul.f32 %v489, %v501
      %v512 = vmul.f32 %v490, %v502
      %v513 = vmul.f32 %v491, %v501
      %v514 = vmul.f32 %v492, %v502
      %v515 = vmul.f32 %v493, %v501
      %v516 = vmul.f32 %v494, %v502
      %v517 = vmul.f32 %v495, %v501
      %v518 = vmul.f32 %v496, %v502
      %v519 = vmul.f32 %v497, %v501
      %v520 = vmul.f32 %v498, %v502
      %v521 = vld [vmem:[%s2] sm:$0x3]
      %v523 = vperm.slane %v521, 0
      %v524 = vperm.slane %v521, 1
      %v527 = vadd.f32 %v505, %v523
      %v528 = vadd.f32 %v506, %v524
      %v529 = vadd.f32 %v507, %v523
      %v530 = vadd.f32 %v508, %v524
      %v531 = vadd.f32 %v509, %v523
      %v532 = vadd.f32 %v510, %v524
      %v533 = vadd.f32 %v511, %v523
      %v534 = vadd.f32 %v512, %v524
      %v535 = vadd.f32 %v513, %v523
      %v536 = vadd.f32 %v514, %v524
      %v537 = vadd.f32 %v515, %v523
      %v538 = vadd.f32 %v516, %v524
      %v539 = vadd.f32 %v517, %v523
      %v540 = vadd.f32 %v518, %v524
      %v541 = vadd.f32 %v519, %v523
      %v542 = vadd.f32 %v520, %v524
      %v543 = vpack.c.bf16 %v529, %v527
      %v544 = vpack.c.bf16 %v530, %v528
      %v545 = vpack.c.bf16 %v533, %v531
      %v546 = vpack.c.bf16 %v534, %v532
      %v547 = vpack.c.bf16 %v537, %v535
      %v548 = vpack.c.bf16 %v538, %v536
      %v549 = vpack.c.bf16 %v541, %v539
      %v550 = vpack.c.bf16 %v542, %v540
      %v551 = vld [vmem:[%s3] sm:$0xff]
      %v552 = vld [vmem:[%s3 + $0x8] sm:$0xff]
      %v553 = vld [vmem:[%s3 + $0x10] sm:$0xff]
      %v554 = vld [vmem:[%s3 + $0x18] sm:$0xff]
      %v555 = vld [vmem:[%s3 + $0x20] sm:$0xff]
      %v556 = vld [vmem:[%s3 + $0x28] sm:$0xff]
      %v557 = vld [vmem:[%s3 + $0x30] sm:$0xff]
      %v558 = vld [vmem:[%s3 + $0x38] sm:$0xff]
      %v559 = vld [vmem:[%s3 + $0x40] sm:$0xff]
      %v560 = vld [vmem:[%s3 + $0x48] sm:$0xff]
      %v561 = vld [vmem:[%s3 + $0x50] sm:$0xff]
      %v562 = vld [vmem:[%s3 + $0x58] sm:$0xff]
      %v563 = vld [vmem:[%s3 + $0x60] sm:$0xff]
      %v564 = vld [vmem:[%s3 + $0x68] sm:$0xff]
      %v565 = vld [vmem:[%s3 + $0x70] sm:$0xff]
      %v566 = vld [vmem:[%s3 + $0x78] sm:$0xff]
      %v567 = vld [vmem:[%s3 + $0x80] sm:$0xff]
      %v568 = vld [vmem:[%s3 + $0x88] sm:$0xff]
      %v569 = vld [vmem:[%s3 + $0x90] sm:$0xff]
      %v570 = vld [vmem:[%s3 + $0x98] sm:$0xff]
      %v571 = vld [vmem:[%s3 + $0xa0] sm:$0xff]
      %v572 = vld [vmem:[%s3 + $0xa8] sm:$0xff]
      %v573 = vld [vmem:[%s3 + $0xb0] sm:$0xff]
      %v574 = vld [vmem:[%s3 + $0xb8] sm:$0xff]
      %v575 = vld [vmem:[%s3 + $0xc0] sm:$0xff]
      %v576 = vld [vmem:[%s3 + $0xc8] sm:$0xff]
      %v577 = vld [vmem:[%s3 + $0xd0] sm:$0xff]
      %v578 = vld [vmem:[%s3 + $0xd8] sm:$0xff]
      %v579 = vld [vmem:[%s3 + $0xe0] sm:$0xff]
      %v580 = vld [vmem:[%s3 + $0xe8] sm:$0xff]
      %v581 = vld [vmem:[%s3 + $0xf0] sm:$0xff]
      %v582 = vld [vmem:[%s3 + $0xf8] sm:$0xff]
      %v583 = vld [vmem:[%s3 + $0x100] sm:$0xff]
      %v584 = vld [vmem:[%s3 + $0x108] sm:$0xff]
      %v585 = vld [vmem:[%s3 + $0x110] sm:$0xff]
      %v586 = vld [vmem:[%s3 + $0x118] sm:$0xff]
      %v587 = vld [vmem:[%s3 + $0x120] sm:$0xff]
      %v588 = vld [vmem:[%s3 + $0x128] sm:$0xff]
      %v589 = vld [vmem:[%s3 + $0x130] sm:$0xff]
      %v590 = vld [vmem:[%s3 + $0x138] sm:$0xff]
      %v591 = vld [vmem:[%s3 + $0x140] sm:$0xff]
      %v592 = vld [vmem:[%s3 + $0x148] sm:$0xff]
      %v593 = vld [vmem:[%s3 + $0x150] sm:$0xff]
      %v594 = vld [vmem:[%s3 + $0x158] sm:$0xff]
      %v595 = vld [vmem:[%s3 + $0x160] sm:$0x33]
      %v596 = vld [vmem:[%s3 + $0x168] sm:$0x33]
      %v597 = vld [vmem:[%s4] sm:$0xff]
      %v598 = vld [vmem:[%s4 + $0x8] sm:$0xff]
      %v599 = vld [vmem:[%s4 + $0x10] sm:$0xff]
      %v600 = vld [vmem:[%s4 + $0x18] sm:$0xff]
      %v601 = vld [vmem:[%s4 + $0x20] sm:$0xff]
      %v602 = vld [vmem:[%s4 + $0x28] sm:$0xff]
      %v603 = vld [vmem:[%s4 + $0x30] sm:$0xff]
      %v604 = vld [vmem:[%s4 + $0x38] sm:$0xff]
      %v605 = vld [vmem:[%s4 + $0x40] sm:$0xff]
      %v606 = vld [vmem:[%s4 + $0x48] sm:$0xff]
      %v607 = vld [vmem:[%s4 + $0x50] sm:$0xff]
      %v608 = vld [vmem:[%s4 + $0x58] sm:$0xff]
      %v609 = vld [vmem:[%s4 + $0x60] sm:$0xff]
      %v610 = vld [vmem:[%s4 + $0x68] sm:$0xff]
      %v611 = vld [vmem:[%s4 + $0x70] sm:$0xff]
      %v612 = vld [vmem:[%s4 + $0x78] sm:$0xff]
      %v613 = vld [vmem:[%s4 + $0x80] sm:$0xff]
      %v614 = vld [vmem:[%s4 + $0x88] sm:$0xff]
      %v615 = vld [vmem:[%s4 + $0x90] sm:$0xff]
      %v616 = vld [vmem:[%s4 + $0x98] sm:$0xff]
      %v617 = vld [vmem:[%s4 + $0xa0] sm:$0xff]
      %v618 = vld [vmem:[%s4 + $0xa8] sm:$0xff]
      %v619 = vld [vmem:[%s4 + $0xb0] sm:$0xff]
      %v620 = vld [vmem:[%s4 + $0xb8] sm:$0xff]
      %v621 = vld [vmem:[%s4 + $0xc0] sm:$0xff]
      %v622 = vld [vmem:[%s4 + $0xc8] sm:$0xff]
      %v623 = vld [vmem:[%s4 + $0xd0] sm:$0xff]
      %v624 = vld [vmem:[%s4 + $0xd8] sm:$0xff]
      %v625 = vld [vmem:[%s4 + $0xe0] sm:$0xff]
      %v626 = vld [vmem:[%s4 + $0xe8] sm:$0xff]
      %v627 = vld [vmem:[%s4 + $0xf0] sm:$0xff]
      %v628 = vld [vmem:[%s4 + $0xf8] sm:$0xff]
      %v675 = vunpack.c.l.b16 %v551
      %v676 = vunpack.c.h.b16 %v551
      %v677 = vunpack.c.l.b16 %v552
      %v678 = vunpack.c.h.b16 %v552
      %v679 = vunpack.c.l.b16 %v553
      %v680 = vunpack.c.h.b16 %v553
      %v681 = vunpack.c.l.b16 %v554
      %v682 = vunpack.c.h.b16 %v554
      %v683 = vunpack.c.l.b16 %v555
      %v684 = vunpack.c.h.b16 %v555
      %v685 = vunpack.c.l.b16 %v556
      %v686 = vunpack.c.h.b16 %v556
      %v687 = vunpack.c.l.b16 %v557
      %v688 = vunpack.c.h.b16 %v557
      %v689 = vunpack.c.l.b16 %v558
      %v690 = vunpack.c.h.b16 %v558
      %v691 = vunpack.c.l.b16 %v559
      %v692 = vunpack.c.h.b16 %v559
      %v693 = vunpack.c.l.b16 %v560
      %v694 = vunpack.c.h.b16 %v560
      %v695 = vunpack.c.l.b16 %v561
      %v696 = vunpack.c.h.b16 %v561
      %v697 = vunpack.c.l.b16 %v562
      %v698 = vunpack.c.h.b16 %v562
      %v699 = vunpack.c.l.b16 %v563
      %v700 = vunpack.c.h.b16 %v563
      %v701 = vunpack.c.l.b16 %v564
      %v702 = vunpack.c.h.b16 %v564
      %v703 = vunpack.c.l.b16 %v565
      %v704 = vunpack.c.h.b16 %v565
      %v705 = vunpack.c.l.b16 %v566
      %v706 = vunpack.c.h.b16 %v566
      %v707 = vunpack.c.l.b16 %v567
      %v708 = vunpack.c.h.b16 %v567
      %v709 = vunpack.c.l.b16 %v568
      %v710 = vunpack.c.h.b16 %v568
      %v711 = vunpack.c.l.b16 %v569
      %v712 = vunpack.c.h.b16 %v569
      %v713 = vunpack.c.l.b16 %v570
      %v714 = vunpack.c.h.b16 %v570
      %v715 = vunpack.c.l.b16 %v571
      %v716 = vunpack.c.h.b16 %v571
      %v717 = vunpack.c.l.b16 %v572
      %v718 = vunpack.c.h.b16 %v572
      %v719 = vunpack.c.l.b16 %v573
      %v720 = vunpack.c.h.b16 %v573
      %v721 = vunpack.c.l.b16 %v574
      %v722 = vunpack.c.h.b16 %v574
      %v723 = vunpack.c.l.b16 %v575
      %v724 = vunpack.c.h.b16 %v575
      %v725 = vunpack.c.l.b16 %v576
      %v726 = vunpack.c.h.b16 %v576
      %v727 = vunpack.c.l.b16 %v577
      %v728 = vunpack.c.h.b16 %v577
      %v729 = vunpack.c.l.b16 %v578
      %v730 = vunpack.c.h.b16 %v578
      %v731 = vunpack.c.l.b16 %v579
      %v732 = vunpack.c.h.b16 %v579
      %v733 = vunpack.c.l.b16 %v580
      %v734 = vunpack.c.h.b16 %v580
      %v735 = vunpack.c.l.b16 %v581
      %v736 = vunpack.c.h.b16 %v581
      %v737 = vunpack.c.l.b16 %v582
      %v738 = vunpack.c.h.b16 %v582
      %v739 = vunpack.c.l.b16 %v583
      %v740 = vunpack.c.h.b16 %v583
      %v741 = vunpack.c.l.b16 %v584
      %v742 = vunpack.c.h.b16 %v584
      %v743 = vunpack.c.l.b16 %v585
      %v744 = vunpack.c.h.b16 %v585
      %v745 = vunpack.c.l.b16 %v586
      %v746 = vunpack.c.h.b16 %v586
      %v747 = vunpack.c.l.b16 %v587
      %v748 = vunpack.c.h.b16 %v587
      %v749 = vunpack.c.l.b16 %v588
      %v750 = vunpack.c.h.b16 %v588
      %v751 = vunpack.c.l.b16 %v589
      %v752 = vunpack.c.h.b16 %v589
      %v753 = vunpack.c.l.b16 %v590
      %v754 = vunpack.c.h.b16 %v590
      %v755 = vunpack.c.l.b16 %v591
      %v756 = vunpack.c.h.b16 %v591
      %v757 = vunpack.c.l.b16 %v592
      %v758 = vunpack.c.h.b16 %v592
      %v759 = vunpack.c.l.b16 %v593
      %v760 = vunpack.c.h.b16 %v593
      %v761 = vunpack.c.l.b16 %v594
      %v762 = vunpack.c.h.b16 %v594
      %v763 = vunpack.c.l.b16 %v595
      %v764 = vunpack.c.h.b16 %v595
      %v765 = vunpack.c.l.b16 %v596
      %v766 = vunpack.c.h.b16 %v596
      %v767 = vpack.c.b16 %v679, %v675
      %v768 = vpack.c.b16 %v680, %v676
      %v769 = vpack.c.b16 %v681, %v677
      %v770 = vpack.c.b16 %v682, %v678
      %v771 = vpack.c.b16 %v687, %v683
      %v772 = vpack.c.b16 %v688, %v684
      %v773 = vpack.c.b16 %v689, %v685
      %v774 = vpack.c.b16 %v690, %v686
      %v775 = vpack.c.b16 %v695, %v691
      %v776 = vpack.c.b16 %v696, %v692
      %v777 = vpack.c.b16 %v697, %v693
      %v778 = vpack.c.b16 %v698, %v694
      %v779 = vpack.c.b16 %v703, %v699
      %v780 = vpack.c.b16 %v704, %v700
      %v781 = vpack.c.b16 %v705, %v701
      %v782 = vpack.c.b16 %v706, %v702
      %v783 = vpack.c.b16 %v711, %v707
      %v784 = vpack.c.b16 %v712, %v708
      %v785 = vpack.c.b16 %v713, %v709
      %v786 = vpack.c.b16 %v714, %v710
      %v787 = vpack.c.b16 %v719, %v715
      %v788 = vpack.c.b16 %v720, %v716
      %v789 = vpack.c.b16 %v721, %v717
      %v790 = vpack.c.b16 %v722, %v718
      %v791 = vpack.c.b16 %v727, %v723
      %v792 = vpack.c.b16 %v728, %v724
      %v793 = vpack.c.b16 %v729, %v725
      %v794 = vpack.c.b16 %v730, %v726
      %v795 = vpack.c.b16 %v735, %v731
      %v796 = vpack.c.b16 %v736, %v732
      %v797 = vpack.c.b16 %v737, %v733
      %v798 = vpack.c.b16 %v738, %v734
      %v799 = vpack.c.b16 %v743, %v739
      %v800 = vpack.c.b16 %v744, %v740
      %v801 = vpack.c.b16 %v745, %v741
      %v802 = vpack.c.b16 %v746, %v742
      %v803 = vpack.c.b16 %v751, %v747
      %v804 = vpack.c.b16 %v752, %v748
      %v805 = vpack.c.b16 %v753, %v749
      %v806 = vpack.c.b16 %v754, %v750
      %v807 = vpack.c.b16 %v759, %v755
      %v808 = vpack.c.b16 %v760, %v756
      %v809 = vpack.c.b16 %v761, %v757
      %v810 = vpack.c.b16 %v762, %v758
      %v811 = vpack.c.b16 %v763, %v763
      %v812 = vpack.c.b16 %v764, %v764
      %v813 = vpack.c.b16 %v765, %v765
      %v814 = vpack.c.b16 %v766, %v766
      %v860 = vsel %vm350, %v544, 0
      %v863 = vsel %vm350, %v546, 0
      %v866 = vsel %vm350, %v548, 0
      %v869 = vsel %vm350, %v550, 0
      %vm871 = vcmask 1041408
      %v873 = vsel %vm871, %v811, 0
      %v876 = vsel %vm871, %v812, 0
      %v879 = vsel %vm871, %v813, 0
      %v882 = vsel %vm871, %v814, 0
      %884 = vmatpush.bf16.msra.mxu0 %v795
      %885 = vmatpush.bf16.msra.mxu0 %v791
      %886 = vmatpush.bf16.msra.mxu0 %v787
      %887 = vmatpush.bf16.msra.mxu0 %v783
      %888 = vmatpush.bf16.msra.mxu0 %v779
      %889 = vmatpush.bf16.msra.mxu0 %v775
      %890 = vmatpush.bf16.msra.mxu0 %v771
      %891 = vmatpush.bf16.msra.mxu0 %v767
      %892 = vmatmul.bf16.gmra.mxu0 %v543
      %v893 = vpop.f32.mrf.mxu0
      %v894 = vadd.f32 %v597, %v893
      %v895 = vpop.f32.mrf.mxu0
      %v896 = vadd.f32 %v601, %v895
      %897 = vmatmul.bf16.gmra.mxu0 %v545
      %v898 = vpop.f32.mrf.mxu0
      %v899 = vadd.f32 %v605, %v898
      %v900 = vpop.f32.mrf.mxu0
      %v901 = vadd.f32 %v609, %v900
      %902 = vmatmul.bf16.gmra.mxu0 %v547
      %v903 = vpop.f32.mrf.mxu0
      %v904 = vadd.f32 %v613, %v903
      %v905 = vpop.f32.mrf.mxu0
      %v906 = vadd.f32 %v617, %v905
      %907 = vmatmul.bf16.gmra.mxu0 %v549
      %v908 = vpop.f32.mrf.mxu0
      %v909 = vadd.f32 %v621, %v908
      %v910 = vpop.f32.mrf.mxu0
      %v911 = vadd.f32 %v625, %v910
      %912 = vdwg.mxu0
      %913 = vmatpush.bf16.msra.mxu0 0
      %914 = vmatpush.bf16.msra.mxu0 0
      %915 = vmatpush.bf16.msra.mxu0 0
      %916 = vmatpush.bf16.msra.mxu0 0
      %917 = vmatpush.bf16.msra.mxu0 %v873
      %918 = vmatpush.bf16.msra.mxu0 %v807
      %919 = vmatpush.bf16.msra.mxu0 %v803
      %920 = vmatpush.bf16.msra.mxu0 %v799
      %921 = vmatmul.bf16.gmra.mxu0 %v860
      %v922 = vpop.f32.mrf.mxu0
      %v923 = vadd.f32 %v894, %v922
      %v924 = vpop.f32.mrf.mxu0
      %v925 = vadd.f32 %v896, %v924
      %926 = vmatmul.bf16.gmra.mxu0 %v863
      %v927 = vpop.f32.mrf.mxu0
      %v928 = vadd.f32 %v899, %v927
      %v929 = vpop.f32.mrf.mxu0
      %v930 = vadd.f32 %v901, %v929
      %931 = vmatmul.bf16.gmra.mxu0 %v866
      %v932 = vpop.f32.mrf.mxu0
      %v933 = vadd.f32 %v904, %v932
      %v934 = vpop.f32.mrf.mxu0
      %v935 = vadd.f32 %v906, %v934
      %936 = vmatmul.bf16.gmra.mxu0 %v869
      %v937 = vpop.f32.mrf.mxu0
      %v938 = vadd.f32 %v909, %v937
      %v939 = vpop.f32.mrf.mxu0
      %v940 = vadd.f32 %v911, %v939
      %941 = vdwg.mxu0
      %942 = vmatpush.bf16.msra.mxu0 %v796
      %943 = vmatpush.bf16.msra.mxu0 %v792
      %944 = vmatpush.bf16.msra.mxu0 %v788
      %945 = vmatpush.bf16.msra.mxu0 %v784
      %946 = vmatpush.bf16.msra.mxu0 %v780
      %947 = vmatpush.bf16.msra.mxu0 %v776
      %948 = vmatpush.bf16.msra.mxu0 %v772
      %949 = vmatpush.bf16.msra.mxu0 %v768
      %950 = vmatmul.bf16.gmra.mxu0 %v543
      %v951 = vpop.f32.mrf.mxu0
      %v952 = vadd.f32 %v598, %v951
      %v953 = vpop.f32.mrf.mxu0
      %v954 = vadd.f32 %v602, %v953
      %955 = vmatmul.bf16.gmra.mxu0 %v545
      %v956 = vpop.f32.mrf.mxu0
      %v957 = vadd.f32 %v606, %v956
      %v958 = vpop.f32.mrf.mxu0
      %v959 = vadd.f32 %v610, %v958
      %960 = vmatmul.bf16.gmra.mxu0 %v547
      %v961 = vpop.f32.mrf.mxu0
      %v962 = vadd.f32 %v614, %v961
      %v963 = vpop.f32.mrf.mxu0
      %v964 = vadd.f32 %v618, %v963
      %965 = vmatmul.bf16.gmra.mxu0 %v549
      %v966 = vpop.f32.mrf.mxu0
      %v967 = vadd.f32 %v622, %v966
      %v968 = vpop.f32.mrf.mxu0
      %v969 = vadd.f32 %v626, %v968
      %970 = vdwg.mxu0
      %971 = vmatpush.bf16.msra.mxu0 0
      %972 = vmatpush.bf16.msra.mxu0 0
      %973 = vmatpush.bf16.msra.mxu0 0
      %974 = vmatpush.bf16.msra.mxu0 0
      %975 = vmatpush.bf16.msra.mxu0 %v876
      %976 = vmatpush.bf16.msra.mxu0 %v808
      %977 = vmatpush.bf16.msra.mxu0 %v804
      %978 = vmatpush.bf16.msra.mxu0 %v800
      %979 = vmatmul.bf16.gmra.mxu0 %v860
      %v980 = vpop.f32.mrf.mxu0
      %v981 = vadd.f32 %v952, %v980
      %v982 = vpop.f32.mrf.mxu0
      %v983 = vadd.f32 %v954, %v982
      %984 = vmatmul.bf16.gmra.mxu0 %v863
      %v985 = vpop.f32.mrf.mxu0
      %v986 = vadd.f32 %v957, %v985
      %v987 = vpop.f32.mrf.mxu0
      %v988 = vadd.f32 %v959, %v987
      %989 = vmatmul.bf16.gmra.mxu0 %v866
      %v990 = vpop.f32.mrf.mxu0
      %v991 = vadd.f32 %v962, %v990
      %v992 = vpop.f32.mrf.mxu0
      %v993 = vadd.f32 %v964, %v992
      %994 = vmatmul.bf16.gmra.mxu0 %v869
      %v995 = vpop.f32.mrf.mxu0
      %v996 = vadd.f32 %v967, %v995
      %v997 = vpop.f32.mrf.mxu0
      %v998 = vadd.f32 %v969, %v997
      %999 = vdwg.mxu0
      %1000 = vmatpush.bf16.msra.mxu0 %v797
      %1001 = vmatpush.bf16.msra.mxu0 %v793
      %1002 = vmatpush.bf16.msra.mxu0 %v789
      %1003 = vmatpush.bf16.msra.mxu0 %v785
      %1004 = vmatpush.bf16.msra.mxu0 %v781
      %1005 = vmatpush.bf16.msra.mxu0 %v777
      %1006 = vmatpush.bf16.msra.mxu0 %v773
      %1007 = vmatpush.bf16.msra.mxu0 %v769
      %1008 = vmatmul.bf16.gmra.mxu0 %v543
      %v1009 = vpop.f32.mrf.mxu0
      %v1010 = vadd.f32 %v599, %v1009
      %v1011 = vpop.f32.mrf.mxu0
      %v1012 = vadd.f32 %v603, %v1011
      %1013 = vmatmul.bf16.gmra.mxu0 %v545
      %v1014 = vpop.f32.mrf.mxu0
      %v1015 = vadd.f32 %v607, %v1014
      %v1016 = vpop.f32.mrf.mxu0
      %v1017 = vadd.f32 %v611, %v1016
      %1018 = vmatmul.bf16.gmra.mxu0 %v547
      %v1019 = vpop.f32.mrf.mxu0
      %v1020 = vadd.f32 %v615, %v1019
      %v1021 = vpop.f32.mrf.mxu0
      %v1022 = vadd.f32 %v619, %v1021
      %1023 = vmatmul.bf16.gmra.mxu0 %v549
      %v1024 = vpop.f32.mrf.mxu0
      %v1025 = vadd.f32 %v623, %v1024
      %v1026 = vpop.f32.mrf.mxu0
      %v1027 = vadd.f32 %v627, %v1026
      %1028 = vdwg.mxu0
      %1029 = vmatpush.bf16.msra.mxu0 0
      %1030 = vmatpush.bf16.msra.mxu0 0
      %1031 = vmatpush.bf16.msra.mxu0 0
      %1032 = vmatpush.bf16.msra.mxu0 0
      %1033 = vmatpush.bf16.msra.mxu0 %v879
      %1034 = vmatpush.bf16.msra.mxu0 %v809
      %1035 = vmatpush.bf16.msra.mxu0 %v805
      %1036 = vmatpush.bf16.msra.mxu0 %v801
      %1037 = vmatmul.bf16.gmra.mxu0 %v860
      %v1038 = vpop.f32.mrf.mxu0
      %v1039 = vadd.f32 %v1010, %v1038
      %v1040 = vpop.f32.mrf.mxu0
      %v1041 = vadd.f32 %v1012, %v1040
      %1042 = vmatmul.bf16.gmra.mxu0 %v863
      %v1043 = vpop.f32.mrf.mxu0
      %v1044 = vadd.f32 %v1015, %v1043
      %v1045 = vpop.f32.mrf.mxu0
      %v1046 = vadd.f32 %v1017, %v1045
      %1047 = vmatmul.bf16.gmra.mxu0 %v866
      %v1048 = vpop.f32.mrf.mxu0
      %v1049 = vadd.f32 %v1020, %v1048
      %v1050 = vpop.f32.mrf.mxu0
      %v1051 = vadd.f32 %v1022, %v1050
      %1052 = vmatmul.bf16.gmra.mxu0 %v869
      %v1053 = vpop.f32.mrf.mxu0
      %v1054 = vadd.f32 %v1025, %v1053
      %v1055 = vpop.f32.mrf.mxu0
      %v1056 = vadd.f32 %v1027, %v1055
      %1057 = vdwg.mxu0
      %1058 = vmatpush.bf16.msra.mxu0 %v798
      %1059 = vmatpush.bf16.msra.mxu0 %v794
      %1060 = vmatpush.bf16.msra.mxu0 %v790
      %1061 = vmatpush.bf16.msra.mxu0 %v786
      %1062 = vmatpush.bf16.msra.mxu0 %v782
      %1063 = vmatpush.bf16.msra.mxu0 %v778
      %1064 = vmatpush.bf16.msra.mxu0 %v774
      %1065 = vmatpush.bf16.msra.mxu0 %v770
      %1066 = vmatmul.bf16.gmra.mxu0 %v543
      %v1067 = vpop.f32.mrf.mxu0
      %v1068 = vadd.f32 %v600, %v1067
      %v1069 = vpop.f32.mrf.mxu0
      %v1070 = vadd.f32 %v604, %v1069
      %1071 = vmatmul.bf16.gmra.mxu0 %v545
      %v1072 = vpop.f32.mrf.mxu0
      %v1073 = vadd.f32 %v608, %v1072
      %v1074 = vpop.f32.mrf.mxu0
      %v1075 = vadd.f32 %v612, %v1074
      %1076 = vmatmul.bf16.gmra.mxu0 %v547
      %v1077 = vpop.f32.mrf.mxu0
      %v1078 = vadd.f32 %v616, %v1077
      %v1079 = vpop.f32.mrf.mxu0
      %v1080 = vadd.f32 %v620, %v1079
      %1081 = vmatmul.bf16.gmra.mxu0 %v549
      %v1082 = vpop.f32.mrf.mxu0
      %v1083 = vadd.f32 %v624, %v1082
      %v1084 = vpop.f32.mrf.mxu0
      %v1085 = vadd.f32 %v628, %v1084
      %1086 = vdwg.mxu0
      %1087 = vmatpush.bf16.msra.mxu0 0
      %1088 = vmatpush.bf16.msra.mxu0 0
      %1089 = vmatpush.bf16.msra.mxu0 0
      %1090 = vmatpush.bf16.msra.mxu0 0
      %1091 = vmatpush.bf16.msra.mxu0 %v882
      %1092 = vmatpush.bf16.msra.mxu0 %v810
      %1093 = vmatpush.bf16.msra.mxu0 %v806
      %1094 = vmatpush.bf16.msra.mxu0 %v802
      %1095 = vmatmul.bf16.gmra.mxu0 %v860
      %v1096 = vpop.f32.mrf.mxu0
      %v1097 = vadd.f32 %v1068, %v1096
      %v1098 = vpop.f32.mrf.mxu0
      %v1099 = vadd.f32 %v1070, %v1098
      %1100 = vmatmul.bf16.gmra.mxu0 %v863
      %v1101 = vpop.f32.mrf.mxu0
      %v1102 = vadd.f32 %v1073, %v1101
      %v1103 = vpop.f32.mrf.mxu0
      %v1104 = vadd.f32 %v1075, %v1103
      %1105 = vmatmul.bf16.gmra.mxu0 %v866
      %v1106 = vpop.f32.mrf.mxu0
      %v1107 = vadd.f32 %v1078, %v1106
      %v1108 = vpop.f32.mrf.mxu0
      %v1109 = vadd.f32 %v1080, %v1108
      %1110 = vmatmul.bf16.gmra.mxu0 %v869
      %v1111 = vpop.f32.mrf.mxu0
      %v1112 = vadd.f32 %v1083, %v1111
      %v1113 = vpop.f32.mrf.mxu0
      %v1114 = vadd.f32 %v1085, %v1113
      %1115 = vdwg.mxu0
      %v1116 = vadd.f32 %v923, %v981
      %v1117 = vadd.f32 %v1116, %v1039
      %v1118 = vadd.f32 %v1117, %v1097
      %1119 = vadd.xlane.f32.xlu0 %v1118
      %v1120 = vpop.xlane.xlu0 %1119
      %v1121 = vadd.f32 %v925, %v983
      %v1122 = vadd.f32 %v1121, %v1041
      %v1123 = vadd.f32 %v1122, %v1099
      %1124 = vadd.xlane.f32.xlu0 %v1123
      %v1125 = vpop.xlane.xlu0 %1124
      %v1126 = vadd.f32 %v928, %v986
      %v1127 = vadd.f32 %v1126, %v1044
      %v1128 = vadd.f32 %v1127, %v1102
      %1129 = vadd.xlane.f32.xlu0 %v1128
      %v1130 = vpop.xlane.xlu0 %1129
      %v1131 = vadd.f32 %v930, %v988
      %v1132 = vadd.f32 %v1131, %v1046
      %v1133 = vadd.f32 %v1132, %v1104
      %1134 = vadd.xlane.f32.xlu0 %v1133
      %v1135 = vpop.xlane.xlu0 %1134
      %v1136 = vadd.f32 %v933, %v991
      %v1137 = vadd.f32 %v1136, %v1049
      %v1138 = vadd.f32 %v1137, %v1107
      %1139 = vadd.xlane.f32.xlu0 %v1138
      %v1140 = vpop.xlane.xlu0 %1139
      %v1141 = vadd.f32 %v935, %v993
      %v1142 = vadd.f32 %v1141, %v1051
      %v1143 = vadd.f32 %v1142, %v1109
      %1144 = vadd.xlane.f32.xlu0 %v1143
      %v1145 = vpop.xlane.xlu0 %1144
      %v1146 = vadd.f32 %v938, %v996
      %v1147 = vadd.f32 %v1146, %v1054
      %v1148 = vadd.f32 %v1147, %v1112
      %1149 = vadd.xlane.f32.xlu0 %v1148
      %v1150 = vpop.xlane.xlu0 %1149
      %v1151 = vadd.f32 %v940, %v998
      %v1152 = vadd.f32 %v1151, %v1056
      %v1153 = vadd.f32 %v1152, %v1114
      %1154 = vadd.xlane.f32.xlu0 %v1153
      %v1155 = vpop.xlane.xlu0 %1154
      %v1156 = vrcp.pop 512.0
      %v1157 = vmul.f32 512.0, %v1156
      %v1158 = vsub.f32 1.0, %v1157
      %v1159 = vmul.f32 %v1156, %v1158
      %v1160 = vadd.f32 %v1156, %v1159
      %vm1161 = vweird.f32 %v1156
      %v1162 = vsel %vm1161, %v1156, %v1160
      %v1163 = vmul.f32 %v1120, %v1162
      %v1164 = vmul.f32 %v1125, %v1162
      %v1165 = vmul.f32 %v1130, %v1162
      %v1166 = vmul.f32 %v1135, %v1162
      %v1167 = vmul.f32 %v1140, %v1162
      %v1168 = vmul.f32 %v1145, %v1162
      %v1169 = vmul.f32 %v1150, %v1162
      %v1170 = vmul.f32 %v1155, %v1162
      %v1171 = vmul.f32 %v923, %v923
      %v1172 = vmul.f32 %v981, %v981
      %v1173 = vmul.f32 %v1039, %v1039
      %v1174 = vmul.f32 %v1097, %v1097
      %v1175 = vmul.f32 %v925, %v925
      %v1176 = vmul.f32 %v983, %v983
      %v1177 = vmul.f32 %v1041, %v1041
      %v1178 = vmul.f32 %v1099, %v1099
      %v1179 = vmul.f32 %v928, %v928
      %v1180 = vmul.f32 %v986, %v986
      %v1181 = vmul.f32 %v1044, %v1044
      %v1182 = vmul.f32 %v1102, %v1102
      %v1183 = vmul.f32 %v930, %v930
      %v1184 = vmul.f32 %v988, %v988
      %v1185 = vmul.f32 %v1046, %v1046
      %v1186 = vmul.f32 %v1104, %v1104
      %v1187 = vmul.f32 %v933, %v933
      %v1188 = vmul.f32 %v991, %v991
      %v1189 = vmul.f32 %v1049, %v1049
      %v1190 = vmul.f32 %v1107, %v1107
      %v1191 = vmul.f32 %v935, %v935
      %v1192 = vmul.f32 %v993, %v993
      %v1193 = vmul.f32 %v1051, %v1051
      %v1194 = vmul.f32 %v1109, %v1109
      %v1195 = vmul.f32 %v938, %v938
      %v1196 = vmul.f32 %v996, %v996
      %v1197 = vmul.f32 %v1054, %v1054
      %v1198 = vmul.f32 %v1112, %v1112
      %v1199 = vmul.f32 %v940, %v940
      %v1200 = vmul.f32 %v998, %v998
      %v1201 = vmul.f32 %v1056, %v1056
      %v1202 = vmul.f32 %v1114, %v1114
      %v1203 = vadd.f32 %v1171, %v1172
      %v1204 = vadd.f32 %v1203, %v1173
      %v1205 = vadd.f32 %v1204, %v1174
      %1206 = vadd.xlane.f32.xlu0 %v1205
      %v1207 = vpop.xlane.xlu0 %1206
      %v1208 = vadd.f32 %v1175, %v1176
      %v1209 = vadd.f32 %v1208, %v1177
      %v1210 = vadd.f32 %v1209, %v1178
      %1211 = vadd.xlane.f32.xlu0 %v1210
      %v1212 = vpop.xlane.xlu0 %1211
      %v1213 = vadd.f32 %v1179, %v1180
      %v1214 = vadd.f32 %v1213, %v1181
      %v1215 = vadd.f32 %v1214, %v1182
      %1216 = vadd.xlane.f32.xlu0 %v1215
      %v1217 = vpop.xlane.xlu0 %1216
      %v1218 = vadd.f32 %v1183, %v1184
      %v1219 = vadd.f32 %v1218, %v1185
      %v1220 = vadd.f32 %v1219, %v1186
      %1221 = vadd.xlane.f32.xlu0 %v1220
      %v1222 = vpop.xlane.xlu0 %1221
      %v1223 = vadd.f32 %v1187, %v1188
      %v1224 = vadd.f32 %v1223, %v1189
      %v1225 = vadd.f32 %v1224, %v1190
      %1226 = vadd.xlane.f32.xlu0 %v1225
      %v1227 = vpop.xlane.xlu0 %1226
      %v1228 = vadd.f32 %v1191, %v1192
      %v1229 = vadd.f32 %v1228, %v1193
      %v1230 = vadd.f32 %v1229, %v1194
      %1231 = vadd.xlane.f32.xlu0 %v1230
      %v1232 = vpop.xlane.xlu0 %1231
      %v1233 = vadd.f32 %v1195, %v1196
      %v1234 = vadd.f32 %v1233, %v1197
      %v1235 = vadd.f32 %v1234, %v1198
      %1236 = vadd.xlane.f32.xlu0 %v1235
      %v1237 = vpop.xlane.xlu0 %1236
      %v1238 = vadd.f32 %v1199, %v1200
      %v1239 = vadd.f32 %v1238, %v1201
      %v1240 = vadd.f32 %v1239, %v1202
      %1241 = vadd.xlane.f32.xlu0 %v1240
      %v1242 = vpop.xlane.xlu0 %1241
      %v1243 = vmul.f32 %v1207, %v1162
      %v1244 = vmul.f32 %v1212, %v1162
      %v1245 = vmul.f32 %v1217, %v1162
      %v1246 = vmul.f32 %v1222, %v1162
      %v1247 = vmul.f32 %v1227, %v1162
      %v1248 = vmul.f32 %v1232, %v1162
      %v1249 = vmul.f32 %v1237, %v1162
      %v1250 = vmul.f32 %v1242, %v1162
      %v1251 = vmul.f32 %v1163, %v1163
      %v1252 = vmul.f32 %v1164, %v1164
      %v1253 = vmul.f32 %v1165, %v1165
      %v1254 = vmul.f32 %v1166, %v1166
      %v1255 = vmul.f32 %v1167, %v1167
      %v1256 = vmul.f32 %v1168, %v1168
      %v1257 = vmul.f32 %v1169, %v1169
      %v1258 = vmul.f32 %v1170, %v1170
      %v1259 = vsub.f32 %v1243, %v1251
      %v1260 = vsub.f32 %v1244, %v1252
      %v1261 = vsub.f32 %v1245, %v1253
      %v1262 = vsub.f32 %v1246, %v1254
      %v1263 = vsub.f32 %v1247, %v1255
      %v1264 = vsub.f32 %v1248, %v1256
      %v1265 = vsub.f32 %v1249, %v1257
      %v1266 = vsub.f32 %v1250, %v1258
      %v1267 = vmax.f32 %v1259, 0.0
      %v1268 = vmax.f32 %v1260, 0.0
      %v1269 = vmax.f32 %v1261, 0.0
      %v1270 = vmax.f32 %v1262, 0.0
      %v1271 = vmax.f32 %v1263, 0.0
      %v1272 = vmax.f32 %v1264, 0.0
      %v1273 = vmax.f32 %v1265, 0.0
      %v1274 = vmax.f32 %v1266, 0.0
      %v1275 = vsub.f32 %v923, %v1163
      %v1276 = vsub.f32 %v981, %v1163
      %v1277 = vsub.f32 %v1039, %v1163
      %v1278 = vsub.f32 %v1097, %v1163
      %v1279 = vsub.f32 %v925, %v1164
      %v1280 = vsub.f32 %v983, %v1164
      %v1281 = vsub.f32 %v1041, %v1164
      %v1282 = vsub.f32 %v1099, %v1164
      %v1283 = vsub.f32 %v928, %v1165
      %v1284 = vsub.f32 %v986, %v1165
      %v1285 = vsub.f32 %v1044, %v1165
      %v1286 = vsub.f32 %v1102, %v1165
      %v1287 = vsub.f32 %v930, %v1166
      %v1288 = vsub.f32 %v988, %v1166
      %v1289 = vsub.f32 %v1046, %v1166
      %v1290 = vsub.f32 %v1104, %v1166
      %v1291 = vsub.f32 %v933, %v1167
      %v1292 = vsub.f32 %v991, %v1167
      %v1293 = vsub.f32 %v1049, %v1167
      %v1294 = vsub.f32 %v1107, %v1167
      %v1295 = vsub.f32 %v935, %v1168
      %v1296 = vsub.f32 %v993, %v1168
      %v1297 = vsub.f32 %v1051, %v1168
      %v1298 = vsub.f32 %v1109, %v1168
      %v1299 = vsub.f32 %v938, %v1169
      %v1300 = vsub.f32 %v996, %v1169
      %v1301 = vsub.f32 %v1054, %v1169
      %v1302 = vsub.f32 %v1112, %v1169
      %v1303 = vsub.f32 %v940, %v1170
      %v1304 = vsub.f32 %v998, %v1170
      %v1305 = vsub.f32 %v1056, %v1170
      %v1306 = vsub.f32 %v1114, %v1170
      %v1307 = vadd.f32 %v1267, 1e-06
      %v1308 = vadd.f32 %v1268, 1e-06
      %v1309 = vadd.f32 %v1269, 1e-06
      %v1310 = vadd.f32 %v1270, 1e-06
      %v1311 = vadd.f32 %v1271, 1e-06
      %v1312 = vadd.f32 %v1272, 1e-06
      %v1313 = vadd.f32 %v1273, 1e-06
      %v1314 = vadd.f32 %v1274, 1e-06
      %v1315 = vrsqrt.pop %v1307
      %v1316 = vmul.f32 %v1315, %v1307
      %v1317 = vmul.f32 %v1316, %v1315
      %v1318 = vmul.f32 0.5, %v1317
      %v1319 = vsub.f32 1.5, %v1318
      %v1320 = vmul.f32 %v1315, %v1319
      %vm1321 = vweird.f32 %v1307
      %vm1322 = vweird.f32 %v1315
      %vm1323 = vmor %vm1321, %vm1322
      %v1324 = vsel %vm1323, %v1315, %v1320
      %v1325 = vrsqrt.pop %v1308
      %v1326 = vmul.f32 %v1325, %v1308
      %v1327 = vmul.f32 %v1326, %v1325
      %v1328 = vmul.f32 0.5, %v1327
      %v1329 = vsub.f32 1.5, %v1328
      %v1330 = vmul.f32 %v1325, %v1329
      %vm1331 = vweird.f32 %v1308
      %vm1332 = vweird.f32 %v1325
      %vm1333 = vmor %vm1331, %vm1332
      %v1334 = vsel %vm1333, %v1325, %v1330
      %v1335 = vrsqrt.pop %v1309
      %v1336 = vmul.f32 %v1335, %v1309
      %v1337 = vmul.f32 %v1336, %v1335
      %v1338 = vmul.f32 0.5, %v1337
      %v1339 = vsub.f32 1.5, %v1338
      %v1340 = vmul.f32 %v1335, %v1339
      %vm1341 = vweird.f32 %v1309
      %vm1342 = vweird.f32 %v1335
      %vm1343 = vmor %vm1341, %vm1342
      %v1344 = vsel %vm1343, %v1335, %v1340
      %v1345 = vrsqrt.pop %v1310
      %v1346 = vmul.f32 %v1345, %v1310
      %v1347 = vmul.f32 %v1346, %v1345
      %v1348 = vmul.f32 0.5, %v1347
      %v1349 = vsub.f32 1.5, %v1348
      %v1350 = vmul.f32 %v1345, %v1349
      %vm1351 = vweird.f32 %v1310
      %vm1352 = vweird.f32 %v1345
      %vm1353 = vmor %vm1351, %vm1352
      %v1354 = vsel %vm1353, %v1345, %v1350
      %v1355 = vrsqrt.pop %v1311
      %v1356 = vmul.f32 %v1355, %v1311
      %v1357 = vmul.f32 %v1356, %v1355
      %v1358 = vmul.f32 0.5, %v1357
      %v1359 = vsub.f32 1.5, %v1358
      %v1360 = vmul.f32 %v1355, %v1359
      %vm1361 = vweird.f32 %v1311
      %vm1362 = vweird.f32 %v1355
      %vm1363 = vmor %vm1361, %vm1362
      %v1364 = vsel %vm1363, %v1355, %v1360
      %v1365 = vrsqrt.pop %v1312
      %v1366 = vmul.f32 %v1365, %v1312
      %v1367 = vmul.f32 %v1366, %v1365
      %v1368 = vmul.f32 0.5, %v1367
      %v1369 = vsub.f32 1.5, %v1368
      %v1370 = vmul.f32 %v1365, %v1369
      %vm1371 = vweird.f32 %v1312
      %vm1372 = vweird.f32 %v1365
      %vm1373 = vmor %vm1371, %vm1372
      %v1374 = vsel %vm1373, %v1365, %v1370
      %v1375 = vrsqrt.pop %v1313
      %v1376 = vmul.f32 %v1375, %v1313
      %v1377 = vmul.f32 %v1376, %v1375
      %v1378 = vmul.f32 0.5, %v1377
      %v1379 = vsub.f32 1.5, %v1378
      %v1380 = vmul.f32 %v1375, %v1379
      %vm1381 = vweird.f32 %v1313
      %vm1382 = vweird.f32 %v1375
      %vm1383 = vmor %vm1381, %vm1382
      %v1384 = vsel %vm1383, %v1375, %v1380
      %v1385 = vrsqrt.pop %v1314
      %v1386 = vmul.f32 %v1385, %v1314
      %v1387 = vmul.f32 %v1386, %v1385
      %v1388 = vmul.f32 0.5, %v1387
      %v1389 = vsub.f32 1.5, %v1388
      %v1390 = vmul.f32 %v1385, %v1389
      %vm1391 = vweird.f32 %v1314
      %vm1392 = vweird.f32 %v1385
      %vm1393 = vmor %vm1391, %vm1392
      %v1394 = vsel %vm1393, %v1385, %v1390
      %v1395 = vmul.f32 %v1275, %v1324
      %v1396 = vmul.f32 %v1276, %v1324
      %v1397 = vmul.f32 %v1277, %v1324
      %v1398 = vmul.f32 %v1278, %v1324
      %v1399 = vmul.f32 %v1279, %v1334
      %v1400 = vmul.f32 %v1280, %v1334
      %v1401 = vmul.f32 %v1281, %v1334
      %v1402 = vmul.f32 %v1282, %v1334
      %v1403 = vmul.f32 %v1283, %v1344
      %v1404 = vmul.f32 %v1284, %v1344
      %v1405 = vmul.f32 %v1285, %v1344
      %v1406 = vmul.f32 %v1286, %v1344
      %v1407 = vmul.f32 %v1287, %v1354
      %v1408 = vmul.f32 %v1288, %v1354
      %v1409 = vmul.f32 %v1289, %v1354
      %v1410 = vmul.f32 %v1290, %v1354
      %v1411 = vmul.f32 %v1291, %v1364
      %v1412 = vmul.f32 %v1292, %v1364
      %v1413 = vmul.f32 %v1293, %v1364
      %v1414 = vmul.f32 %v1294, %v1364
      %v1415 = vmul.f32 %v1295, %v1374
      %v1416 = vmul.f32 %v1296, %v1374
      %v1417 = vmul.f32 %v1297, %v1374
      %v1418 = vmul.f32 %v1298, %v1374
      %v1419 = vmul.f32 %v1299, %v1384
      %v1420 = vmul.f32 %v1300, %v1384
      %v1421 = vmul.f32 %v1301, %v1384
      %v1422 = vmul.f32 %v1302, %v1384
      %v1423 = vmul.f32 %v1303, %v1394
      %v1424 = vmul.f32 %v1304, %v1394
      %v1425 = vmul.f32 %v1305, %v1394
      %v1426 = vmul.f32 %v1306, %v1394
      %v1427 = vld [vmem:[%s5] sm:$0xf]
      %v1429 = vperm.slane %v1427, 0
      %v1430 = vperm.slane %v1427, 1
      %v1431 = vperm.slane %v1427, 2
      %v1432 = vperm.slane %v1427, 3
      %v1437 = vmul.f32 %v1395, %v1429
      %v1438 = vmul.f32 %v1396, %v1430
      %v1439 = vmul.f32 %v1397, %v1431
      %v1440 = vmul.f32 %v1398, %v1432
      %v1441 = vmul.f32 %v1399, %v1429
      %v1442 = vmul.f32 %v1400, %v1430
      %v1443 = vmul.f32 %v1401, %v1431
      %v1444 = vmul.f32 %v1402, %v1432
      %v1445 = vmul.f32 %v1403, %v1429
      %v1446 = vmul.f32 %v1404, %v1430
      %v1447 = vmul.f32 %v1405, %v1431
      %v1448 = vmul.f32 %v1406, %v1432
      %v1449 = vmul.f32 %v1407, %v1429
      %v1450 = vmul.f32 %v1408, %v1430
      %v1451 = vmul.f32 %v1409, %v1431
      %v1452 = vmul.f32 %v1410, %v1432
      %v1453 = vmul.f32 %v1411, %v1429
      %v1454 = vmul.f32 %v1412, %v1430
      %v1455 = vmul.f32 %v1413, %v1431
      %v1456 = vmul.f32 %v1414, %v1432
      %v1457 = vmul.f32 %v1415, %v1429
      %v1458 = vmul.f32 %v1416, %v1430
      %v1459 = vmul.f32 %v1417, %v1431
      %v1460 = vmul.f32 %v1418, %v1432
      %v1461 = vmul.f32 %v1419, %v1429
      %v1462 = vmul.f32 %v1420, %v1430
      %v1463 = vmul.f32 %v1421, %v1431
      %v1464 = vmul.f32 %v1422, %v1432
      %v1465 = vmul.f32 %v1423, %v1429
      %v1466 = vmul.f32 %v1424, %v1430
      %v1467 = vmul.f32 %v1425, %v1431
      %v1468 = vmul.f32 %v1426, %v1432
      %v1469 = vld [vmem:[%s6] sm:$0xf]
      %v1471 = vperm.slane %v1469, 0
      %v1472 = vperm.slane %v1469, 1
      %v1473 = vperm.slane %v1469, 2
      %v1474 = vperm.slane %v1469, 3
      %v1479 = vadd.f32 %v1437, %v1471
      %v1480 = vadd.f32 %v1438, %v1472
      %v1481 = vadd.f32 %v1439, %v1473
      %v1482 = vadd.f32 %v1440, %v1474
      %v1483 = vadd.f32 %v1441, %v1471
      %v1484 = vadd.f32 %v1442, %v1472
      %v1485 = vadd.f32 %v1443, %v1473
      %v1486 = vadd.f32 %v1444, %v1474
      %v1487 = vadd.f32 %v1445, %v1471
      %v1488 = vadd.f32 %v1446, %v1472
      %v1489 = vadd.f32 %v1447, %v1473
      %v1490 = vadd.f32 %v1448, %v1474
      %v1491 = vadd.f32 %v1449, %v1471
      %v1492 = vadd.f32 %v1450, %v1472
      %v1493 = vadd.f32 %v1451, %v1473
      %v1494 = vadd.f32 %v1452, %v1474
      %v1495 = vadd.f32 %v1453, %v1471
      %v1496 = vadd.f32 %v1454, %v1472
      %v1497 = vadd.f32 %v1455, %v1473
      %v1498 = vadd.f32 %v1456, %v1474
      %v1499 = vadd.f32 %v1457, %v1471
      %v1500 = vadd.f32 %v1458, %v1472
      %v1501 = vadd.f32 %v1459, %v1473
      %v1502 = vadd.f32 %v1460, %v1474
      %v1503 = vadd.f32 %v1461, %v1471
      %v1504 = vadd.f32 %v1462, %v1472
      %v1505 = vadd.f32 %v1463, %v1473
      %v1506 = vadd.f32 %v1464, %v1474
      %v1507 = vadd.f32 %v1465, %v1471
      %v1508 = vadd.f32 %v1466, %v1472
      %v1509 = vadd.f32 %v1467, %v1473
      %v1510 = vadd.f32 %v1468, %v1474
      %v1511 = vadd.f32 %v1479, %v1480
      %v1512 = vadd.f32 %v1511, %v1481
      %v1513 = vadd.f32 %v1512, %v1482
      %v1514 = vadd.f32 %v1513, %v1483
      %v1515 = vadd.f32 %v1514, %v1484
      %v1516 = vadd.f32 %v1515, %v1485
      %v1517 = vadd.f32 %v1516, %v1486
      %v1518 = vadd.f32 %v1517, %v1487
      %v1519 = vadd.f32 %v1518, %v1488
      %v1520 = vadd.f32 %v1519, %v1489
      %v1521 = vadd.f32 %v1520, %v1490
      %v1522 = vadd.f32 %v1521, %v1491
      %v1523 = vadd.f32 %v1522, %v1492
      %v1524 = vadd.f32 %v1523, %v1493
      %v1525 = vadd.f32 %v1524, %v1494
      %v1526 = vadd.f32 %v1525, %v1495
      %v1527 = vadd.f32 %v1526, %v1496
      %v1528 = vadd.f32 %v1527, %v1497
      %v1529 = vadd.f32 %v1528, %v1498
      %v1530 = vadd.f32 %v1529, %v1499
      %v1531 = vadd.f32 %v1530, %v1500
      %v1532 = vadd.f32 %v1531, %v1501
      %v1533 = vadd.f32 %v1532, %v1502
      %v1534 = vadd.f32 %v1533, %v1503
      %v1535 = vadd.f32 %v1534, %v1504
      %v1536 = vadd.f32 %v1535, %v1505
      %v1537 = vadd.f32 %v1536, %v1506
      %v1538 = vadd.f32 %v1537, %v1507
      %v1539 = vadd.f32 %v1538, %v1508
      %v1540 = vadd.f32 %v1539, %v1509
      %v1541 = vadd.f32 %v1540, %v1510
      %1542 = vadd.xlane.f32.xlu0 %v1541
      %v1543 = vpop.xlane.xlu0 %1542
      %v1544 = vrot.slane %v1543, 4
      %v1545 = vadd.f32 %v1543, %v1544
      %v1546 = vrot.slane %v1545, 2
      %v1547 = vadd.f32 %v1545, %v1546
      %v1548 = vrot.slane %v1547, 1
      %v1549 = vadd.f32 %v1547, %v1548
      %s1550 = vtos %v1549
      %v1551 = vrcp.pop 32768.0
      %v1552 = vmul.f32 32768.0, %v1551
      %v1553 = vsub.f32 1.0, %v1552
      %v1554 = vmul.f32 %v1551, %v1553
      %v1555 = vadd.f32 %v1551, %v1554
      %vm1556 = vweird.f32 %v1551
      %v1557 = vsel %vm1556, %v1551, %v1555
      %s1558 = vtos %v1557
      %s1559 = smul.f32 %s1550, %s1558
      %v1560 = vmul.f32 %v1479, %v1479
      %v1561 = vmul.f32 %v1480, %v1480
      %v1562 = vmul.f32 %v1481, %v1481
      %v1563 = vmul.f32 %v1482, %v1482
      %v1564 = vmul.f32 %v1483, %v1483
      %v1565 = vmul.f32 %v1484, %v1484
      %v1566 = vmul.f32 %v1485, %v1485
      %v1567 = vmul.f32 %v1486, %v1486
      %v1568 = vmul.f32 %v1487, %v1487
      %v1569 = vmul.f32 %v1488, %v1488
      %v1570 = vmul.f32 %v1489, %v1489
      %v1571 = vmul.f32 %v1490, %v1490
      %v1572 = vmul.f32 %v1491, %v1491
      %v1573 = vmul.f32 %v1492, %v1492
      %v1574 = vmul.f32 %v1493, %v1493
      %v1575 = vmul.f32 %v1494, %v1494
      %v1576 = vmul.f32 %v1495, %v1495
      %v1577 = vmul.f32 %v1496, %v1496
      %v1578 = vmul.f32 %v1497, %v1497
      %v1579 = vmul.f32 %v1498, %v1498
      %v1580 = vmul.f32 %v1499, %v1499
      %v1581 = vmul.f32 %v1500, %v1500
      %v1582 = vmul.f32 %v1501, %v1501
      %v1583 = vmul.f32 %v1502, %v1502
      %v1584 = vmul.f32 %v1503, %v1503
      %v1585 = vmul.f32 %v1504, %v1504
      %v1586 = vmul.f32 %v1505, %v1505
      %v1587 = vmul.f32 %v1506, %v1506
      %v1588 = vmul.f32 %v1507, %v1507
      %v1589 = vmul.f32 %v1508, %v1508
      %v1590 = vmul.f32 %v1509, %v1509
      %v1591 = vmul.f32 %v1510, %v1510
      %v1592 = vadd.f32 %v1560, %v1561
      %v1593 = vadd.f32 %v1592, %v1562
      %v1594 = vadd.f32 %v1593, %v1563
      %v1595 = vadd.f32 %v1594, %v1564
      %v1596 = vadd.f32 %v1595, %v1565
      %v1597 = vadd.f32 %v1596, %v1566
      %v1598 = vadd.f32 %v1597, %v1567
      %v1599 = vadd.f32 %v1598, %v1568
      %v1600 = vadd.f32 %v1599, %v1569
      %v1601 = vadd.f32 %v1600, %v1570
      %v1602 = vadd.f32 %v1601, %v1571
      %v1603 = vadd.f32 %v1602, %v1572
      %v1604 = vadd.f32 %v1603, %v1573
      %v1605 = vadd.f32 %v1604, %v1574
      %v1606 = vadd.f32 %v1605, %v1575
      %v1607 = vadd.f32 %v1606, %v1576
      %v1608 = vadd.f32 %v1607, %v1577
      %v1609 = vadd.f32 %v1608, %v1578
      %v1610 = vadd.f32 %v1609, %v1579
      %v1611 = vadd.f32 %v1610, %v1580
      %v1612 = vadd.f32 %v1611, %v1581
      %v1613 = vadd.f32 %v1612, %v1582
      %v1614 = vadd.f32 %v1613, %v1583
      %v1615 = vadd.f32 %v1614, %v1584
      %v1616 = vadd.f32 %v1615, %v1585
      %v1617 = vadd.f32 %v1616, %v1586
      %v1618 = vadd.f32 %v1617, %v1587
      %v1619 = vadd.f32 %v1618, %v1588
      %v1620 = vadd.f32 %v1619, %v1589
      %v1621 = vadd.f32 %v1620, %v1590
      %v1622 = vadd.f32 %v1621, %v1591
      %1623 = vadd.xlane.f32.xlu0 %v1622
      %v1624 = vpop.xlane.xlu0 %1623
      %v1625 = vrot.slane %v1624, 4
      %v1626 = vadd.f32 %v1624, %v1625
      %v1627 = vrot.slane %v1626, 2
      %v1628 = vadd.f32 %v1626, %v1627
      %v1629 = vrot.slane %v1628, 1
      %v1630 = vadd.f32 %v1628, %v1629
      %s1631 = vtos %v1630
      %v1632 = vrcp.pop 32768.0
      %v1633 = vmul.f32 32768.0, %v1632
      %v1634 = vsub.f32 1.0, %v1633
      %v1635 = vmul.f32 %v1632, %v1634
      %v1636 = vadd.f32 %v1632, %v1635
      %vm1637 = vweird.f32 %v1632
      %v1638 = vsel %vm1637, %v1632, %v1636
      %s1639 = vtos %v1638
      %s1640 = smul.f32 %s1631, %s1639
      %s1641 = smul.f32 %s1559, %s1559
      %s1642 = ssub.f32 %s1640, %s1641
      %s1643 = smax.f32 %s1642, 0.0
      %v1644 = vstv %s1559
      %v1645 = vsub.f32 %v1479, %v1644
      %v1646 = vsub.f32 %v1480, %v1644
      %v1647 = vsub.f32 %v1481, %v1644
      %v1648 = vsub.f32 %v1482, %v1644
      %v1649 = vsub.f32 %v1483, %v1644
      %v1650 = vsub.f32 %v1484, %v1644
      %v1651 = vsub.f32 %v1485, %v1644
      %v1652 = vsub.f32 %v1486, %v1644
      %v1653 = vsub.f32 %v1487, %v1644
      %v1654 = vsub.f32 %v1488, %v1644
      %v1655 = vsub.f32 %v1489, %v1644
      %v1656 = vsub.f32 %v1490, %v1644
      %v1657 = vsub.f32 %v1491, %v1644
      %v1658 = vsub.f32 %v1492, %v1644
      %v1659 = vsub.f32 %v1493, %v1644
      %v1660 = vsub.f32 %v1494, %v1644
      %v1661 = vsub.f32 %v1495, %v1644
      %v1662 = vsub.f32 %v1496, %v1644
      %v1663 = vsub.f32 %v1497, %v1644
      %v1664 = vsub.f32 %v1498, %v1644
      %v1665 = vsub.f32 %v1499, %v1644
      %v1666 = vsub.f32 %v1500, %v1644
      %v1667 = vsub.f32 %v1501, %v1644
      %v1668 = vsub.f32 %v1502, %v1644
      %v1669 = vsub.f32 %v1503, %v1644
      %v1670 = vsub.f32 %v1504, %v1644
      %v1671 = vsub.f32 %v1505, %v1644
      %v1672 = vsub.f32 %v1506, %v1644
      %v1673 = vsub.f32 %v1507, %v1644
      %v1674 = vsub.f32 %v1508, %v1644
      %v1675 = vsub.f32 %v1509, %v1644
      %v1676 = vsub.f32 %v1510, %v1644
      %s1677 = sadd.f32 %s1643, 1e-08
      %v1678 = vstv %s1677
      %v1679 = vrsqrt.pop %v1678
      %v1680 = vmul.f32 %v1679, %v1678
      %v1681 = vmul.f32 %v1680, %v1679
      %v1682 = vmul.f32 0.5, %v1681
      %v1683 = vsub.f32 1.5, %v1682
      %v1684 = vmul.f32 %v1679, %v1683
      %vm1685 = vweird.f32 %v1678
      %vm1686 = vweird.f32 %v1679
      %vm1687 = vmor %vm1685, %vm1686
      %v1688 = vsel %vm1687, %v1679, %v1684
      %s1689 = vtos %v1688
      %v1690 = vstv %s1689
      %v1691 = vmul.f32 %v1645, %v1690
      %v1692 = vmul.f32 %v1646, %v1690
      %v1693 = vmul.f32 %v1647, %v1690
      %v1694 = vmul.f32 %v1648, %v1690
      %v1695 = vmul.f32 %v1649, %v1690
      %v1696 = vmul.f32 %v1650, %v1690
      %v1697 = vmul.f32 %v1651, %v1690
      %v1698 = vmul.f32 %v1652, %v1690
      %v1699 = vmul.f32 %v1653, %v1690
      %v1700 = vmul.f32 %v1654, %v1690
      %v1701 = vmul.f32 %v1655, %v1690
      %v1702 = vmul.f32 %v1656, %v1690
      %v1703 = vmul.f32 %v1657, %v1690
      %v1704 = vmul.f32 %v1658, %v1690
      %v1705 = vmul.f32 %v1659, %v1690
      %v1706 = vmul.f32 %v1660, %v1690
      %v1707 = vmul.f32 %v1661, %v1690
      %v1708 = vmul.f32 %v1662, %v1690
      %v1709 = vmul.f32 %v1663, %v1690
      %v1710 = vmul.f32 %v1664, %v1690
      %v1711 = vmul.f32 %v1665, %v1690
      %v1712 = vmul.f32 %v1666, %v1690
      %v1713 = vmul.f32 %v1667, %v1690
      %v1714 = vmul.f32 %v1668, %v1690
      %v1715 = vmul.f32 %v1669, %v1690
      %v1716 = vmul.f32 %v1670, %v1690
      %v1717 = vmul.f32 %v1671, %v1690
      %v1718 = vmul.f32 %v1672, %v1690
      %v1719 = vmul.f32 %v1673, %v1690
      %v1720 = vmul.f32 %v1674, %v1690
      %v1721 = vmul.f32 %v1675, %v1690
      %v1722 = vmul.f32 %v1676, %v1690
      %v1723 = vld [vmem:[%s7] sm:$0xf]
      %v1725 = vperm.slane %v1723, 0
      %v1726 = vperm.slane %v1723, 1
      %v1727 = vperm.slane %v1723, 2
      %v1728 = vperm.slane %v1723, 3
      %v1733 = vmul.f32 %v1691, %v1725
      %v1734 = vmul.f32 %v1692, %v1726
      %v1735 = vmul.f32 %v1693, %v1727
      %v1736 = vmul.f32 %v1694, %v1728
      %v1737 = vmul.f32 %v1695, %v1725
      %v1738 = vmul.f32 %v1696, %v1726
      %v1739 = vmul.f32 %v1697, %v1727
      %v1740 = vmul.f32 %v1698, %v1728
      %v1741 = vmul.f32 %v1699, %v1725
      %v1742 = vmul.f32 %v1700, %v1726
      %v1743 = vmul.f32 %v1701, %v1727
      %v1744 = vmul.f32 %v1702, %v1728
      %v1745 = vmul.f32 %v1703, %v1725
      %v1746 = vmul.f32 %v1704, %v1726
      %v1747 = vmul.f32 %v1705, %v1727
      %v1748 = vmul.f32 %v1706, %v1728
      %v1749 = vmul.f32 %v1707, %v1725
      %v1750 = vmul.f32 %v1708, %v1726
      %v1751 = vmul.f32 %v1709, %v1727
      %v1752 = vmul.f32 %v1710, %v1728
      %v1753 = vmul.f32 %v1711, %v1725
      %v1754 = vmul.f32 %v1712, %v1726
      %v1755 = vmul.f32 %v1713, %v1727
      %v1756 = vmul.f32 %v1714, %v1728
      %v1757 = vmul.f32 %v1715, %v1725
      %v1758 = vmul.f32 %v1716, %v1726
      %v1759 = vmul.f32 %v1717, %v1727
      %v1760 = vmul.f32 %v1718, %v1728
      %v1761 = vmul.f32 %v1719, %v1725
      %v1762 = vmul.f32 %v1720, %v1726
      %v1763 = vmul.f32 %v1721, %v1727
      %v1764 = vmul.f32 %v1722, %v1728
      %v1765 = vld [vmem:[%s8] sm:$0xf]
      %v1767 = vperm.slane %v1765, 0
      %v1768 = vperm.slane %v1765, 1
      %v1769 = vperm.slane %v1765, 2
      %v1770 = vperm.slane %v1765, 3
      %v1775 = vadd.f32 %v1733, %v1767
      %v1776 = vadd.f32 %v1734, %v1768
      %v1777 = vadd.f32 %v1735, %v1769
      %v1778 = vadd.f32 %v1736, %v1770
      %v1779 = vadd.f32 %v1737, %v1767
      %v1780 = vadd.f32 %v1738, %v1768
      %v1781 = vadd.f32 %v1739, %v1769
      %v1782 = vadd.f32 %v1740, %v1770
      %v1783 = vadd.f32 %v1741, %v1767
      %v1784 = vadd.f32 %v1742, %v1768
      %v1785 = vadd.f32 %v1743, %v1769
      %v1786 = vadd.f32 %v1744, %v1770
      %v1787 = vadd.f32 %v1745, %v1767
      %v1788 = vadd.f32 %v1746, %v1768
      %v1789 = vadd.f32 %v1747, %v1769
      %v1790 = vadd.f32 %v1748, %v1770
      %v1791 = vadd.f32 %v1749, %v1767
      %v1792 = vadd.f32 %v1750, %v1768
      %v1793 = vadd.f32 %v1751, %v1769
      %v1794 = vadd.f32 %v1752, %v1770
      %v1795 = vadd.f32 %v1753, %v1767
      %v1796 = vadd.f32 %v1754, %v1768
      %v1797 = vadd.f32 %v1755, %v1769
      %v1798 = vadd.f32 %v1756, %v1770
      %v1799 = vadd.f32 %v1757, %v1767
      %v1800 = vadd.f32 %v1758, %v1768
      %v1801 = vadd.f32 %v1759, %v1769
      %v1802 = vadd.f32 %v1760, %v1770
      %v1803 = vadd.f32 %v1761, %v1767
      %v1804 = vadd.f32 %v1762, %v1768
      %v1805 = vadd.f32 %v1763, %v1769
      %v1806 = vadd.f32 %v1764, %v1770
      %v1807 = vadd.f32 %v1775, %v923
      %v1808 = vadd.f32 %v1776, %v981
      %v1809 = vadd.f32 %v1777, %v1039
      %v1810 = vadd.f32 %v1778, %v1097
      %v1811 = vadd.f32 %v1779, %v925
      %v1812 = vadd.f32 %v1780, %v983
      %v1813 = vadd.f32 %v1781, %v1041
      %v1814 = vadd.f32 %v1782, %v1099
      %v1815 = vadd.f32 %v1783, %v928
      %v1816 = vadd.f32 %v1784, %v986
      %v1817 = vadd.f32 %v1785, %v1044
      %v1818 = vadd.f32 %v1786, %v1102
      %v1819 = vadd.f32 %v1787, %v930
      %v1820 = vadd.f32 %v1788, %v988
      %v1821 = vadd.f32 %v1789, %v1046
      %v1822 = vadd.f32 %v1790, %v1104
      %v1823 = vadd.f32 %v1791, %v933
      %v1824 = vadd.f32 %v1792, %v991
      %v1825 = vadd.f32 %v1793, %v1049
      %v1826 = vadd.f32 %v1794, %v1107
      %v1827 = vadd.f32 %v1795, %v935
      %v1828 = vadd.f32 %v1796, %v993
      %v1829 = vadd.f32 %v1797, %v1051
      %v1830 = vadd.f32 %v1798, %v1109
      %v1831 = vadd.f32 %v1799, %v938
      %v1832 = vadd.f32 %v1800, %v996
      %v1833 = vadd.f32 %v1801, %v1054
      %v1834 = vadd.f32 %v1802, %v1112
      %v1835 = vadd.f32 %v1803, %v940
      %v1836 = vadd.f32 %v1804, %v998
      %v1837 = vadd.f32 %v1805, %v1056
      %v1838 = vadd.f32 %v1806, %v1114
      %v1839 = vpack.c.bf16 %v1808, %v1807
      %v1840 = vpack.c.bf16 %v1810, %v1809
      %v1841 = vpack.c.bf16 %v1812, %v1811
      %v1842 = vpack.c.bf16 %v1814, %v1813
      %v1843 = vpack.c.bf16 %v1816, %v1815
      %v1844 = vpack.c.bf16 %v1818, %v1817
      %v1845 = vpack.c.bf16 %v1820, %v1819
      %v1846 = vpack.c.bf16 %v1822, %v1821
      %v1847 = vpack.c.bf16 %v1824, %v1823
      %v1848 = vpack.c.bf16 %v1826, %v1825
      %v1849 = vpack.c.bf16 %v1828, %v1827
      %v1850 = vpack.c.bf16 %v1830, %v1829
      %v1851 = vpack.c.bf16 %v1832, %v1831
      %v1852 = vpack.c.bf16 %v1834, %v1833
      %v1853 = vpack.c.bf16 %v1836, %v1835
      %v1854 = vpack.c.bf16 %v1838, %v1837
      %1855 = vst [vmem:[%s332] sm:$0xff] %v1839
      %1856 = vst [vmem:[%s332 + $0x8] sm:$0xff] %v1840
      %1857 = vst [vmem:[%s332 + $0x10] sm:$0xff] %v1841
      %1858 = vst [vmem:[%s332 + $0x18] sm:$0xff] %v1842
      %1859 = vst [vmem:[%s332 + $0x20] sm:$0xff] %v1843
      %1860 = vst [vmem:[%s332 + $0x28] sm:$0xff] %v1844
      %1861 = vst [vmem:[%s332 + $0x30] sm:$0xff] %v1845
      %1862 = vst [vmem:[%s332 + $0x38] sm:$0xff] %v1846
      %1863 = vst [vmem:[%s332 + $0x40] sm:$0xff] %v1847
      %1864 = vst [vmem:[%s332 + $0x48] sm:$0xff] %v1848
      %1865 = vst [vmem:[%s332 + $0x50] sm:$0xff] %v1849
      %1866 = vst [vmem:[%s332 + $0x58] sm:$0xff] %v1850
      %1867 = vst [vmem:[%s332 + $0x60] sm:$0xff] %v1851
      %1868 = vst [vmem:[%s332 + $0x68] sm:$0xff] %v1852
      %1869 = vst [vmem:[%s332 + $0x70] sm:$0xff] %v1853
      %1870 = vst [vmem:[%s332 + $0x78] sm:$0xff] %v1854
      %p1871 = scmp.lt.s32.totalorder %s20, 1
      %s1872 = scalar_select %p1871, %s20, 1
      %s1873 = smul.addr %s1872, 32
      %s1874 = smul.addr %s1873, 4
      %s1875 = scalar_lea.vmem %s9, %s1874
      // Predicated region
      $region57: #{_lambda_.2} parent=55 // pred_check
        %p1876 = pneg %p232
      $region58: #{_lambda_.2} parent=55 // pred_check_branch
        %1878 = sbr.rel (%p1876) target = $region60
      $region59: #{_lambda_.2} parent=55 // pred_region
        _
      $region60: #{_lambda_.2} parent=55 // pred_fallthru
        _
    $region56: #{_lambda_.2} parent=5 // pred_fallthru
      _
    %p1879 = scmp.le.s32.totalorder 2, %s15
    // Predicated region
    $region61: #{_lambda_.2} parent=5 // pred_check
      %p1880 = pneg %p1879
    $region62: #{_lambda_.2} parent=5 // pred_check_branch
      %1882 = sbr.rel (%p1880) target = $region64
    $region63: #{_lambda_.2} parent=5 // pred_region
      %s1883 = ssub.s32 %s15, 2
      // Predicated region
      $region65: #{_lambda_.2} parent=63 // pred_check
        %p1884 = pneg %p238
      $region66: #{_lambda_.2} parent=63 // pred_check_branch
        %1886 = sbr.rel (%p1884) target = $region68
      $region67: #{_lambda_.2} parent=63 // pred_region
        %p1887 = scmp.lt.s32.totalorder %s21, 1
        %s1888 = scalar_select %p1887, %s21, 1
        %s1889 = smul.addr %s1888, 32
        %s1890 = smul.addr %s1889, 4
        %s1891 = scalar_lea.vmem %s9, %s1890
      $region68: #{_lambda_.2} parent=63 // pred_fallthru
        _
    $region64: #{_lambda_.2} parent=5 // pred_fallthru
      _
  $region6: #{_lambda_.2} parent=0 // loop_footer
    %s19 = sadd.s32 1, %s15
  $region7: #{_lambda_.2} parent=0 // loop_footer_branch
    %14 = sbr.rel target = $region3
  $region8: #{_lambda_.2} parent=0 // loop_exit
    _

// kernel: _lambda_.3
$region0: #{_lambda_.3}
  #allocation0 [shape = 'u32[]', space=smem, size = 0x4, offset = 0x4, fixed_abs, tag = 'smem constant byte address 0x4 - core index']
  #allocation1 [shape = 'u32[72,128]{1,0:T(1,128)}', space=vmem, size = 0x9000, scoped, tag = 'internal scratch']
  #allocation2 [shape = 'f32[1,1]{1,0:T(1,128)S(6)}', space=smem, size = 0x200, scoped, tag = 'scoped memory for _lambda_.3']
  %s0 = inlined_call_operand.vmem [shape: bf16[2,64,512], index: 0, kind: input, shape index: {}]
  %s1 = inlined_call_operand.<no memory space> [shape: f32[1,1], index: 1, kind: input, shape index: {}]
  %s2 = inlined_call_operand.hbm [shape: bf16[512,1024], index: 2, kind: input, shape index: {}]
  %s3 = inlined_call_operand.vmem [shape: f32[1,1024], index: 3, kind: input, shape index: {}]
  %s4 = inlined_call_operand.hbm [shape: bf16[1024,512], index: 4, kind: input, shape index: {}]
  %s5 = inlined_call_operand.vmem [shape: f32[2,961,64], index: 5, kind: output, shape index: {}]
  %s6 = sld [smem:[#allocation0]]
  $region61: #{_lambda_.3} parent=0
    _
  %s8 = ssub.s32 1, %s6
  %s9 = scalar_select 0, %s8, %s6
  %10 = sst [smem:[#allocation2]] %s1
  $region1: #{_lambda_.3} parent=0
    #allocation3 [shape = 'u8[1048576]{0}', space=vmem, size = 0x100000, scoped, tag = 'input window, operand 2, single buffered']
    #allocation4 [shape = 's32[2]{0}', space=sflag, size = 0x8, scoped, tag = 'scoped memory for _lambda_.3']
    #allocation5 [shape = 'u8[1048576]{0}', space=vmem, size = 0x100000, scoped, tag = 'input window, operand 4, single buffered']
    #allocation6 [shape = 's32[1]{0}', space=sflag, size = 0x4, scoped, tag = 'scoped memory for _lambda_.3']
    %11 = vsyncpa [#allocation4], 0
    %12 = vsyncpa [#allocation6], 0
    loop: start=0, step=1, limit=4
    $region2: #{_lambda_.3} parent=1 // loop_pre_header
      _
    $region3: #{_lambda_.3} parent=1 // loop_header
      %s14 = sphi 0, %s18
      %p15 = scmp.ge.s32.totalorder %s14, 4
      %s21 = sphi 0, %s33
      %s22 = sphi 0, %s29
      %s23 = sphi 0, %s21
      %s24 = sphi 0, %s22
      %s25 = sphi 0, %s23
      %s26 = sphi 0, %s24
      %s38 = sphi 0, %s40
      %s41 = sphi 0, %s38
      %s42 = sphi 0, %s41
      %s58 = sphi 0, %s42
      %s62 = sphi 0, %s62
      %s64 = sphi 0, %s62
      %s65 = sphi 0, %s64
      %s79 = sphi 0, %s65
      %s83 = sphi 0, %s83
      %s85 = sphi 0, %s83
      %s86 = sphi 0, %s85
      %s100 = sphi 0, %s86
      %s104 = sphi 0, %s104
      %s106 = sphi 0, %s104
      %s107 = sphi 0, %s106
      %s121 = sphi 0, %s107
      %s125 = sphi 0, %s125
      %s127 = sphi 0, %s125
      %s128 = sphi 0, %s127
      %s142 = sphi 0, %s128
      %s150 = sphi 0, %s152
      %s153 = sphi 0, %s150
      %s154 = sphi 0, %s153
      %s170 = sphi 0, %s154
    $region4: #{_lambda_.3} parent=1 // loop_header_branch
      %17 = sbr.rel (%p15) target = $region8
    $region5: #{_lambda_.3} parent=1 // loop_body
      %s19 = ssub.s32 %s14, 1
      %s20 = ssub.s32 %s14, 2
      %s27 = sadd.s32 1, %s22
      %p28 = scmp.ge.s32.totalorder %s27, 1
      %s29 = scalar_select %p28, 0, %s27
      %s30 = sadd.s32 1, %s21
      %s31 = scalar_select %p28, %s30, %s21
      %p32 = scmp.ge.s32.totalorder %s31, 2
      %s33 = scalar_select %p32, 0, %s31
      %s34 = ssub.s32 %s21, %s33
      %s35 = ssub.s32 %s22, %s29
      %s36 = sor.u32 %s34, %s35
      %p37 = scmp.eq.s32.totalorder %s36, 0
      %s39 = sadd.s32 %s38, 1
      %s40 = scalar_select %p37, %s38, %s39
      %p43 = pneg %p37
      %p44 = scmp.eq.s32.totalorder %s14, 1
      %p45 = por %p43, %p44
      %p46 = scmp.ne.s32.totalorder %s38, %s41
      %p47 = scmp.eq.s32.totalorder %s14, 0
      %p48 = por %p46, %p47
      %p49 = scmp.ne.s32.totalorder %s38, %s41
      %p50 = scmp.eq.s32.totalorder %s19, 1
      %p51 = por %p49, %p50
      %p52 = scmp.ne.s32.totalorder %s41, %s42
      %p53 = scmp.eq.s32.totalorder %s19, 0
      %p54 = por %p52, %p53
      %p55 = scmp.ne.s32.totalorder %s41, %s42
      %p56 = scmp.eq.s32.totalorder %s20, 1
      %p57 = por %p55, %p56
      %p59 = scmp.ne.s32.totalorder %s42, %s58
      %p60 = scmp.eq.s32.totalorder %s20, 0
      %p61 = por %p59, %p60
      %s63 = sadd.s32 %s62, 1
      %p66 = scmp.eq.s32.totalorder %s14, 1
      %p67 = scmp.ne.s32.totalorder %s62, %s64
      %p68 = scmp.eq.s32.totalorder %s14, 0
      %p69 = por %p67, %p68
      %p70 = scmp.ne.s32.totalorder %s62, %s64
      %p71 = scmp.eq.s32.totalorder %s19, 1
      %p72 = por %p70, %p71
      %p73 = scmp.ne.s32.totalorder %s64, %s65
      %p74 = scmp.eq.s32.totalorder %s19, 0
      %p75 = por %p73, %p74
      %p76 = scmp.ne.s32.totalorder %s64, %s65
      %p77 = scmp.eq.s32.totalorder %s20, 1
      %p78 = por %p76, %p77
      %p80 = scmp.ne.s32.totalorder %s65, %s79
      %p81 = scmp.eq.s32.totalorder %s20, 0
      %p82 = por %p80, %p81
      %s84 = sadd.s32 %s83, 1
      %p87 = scmp.eq.s32.totalorder %s14, 1
      %p88 = scmp.ne.s32.totalorder %s83, %s85
      %p89 = scmp.eq.s32.totalorder %s14, 0
      %p90 = por %p88, %p89
      %p91 = scmp.ne.s32.totalorder %s83, %s85
      %p92 = scmp.eq.s32.totalorder %s19, 1
      %p93 = por %p91, %p92
      %p94 = scmp.ne.s32.totalorder %s85, %s86
      %p95 = scmp.eq.s32.totalorder %s19, 0
      %p96 = por %p94, %p95
      %p97 = scmp.ne.s32.totalorder %s85, %s86
      %p98 = scmp.eq.s32.totalorder %s20, 1
      %p99 = por %p97, %p98
      %p101 = scmp.ne.s32.totalorder %s86, %s100
      %p102 = scmp.eq.s32.totalorder %s20, 0
      %p103 = por %p101, %p102
      %s105 = sadd.s32 %s104, 1
      %p108 = scmp.eq.s32.totalorder %s14, 1
      %p109 = scmp.ne.s32.totalorder %s104, %s106
      %p110 = scmp.eq.s32.totalorder %s14, 0
      %p111 = por %p109, %p110
      %p112 = scmp.ne.s32.totalorder %s104, %s106
      %p113 = scmp.eq.s32.totalorder %s19, 1
      %p114 = por %p112, %p113
      %p115 = scmp.ne.s32.totalorder %s106, %s107
      %p116 = scmp.eq.s32.totalorder %s19, 0
      %p117 = por %p115, %p116
      %p118 = scmp.ne.s32.totalorder %s106, %s107
      %p119 = scmp.eq.s32.totalorder %s20, 1
      %p120 = por %p118, %p119
      %p122 = scmp.ne.s32.totalorder %s107, %s121
      %p123 = scmp.eq.s32.totalorder %s20, 0
      %p124 = por %p122, %p123
      %s126 = sadd.s32 %s125, 1
      %p129 = scmp.eq.s32.totalorder %s14, 1
      %p130 = scmp.ne.s32.totalorder %s125, %s127
      %p131 = scmp.eq.s32.totalorder %s14, 0
      %p132 = por %p130, %p131
      %p133 = scmp.ne.s32.totalorder %s125, %s127
      %p134 = scmp.eq.s32.totalorder %s19, 1
      %p135 = por %p133, %p134
      %p136 = scmp.ne.s32.totalorder %s127, %s128
      %p137 = scmp.eq.s32.totalorder %s19, 0
      %p138 = por %p136, %p137
      %p139 = scmp.ne.s32.totalorder %s127, %s128
      %p140 = scmp.eq.s32.totalorder %s20, 1
      %p141 = por %p139, %p140
      %p143 = scmp.ne.s32.totalorder %s128, %s142
      %p144 = scmp.eq.s32.totalorder %s20, 0
      %p145 = por %p143, %p144
      %s146 = ssub.s32 %s21, %s33
      %s147 = ssub.s32 %s22, %s29
      %s148 = sor.u32 %s146, %s147
      %p149 = scmp.eq.s32.totalorder %s148, 0
      %s151 = sadd.s32 %s150, 1
      %s152 = scalar_select %p149, %s150, %s151
      %p155 = pneg %p149
      %p156 = scmp.eq.s32.totalorder %s14, 1
      %p157 = por %p155, %p156
      %p158 = scmp.ne.s32.totalorder %s150, %s153
      %p159 = scmp.eq.s32.totalorder %s14, 0
      %p160 = por %p158, %p159
      %p161 = scmp.ne.s32.totalorder %s150, %s153
      %p162 = scmp.eq.s32.totalorder %s19, 1
      %p163 = por %p161, %p162
      %p164 = scmp.ne.s32.totalorder %s153, %s154
      %p165 = scmp.eq.s32.totalorder %s19, 0
      %p166 = por %p164, %p165
      %p167 = scmp.ne.s32.totalorder %s153, %s154
      %p168 = scmp.eq.s32.totalorder %s20, 1
      %p169 = por %p167, %p168
      %p171 = scmp.ne.s32.totalorder %s154, %s170
      %p172 = scmp.eq.s32.totalorder %s20, 0
      %p173 = por %p171, %p172
      %p174 = scmp.le.s32.totalorder 1, %s14
      %p175 = scmp.lt.s32.totalorder %s14, 3
      %p176 = pnand %p174, %p175
      %p177 = pneg %p176
      // Predicated region
      $region9: #{_lambda_.3} parent=5 // pred_check
        _
      $region10: #{_lambda_.3} parent=5 // pred_check_branch
        %179 = sbr.rel (%p176) target = $region12
      $region11: #{_lambda_.3} parent=5 // pred_region
        %s180 = ssub.s32 %s14, 1
        // Predicated region
        $region13: #{_lambda_.3} parent=11 // pred_check
          %p181 = pneg %p75
        $region14: #{_lambda_.3} parent=11 // pred_check_branch
          %183 = sbr.rel (%p181) target = $region16
        $region15: #{_lambda_.3} parent=11 // pred_region
          _
        $region16: #{_lambda_.3} parent=11 // pred_fallthru
          _
        // Predicated region
        $region17: #{_lambda_.3} parent=11 // pred_check
          %p184 = pneg %p96
        $region18: #{_lambda_.3} parent=11 // pred_check_branch
          %186 = sbr.rel (%p184) target = $region20
        $region19: #{_lambda_.3} parent=11 // pred_region
          %188 = vsyncadd [#allocation4], 0
          %s189 = sshll.u32 %s2, 4
          %s190 = int_to_ptr.hbm [resolvable:$true] %s189
          %s191 = sshll.u32 [#allocation3], 4
          %s192 = int_to_ptr.vmem [resolvable:$true] %s191
          %197 = dma.hbm_to_vmem [thread:$0]  %s190, 32768, %s192, [#allocation4], 512, 512, 32
        $region20: #{_lambda_.3} parent=11 // pred_fallthru
          _
        // Predicated region
        $region21: #{_lambda_.3} parent=11 // pred_check
          %p198 = pneg %p117
        $region22: #{_lambda_.3} parent=11 // pred_check_branch
          %200 = sbr.rel (%p198) target = $region24
        $region23: #{_lambda_.3} parent=11 // pred_region
          _
        $region24: #{_lambda_.3} parent=11 // pred_fallthru
          _
        // Predicated region
        $region25: #{_lambda_.3} parent=11 // pred_check
          %p201 = pneg %p138
        $region26: #{_lambda_.3} parent=11 // pred_check_branch
          %203 = sbr.rel (%p201) target = $region28
        $region27: #{_lambda_.3} parent=11 // pred_region
          %205 = vsyncadd [#allocation6], 0
          %s206 = sshll.u32 %s4, 4
          %s207 = int_to_ptr.hbm [resolvable:$true] %s206
          %s208 = sshll.u32 [#allocation5], 4
          %s209 = int_to_ptr.vmem [resolvable:$true] %s208
          %214 = dma.hbm_to_vmem [thread:$0]  %s207, 32768, %s209, [#allocation6], 256, 256, 16
        $region28: #{_lambda_.3} parent=11 // pred_fallthru
          _
      $region12: #{_lambda_.3} parent=5 // pred_fallthru
        _
      %p215 = scmp.lt.s32.totalorder %s14, 2
      // Predicated region
      $region29: #{_lambda_.3} parent=5 // pred_check
        %p216 = pneg %p215
      $region30: #{_lambda_.3} parent=5 // pred_check_branch
        %218 = sbr.rel (%p216) target = $region32
      $region31: #{_lambda_.3} parent=5 // pred_region
        // Predicated region
        $region33: #{_lambda_.3} parent=31 // pred_check
          %p219 = pneg %p48
        $region34: #{_lambda_.3} parent=31 // pred_check_branch
          %221 = sbr.rel (%p219) target = $region36
        $region35: #{_lambda_.3} parent=31 // pred_region
          %s222 = smul.u32 8, %s22
          %p223 = scmp.lt.s32.totalorder %s21, 1
          %s224 = scalar_select %p223, %s21, 1
          %p225 = scmp.lt.s32.totalorder %s222, 7
          %s226 = scalar_select %p225, %s222, 7
          %s227 = smul.addr %s226, 4
          %s228 = smul.addr %s224, 32
          %s229 = sadd.s32 %s227, %s228
          %s230 = smul.addr %s229, 4
          %s231 = scalar_lea.vmem %s0, %s230
          %s232 = smul.u32 8, %s22
        $region36: #{_lambda_.3} parent=31 // pred_fallthru
          _
      $region32: #{_lambda_.3} parent=5 // pred_fallthru
        _
      %p233 = scmp.le.s32.totalorder 1, %s14
      %p234 = scmp.lt.s32.totalorder %s14, 3
      %p235 = pnand %p233, %p234
      %p236 = pneg %p235
      // Predicated region
      $region37: #{_lambda_.3} parent=5 // pred_check
        _
      $region38: #{_lambda_.3} parent=5 // pred_check_branch
        %238 = sbr.rel (%p235) target = $region40
      $region39: #{_lambda_.3} parent=5 // pred_region
        %s239 = ssub.s32 %s14, 1
        // Predicated region
        $region41: #{_lambda_.3} parent=39 // pred_check
          %p240 = pneg %p96
        $region42: #{_lambda_.3} parent=39 // pred_check_branch
          %242 = sbr.rel (%p240) target = $region44
        $region43: #{_lambda_.3} parent=39 // pred_region
          %244 = dma.done [#allocation4], 32768
        $region44: #{_lambda_.3} parent=39 // pred_fallthru
          _
        // Predicated region
        $region45: #{_lambda_.3} parent=39 // pred_check
          %p245 = pneg %p138
        $region46: #{_lambda_.3} parent=39 // pred_check_branch
          %247 = sbr.rel (%p245) target = $region48
        $region47: #{_lambda_.3} parent=39 // pred_region
          %249 = dma.done [#allocation6], 32768
        $region48: #{_lambda_.3} parent=39 // pred_fallthru
          _
        %s250 = smul.u32 8, %s24
        %p251 = scmp.lt.s32.totalorder %s23, 1
        %s252 = scalar_select %p251, %s23, 1
        %p253 = scmp.lt.s32.totalorder %s250, 7
        %s254 = scalar_select %p253, %s250, 7
        %s255 = smul.addr %s254, 4
        %s256 = smul.addr %s252, 32
        %s257 = sadd.s32 %s255, %s256
        %s258 = smul.addr %s257, 4
        %s259 = scalar_lea.vmem %s0, %s258
        %p260 = pneg %p54
        %p261 = pneg %p51
        %p262 = pneg %p75
        %p263 = pneg %p72
        %p264 = pneg %p96
        %p265 = pneg %p93
        %p266 = pneg %p117
        %p267 = pneg %p114
        %p268 = pneg %p138
        %p269 = pneg %p135
        %p270 = pneg %p166
        %p271 = pneg %p163
        %p272 = scmp.lt.s32.totalorder %s23, 1
        %s273 = scalar_select %p272, %s23, 1
        %p274 = scmp.lt.s32.totalorder %s24, 0
        %s275 = scalar_select %p274, %s24, 0
        %s276 = smul.addr %s273, 121
        %s277 = sadd.s32 %s275, %s276
        %s278 = smul.addr %s277, 8
        %s279 = scalar_lea.vmem %s5, %s278
        %s280 = smul.u32 8, %s24
        %p281 = scmp.lt.s32.totalorder %s23, 1
        %s282 = scalar_select %p281, %s23, 1
        %p283 = scmp.lt.s32.totalorder %s280, 7
        %s284 = scalar_select %p283, %s280, 7
        %s285 = smul.addr %s284, 4
        %s286 = smul.addr %s282, 32
        %s287 = sadd.s32 %s285, %s286
        %s288 = smul.addr %s287, 4
        %s289 = scalar_lea.vmem %s0, %s288
        %s290 = smul.u32 8, %s24
        %p291 = scmp.lt.s32.totalorder %s23, 1
        %s292 = scalar_select %p291, %s23, 1
        %p293 = scmp.lt.s32.totalorder %s24, 0
        %s294 = scalar_select %p293, %s24, 0
        %s295 = smul.addr %s292, 121
        %s296 = sadd.s32 %s294, %s295
        %s297 = smul.addr %s296, 8
        %s298 = scalar_lea.vmem %s5, %s297
        %v300 = vld [vmem:[%s289] sm:$0xff]
        %v301 = vld [vmem:[%s289 + $0x8] sm:$0xff]
        %v302 = vld [vmem:[%s289 + $0x10] sm:$0xff]
        %v303 = vld [vmem:[%s289 + $0x18] sm:$0xff]
        %v304 = vld [vmem:[%s289 + $0x20] sm:$0xff]
        %v305 = vld [vmem:[%s289 + $0x28] sm:$0xff]
        %v306 = vld [vmem:[%s289 + $0x30] sm:$0xff]
        %v307 = vld [vmem:[%s289 + $0x38] sm:$0xff]
        %v308 = vld [vmem:[%s289 + $0x40] sm:$0xff]
        %v309 = vld [vmem:[%s289 + $0x48] sm:$0xff]
        %v310 = vld [vmem:[%s289 + $0x50] sm:$0xff]
        %v311 = vld [vmem:[%s289 + $0x58] sm:$0xff]
        %v312 = vld [vmem:[%s289 + $0x60] sm:$0xff]
        %v313 = vld [vmem:[%s289 + $0x68] sm:$0xff]
        %v314 = vld [vmem:[%s289 + $0x70] sm:$0xff]
        %v315 = vld [vmem:[%s289 + $0x78] sm:$0xff]
        %s316 = sld [smem:[#allocation2]]
        %v317 = vunpack.c.l.bf16 %v300
        %v318 = vunpack.c.h.bf16 %v300
        %v319 = vunpack.c.l.bf16 %v301
        %v320 = vunpack.c.h.bf16 %v301
        %v321 = vunpack.c.l.bf16 %v302
        %v322 = vunpack.c.h.bf16 %v302
        %v323 = vunpack.c.l.bf16 %v303
        %v324 = vunpack.c.h.bf16 %v303
        %v325 = vunpack.c.l.bf16 %v304
        %v326 = vunpack.c.h.bf16 %v304
        %v327 = vunpack.c.l.bf16 %v305
        %v328 = vunpack.c.h.bf16 %v305
        %v329 = vunpack.c.l.bf16 %v306
        %v330 = vunpack.c.h.bf16 %v306
        %v331 = vunpack.c.l.bf16 %v307
        %v332 = vunpack.c.h.bf16 %v307
        %v333 = vunpack.c.l.bf16 %v308
        %v334 = vunpack.c.h.bf16 %v308
        %v335 = vunpack.c.l.bf16 %v309
        %v336 = vunpack.c.h.bf16 %v309
        %v337 = vunpack.c.l.bf16 %v310
        %v338 = vunpack.c.h.bf16 %v310
        %v339 = vunpack.c.l.bf16 %v311
        %v340 = vunpack.c.h.bf16 %v311
        %v341 = vunpack.c.l.bf16 %v312
        %v342 = vunpack.c.h.bf16 %v312
        %v343 = vunpack.c.l.bf16 %v313
        %v344 = vunpack.c.h.bf16 %v313
        %v345 = vunpack.c.l.bf16 %v314
        %v346 = vunpack.c.h.bf16 %v314
        %v347 = vunpack.c.l.bf16 %v315
        %v348 = vunpack.c.h.bf16 %v315
        %vm349 = vcmp.gt.f32.partialorder %v317, 0.0
        %vm350 = vcmp.gt.f32.partialorder %v318, 0.0
        %vm351 = vcmp.gt.f32.partialorder %v319, 0.0
        %vm352 = vcmp.gt.f32.partialorder %v320, 0.0
        %vm353 = vcmp.gt.f32.partialorder %v321, 0.0
        %vm354 = vcmp.gt.f32.partialorder %v322, 0.0
        %vm355 = vcmp.gt.f32.partialorder %v323, 0.0
        %vm356 = vcmp.gt.f32.partialorder %v324, 0.0
        %vm357 = vcmp.gt.f32.partialorder %v325, 0.0
        %vm358 = vcmp.gt.f32.partialorder %v326, 0.0
        %vm359 = vcmp.gt.f32.partialorder %v327, 0.0
        %vm360 = vcmp.gt.f32.partialorder %v328, 0.0
        %vm361 = vcmp.gt.f32.partialorder %v329, 0.0
        %vm362 = vcmp.gt.f32.partialorder %v330, 0.0
        %vm363 = vcmp.gt.f32.partialorder %v331, 0.0
        %vm364 = vcmp.gt.f32.partialorder %v332, 0.0
        %vm365 = vcmp.gt.f32.partialorder %v333, 0.0
        %vm366 = vcmp.gt.f32.partialorder %v334, 0.0
        %vm367 = vcmp.gt.f32.partialorder %v335, 0.0
        %vm368 = vcmp.gt.f32.partialorder %v336, 0.0
        %vm369 = vcmp.gt.f32.partialorder %v337, 0.0
        %vm370 = vcmp.gt.f32.partialorder %v338, 0.0
        %vm371 = vcmp.gt.f32.partialorder %v339, 0.0
        %vm372 = vcmp.gt.f32.partialorder %v340, 0.0
        %vm373 = vcmp.gt.f32.partialorder %v341, 0.0
        %vm374 = vcmp.gt.f32.partialorder %v342, 0.0
        %vm375 = vcmp.gt.f32.partialorder %v343, 0.0
        %vm376 = vcmp.gt.f32.partialorder %v344, 0.0
        %vm377 = vcmp.gt.f32.partialorder %v345, 0.0
        %vm378 = vcmp.gt.f32.partialorder %v346, 0.0
        %vm379 = vcmp.gt.f32.partialorder %v347, 0.0
        %vm380 = vcmp.gt.f32.partialorder %v348, 0.0
        %v381 = vstv %s316
        %v382 = vmul.f32 %v381, %v317
        %v383 = vmul.f32 %v381, %v318
        %v384 = vmul.f32 %v381, %v319
        %v385 = vmul.f32 %v381, %v320
        %v386 = vmul.f32 %v381, %v321
        %v387 = vmul.f32 %v381, %v322
        %v388 = vmul.f32 %v381, %v323
        %v389 = vmul.f32 %v381, %v324
        %v390 = vmul.f32 %v381, %v325
        %v391 = vmul.f32 %v381, %v326
        %v392 = vmul.f32 %v381, %v327
        %v393 = vmul.f32 %v381, %v328
        %v394 = vmul.f32 %v381, %v329
        %v395 = vmul.f32 %v381, %v330
        %v396 = vmul.f32 %v381, %v331
        %v397 = vmul.f32 %v381, %v332
        %v398 = vmul.f32 %v381, %v333
        %v399 = vmul.f32 %v381, %v334
        %v400 = vmul.f32 %v381, %v335
        %v401 = vmul.f32 %v381, %v336
        %v402 = vmul.f32 %v381, %v337
        %v403 = vmul.f32 %v381, %v338
        %v404 = vmul.f32 %v381, %v339
        %v405 = vmul.f32 %v381, %v340
        %v406 = vmul.f32 %v381, %v341
        %v407 = vmul.f32 %v381, %v342
        %v408 = vmul.f32 %v381, %v343
        %v409 = vmul.f32 %v381, %v344
        %v410 = vmul.f32 %v381, %v345
        %v411 = vmul.f32 %v381, %v346
        %v412 = vmul.f32 %v381, %v347
        %v413 = vmul.f32 %v381, %v348
        %v414 = vsel %vm349, %v317, %v382
        %v415 = vsel %vm350, %v318, %v383
        %v416 = vsel %vm351, %v319, %v384
        %v417 = vsel %vm352, %v320, %v385
        %v418 = vsel %vm353, %v321, %v386
        %v419 = vsel %vm354, %v322, %v387
        %v420 = vsel %vm355, %v323, %v388
        %v421 = vsel %vm356, %v324, %v389
        %v422 = vsel %vm357, %v325, %v390
        %v423 = vsel %vm358, %v326, %v391
        %v424 = vsel %vm359, %v327, %v392
        %v425 = vsel %vm360, %v328, %v393
        %v426 = vsel %vm361, %v329, %v394
        %v427 = vsel %vm362, %v330, %v395
        %v428 = vsel %vm363, %v331, %v396
        %v429 = vsel %vm364, %v332, %v397
        %v430 = vsel %vm365, %v333, %v398
        %v431 = vsel %vm366, %v334, %v399
        %v432 = vsel %vm367, %v335, %v400
        %v433 = vsel %vm368, %v336, %v401
        %v434 = vsel %vm369, %v337, %v402
        %v435 = vsel %vm370, %v338, %v403
        %v436 = vsel %vm371, %v339, %v404
        %v437 = vsel %vm372, %v340, %v405
        %v438 = vsel %vm373, %v341, %v406
        %v439 = vsel %vm374, %v342, %v407
        %v440 = vsel %vm375, %v343, %v408
        %v441 = vsel %vm376, %v344, %v409
        %v442 = vsel %vm377, %v345, %v410
        %v443 = vsel %vm378, %v346, %v411
        %v444 = vsel %vm379, %v347, %v412
        %v445 = vsel %vm380, %v348, %v413
        %v446 = vpack.c.bf16 %v418, %v414
        %v447 = vpack.c.bf16 %v419, %v415
        %v448 = vpack.c.bf16 %v420, %v416
        %v449 = vpack.c.bf16 %v421, %v417
        %v450 = vpack.c.bf16 %v426, %v422
        %v451 = vpack.c.bf16 %v427, %v423
        %v452 = vpack.c.bf16 %v428, %v424
        %v453 = vpack.c.bf16 %v429, %v425
        %v454 = vpack.c.bf16 %v434, %v430
        %v455 = vpack.c.bf16 %v435, %v431
        %v456 = vpack.c.bf16 %v436, %v432
        %v457 = vpack.c.bf16 %v437, %v433
        %v458 = vpack.c.bf16 %v442, %v438
        %v459 = vpack.c.bf16 %v443, %v439
        %v460 = vpack.c.bf16 %v444, %v440
        %v461 = vpack.c.bf16 %v445, %v441
        %v462 = vld [vmem:[#allocation3] sm:$0xff]
        %v463 = vld [vmem:[#allocation3 + $0x8] sm:$0xff]
        %v464 = vld [vmem:[#allocation3 + $0x10] sm:$0xff]
        %v465 = vld [vmem:[#allocation3 + $0x18] sm:$0xff]
        %v466 = vld [vmem:[#allocation3 + $0x20] sm:$0xff]
        %v467 = vld [vmem:[#allocation3 + $0x28] sm:$0xff]
        %v468 = vld [vmem:[#allocation3 + $0x30] sm:$0xff]
        %v469 = vld [vmem:[#allocation3 + $0x38] sm:$0xff]
        %v470 = vld [vmem:[#allocation3 + $0x40] sm:$0xff]
        %v471 = vld [vmem:[#allocation3 + $0x48] sm:$0xff]
        %v472 = vld [vmem:[#allocation3 + $0x50] sm:$0xff]
        %v473 = vld [vmem:[#allocation3 + $0x58] sm:$0xff]
        %v474 = vld [vmem:[#allocation3 + $0x60] sm:$0xff]
        %v475 = vld [vmem:[#allocation3 + $0x68] sm:$0xff]
        %v476 = vld [vmem:[#allocation3 + $0x70] sm:$0xff]
        %v477 = vld [vmem:[#allocation3 + $0x78] sm:$0xff]
        %v478 = vld [vmem:[#allocation3 + $0x80] sm:$0xff]
        %v479 = vld [vmem:[#allocation3 + $0x88] sm:$0xff]
        %v480 = vld [vmem:[#allocation3 + $0x90] sm:$0xff]
        %v481 = vld [vmem:[#allocation3 + $0x98] sm:$0xff]
        %v482 = vld [vmem:[#allocation3 + $0xa0] sm:$0xff]
        %v483 = vld [vmem:[#allocation3 + $0xa8] sm:$0xff]
        %v484 = vld [vmem:[#allocation3 + $0xb0] sm:$0xff]
        %v485 = vld [vmem:[#allocation3 + $0xb8] sm:$0xff]
        %v486 = vld [vmem:[#allocation3 + $0xc0] sm:$0xff]
        %v487 = vld [vmem:[#allocation3 + $0xc8] sm:$0xff]
        %v488 = vld [vmem:[#allocation3 + $0xd0] sm:$0xff]
        %v489 = vld [vmem:[#allocation3 + $0xd8] sm:$0xff]
        %v490 = vld [vmem:[#allocation3 + $0xe0] sm:$0xff]
        %v491 = vld [vmem:[#allocation3 + $0xe8] sm:$0xff]
        %v492 = vld [vmem:[#allocation3 + $0xf0] sm:$0xff]
        %v493 = vld [vmem:[#allocation3 + $0xf8] sm:$0xff]
        %v494 = vld [vmem:[#allocation3 + $0x100] sm:$0xff]
        %v495 = vld [vmem:[#allocation3 + $0x108] sm:$0xff]
        %v496 = vld [vmem:[#allocation3 + $0x110] sm:$0xff]
        %v497 = vld [vmem:[#allocation3 + $0x118] sm:$0xff]
        %v498 = vld [vmem:[#allocation3 + $0x120] sm:$0xff]
        %v499 = vld [vmem:[#allocation3 + $0x128] sm:$0xff]
        %v500 = vld [vmem:[#allocation3 + $0x130] sm:$0xff]
        %v501 = vld [vmem:[#allocation3 + $0x138] sm:$0xff]
        %v502 = vld [vmem:[#allocation3 + $0x140] sm:$0xff]
        %v503 = vld [vmem:[#allocation3 + $0x148] sm:$0xff]
        %v504 = vld [vmem:[#allocation3 + $0x150] sm:$0xff]
        %v505 = vld [vmem:[#allocation3 + $0x158] sm:$0xff]
        %v506 = vld [vmem:[#allocation3 + $0x160] sm:$0xff]
        %v507 = vld [vmem:[#allocation3 + $0x168] sm:$0xff]
        %v508 = vld [vmem:[#allocation3 + $0x170] sm:$0xff]
        %v509 = vld [vmem:[#allocation3 + $0x178] sm:$0xff]
        %v510 = vld [vmem:[#allocation3 + $0x180] sm:$0xff]
        %v511 = vld [vmem:[#allocation3 + $0x188] sm:$0xff]
        %v512 = vld [vmem:[#allocation3 + $0x190] sm:$0xff]
        %v513 = vld [vmem:[#allocation3 + $0x198] sm:$0xff]
        %v514 = vld [vmem:[#allocation3 + $0x1a0] sm:$0xff]
        %v515 = vld [vmem:[#allocation3 + $0x1a8] sm:$0xff]
        %v516 = vld [vmem:[#allocation3 + $0x1b0] sm:$0xff]
        %v517 = vld [vmem:[#allocation3 + $0x1b8] sm:$0xff]
        %v518 = vld [vmem:[#allocation3 + $0x1c0] sm:$0xff]
        %v519 = vld [vmem:[#allocation3 + $0x1c8] sm:$0xff]
        %v520 = vld [vmem:[#allocation3 + $0x1d0] sm:$0xff]
        %v521 = vld [vmem:[#allocation3 + $0x1d8] sm:$0xff]
        %v522 = vld [vmem:[#allocation3 + $0x1e0] sm:$0xff]
        %v523 = vld [vmem:[#allocation3 + $0x1e8] sm:$0xff]
        %v524 = vld [vmem:[#allocation3 + $0x1f0] sm:$0xff]
        %v525 = vld [vmem:[#allocation3 + $0x1f8] sm:$0xff]
        %v526 = vld [vmem:[#allocation3 + $0x200] sm:$0xff]
        %v527 = vld [vmem:[#allocation3 + $0x208] sm:$0xff]
        %v528 = vld [vmem:[#allocation3 + $0x210] sm:$0xff]
        %v529 = vld [vmem:[#allocation3 + $0x218] sm:$0xff]
        %v530 = vld [vmem:[#allocation3 + $0x220] sm:$0xff]
        %v531 = vld [vmem:[#allocation3 + $0x228] sm:$0xff]
        %v532 = vld [vmem:[#allocation3 + $0x230] sm:$0xff]
        %v533 = vld [vmem:[#allocation3 + $0x238] sm:$0xff]
        %v534 = vld [vmem:[#allocation3 + $0x240] sm:$0xff]
        %v535 = vld [vmem:[#allocation3 + $0x248] sm:$0xff]
        %v536 = vld [vmem:[#allocation3 + $0x250] sm:$0xff]
        %v537 = vld [vmem:[#allocation3 + $0x258] sm:$0xff]
        %v538 = vld [vmem:[#allocation3 + $0x260] sm:$0xff]
        %v539 = vld [vmem:[#allocation3 + $0x268] sm:$0xff]
        %v540 = vld [vmem:[#allocation3 + $0x270] sm:$0xff]
        %v541 = vld [vmem:[#allocation3 + $0x278] sm:$0xff]
        %v542 = vld [vmem:[#allocation3 + $0x280] sm:$0xff]
        %v543 = vld [vmem:[#allocation3 + $0x288] sm:$0xff]
        %v544 = vld [vmem:[#allocation3 + $0x290] sm:$0xff]
        %v545 = vld [vmem:[#allocation3 + $0x298] sm:$0xff]
        %v546 = vld [vmem:[#allocation3 + $0x2a0] sm:$0xff]
        %v547 = vld [vmem:[#allocation3 + $0x2a8] sm:$0xff]
        %v548 = vld [vmem:[#allocation3 + $0x2b0] sm:$0xff]
        %v549 = vld [vmem:[#allocation3 + $0x2b8] sm:$0xff]
        %v550 = vld [vmem:[#allocation3 + $0x2c0] sm:$0xff]
        %v551 = vld [vmem:[#allocation3 + $0x2c8] sm:$0xff]
        %v552 = vld [vmem:[#allocation3 + $0x2d0] sm:$0xff]
        %v553 = vld [vmem:[#allocation3 + $0x2d8] sm:$0xff]
        %v554 = vld [vmem:[#allocation3 + $0x2e0] sm:$0xff]
        %v555 = vld [vmem:[#allocation3 + $0x2e8] sm:$0xff]
        %v556 = vld [vmem:[#allocation3 + $0x2f0] sm:$0xff]
        %v557 = vld [vmem:[#allocation3 + $0x2f8] sm:$0xff]
        %v558 = vld [vmem:[#allocation3 + $0x300] sm:$0xff]
        %v559 = vld [vmem:[#allocation3 + $0x308] sm:$0xff]
        %v560 = vld [vmem:[#allocation3 + $0x310] sm:$0xff]
        %v561 = vld [vmem:[#allocation3 + $0x318] sm:$0xff]
        %v562 = vld [vmem:[#allocation3 + $0x320] sm:$0xff]
        %v563 = vld [vmem:[#allocation3 + $0x328] sm:$0xff]
        %v564 = vld [vmem:[#allocation3 + $0x330] sm:$0xff]
        %v565 = vld [vmem:[#allocation3 + $0x338] sm:$0xff]
        %v566 = vld [vmem:[#allocation3 + $0x340] sm:$0xff]
        %v567 = vld [vmem:[#allocation3 + $0x348] sm:$0xff]
        %v568 = vld [vmem:[#allocation3 + $0x350] sm:$0xff]
        %v569 = vld [vmem:[#allocation3 + $0x358] sm:$0xff]
        %v570 = vld [vmem:[#allocation3 + $0x360] sm:$0xff]
        %v571 = vld [vmem:[#allocation3 + $0x368] sm:$0xff]
        %v572 = vld [vmem:[#allocation3 + $0x370] sm:$0xff]
        %v573 = vld [vmem:[#allocation3 + $0x378] sm:$0xff]
        %v574 = vld [vmem:[#allocation3 + $0x380] sm:$0xff]
        %v575 = vld [vmem:[#allocation3 + $0x388] sm:$0xff]
        %v576 = vld [vmem:[#allocation3 + $0x390] sm:$0xff]
        %v577 = vld [vmem:[#allocation3 + $0x398] sm:$0xff]
        %v578 = vld [vmem:[#allocation3 + $0x3a0] sm:$0xff]
        %v579 = vld [vmem:[#allocation3 + $0x3a8] sm:$0xff]
        %v580 = vld [vmem:[#allocation3 + $0x3b0] sm:$0xff]
        %v581 = vld [vmem:[#allocation3 + $0x3b8] sm:$0xff]
        %v582 = vld [vmem:[#allocation3 + $0x3c0] sm:$0xff]
        %v583 = vld [vmem:[#allocation3 + $0x3c8] sm:$0xff]
        %v584 = vld [vmem:[#allocation3 + $0x3d0] sm:$0xff]
        %v585 = vld [vmem:[#allocation3 + $0x3d8] sm:$0xff]
        %v586 = vld [vmem:[#allocation3 + $0x3e0] sm:$0xff]
        %v587 = vld [vmem:[#allocation3 + $0x3e8] sm:$0xff]
        %v588 = vld [vmem:[#allocation3 + $0x3f0] sm:$0xff]
        %v589 = vld [vmem:[#allocation3 + $0x3f8] sm:$0xff]
        %v590 = vld [vmem:[#allocation3 + $0x400] sm:$0xff]
        %v591 = vld [vmem:[#allocation3 + $0x408] sm:$0xff]
        %v592 = vld [vmem:[#allocation3 + $0x410] sm:$0xff]
        %v593 = vld [vmem:[#allocation3 + $0x418] sm:$0xff]
        %v594 = vld [vmem:[#allocation3 + $0x420] sm:$0xff]
        %v595 = vld [vmem:[#allocation3 + $0x428] sm:$0xff]
        %v596 = vld [vmem:[#allocation3 + $0x430] sm:$0xff]
        %v597 = vld [vmem:[#allocation3 + $0x438] sm:$0xff]
        %v598 = vld [vmem:[#allocation3 + $0x440] sm:$0xff]
        %v599 = vld [vmem:[#allocation3 + $0x448] sm:$0xff]
        %v600 = vld [vmem:[#allocation3 + $0x450] sm:$0xff]
        %v601 = vld [vmem:[#allocation3 + $0x458] sm:$0xff]
        %v602 = vld [vmem:[#allocation3 + $0x460] sm:$0xff]
        %v603 = vld [vmem:[#allocation3 + $0x468] sm:$0xff]
        %v604 = vld [vmem:[#allocation3 + $0x470] sm:$0xff]
        %v605 = vld [vmem:[#allocation3 + $0x478] sm:$0xff]
        %v606 = vld [vmem:[#allocation3 + $0x480] sm:$0xff]
        %v607 = vld [vmem:[#allocation3 + $0x488] sm:$0xff]
        %v608 = vld [vmem:[#allocation3 + $0x490] sm:$0xff]
        %v609 = vld [vmem:[#allocation3 + $0x498] sm:$0xff]
        %v610 = vld [vmem:[#allocation3 + $0x4a0] sm:$0xff]
        %v611 = vld [vmem:[#allocation3 + $0x4a8] sm:$0xff]
        %v612 = vld [vmem:[#allocation3 + $0x4b0] sm:$0xff]
        %v613 = vld [vmem:[#allocation3 + $0x4b8] sm:$0xff]
        %v614 = vld [vmem:[#allocation3 + $0x4c0] sm:$0xff]
        %v615 = vld [vmem:[#allocation3 + $0x4c8] sm:$0xff]
        %v616 = vld [vmem:[#allocation3 + $0x4d0] sm:$0xff]
        %v617 = vld [vmem:[#allocation3 + $0x4d8] sm:$0xff]
        %v618 = vld [vmem:[#allocation3 + $0x4e0] sm:$0xff]
        %v619 = vld [vmem:[#allocation3 + $0x4e8] sm:$0xff]
        %v620 = vld [vmem:[#allocation3 + $0x4f0] sm:$0xff]
        %v621 = vld [vmem:[#allocation3 + $0x4f8] sm:$0xff]
        %v622 = vld [vmem:[#allocation3 + $0x500] sm:$0xff]
        %v623 = vld [vmem:[#allocation3 + $0x508] sm:$0xff]
        %v624 = vld [vmem:[#allocation3 + $0x510] sm:$0xff]
        %v625 = vld [vmem:[#allocation3 + $0x518] sm:$0xff]
        %v626 = vld [vmem:[#allocation3 + $0x520] sm:$0xff]
        %v627 = vld [vmem:[#allocation3 + $0x528] sm:$0xff]
        %v628 = vld [vmem:[#allocation3 + $0x530] sm:$0xff]
        %v629 = vld [vmem:[#allocation3 + $0x538] sm:$0xff]
        %v630 = vld [vmem:[#allocation3 + $0x540] sm:$0xff]
        %v631 = vld [vmem:[#allocation3 + $0x548] sm:$0xff]
        %v632 = vld [vmem:[#allocation3 + $0x550] sm:$0xff]
        %v633 = vld [vmem:[#allocation3 + $0x558] sm:$0xff]
        %v634 = vld [vmem:[#allocation3 + $0x560] sm:$0xff]
        %v635 = vld [vmem:[#allocation3 + $0x568] sm:$0xff]
        %v636 = vld [vmem:[#allocation3 + $0x570] sm:$0xff]
        %v637 = vld [vmem:[#allocation3 + $0x578] sm:$0xff]
        %v638 = vld [vmem:[#allocation3 + $0x580] sm:$0xff]
        %v639 = vld [vmem:[#allocation3 + $0x588] sm:$0xff]
        %v640 = vld [vmem:[#allocation3 + $0x590] sm:$0xff]
        %v641 = vld [vmem:[#allocation3 + $0x598] sm:$0xff]
        %v642 = vld [vmem:[#allocation3 + $0x5a0] sm:$0xff]
        %v643 = vld [vmem:[#allocation3 + $0x5a8] sm:$0xff]
        %v644 = vld [vmem:[#allocation3 + $0x5b0] sm:$0xff]
        %v645 = vld [vmem:[#allocation3 + $0x5b8] sm:$0xff]
        %v646 = vld [vmem:[#allocation3 + $0x5c0] sm:$0xff]
        %v647 = vld [vmem:[#allocation3 + $0x5c8] sm:$0xff]
        %v648 = vld [vmem:[#allocation3 + $0x5d0] sm:$0xff]
        %v649 = vld [vmem:[#allocation3 + $0x5d8] sm:$0xff]
        %v650 = vld [vmem:[#allocation3 + $0x5e0] sm:$0xff]
        %v651 = vld [vmem:[#allocation3 + $0x5e8] sm:$0xff]
        %v652 = vld [vmem:[#allocation3 + $0x5f0] sm:$0xff]
        %v653 = vld [vmem:[#allocation3 + $0x5f8] sm:$0xff]
        %v654 = vld [vmem:[#allocation3 + $0x600] sm:$0xff]
        %v655 = vld [vmem:[#allocation3 + $0x608] sm:$0xff]
        %v656 = vld [vmem:[#allocation3 + $0x610] sm:$0xff]
        %v657 = vld [vmem:[#allocation3 + $0x618] sm:$0xff]
        %v658 = vld [vmem:[#allocation3 + $0x620] sm:$0xff]
        %v659 = vld [vmem:[#allocation3 + $0x628] sm:$0xff]
        %v660 = vld [vmem:[#allocation3 + $0x630] sm:$0xff]
        %v661 = vld [vmem:[#allocation3 + $0x638] sm:$0xff]
        %v662 = vld [vmem:[#allocation3 + $0x640] sm:$0xff]
        %v663 = vld [vmem:[#allocation3 + $0x648] sm:$0xff]
        %v664 = vld [vmem:[#allocation3 + $0x650] sm:$0xff]
        %v665 = vld [vmem:[#allocation3 + $0x658] sm:$0xff]
        %v666 = vld [vmem:[#allocation3 + $0x660] sm:$0xff]
        %v667 = vld [vmem:[#allocation3 + $0x668] sm:$0xff]
        %v668 = vld [vmem:[#allocation3 + $0x670] sm:$0xff]
        %v669 = vld [vmem:[#allocation3 + $0x678] sm:$0xff]
        %v670 = vld [vmem:[#allocation3 + $0x680] sm:$0xff]
        %v671 = vld [vmem:[#allocation3 + $0x688] sm:$0xff]
        %v672 = vld [vmem:[#allocation3 + $0x690] sm:$0xff]
        %v673 = vld [vmem:[#allocation3 + $0x698] sm:$0xff]
        %v674 = vld [vmem:[#allocation3 + $0x6a0] sm:$0xff]
        %v675 = vld [vmem:[#allocation3 + $0x6a8] sm:$0xff]
        %v676 = vld [vmem:[#allocation3 + $0x6b0] sm:$0xff]
        %v677 = vld [vmem:[#allocation3 + $0x6b8] sm:$0xff]
        %v678 = vld [vmem:[#allocation3 + $0x6c0] sm:$0xff]
        %v679 = vld [vmem:[#allocation3 + $0x6c8] sm:$0xff]
        %v680 = vld [vmem:[#allocation3 + $0x6d0] sm:$0xff]
        %v681 = vld [vmem:[#allocation3 + $0x6d8] sm:$0xff]
        %v682 = vld [vmem:[#allocation3 + $0x6e0] sm:$0xff]
        %v683 = vld [vmem:[#allocation3 + $0x6e8] sm:$0xff]
        %v684 = vld [vmem:[#allocation3 + $0x6f0] sm:$0xff]
        %v685 = vld [vmem:[#allocation3 + $0x6f8] sm:$0xff]
        %v686 = vld [vmem:[#allocation3 + $0x700] sm:$0xff]
        %v687 = vld [vmem:[#allocation3 + $0x708] sm:$0xff]
        %v688 = vld [vmem:[#allocation3 + $0x710] sm:$0xff]
        %v689 = vld [vmem:[#allocation3 + $0x718] sm:$0xff]
        %v690 = vld [vmem:[#allocation3 + $0x720] sm:$0xff]
        %v691 = vld [vmem:[#allocation3 + $0x728] sm:$0xff]
        %v692 = vld [vmem:[#allocation3 + $0x730] sm:$0xff]
        %v693 = vld [vmem:[#allocation3 + $0x738] sm:$0xff]
        %v694 = vld [vmem:[#allocation3 + $0x740] sm:$0xff]
        %v695 = vld [vmem:[#allocation3 + $0x748] sm:$0xff]
        %v696 = vld [vmem:[#allocation3 + $0x750] sm:$0xff]
        %v697 = vld [vmem:[#allocation3 + $0x758] sm:$0xff]
        %v698 = vld [vmem:[#allocation3 + $0x760] sm:$0xff]
        %v699 = vld [vmem:[#allocation3 + $0x768] sm:$0xff]
        %v700 = vld [vmem:[#allocation3 + $0x770] sm:$0xff]
        %v701 = vld [vmem:[#allocation3 + $0x778] sm:$0xff]
        %v702 = vld [vmem:[#allocation3 + $0x780] sm:$0xff]
        %v703 = vld [vmem:[#allocation3 + $0x788] sm:$0xff]
        %v704 = vld [vmem:[#allocation3 + $0x790] sm:$0xff]
        %v705 = vld [vmem:[#allocation3 + $0x798] sm:$0xff]
        %v706 = vld [vmem:[#allocation3 + $0x7a0] sm:$0xff]
        %v707 = vld [vmem:[#allocation3 + $0x7a8] sm:$0xff]
        %v708 = vld [vmem:[#allocation3 + $0x7b0] sm:$0xff]
        %v709 = vld [vmem:[#allocation3 + $0x7b8] sm:$0xff]
        %v710 = vld [vmem:[#allocation3 + $0x7c0] sm:$0xff]
        %v711 = vld [vmem:[#allocation3 + $0x7c8] sm:$0xff]
        %v712 = vld [vmem:[#allocation3 + $0x7d0] sm:$0xff]
        %v713 = vld [vmem:[#allocation3 + $0x7d8] sm:$0xff]
        %v714 = vld [vmem:[#allocation3 + $0x7e0] sm:$0xff]
        %v715 = vld [vmem:[#allocation3 + $0x7e8] sm:$0xff]
        %v716 = vld [vmem:[#allocation3 + $0x7f0] sm:$0xff]
        %v717 = vld [vmem:[#allocation3 + $0x7f8] sm:$0xff]
        %v718 = vld [vmem:[%s3] sm:$0xff]
        %v720 = vperm.slane %v718, 0
        %v721 = vperm.slane %v718, 1
        %v722 = vperm.slane %v718, 2
        %v723 = vperm.slane %v718, 3
        %v724 = vperm.slane %v718, 4
        %v725 = vperm.slane %v718, 5
        %v726 = vperm.slane %v718, 6
        %v727 = vperm.slane %v718, 7
        %v992 = vunpack.c.l.b16 %v462
        %v993 = vunpack.c.h.b16 %v462
        %v994 = vunpack.c.l.b16 %v463
        %v995 = vunpack.c.h.b16 %v463
        %v996 = vunpack.c.l.b16 %v464
        %v997 = vunpack.c.h.b16 %v464
        %v998 = vunpack.c.l.b16 %v465
        %v999 = vunpack.c.h.b16 %v465
        %v1000 = vunpack.c.l.b16 %v466
        %v1001 = vunpack.c.h.b16 %v466
        %v1002 = vunpack.c.l.b16 %v467
        %v1003 = vunpack.c.h.b16 %v467
        %v1004 = vunpack.c.l.b16 %v468
        %v1005 = vunpack.c.h.b16 %v468
        %v1006 = vunpack.c.l.b16 %v469
        %v1007 = vunpack.c.h.b16 %v469
        %v1008 = vunpack.c.l.b16 %v470
        %v1009 = vunpack.c.h.b16 %v470
        %v1010 = vunpack.c.l.b16 %v471
        %v1011 = vunpack.c.h.b16 %v471
        %v1012 = vunpack.c.l.b16 %v472
        %v1013 = vunpack.c.h.b16 %v472
        %v1014 = vunpack.c.l.b16 %v473
        %v1015 = vunpack.c.h.b16 %v473
        %v1016 = vunpack.c.l.b16 %v474
        %v1017 = vunpack.c.h.b16 %v474
        %v1018 = vunpack.c.l.b16 %v475
        %v1019 = vunpack.c.h.b16 %v475
        %v1020 = vunpack.c.l.b16 %v476
        %v1021 = vunpack.c.h.b16 %v476
        %v1022 = vunpack.c.l.b16 %v477
        %v1023 = vunpack.c.h.b16 %v477
        %v1024 = vunpack.c.l.b16 %v478
        %v1025 = vunpack.c.h.b16 %v478
        %v1026 = vunpack.c.l.b16 %v479
        %v1027 = vunpack.c.h.b16 %v479
        %v1028 = vunpack.c.l.b16 %v480
        %v1029 = vunpack.c.h.b16 %v480
        %v1030 = vunpack.c.l.b16 %v481
        %v1031 = vunpack.c.h.b16 %v481
        %v1032 = vunpack.c.l.b16 %v482
        %v1033 = vunpack.c.h.b16 %v482
        %v1034 = vunpack.c.l.b16 %v483
        %v1035 = vunpack.c.h.b16 %v483
        %v1036 = vunpack.c.l.b16 %v484
        %v1037 = vunpack.c.h.b16 %v484
        %v1038 = vunpack.c.l.b16 %v485
        %v1039 = vunpack.c.h.b16 %v485
        %v1040 = vunpack.c.l.b16 %v486
        %v1041 = vunpack.c.h.b16 %v486
        %v1042 = vunpack.c.l.b16 %v487
        %v1043 = vunpack.c.h.b16 %v487
        %v1044 = vunpack.c.l.b16 %v488
        %v1045 = vunpack.c.h.b16 %v488
        %v1046 = vunpack.c.l.b16 %v489
        %v1047 = vunpack.c.h.b16 %v489
        %v1048 = vunpack.c.l.b16 %v490
        %v1049 = vunpack.c.h.b16 %v490
        %v1050 = vunpack.c.l.b16 %v491
        %v1051 = vunpack.c.h.b16 %v491
        %v1052 = vunpack.c.l.b16 %v492
        %v1053 = vunpack.c.h.b16 %v492
        %v1054 = vunpack.c.l.b16 %v493
        %v1055 = vunpack.c.h.b16 %v493
        %v1056 = vunpack.c.l.b16 %v494
        %v1057 = vunpack.c.h.b16 %v494
        %v1058 = vunpack.c.l.b16 %v495
        %v1059 = vunpack.c.h.b16 %v495
        %v1060 = vunpack.c.l.b16 %v496
        %v1061 = vunpack.c.h.b16 %v496
        %v1062 = vunpack.c.l.b16 %v497
        %v1063 = vunpack.c.h.b16 %v497
        %v1064 = vunpack.c.l.b16 %v498
        %v1065 = vunpack.c.h.b16 %v498
        %v1066 = vunpack.c.l.b16 %v499
        %v1067 = vunpack.c.h.b16 %v499
        %v1068 = vunpack.c.l.b16 %v500
        %v1069 = vunpack.c.h.b16 %v500
        %v1070 = vunpack.c.l.b16 %v501
        %v1071 = vunpack.c.h.b16 %v501
        %v1072 = vunpack.c.l.b16 %v502
        %v1073 = vunpack.c.h.b16 %v502
        %v1074 = vunpack.c.l.b16 %v503
        %v1075 = vunpack.c.h.b16 %v503
        %v1076 = vunpack.c.l.b16 %v504
        %v1077 = vunpack.c.h.b16 %v504
        %v1078 = vunpack.c.l.b16 %v505
        %v1079 = vunpack.c.h.b16 %v505
        %v1080 = vunpack.c.l.b16 %v506
        %v1081 = vunpack.c.h.b16 %v506
        %v1082 = vunpack.c.l.b16 %v507
        %v1083 = vunpack.c.h.b16 %v507
        %v1084 = vunpack.c.l.b16 %v508
        %v1085 = vunpack.c.h.b16 %v508
        %v1086 = vunpack.c.l.b16 %v509
        %v1087 = vunpack.c.h.b16 %v509
        %v1088 = vunpack.c.l.b16 %v510
        %v1089 = vunpack.c.h.b16 %v510
        %v1090 = vunpack.c.l.b16 %v511
        %v1091 = vunpack.c.h.b16 %v511
        %v1092 = vunpack.c.l.b16 %v512
        %v1093 = vunpack.c.h.b16 %v512
        %v1094 = vunpack.c.l.b16 %v513
        %v1095 = vunpack.c.h.b16 %v513
        %v1096 = vunpack.c.l.b16 %v514
        %v1097 = vunpack.c.h.b16 %v514
        %v1098 = vunpack.c.l.b16 %v515
        %v1099 = vunpack.c.h.b16 %v515
        %v1100 = vunpack.c.l.b16 %v516
        %v1101 = vunpack.c.h.b16 %v516
        %v1102 = vunpack.c.l.b16 %v517
        %v1103 = vunpack.c.h.b16 %v517
        %v1104 = vunpack.c.l.b16 %v518
        %v1105 = vunpack.c.h.b16 %v518
        %v1106 = vunpack.c.l.b16 %v519
        %v1107 = vunpack.c.h.b16 %v519
        %v1108 = vunpack.c.l.b16 %v520
        %v1109 = vunpack.c.h.b16 %v520
        %v1110 = vunpack.c.l.b16 %v521
        %v1111 = vunpack.c.h.b16 %v521
        %v1112 = vunpack.c.l.b16 %v522
        %v1113 = vunpack.c.h.b16 %v522
        %v1114 = vunpack.c.l.b16 %v523
        %v1115 = vunpack.c.h.b16 %v523
        %v1116 = vunpack.c.l.b16 %v524
        %v1117 = vunpack.c.h.b16 %v524
        %v1118 = vunpack.c.l.b16 %v525
        %v1119 = vunpack.c.h.b16 %v525
        %v1120 = vunpack.c.l.b16 %v526
        %v1121 = vunpack.c.h.b16 %v526
        %v1122 = vunpack.c.l.b16 %v527
        %v1123 = vunpack.c.h.b16 %v527
        %v1124 = vunpack.c.l.b16 %v528
        %v1125 = vunpack.c.h.b16 %v528
        %v1126 = vunpack.c.l.b16 %v529
        %v1127 = vunpack.c.h.b16 %v529
        %v1128 = vunpack.c.l.b16 %v530
        %v1129 = vunpack.c.h.b16 %v530
        %v1130 = vunpack.c.l.b16 %v531
        %v1131 = vunpack.c.h.b16 %v531
        %v1132 = vunpack.c.l.b16 %v532
        %v1133 = vunpack.c.h.b16 %v532
        %v1134 = vunpack.c.l.b16 %v533
        %v1135 = vunpack.c.h.b16 %v533
        %v1136 = vunpack.c.l.b16 %v534
        %v1137 = vunpack.c.h.b16 %v534
        %v1138 = vunpack.c.l.b16 %v535
        %v1139 = vunpack.c.h.b16 %v535
        %v1140 = vunpack.c.l.b16 %v536
        %v1141 = vunpack.c.h.b16 %v536
        %v1142 = vunpack.c.l.b16 %v537
        %v1143 = vunpack.c.h.b16 %v537
        %v1144 = vunpack.c.l.b16 %v538
        %v1145 = vunpack.c.h.b16 %v538
        %v1146 = vunpack.c.l.b16 %v539
        %v1147 = vunpack.c.h.b16 %v539
        %v1148 = vunpack.c.l.b16 %v540
        %v1149 = vunpack.c.h.b16 %v540
        %v1150 = vunpack.c.l.b16 %v541
        %v1151 = vunpack.c.h.b16 %v541
        %v1152 = vunpack.c.l.b16 %v542
        %v1153 = vunpack.c.h.b16 %v542
        %v1154 = vunpack.c.l.b16 %v543
        %v1155 = vunpack.c.h.b16 %v543
        %v1156 = vunpack.c.l.b16 %v544
        %v1157 = vunpack.c.h.b16 %v544
        %v1158 = vunpack.c.l.b16 %v545
        %v1159 = vunpack.c.h.b16 %v545
        %v1160 = vunpack.c.l.b16 %v546
        %v1161 = vunpack.c.h.b16 %v546
        %v1162 = vunpack.c.l.b16 %v547
        %v1163 = vunpack.c.h.b16 %v547
        %v1164 = vunpack.c.l.b16 %v548
        %v1165 = vunpack.c.h.b16 %v548
        %v1166 = vunpack.c.l.b16 %v549
        %v1167 = vunpack.c.h.b16 %v549
        %v1168 = vunpack.c.l.b16 %v550
        %v1169 = vunpack.c.h.b16 %v550
        %v1170 = vunpack.c.l.b16 %v551
        %v1171 = vunpack.c.h.b16 %v551
        %v1172 = vunpack.c.l.b16 %v552
        %v1173 = vunpack.c.h.b16 %v552
        %v1174 = vunpack.c.l.b16 %v553
        %v1175 = vunpack.c.h.b16 %v553
        %v1176 = vunpack.c.l.b16 %v554
        %v1177 = vunpack.c.h.b16 %v554
        %v1178 = vunpack.c.l.b16 %v555
        %v1179 = vunpack.c.h.b16 %v555
        %v1180 = vunpack.c.l.b16 %v556
        %v1181 = vunpack.c.h.b16 %v556
        %v1182 = vunpack.c.l.b16 %v557
        %v1183 = vunpack.c.h.b16 %v557
        %v1184 = vunpack.c.l.b16 %v558
        %v1185 = vunpack.c.h.b16 %v558
        %v1186 = vunpack.c.l.b16 %v559
        %v1187 = vunpack.c.h.b16 %v559
        %v1188 = vunpack.c.l.b16 %v560
        %v1189 = vunpack.c.h.b16 %v560
        %v1190 = vunpack.c.l.b16 %v561
        %v1191 = vunpack.c.h.b16 %v561
        %v1192 = vunpack.c.l.b16 %v562
        %v1193 = vunpack.c.h.b16 %v562
        %v1194 = vunpack.c.l.b16 %v563
        %v1195 = vunpack.c.h.b16 %v563
        %v1196 = vunpack.c.l.b16 %v564
        %v1197 = vunpack.c.h.b16 %v564
        %v1198 = vunpack.c.l.b16 %v565
        %v1199 = vunpack.c.h.b16 %v565
        %v1200 = vunpack.c.l.b16 %v566
        %v1201 = vunpack.c.h.b16 %v566
        %v1202 = vunpack.c.l.b16 %v567
        %v1203 = vunpack.c.h.b16 %v567
        %v1204 = vunpack.c.l.b16 %v568
        %v1205 = vunpack.c.h.b16 %v568
        %v1206 = vunpack.c.l.b16 %v569
        %v1207 = vunpack.c.h.b16 %v569
        %v1208 = vunpack.c.l.b16 %v570
        %v1209 = vunpack.c.h.b16 %v570
        %v1210 = vunpack.c.l.b16 %v571
        %v1211 = vunpack.c.h.b16 %v571
        %v1212 = vunpack.c.l.b16 %v572
        %v1213 = vunpack.c.h.b16 %v572
        %v1214 = vunpack.c.l.b16 %v573
        %v1215 = vunpack.c.h.b16 %v573
        %v1216 = vunpack.c.l.b16 %v574
        %v1217 = vunpack.c.h.b16 %v574
        %v1218 = vunpack.c.l.b16 %v575
        %v1219 = vunpack.c.h.b16 %v575
        %v1220 = vunpack.c.l.b16 %v576
        %v1221 = vunpack.c.h.b16 %v576
        %v1222 = vunpack.c.l.b16 %v577
        %v1223 = vunpack.c.h.b16 %v577
        %v1224 = vunpack.c.l.b16 %v578
        %v1225 = vunpack.c.h.b16 %v578
        %v1226 = vunpack.c.l.b16 %v579
        %v1227 = vunpack.c.h.b16 %v579
        %v1228 = vunpack.c.l.b16 %v580
        %v1229 = vunpack.c.h.b16 %v580
        %v1230 = vunpack.c.l.b16 %v581
        %v1231 = vunpack.c.h.b16 %v581
        %v1232 = vunpack.c.l.b16 %v582
        %v1233 = vunpack.c.h.b16 %v582
        %v1234 = vunpack.c.l.b16 %v583
        %v1235 = vunpack.c.h.b16 %v583
        %v1236 = vunpack.c.l.b16 %v584
        %v1237 = vunpack.c.h.b16 %v584
        %v1238 = vunpack.c.l.b16 %v585
        %v1239 = vunpack.c.h.b16 %v585
        %v1240 = vunpack.c.l.b16 %v586
        %v1241 = vunpack.c.h.b16 %v586
        %v1242 = vunpack.c.l.b16 %v587
        %v1243 = vunpack.c.h.b16 %v587
        %v1244 = vunpack.c.l.b16 %v588
        %v1245 = vunpack.c.h.b16 %v588
        %v1246 = vunpack.c.l.b16 %v589
        %v1247 = vunpack.c.h.b16 %v589
        %v1248 = vunpack.c.l.b16 %v590
        %v1249 = vunpack.c.h.b16 %v590
        %v1250 = vunpack.c.l.b16 %v591
        %v1251 = vunpack.c.h.b16 %v591
        %v1252 = vunpack.c.l.b16 %v592
        %v1253 = vunpack.c.h.b16 %v592
        %v1254 = vunpack.c.l.b16 %v593
        %v1255 = vunpack.c.h.b16 %v593
        %v1256 = vunpack.c.l.b16 %v594
        %v1257 = vunpack.c.h.b16 %v594
        %v1258 = vunpack.c.l.b16 %v595
        %v1259 = vunpack.c.h.b16 %v595
        %v1260 = vunpack.c.l.b16 %v596
        %v1261 = vunpack.c.h.b16 %v596
        %v1262 = vunpack.c.l.b16 %v597
        %v1263 = vunpack.c.h.b16 %v597
        %v1264 = vunpack.c.l.b16 %v598
        %v1265 = vunpack.c.h.b16 %v598
        %v1266 = vunpack.c.l.b16 %v599
        %v1267 = vunpack.c.h.b16 %v599
        %v1268 = vunpack.c.l.b16 %v600
        %v1269 = vunpack.c.h.b16 %v600
        %v1270 = vunpack.c.l.b16 %v601
        %v1271 = vunpack.c.h.b16 %v601
        %v1272 = vunpack.c.l.b16 %v602
        %v1273 = vunpack.c.h.b16 %v602
        %v1274 = vunpack.c.l.b16 %v603
        %v1275 = vunpack.c.h.b16 %v603
        %v1276 = vunpack.c.l.b16 %v604
        %v1277 = vunpack.c.h.b16 %v604
        %v1278 = vunpack.c.l.b16 %v605
        %v1279 = vunpack.c.h.b16 %v605
        %v1280 = vunpack.c.l.b16 %v606
        %v1281 = vunpack.c.h.b16 %v606
        %v1282 = vunpack.c.l.b16 %v607
        %v1283 = vunpack.c.h.b16 %v607
        %v1284 = vunpack.c.l.b16 %v608
        %v1285 = vunpack.c.h.b16 %v608
        %v1286 = vunpack.c.l.b16 %v609
        %v1287 = vunpack.c.h.b16 %v609
        %v1288 = vunpack.c.l.b16 %v610
        %v1289 = vunpack.c.h.b16 %v610
        %v1290 = vunpack.c.l.b16 %v611
        %v1291 = vunpack.c.h.b16 %v611
        %v1292 = vunpack.c.l.b16 %v612
        %v1293 = vunpack.c.h.b16 %v612
        %v1294 = vunpack.c.l.b16 %v613
        %v1295 = vunpack.c.h.b16 %v613
        %v1296 = vunpack.c.l.b16 %v614
        %v1297 = vunpack.c.h.b16 %v614
        %v1298 = vunpack.c.l.b16 %v615
        %v1299 = vunpack.c.h.b16 %v615
        %v1300 = vunpack.c.l.b16 %v616
        %v1301 = vunpack.c.h.b16 %v616
        %v1302 = vunpack.c.l.b16 %v617
        %v1303 = vunpack.c.h.b16 %v617
        %v1304 = vunpack.c.l.b16 %v618
        %v1305 = vunpack.c.h.b16 %v618
        %v1306 = vunpack.c.l.b16 %v619
        %v1307 = vunpack.c.h.b16 %v619
        %v1308 = vunpack.c.l.b16 %v620
        %v1309 = vunpack.c.h.b16 %v620
        %v1310 = vunpack.c.l.b16 %v621
        %v1311 = vunpack.c.h.b16 %v621
        %v1312 = vunpack.c.l.b16 %v622
        %v1313 = vunpack.c.h.b16 %v622
        %v1314 = vunpack.c.l.b16 %v623
        %v1315 = vunpack.c.h.b16 %v623
        %v1316 = vunpack.c.l.b16 %v624
        %v1317 = vunpack.c.h.b16 %v624
        %v1318 = vunpack.c.l.b16 %v625
        %v1319 = vunpack.c.h.b16 %v625
        %v1320 = vunpack.c.l.b16 %v626
        %v1321 = vunpack.c.h.b16 %v626
        %v1322 = vunpack.c.l.b16 %v627
        %v1323 = vunpack.c.h.b16 %v627
        %v1324 = vunpack.c.l.b16 %v628
        %v1325 = vunpack.c.h.b16 %v628
        %v1326 = vunpack.c.l.b16 %v629
        %v1327 = vunpack.c.h.b16 %v629
        %v1328 = vunpack.c.l.b16 %v630
        %v1329 = vunpack.c.h.b16 %v630
        %v1330 = vunpack.c.l.b16 %v631
        %v1331 = vunpack.c.h.b16 %v631
        %v1332 = vunpack.c.l.b16 %v632
        %v1333 = vunpack.c.h.b16 %v632
        %v1334 = vunpack.c.l.b16 %v633
        %v1335 = vunpack.c.h.b16 %v633
        %v1336 = vunpack.c.l.b16 %v634
        %v1337 = vunpack.c.h.b16 %v634
        %v1338 = vunpack.c.l.b16 %v635
        %v1339 = vunpack.c.h.b16 %v635
        %v1340 = vunpack.c.l.b16 %v636
        %v1341 = vunpack.c.h.b16 %v636
        %v1342 = vunpack.c.l.b16 %v637
        %v1343 = vunpack.c.h.b16 %v637
        %v1344 = vunpack.c.l.b16 %v638
        %v1345 = vunpack.c.h.b16 %v638
        %v1346 = vunpack.c.l.b16 %v639
        %v1347 = vunpack.c.h.b16 %v639
        %v1348 = vunpack.c.l.b16 %v640
        %v1349 = vunpack.c.h.b16 %v640
        %v1350 = vunpack.c.l.b16 %v641
        %v1351 = vunpack.c.h.b16 %v641
        %v1352 = vunpack.c.l.b16 %v642
        %v1353 = vunpack.c.h.b16 %v642
        %v1354 = vunpack.c.l.b16 %v643
        %v1355 = vunpack.c.h.b16 %v643
        %v1356 = vunpack.c.l.b16 %v644
        %v1357 = vunpack.c.h.b16 %v644
        %v1358 = vunpack.c.l.b16 %v645
        %v1359 = vunpack.c.h.b16 %v645
        %v1360 = vunpack.c.l.b16 %v646
        %v1361 = vunpack.c.h.b16 %v646
        %v1362 = vunpack.c.l.b16 %v647
        %v1363 = vunpack.c.h.b16 %v647
        %v1364 = vunpack.c.l.b16 %v648
        %v1365 = vunpack.c.h.b16 %v648
        %v1366 = vunpack.c.l.b16 %v649
        %v1367 = vunpack.c.h.b16 %v649
        %v1368 = vunpack.c.l.b16 %v650
        %v1369 = vunpack.c.h.b16 %v650
        %v1370 = vunpack.c.l.b16 %v651
        %v1371 = vunpack.c.h.b16 %v651
        %v1372 = vunpack.c.l.b16 %v652
        %v1373 = vunpack.c.h.b16 %v652
        %v1374 = vunpack.c.l.b16 %v653
        %v1375 = vunpack.c.h.b16 %v653
        %v1376 = vunpack.c.l.b16 %v654
        %v1377 = vunpack.c.h.b16 %v654
        %v1378 = vunpack.c.l.b16 %v655
        %v1379 = vunpack.c.h.b16 %v655
        %v1380 = vunpack.c.l.b16 %v656
        %v1381 = vunpack.c.h.b16 %v656
        %v1382 = vunpack.c.l.b16 %v657
        %v1383 = vunpack.c.h.b16 %v657
        %v1384 = vunpack.c.l.b16 %v658
        %v1385 = vunpack.c.h.b16 %v658
        %v1386 = vunpack.c.l.b16 %v659
        %v1387 = vunpack.c.h.b16 %v659
        %v1388 = vunpack.c.l.b16 %v660
        %v1389 = vunpack.c.h.b16 %v660
        %v1390 = vunpack.c.l.b16 %v661
        %v1391 = vunpack.c.h.b16 %v661
        %v1392 = vunpack.c.l.b16 %v662
        %v1393 = vunpack.c.h.b16 %v662
        %v1394 = vunpack.c.l.b16 %v663
        %v1395 = vunpack.c.h.b16 %v663
        %v1396 = vunpack.c.l.b16 %v664
        %v1397 = vunpack.c.h.b16 %v664
        %v1398 = vunpack.c.l.b16 %v665
        %v1399 = vunpack.c.h.b16 %v665
        %v1400 = vunpack.c.l.b16 %v666
        %v1401 = vunpack.c.h.b16 %v666
        %v1402 = vunpack.c.l.b16 %v667
        %v1403 = vunpack.c.h.b16 %v667
        %v1404 = vunpack.c.l.b16 %v668
        %v1405 = vunpack.c.h.b16 %v668
        %v1406 = vunpack.c.l.b16 %v669
        %v1407 = vunpack.c.h.b16 %v669
        %v1408 = vunpack.c.l.b16 %v670
        %v1409 = vunpack.c.h.b16 %v670
        %v1410 = vunpack.c.l.b16 %v671
        %v1411 = vunpack.c.h.b16 %v671
        %v1412 = vunpack.c.l.b16 %v672
        %v1413 = vunpack.c.h.b16 %v672
        %v1414 = vunpack.c.l.b16 %v673
        %v1415 = vunpack.c.h.b16 %v673
        %v1416 = vunpack.c.l.b16 %v674
        %v1417 = vunpack.c.h.b16 %v674
        %v1418 = vunpack.c.l.b16 %v675
        %v1419 = vunpack.c.h.b16 %v675
        %v1420 = vunpack.c.l.b16 %v676
        %v1421 = vunpack.c.h.b16 %v676
        %v1422 = vunpack.c.l.b16 %v677
        %v1423 = vunpack.c.h.b16 %v677
        %v1424 = vunpack.c.l.b16 %v678
        %v1425 = vunpack.c.h.b16 %v678
        %v1426 = vunpack.c.l.b16 %v679
        %v1427 = vunpack.c.h.b16 %v679
        %v1428 = vunpack.c.l.b16 %v680
        %v1429 = vunpack.c.h.b16 %v680
        %v1430 = vunpack.c.l.b16 %v681
        %v1431 = vunpack.c.h.b16 %v681
        %v1432 = vunpack.c.l.b16 %v682
        %v1433 = vunpack.c.h.b16 %v682
        %v1434 = vunpack.c.l.b16 %v683
        %v1435 = vunpack.c.h.b16 %v683
        %v1436 = vunpack.c.l.b16 %v684
        %v1437 = vunpack.c.h.b16 %v684
        %v1438 = vunpack.c.l.b16 %v685
        %v1439 = vunpack.c.h.b16 %v685
        %v1440 = vunpack.c.l.b16 %v686
        %v1441 = vunpack.c.h.b16 %v686
        %v1442 = vunpack.c.l.b16 %v687
        %v1443 = vunpack.c.h.b16 %v687
        %v1444 = vunpack.c.l.b16 %v688
        %v1445 = vunpack.c.h.b16 %v688
        %v1446 = vunpack.c.l.b16 %v689
        %v1447 = vunpack.c.h.b16 %v689
        %v1448 = vunpack.c.l.b16 %v690
        %v1449 = vunpack.c.h.b16 %v690
        %v1450 = vunpack.c.l.b16 %v691
        %v1451 = vunpack.c.h.b16 %v691
        %v1452 = vunpack.c.l.b16 %v692
        %v1453 = vunpack.c.h.b16 %v692
        %v1454 = vunpack.c.l.b16 %v693
        %v1455 = vunpack.c.h.b16 %v693
        %v1456 = vunpack.c.l.b16 %v694
        %v1457 = vunpack.c.h.b16 %v694
        %v1458 = vunpack.c.l.b16 %v695
        %v1459 = vunpack.c.h.b16 %v695
        %v1460 = vunpack.c.l.b16 %v696
        %v1461 = vunpack.c.h.b16 %v696
        %v1462 = vunpack.c.l.b16 %v697
        %v1463 = vunpack.c.h.b16 %v697
        %v1464 = vunpack.c.l.b16 %v698
        %v1465 = vunpack.c.h.b16 %v698
        %v1466 = vunpack.c.l.b16 %v699
        %v1467 = vunpack.c.h.b16 %v699
        %v1468 = vunpack.c.l.b16 %v700
        %v1469 = vunpack.c.h.b16 %v700
        %v1470 = vunpack.c.l.b16 %v701
        %v1471 = vunpack.c.h.b16 %v701
        %v1472 = vunpack.c.l.b16 %v702
        %v1473 = vunpack.c.h.b16 %v702
        %v1474 = vunpack.c.l.b16 %v703
        %v1475 = vunpack.c.h.b16 %v703
        %v1476 = vunpack.c.l.b16 %v704
        %v1477 = vunpack.c.h.b16 %v704
        %v1478 = vunpack.c.l.b16 %v705
        %v1479 = vunpack.c.h.b16 %v705
        %v1480 = vunpack.c.l.b16 %v706
        %v1481 = vunpack.c.h.b16 %v706
        %v1482 = vunpack.c.l.b16 %v707
        %v1483 = vunpack.c.h.b16 %v707
        %v1484 = vunpack.c.l.b16 %v708
        %v1485 = vunpack.c.h.b16 %v708
        %v1486 = vunpack.c.l.b16 %v709
        %v1487 = vunpack.c.h.b16 %v709
        %v1488 = vunpack.c.l.b16 %v710
        %v1489 = vunpack.c.h.b16 %v710
        %v1490 = vunpack.c.l.b16 %v711
        %v1491 = vunpack.c.h.b16 %v711
        %v1492 = vunpack.c.l.b16 %v712
        %v1493 = vunpack.c.h.b16 %v712
        %v1494 = vunpack.c.l.b16 %v713
        %v1495 = vunpack.c.h.b16 %v713
        %v1496 = vunpack.c.l.b16 %v714
        %v1497 = vunpack.c.h.b16 %v714
        %v1498 = vunpack.c.l.b16 %v715
        %v1499 = vunpack.c.h.b16 %v715
        %v1500 = vunpack.c.l.b16 %v716
        %v1501 = vunpack.c.h.b16 %v716
        %v1502 = vunpack.c.l.b16 %v717
        %v1503 = vunpack.c.h.b16 %v717
        %v1504 = vpack.c.b16 %v1000, %v992
        %v1505 = vpack.c.b16 %v1001, %v993
        %v1506 = vpack.c.b16 %v1002, %v994
        %v1507 = vpack.c.b16 %v1003, %v995
        %v1508 = vpack.c.b16 %v1004, %v996
        %v1509 = vpack.c.b16 %v1005, %v997
        %v1510 = vpack.c.b16 %v1006, %v998
        %v1511 = vpack.c.b16 %v1007, %v999
        %v1512 = vpack.c.b16 %v1016, %v1008
        %v1513 = vpack.c.b16 %v1017, %v1009
        %v1514 = vpack.c.b16 %v1018, %v1010
        %v1515 = vpack.c.b16 %v1019, %v1011
        %v1516 = vpack.c.b16 %v1020, %v1012
        %v1517 = vpack.c.b16 %v1021, %v1013
        %v1518 = vpack.c.b16 %v1022, %v1014
        %v1519 = vpack.c.b16 %v1023, %v1015
        %v1520 = vpack.c.b16 %v1032, %v1024
        %v1521 = vpack.c.b16 %v1033, %v1025
        %v1522 = vpack.c.b16 %v1034, %v1026
        %v1523 = vpack.c.b16 %v1035, %v1027
        %v1524 = vpack.c.b16 %v1036, %v1028
        %v1525 = vpack.c.b16 %v1037, %v1029
        %v1526 = vpack.c.b16 %v1038, %v1030
        %v1527 = vpack.c.b16 %v1039, %v1031
        %v1528 = vpack.c.b16 %v1048, %v1040
        %v1529 = vpack.c.b16 %v1049, %v1041
        %v1530 = vpack.c.b16 %v1050, %v1042
        %v1531 = vpack.c.b16 %v1051, %v1043
        %v1532 = vpack.c.b16 %v1052, %v1044
        %v1533 = vpack.c.b16 %v1053, %v1045
        %v1534 = vpack.c.b16 %v1054, %v1046
        %v1535 = vpack.c.b16 %v1055, %v1047
        %v1536 = vpack.c.b16 %v1064, %v1056
        %v1537 = vpack.c.b16 %v1065, %v1057
        %v1538 = vpack.c.b16 %v1066, %v1058
        %v1539 = vpack.c.b16 %v1067, %v1059
        %v1540 = vpack.c.b16 %v1068, %v1060
        %v1541 = vpack.c.b16 %v1069, %v1061
        %v1542 = vpack.c.b16 %v1070, %v1062
        %v1543 = vpack.c.b16 %v1071, %v1063
        %v1544 = vpack.c.b16 %v1080, %v1072
        %v1545 = vpack.c.b16 %v1081, %v1073
        %v1546 = vpack.c.b16 %v1082, %v1074
        %v1547 = vpack.c.b16 %v1083, %v1075
        %v1548 = vpack.c.b16 %v1084, %v1076
        %v1549 = vpack.c.b16 %v1085, %v1077
        %v1550 = vpack.c.b16 %v1086, %v1078
        %v1551 = vpack.c.b16 %v1087, %v1079
        %v1552 = vpack.c.b16 %v1096, %v1088
        %v1553 = vpack.c.b16 %v1097, %v1089
        %v1554 = vpack.c.b16 %v1098, %v1090
        %v1555 = vpack.c.b16 %v1099, %v1091
        %v1556 = vpack.c.b16 %v1100, %v1092
        %v1557 = vpack.c.b16 %v1101, %v1093
        %v1558 = vpack.c.b16 %v1102, %v1094
        %v1559 = vpack.c.b16 %v1103, %v1095
        %v1560 = vpack.c.b16 %v1112, %v1104
        %v1561 = vpack.c.b16 %v1113, %v1105
        %v1562 = vpack.c.b16 %v1114, %v1106
        %v1563 = vpack.c.b16 %v1115, %v1107
        %v1564 = vpack.c.b16 %v1116, %v1108
        %v1565 = vpack.c.b16 %v1117, %v1109
        %v1566 = vpack.c.b16 %v1118, %v1110
        %v1567 = vpack.c.b16 %v1119, %v1111
        %v1568 = vpack.c.b16 %v1128, %v1120
        %v1569 = vpack.c.b16 %v1129, %v1121
        %v1570 = vpack.c.b16 %v1130, %v1122
        %v1571 = vpack.c.b16 %v1131, %v1123
        %v1572 = vpack.c.b16 %v1132, %v1124
        %v1573 = vpack.c.b16 %v1133, %v1125
        %v1574 = vpack.c.b16 %v1134, %v1126
        %v1575 = vpack.c.b16 %v1135, %v1127
        %v1576 = vpack.c.b16 %v1144, %v1136
        %v1577 = vpack.c.b16 %v1145, %v1137
        %v1578 = vpack.c.b16 %v1146, %v1138
        %v1579 = vpack.c.b16 %v1147, %v1139
        %v1580 = vpack.c.b16 %v1148, %v1140
        %v1581 = vpack.c.b16 %v1149, %v1141
        %v1582 = vpack.c.b16 %v1150, %v1142
        %v1583 = vpack.c.b16 %v1151, %v1143
        %v1584 = vpack.c.b16 %v1160, %v1152
        %v1585 = vpack.c.b16 %v1161, %v1153
        %v1586 = vpack.c.b16 %v1162, %v1154
        %v1587 = vpack.c.b16 %v1163, %v1155
        %v1588 = vpack.c.b16 %v1164, %v1156
        %v1589 = vpack.c.b16 %v1165, %v1157
        %v1590 = vpack.c.b16 %v1166, %v1158
        %v1591 = vpack.c.b16 %v1167, %v1159
        %v1592 = vpack.c.b16 %v1176, %v1168
        %v1593 = vpack.c.b16 %v1177, %v1169
        %v1594 = vpack.c.b16 %v1178, %v1170
        %v1595 = vpack.c.b16 %v1179, %v1171
        %v1596 = vpack.c.b16 %v1180, %v1172
        %v1597 = vpack.c.b16 %v1181, %v1173
        %v1598 = vpack.c.b16 %v1182, %v1174
        %v1599 = vpack.c.b16 %v1183, %v1175
        %v1600 = vpack.c.b16 %v1192, %v1184
        %v1601 = vpack.c.b16 %v1193, %v1185
        %v1602 = vpack.c.b16 %v1194, %v1186
        %v1603 = vpack.c.b16 %v1195, %v1187
        %v1604 = vpack.c.b16 %v1196, %v1188
        %v1605 = vpack.c.b16 %v1197, %v1189
        %v1606 = vpack.c.b16 %v1198, %v1190
        %v1607 = vpack.c.b16 %v1199, %v1191
        %v1608 = vpack.c.b16 %v1208, %v1200
        %v1609 = vpack.c.b16 %v1209, %v1201
        %v1610 = vpack.c.b16 %v1210, %v1202
        %v1611 = vpack.c.b16 %v1211, %v1203
        %v1612 = vpack.c.b16 %v1212, %v1204
        %v1613 = vpack.c.b16 %v1213, %v1205
        %v1614 = vpack.c.b16 %v1214, %v1206
        %v1615 = vpack.c.b16 %v1215, %v1207
        %v1616 = vpack.c.b16 %v1224, %v1216
        %v1617 = vpack.c.b16 %v1225, %v1217
        %v1618 = vpack.c.b16 %v1226, %v1218
        %v1619 = vpack.c.b16 %v1227, %v1219
        %v1620 = vpack.c.b16 %v1228, %v1220
        %v1621 = vpack.c.b16 %v1229, %v1221
        %v1622 = vpack.c.b16 %v1230, %v1222
        %v1623 = vpack.c.b16 %v1231, %v1223
        %v1624 = vpack.c.b16 %v1240, %v1232
        %v1625 = vpack.c.b16 %v1241, %v1233
        %v1626 = vpack.c.b16 %v1242, %v1234
        %v1627 = vpack.c.b16 %v1243, %v1235
        %v1628 = vpack.c.b16 %v1244, %v1236
        %v1629 = vpack.c.b16 %v1245, %v1237
        %v1630 = vpack.c.b16 %v1246, %v1238
        %v1631 = vpack.c.b16 %v1247, %v1239
        %v1632 = vpack.c.b16 %v1256, %v1248
        %v1633 = vpack.c.b16 %v1257, %v1249
        %v1634 = vpack.c.b16 %v1258, %v1250
        %v1635 = vpack.c.b16 %v1259, %v1251
        %v1636 = vpack.c.b16 %v1260, %v1252
        %v1637 = vpack.c.b16 %v1261, %v1253
        %v1638 = vpack.c.b16 %v1262, %v1254
        %v1639 = vpack.c.b16 %v1263, %v1255
        %v1640 = vpack.c.b16 %v1272, %v1264
        %v1641 = vpack.c.b16 %v1273, %v1265
        %v1642 = vpack.c.b16 %v1274, %v1266
        %v1643 = vpack.c.b16 %v1275, %v1267
        %v1644 = vpack.c.b16 %v1276, %v1268
        %v1645 = vpack.c.b16 %v1277, %v1269
        %v1646 = vpack.c.b16 %v1278, %v1270
        %v1647 = vpack.c.b16 %v1279, %v1271
        %v1648 = vpack.c.b16 %v1288, %v1280
        %v1649 = vpack.c.b16 %v1289, %v1281
        %v1650 = vpack.c.b16 %v1290, %v1282
        %v1651 = vpack.c.b16 %v1291, %v1283
        %v1652 = vpack.c.b16 %v1292, %v1284
        %v1653 = vpack.c.b16 %v1293, %v1285
        %v1654 = vpack.c.b16 %v1294, %v1286
        %v1655 = vpack.c.b16 %v1295, %v1287
        %v1656 = vpack.c.b16 %v1304, %v1296
        %v1657 = vpack.c.b16 %v1305, %v1297
        %v1658 = vpack.c.b16 %v1306, %v1298
        %v1659 = vpack.c.b16 %v1307, %v1299
        %v1660 = vpack.c.b16 %v1308, %v1300
        %v1661 = vpack.c.b16 %v1309, %v1301
        %v1662 = vpack.c.b16 %v1310, %v1302
        %v1663 = vpack.c.b16 %v1311, %v1303
        %v1664 = vpack.c.b16 %v1320, %v1312
        %v1665 = vpack.c.b16 %v1321, %v1313
        %v1666 = vpack.c.b16 %v1322, %v1314
        %v1667 = vpack.c.b16 %v1323, %v1315
        %v1668 = vpack.c.b16 %v1324, %v1316
        %v1669 = vpack.c.b16 %v1325, %v1317
        %v1670 = vpack.c.b16 %v1326, %v1318
        %v1671 = vpack.c.b16 %v1327, %v1319
        %v1672 = vpack.c.b16 %v1336, %v1328
        %v1673 = vpack.c.b16 %v1337, %v1329
        %v1674 = vpack.c.b16 %v1338, %v1330
        %v1675 = vpack.c.b16 %v1339, %v1331
        %v1676 = vpack.c.b16 %v1340, %v1332
        %v1677 = vpack.c.b16 %v1341, %v1333
        %v1678 = vpack.c.b16 %v1342, %v1334
        %v1679 = vpack.c.b16 %v1343, %v1335
        %v1680 = vpack.c.b16 %v1352, %v1344
        %v1681 = vpack.c.b16 %v1353, %v1345
        %v1682 = vpack.c.b16 %v1354, %v1346
        %v1683 = vpack.c.b16 %v1355, %v1347
        %v1684 = vpack.c.b16 %v1356, %v1348
        %v1685 = vpack.c.b16 %v1357, %v1349
        %v1686 = vpack.c.b16 %v1358, %v1350
        %v1687 = vpack.c.b16 %v1359, %v1351
        %v1688 = vpack.c.b16 %v1368, %v1360
        %v1689 = vpack.c.b16 %v1369, %v1361
        %v1690 = vpack.c.b16 %v1370, %v1362
        %v1691 = vpack.c.b16 %v1371, %v1363
        %v1692 = vpack.c.b16 %v1372, %v1364
        %v1693 = vpack.c.b16 %v1373, %v1365
        %v1694 = vpack.c.b16 %v1374, %v1366
        %v1695 = vpack.c.b16 %v1375, %v1367
        %v1696 = vpack.c.b16 %v1384, %v1376
        %v1697 = vpack.c.b16 %v1385, %v1377
        %v1698 = vpack.c.b16 %v1386, %v1378
        %v1699 = vpack.c.b16 %v1387, %v1379
        %v1700 = vpack.c.b16 %v1388, %v1380
        %v1701 = vpack.c.b16 %v1389, %v1381
        %v1702 = vpack.c.b16 %v1390, %v1382
        %v1703 = vpack.c.b16 %v1391, %v1383
        %v1704 = vpack.c.b16 %v1400, %v1392
        %v1705 = vpack.c.b16 %v1401, %v1393
        %v1706 = vpack.c.b16 %v1402, %v1394
        %v1707 = vpack.c.b16 %v1403, %v1395
        %v1708 = vpack.c.b16 %v1404, %v1396
        %v1709 = vpack.c.b16 %v1405, %v1397
        %v1710 = vpack.c.b16 %v1406, %v1398
        %v1711 = vpack.c.b16 %v1407, %v1399
        %v1712 = vpack.c.b16 %v1416, %v1408
        %v1713 = vpack.c.b16 %v1417, %v1409
        %v1714 = vpack.c.b16 %v1418, %v1410
        %v1715 = vpack.c.b16 %v1419, %v1411
        %v1716 = vpack.c.b16 %v1420, %v1412
        %v1717 = vpack.c.b16 %v1421, %v1413
        %v1718 = vpack.c.b16 %v1422, %v1414
        %v1719 = vpack.c.b16 %v1423, %v1415
        %v1720 = vpack.c.b16 %v1432, %v1424
        %v1721 = vpack.c.b16 %v1433, %v1425
        %v1722 = vpack.c.b16 %v1434, %v1426
        %v1723 = vpack.c.b16 %v1435, %v1427
        %v1724 = vpack.c.b16 %v1436, %v1428
        %v1725 = vpack.c.b16 %v1437, %v1429
        %v1726 = vpack.c.b16 %v1438, %v1430
        %v1727 = vpack.c.b16 %v1439, %v1431
        %v1728 = vpack.c.b16 %v1448, %v1440
        %v1729 = vpack.c.b16 %v1449, %v1441
        %v1730 = vpack.c.b16 %v1450, %v1442
        %v1731 = vpack.c.b16 %v1451, %v1443
        %v1732 = vpack.c.b16 %v1452, %v1444
        %v1733 = vpack.c.b16 %v1453, %v1445
        %v1734 = vpack.c.b16 %v1454, %v1446
        %v1735 = vpack.c.b16 %v1455, %v1447
        %v1736 = vpack.c.b16 %v1464, %v1456
        %v1737 = vpack.c.b16 %v1465, %v1457
        %v1738 = vpack.c.b16 %v1466, %v1458
        %v1739 = vpack.c.b16 %v1467, %v1459
        %v1740 = vpack.c.b16 %v1468, %v1460
        %v1741 = vpack.c.b16 %v1469, %v1461
        %v1742 = vpack.c.b16 %v1470, %v1462
        %v1743 = vpack.c.b16 %v1471, %v1463
        %v1744 = vpack.c.b16 %v1480, %v1472
        %v1745 = vpack.c.b16 %v1481, %v1473
        %v1746 = vpack.c.b16 %v1482, %v1474
        %v1747 = vpack.c.b16 %v1483, %v1475
        %v1748 = vpack.c.b16 %v1484, %v1476
        %v1749 = vpack.c.b16 %v1485, %v1477
        %v1750 = vpack.c.b16 %v1486, %v1478
        %v1751 = vpack.c.b16 %v1487, %v1479
        %v1752 = vpack.c.b16 %v1496, %v1488
        %v1753 = vpack.c.b16 %v1497, %v1489
        %v1754 = vpack.c.b16 %v1498, %v1490
        %v1755 = vpack.c.b16 %v1499, %v1491
        %v1756 = vpack.c.b16 %v1500, %v1492
        %v1757 = vpack.c.b16 %v1501, %v1493
        %v1758 = vpack.c.b16 %v1502, %v1494
        %v1759 = vpack.c.b16 %v1503, %v1495
        %2016 = vmatpush.bf16.msra.mxu0 %v1560
        %2017 = vmatpush.bf16.msra.mxu0 %v1552
        %2018 = vmatpush.bf16.msra.mxu0 %v1544
        %2019 = vmatpush.bf16.msra.mxu0 %v1536
        %2020 = vmatpush.bf16.msra.mxu0 %v1528
        %2021 = vmatpush.bf16.msra.mxu0 %v1520
        %2022 = vmatpush.bf16.msra.mxu0 %v1512
        %2023 = vmatpush.bf16.msra.mxu0 %v1504
        %2024 = vmatmul.bf16.gmra.mxu0 %v446
        %v2025 = vpop.f32.mrf.mxu0
        %v2026 = vadd.f32 %v720, %v2025
        %v2027 = vpop.f32.mrf.mxu0
        %v2028 = vadd.f32 %v720, %v2027
        %2029 = vmatmul.bf16.gmra.mxu0 %v450
        %v2030 = vpop.f32.mrf.mxu0
        %v2031 = vadd.f32 %v720, %v2030
        %v2032 = vpop.f32.mrf.mxu0
        %v2033 = vadd.f32 %v720, %v2032
        %2034 = vmatmul.bf16.gmra.mxu0 %v454
        %v2035 = vpop.f32.mrf.mxu0
        %v2036 = vadd.f32 %v720, %v2035
        %v2037 = vpop.f32.mrf.mxu0
        %v2038 = vadd.f32 %v720, %v2037
        %2039 = vmatmul.bf16.gmra.mxu0 %v458
        %v2040 = vpop.f32.mrf.mxu0
        %v2041 = vadd.f32 %v720, %v2040
        %v2042 = vpop.f32.mrf.mxu0
        %v2043 = vadd.f32 %v720, %v2042
        %2044 = vdwg.mxu0
        %2045 = vmatpush.bf16.msra.mxu0 %v1624
        %2046 = vmatpush.bf16.msra.mxu0 %v1616
        %2047 = vmatpush.bf16.msra.mxu0 %v1608
        %2048 = vmatpush.bf16.msra.mxu0 %v1600
        %2049 = vmatpush.bf16.msra.mxu0 %v1592
        %2050 = vmatpush.bf16.msra.mxu0 %v1584
        %2051 = vmatpush.bf16.msra.mxu0 %v1576
        %2052 = vmatpush.bf16.msra.mxu0 %v1568
        %2053 = vmatmul.bf16.gmra.mxu0 %v447
        %v2054 = vpop.f32.mrf.mxu0
        %v2055 = vadd.f32 %v2026, %v2054
        %v2056 = vpop.f32.mrf.mxu0
        %v2057 = vadd.f32 %v2028, %v2056
        %2058 = vmatmul.bf16.gmra.mxu0 %v451
        %v2059 = vpop.f32.mrf.mxu0
        %v2060 = vadd.f32 %v2031, %v2059
        %v2061 = vpop.f32.mrf.mxu0
        %v2062 = vadd.f32 %v2033, %v2061
        %2063 = vmatmul.bf16.gmra.mxu0 %v455
        %v2064 = vpop.f32.mrf.mxu0
        %v2065 = vadd.f32 %v2036, %v2064
        %v2066 = vpop.f32.mrf.mxu0
        %v2067 = vadd.f32 %v2038, %v2066
        %2068 = vmatmul.bf16.gmra.mxu0 %v459
        %v2069 = vpop.f32.mrf.mxu0
        %v2070 = vadd.f32 %v2041, %v2069
        %v2071 = vpop.f32.mrf.mxu0
        %v2072 = vadd.f32 %v2043, %v2071
        %2073 = vdwg.mxu0
        %2074 = vmatpush.bf16.msra.mxu0 %v1688
        %2075 = vmatpush.bf16.msra.mxu0 %v1680
        %2076 = vmatpush.bf16.msra.mxu0 %v1672
        %2077 = vmatpush.bf16.msra.mxu0 %v1664
        %2078 = vmatpush.bf16.msra.mxu0 %v1656
        %2079 = vmatpush.bf16.msra.mxu0 %v1648
        %2080 = vmatpush.bf16.msra.mxu0 %v1640
        %2081 = vmatpush.bf16.msra.mxu0 %v1632
        %2082 = vmatmul.bf16.gmra.mxu0 %v448
        %v2083 = vpop.f32.mrf.mxu0
        %v2084 = vadd.f32 %v2055, %v2083
        %v2085 = vpop.f32.mrf.mxu0
        %v2086 = vadd.f32 %v2057, %v2085
        %2087 = vmatmul.bf16.gmra.mxu0 %v452
        %v2088 = vpop.f32.mrf.mxu0
        %v2089 = vadd.f32 %v2060, %v2088
        %v2090 = vpop.f32.mrf.mxu0
        %v2091 = vadd.f32 %v2062, %v2090
        %2092 = vmatmul.bf16.gmra.mxu0 %v456
        %v2093 = vpop.f32.mrf.mxu0
        %v2094 = vadd.f32 %v2065, %v2093
        %v2095 = vpop.f32.mrf.mxu0
        %v2096 = vadd.f32 %v2067, %v2095
        %2097 = vmatmul.bf16.gmra.mxu0 %v460
        %v2098 = vpop.f32.mrf.mxu0
        %v2099 = vadd.f32 %v2070, %v2098
        %v2100 = vpop.f32.mrf.mxu0
        %v2101 = vadd.f32 %v2072, %v2100
        %2102 = vdwg.mxu0
        %2103 = vmatpush.bf16.msra.mxu0 %v1752
        %2104 = vmatpush.bf16.msra.mxu0 %v1744
        %2105 = vmatpush.bf16.msra.mxu0 %v1736
        %2106 = vmatpush.bf16.msra.mxu0 %v1728
        %2107 = vmatpush.bf16.msra.mxu0 %v1720
        %2108 = vmatpush.bf16.msra.mxu0 %v1712
        %2109 = vmatpush.bf16.msra.mxu0 %v1704
        %2110 = vmatpush.bf16.msra.mxu0 %v1696
        %2111 = vmatmul.bf16.gmra.mxu0 %v449
        %v2112 = vpop.f32.mrf.mxu0
        %v2113 = vadd.f32 %v2084, %v2112
        %v2114 = vpop.f32.mrf.mxu0
        %v2115 = vadd.f32 %v2086, %v2114
        %2116 = vmatmul.bf16.gmra.mxu0 %v453
        %v2117 = vpop.f32.mrf.mxu0
        %v2118 = vadd.f32 %v2089, %v2117
        %v2119 = vpop.f32.mrf.mxu0
        %v2120 = vadd.f32 %v2091, %v2119
        %2121 = vmatmul.bf16.gmra.mxu0 %v457
        %v2122 = vpop.f32.mrf.mxu0
        %v2123 = vadd.f32 %v2094, %v2122
        %v2124 = vpop.f32.mrf.mxu0
        %v2125 = vadd.f32 %v2096, %v2124
        %2126 = vmatmul.bf16.gmra.mxu0 %v461
        %v2127 = vpop.f32.mrf.mxu0
        %v2128 = vadd.f32 %v2099, %v2127
        %v2129 = vpop.f32.mrf.mxu0
        %v2130 = vadd.f32 %v2101, %v2129
        %2131 = vdwg.mxu0
        %2132 = vmatpush.bf16.msra.mxu0 %v1561
        %2133 = vmatpush.bf16.msra.mxu0 %v1553
        %2134 = vmatpush.bf16.msra.mxu0 %v1545
        %2135 = vmatpush.bf16.msra.mxu0 %v1537
        %2136 = vmatpush.bf16.msra.mxu0 %v1529
        %2137 = vmatpush.bf16.msra.mxu0 %v1521
        %2138 = vmatpush.bf16.msra.mxu0 %v1513
        %2139 = vmatpush.bf16.msra.mxu0 %v1505
        %2140 = vmatmul.bf16.gmra.mxu0 %v446
        %v2141 = vpop.f32.mrf.mxu0
        %v2142 = vadd.f32 %v721, %v2141
        %v2143 = vpop.f32.mrf.mxu0
        %v2144 = vadd.f32 %v721, %v2143
        %2145 = vmatmul.bf16.gmra.mxu0 %v450
        %v2146 = vpop.f32.mrf.mxu0
        %v2147 = vadd.f32 %v721, %v2146
        %v2148 = vpop.f32.mrf.mxu0
        %v2149 = vadd.f32 %v721, %v2148
        %2150 = vmatmul.bf16.gmra.mxu0 %v454
        %v2151 = vpop.f32.mrf.mxu0
        %v2152 = vadd.f32 %v721, %v2151
        %v2153 = vpop.f32.mrf.mxu0
        %v2154 = vadd.f32 %v721, %v2153
        %2155 = vmatmul.bf16.gmra.mxu0 %v458
        %v2156 = vpop.f32.mrf.mxu0
        %v2157 = vadd.f32 %v721, %v2156
        %v2158 = vpop.f32.mrf.mxu0
        %v2159 = vadd.f32 %v721, %v2158
        %2160 = vdwg.mxu0
        %2161 = vmatpush.bf16.msra.mxu0 %v1625
        %2162 = vmatpush.bf16.msra.mxu0 %v1617
        %2163 = vmatpush.bf16.msra.mxu0 %v1609
        %2164 = vmatpush.bf16.msra.mxu0 %v1601
        %2165 = vmatpush.bf16.msra.mxu0 %v1593
        %2166 = vmatpush.bf16.msra.mxu0 %v1585
        %2167 = vmatpush.bf16.msra.mxu0 %v1577
        %2168 = vmatpush.bf16.msra.mxu0 %v1569
        %2169 = vmatmul.bf16.gmra.mxu0 %v447
        %v2170 = vpop.f32.mrf.mxu0
        %v2171 = vadd.f32 %v2142, %v2170
        %v2172 = vpop.f32.mrf.mxu0
        %v2173 = vadd.f32 %v2144, %v2172
        %2174 = vmatmul.bf16.gmra.mxu0 %v451
        %v2175 = vpop.f32.mrf.mxu0
        %v2176 = vadd.f32 %v2147, %v2175
        %v2177 = vpop.f32.mrf.mxu0
        %v2178 = vadd.f32 %v2149, %v2177
        %2179 = vmatmul.bf16.gmra.mxu0 %v455
        %v2180 = vpop.f32.mrf.mxu0
        %v2181 = vadd.f32 %v2152, %v2180
        %v2182 = vpop.f32.mrf.mxu0
        %v2183 = vadd.f32 %v2154, %v2182
        %2184 = vmatmul.bf16.gmra.mxu0 %v459
        %v2185 = vpop.f32.mrf.mxu0
        %v2186 = vadd.f32 %v2157, %v2185
        %v2187 = vpop.f32.mrf.mxu0
        %v2188 = vadd.f32 %v2159, %v2187
        %2189 = vdwg.mxu0
        %2190 = vmatpush.bf16.msra.mxu0 %v1689
        %2191 = vmatpush.bf16.msra.mxu0 %v1681
        %2192 = vmatpush.bf16.msra.mxu0 %v1673
        %2193 = vmatpush.bf16.msra.mxu0 %v1665
        %2194 = vmatpush.bf16.msra.mxu0 %v1657
        %2195 = vmatpush.bf16.msra.mxu0 %v1649
        %2196 = vmatpush.bf16.msra.mxu0 %v1641
        %2197 = vmatpush.bf16.msra.mxu0 %v1633
        %2198 = vmatmul.bf16.gmra.mxu0 %v448
        %v2199 = vpop.f32.mrf.mxu0
        %v2200 = vadd.f32 %v2171, %v2199
        %v2201 = vpop.f32.mrf.mxu0
        %v2202 = vadd.f32 %v2173, %v2201
        %2203 = vmatmul.bf16.gmra.mxu0 %v452
        %v2204 = vpop.f32.mrf.mxu0
        %v2205 = vadd.f32 %v2176, %v2204
        %v2206 = vpop.f32.mrf.mxu0
        %v2207 = vadd.f32 %v2178, %v2206
        %2208 = vmatmul.bf16.gmra.mxu0 %v456
        %v2209 = vpop.f32.mrf.mxu0
        %v2210 = vadd.f32 %v2181, %v2209
        %v2211 = vpop.f32.mrf.mxu0
        %v2212 = vadd.f32 %v2183, %v2211
        %2213 = vmatmul.bf16.gmra.mxu0 %v460
        %v2214 = vpop.f32.mrf.mxu0
        %v2215 = vadd.f32 %v2186, %v2214
        %v2216 = vpop.f32.mrf.mxu0
        %v2217 = vadd.f32 %v2188, %v2216
        %2218 = vdwg.mxu0
        %2219 = vmatpush.bf16.msra.mxu0 %v1753
        %2220 = vmatpush.bf16.msra.mxu0 %v1745
        %2221 = vmatpush.bf16.msra.mxu0 %v1737
        %2222 = vmatpush.bf16.msra.mxu0 %v1729
        %2223 = vmatpush.bf16.msra.mxu0 %v1721
        %2224 = vmatpush.bf16.msra.mxu0 %v1713
        %2225 = vmatpush.bf16.msra.mxu0 %v1705
        %2226 = vmatpush.bf16.msra.mxu0 %v1697
        %2227 = vmatmul.bf16.gmra.mxu0 %v449
        %v2228 = vpop.f32.mrf.mxu0
        %v2229 = vadd.f32 %v2200, %v2228
        %v2230 = vpop.f32.mrf.mxu0
        %v2231 = vadd.f32 %v2202, %v2230
        %2232 = vmatmul.bf16.gmra.mxu0 %v453
        %v2233 = vpop.f32.mrf.mxu0
        %v2234 = vadd.f32 %v2205, %v2233
        %v2235 = vpop.f32.mrf.mxu0
        %v2236 = vadd.f32 %v2207, %v2235
        %2237 = vmatmul.bf16.gmra.mxu0 %v457
        %v2238 = vpop.f32.mrf.mxu0
        %v2239 = vadd.f32 %v2210, %v2238
        %v2240 = vpop.f32.mrf.mxu0
        %v2241 = vadd.f32 %v2212, %v2240
        %2242 = vmatmul.bf16.gmra.mxu0 %v461
        %v2243 = vpop.f32.mrf.mxu0
        %v2244 = vadd.f32 %v2215, %v2243
        %v2245 = vpop.f32.mrf.mxu0
        %v2246 = vadd.f32 %v2217, %v2245
        %2247 = vdwg.mxu0
        %2248 = vmatpush.bf16.msra.mxu0 %v1562
        %2249 = vmatpush.bf16.msra.mxu0 %v1554
        %2250 = vmatpush.bf16.msra.mxu0 %v1546
        %2251 = vmatpush.bf16.msra.mxu0 %v1538
        %2252 = vmatpush.bf16.msra.mxu0 %v1530
        %2253 = vmatpush.bf16.msra.mxu0 %v1522
        %2254 = vmatpush.bf16.msra.mxu0 %v1514
        %2255 = vmatpush.bf16.msra.mxu0 %v1506
        %2256 = vmatmul.bf16.gmra.mxu0 %v446
        %v2257 = vpop.f32.mrf.mxu0
        %v2258 = vadd.f32 %v722, %v2257
        %v2259 = vpop.f32.mrf.mxu0
        %v2260 = vadd.f32 %v722, %v2259
        %2261 = vmatmul.bf16.gmra.mxu0 %v450
        %v2262 = vpop.f32.mrf.mxu0
        %v2263 = vadd.f32 %v722, %v2262
        %v2264 = vpop.f32.mrf.mxu0
        %v2265 = vadd.f32 %v722, %v2264
        %2266 = vmatmul.bf16.gmra.mxu0 %v454
        %v2267 = vpop.f32.mrf.mxu0
        %v2268 = vadd.f32 %v722, %v2267
        %v2269 = vpop.f32.mrf.mxu0
        %v2270 = vadd.f32 %v722, %v2269
        %2271 = vmatmul.bf16.gmra.mxu0 %v458
        %v2272 = vpop.f32.mrf.mxu0
        %v2273 = vadd.f32 %v722, %v2272
        %v2274 = vpop.f32.mrf.mxu0
        %v2275 = vadd.f32 %v722, %v2274
        %2276 = vdwg.mxu0
        %2277 = vmatpush.bf16.msra.mxu0 %v1626
        %2278 = vmatpush.bf16.msra.mxu0 %v1618
        %2279 = vmatpush.bf16.msra.mxu0 %v1610
        %2280 = vmatpush.bf16.msra.mxu0 %v1602
        %2281 = vmatpush.bf16.msra.mxu0 %v1594
        %2282 = vmatpush.bf16.msra.mxu0 %v1586
        %2283 = vmatpush.bf16.msra.mxu0 %v1578
        %2284 = vmatpush.bf16.msra.mxu0 %v1570
        %2285 = vmatmul.bf16.gmra.mxu0 %v447
        %v2286 = vpop.f32.mrf.mxu0
        %v2287 = vadd.f32 %v2258, %v2286
        %v2288 = vpop.f32.mrf.mxu0
        %v2289 = vadd.f32 %v2260, %v2288
        %2290 = vmatmul.bf16.gmra.mxu0 %v451
        %v2291 = vpop.f32.mrf.mxu0
        %v2292 = vadd.f32 %v2263, %v2291
        %v2293 = vpop.f32.mrf.mxu0
        %v2294 = vadd.f32 %v2265, %v2293
        %2295 = vmatmul.bf16.gmra.mxu0 %v455
        %v2296 = vpop.f32.mrf.mxu0
        %v2297 = vadd.f32 %v2268, %v2296
        %v2298 = vpop.f32.mrf.mxu0
        %v2299 = vadd.f32 %v2270, %v2298
        %2300 = vmatmul.bf16.gmra.mxu0 %v459
        %v2301 = vpop.f32.mrf.mxu0
        %v2302 = vadd.f32 %v2273, %v2301
        %v2303 = vpop.f32.mrf.mxu0
        %v2304 = vadd.f32 %v2275, %v2303
        %2305 = vdwg.mxu0
        %2306 = vmatpush.bf16.msra.mxu0 %v1690
        %2307 = vmatpush.bf16.msra.mxu0 %v1682
        %2308 = vmatpush.bf16.msra.mxu0 %v1674
        %2309 = vmatpush.bf16.msra.mxu0 %v1666
        %2310 = vmatpush.bf16.msra.mxu0 %v1658
        %2311 = vmatpush.bf16.msra.mxu0 %v1650
        %2312 = vmatpush.bf16.msra.mxu0 %v1642
        %2313 = vmatpush.bf16.msra.mxu0 %v1634
        %2314 = vmatmul.bf16.gmra.mxu0 %v448
        %v2315 = vpop.f32.mrf.mxu0
        %v2316 = vadd.f32 %v2287, %v2315
        %v2317 = vpop.f32.mrf.mxu0
        %v2318 = vadd.f32 %v2289, %v2317
        %2319 = vmatmul.bf16.gmra.mxu0 %v452
        %v2320 = vpop.f32.mrf.mxu0
        %v2321 = vadd.f32 %v2292, %v2320
        %v2322 = vpop.f32.mrf.mxu0
        %v2323 = vadd.f32 %v2294, %v2322
        %2324 = vmatmul.bf16.gmra.mxu0 %v456
        %v2325 = vpop.f32.mrf.mxu0
        %v2326 = vadd.f32 %v2297, %v2325
        %v2327 = vpop.f32.mrf.mxu0
        %v2328 = vadd.f32 %v2299, %v2327
        %2329 = vmatmul.bf16.gmra.mxu0 %v460
        %v2330 = vpop.f32.mrf.mxu0
        %v2331 = vadd.f32 %v2302, %v2330
        %v2332 = vpop.f32.mrf.mxu0
        %v2333 = vadd.f32 %v2304, %v2332
        %2334 = vdwg.mxu0
        %2335 = vmatpush.bf16.msra.mxu0 %v1754
        %2336 = vmatpush.bf16.msra.mxu0 %v1746
        %2337 = vmatpush.bf16.msra.mxu0 %v1738
        %2338 = vmatpush.bf16.msra.mxu0 %v1730
        %2339 = vmatpush.bf16.msra.mxu0 %v1722
        %2340 = vmatpush.bf16.msra.mxu0 %v1714
        %2341 = vmatpush.bf16.msra.mxu0 %v1706
        %2342 = vmatpush.bf16.msra.mxu0 %v1698
        %2343 = vmatmul.bf16.gmra.mxu0 %v449
        %v2344 = vpop.f32.mrf.mxu0
        %v2345 = vadd.f32 %v2316, %v2344
        %v2346 = vpop.f32.mrf.mxu0
        %v2347 = vadd.f32 %v2318, %v2346
        %2348 = vmatmul.bf16.gmra.mxu0 %v453
        %v2349 = vpop.f32.mrf.mxu0
        %v2350 = vadd.f32 %v2321, %v2349
        %v2351 = vpop.f32.mrf.mxu0
        %v2352 = vadd.f32 %v2323, %v2351
        %2353 = vmatmul.bf16.gmra.mxu0 %v457
        %v2354 = vpop.f32.mrf.mxu0
        %v2355 = vadd.f32 %v2326, %v2354
        %v2356 = vpop.f32.mrf.mxu0
        %v2357 = vadd.f32 %v2328, %v2356
        %2358 = vmatmul.bf16.gmra.mxu0 %v461
        %v2359 = vpop.f32.mrf.mxu0
        %v2360 = vadd.f32 %v2331, %v2359
        %v2361 = vpop.f32.mrf.mxu0
        %v2362 = vadd.f32 %v2333, %v2361
        %2363 = vdwg.mxu0
        %2364 = vmatpush.bf16.msra.mxu0 %v1563
        %2365 = vmatpush.bf16.msra.mxu0 %v1555
        %2366 = vmatpush.bf16.msra.mxu0 %v1547
        %2367 = vmatpush.bf16.msra.mxu0 %v1539
        %2368 = vmatpush.bf16.msra.mxu0 %v1531
        %2369 = vmatpush.bf16.msra.mxu0 %v1523
        %2370 = vmatpush.bf16.msra.mxu0 %v1515
        %2371 = vmatpush.bf16.msra.mxu0 %v1507
        %2372 = vmatmul.bf16.gmra.mxu0 %v446
        %v2373 = vpop.f32.mrf.mxu0
        %v2374 = vadd.f32 %v723, %v2373
        %v2375 = vpop.f32.mrf.mxu0
        %v2376 = vadd.f32 %v723, %v2375
        %2377 = vmatmul.bf16.gmra.mxu0 %v450
        %v2378 = vpop.f32.mrf.mxu0
        %v2379 = vadd.f32 %v723, %v2378
        %v2380 = vpop.f32.mrf.mxu0
        %v2381 = vadd.f32 %v723, %v2380
        %2382 = vmatmul.bf16.gmra.mxu0 %v454
        %v2383 = vpop.f32.mrf.mxu0
        %v2384 = vadd.f32 %v723, %v2383
        %v2385 = vpop.f32.mrf.mxu0
        %v2386 = vadd.f32 %v723, %v2385
        %2387 = vmatmul.bf16.gmra.mxu0 %v458
        %v2388 = vpop.f32.mrf.mxu0
        %v2389 = vadd.f32 %v723, %v2388
        %v2390 = vpop.f32.mrf.mxu0
        %v2391 = vadd.f32 %v723, %v2390
        %2392 = vdwg.mxu0
        %2393 = vmatpush.bf16.msra.mxu0 %v1627
        %2394 = vmatpush.bf16.msra.mxu0 %v1619
        %2395 = vmatpush.bf16.msra.mxu0 %v1611
        %2396 = vmatpush.bf16.msra.mxu0 %v1603
        %2397 = vmatpush.bf16.msra.mxu0 %v1595
        %2398 = vmatpush.bf16.msra.mxu0 %v1587
        %2399 = vmatpush.bf16.msra.mxu0 %v1579
        %2400 = vmatpush.bf16.msra.mxu0 %v1571
        %2401 = vmatmul.bf16.gmra.mxu0 %v447
        %v2402 = vpop.f32.mrf.mxu0
        %v2403 = vadd.f32 %v2374, %v2402
        %v2404 = vpop.f32.mrf.mxu0
        %v2405 = vadd.f32 %v2376, %v2404
        %2406 = vmatmul.bf16.gmra.mxu0 %v451
        %v2407 = vpop.f32.mrf.mxu0
        %v2408 = vadd.f32 %v2379, %v2407
        %v2409 = vpop.f32.mrf.mxu0
        %v2410 = vadd.f32 %v2381, %v2409
        %2411 = vmatmul.bf16.gmra.mxu0 %v455
        %v2412 = vpop.f32.mrf.mxu0
        %v2413 = vadd.f32 %v2384, %v2412
        %v2414 = vpop.f32.mrf.mxu0
        %v2415 = vadd.f32 %v2386, %v2414
        %2416 = vmatmul.bf16.gmra.mxu0 %v459
        %v2417 = vpop.f32.mrf.mxu0
        %v2418 = vadd.f32 %v2389, %v2417
        %v2419 = vpop.f32.mrf.mxu0
        %v2420 = vadd.f32 %v2391, %v2419
        %2421 = vdwg.mxu0
        %2422 = vmatpush.bf16.msra.mxu0 %v1691
        %2423 = vmatpush.bf16.msra.mxu0 %v1683
        %2424 = vmatpush.bf16.msra.mxu0 %v1675
        %2425 = vmatpush.bf16.msra.mxu0 %v1667
        %2426 = vmatpush.bf16.msra.mxu0 %v1659
        %2427 = vmatpush.bf16.msra.mxu0 %v1651
        %2428 = vmatpush.bf16.msra.mxu0 %v1643
        %2429 = vmatpush.bf16.msra.mxu0 %v1635
        %2430 = vmatmul.bf16.gmra.mxu0 %v448
        %v2431 = vpop.f32.mrf.mxu0
        %v2432 = vadd.f32 %v2403, %v2431
        %v2433 = vpop.f32.mrf.mxu0
        %v2434 = vadd.f32 %v2405, %v2433
        %2435 = vmatmul.bf16.gmra.mxu0 %v452
        %v2436 = vpop.f32.mrf.mxu0
        %v2437 = vadd.f32 %v2408, %v2436
        %v2438 = vpop.f32.mrf.mxu0
        %v2439 = vadd.f32 %v2410, %v2438
        %2440 = vmatmul.bf16.gmra.mxu0 %v456
        %v2441 = vpop.f32.mrf.mxu0
        %v2442 = vadd.f32 %v2413, %v2441
        %v2443 = vpop.f32.mrf.mxu0
        %v2444 = vadd.f32 %v2415, %v2443
        %2445 = vmatmul.bf16.gmra.mxu0 %v460
        %v2446 = vpop.f32.mrf.mxu0
        %v2447 = vadd.f32 %v2418, %v2446
        %v2448 = vpop.f32.mrf.mxu0
        %v2449 = vadd.f32 %v2420, %v2448
        %2450 = vdwg.mxu0
        %2451 = vmatpush.bf16.msra.mxu0 %v1755
        %2452 = vmatpush.bf16.msra.mxu0 %v1747
        %2453 = vmatpush.bf16.msra.mxu0 %v1739
        %2454 = vmatpush.bf16.msra.mxu0 %v1731
        %2455 = vmatpush.bf16.msra.mxu0 %v1723
        %2456 = vmatpush.bf16.msra.mxu0 %v1715
        %2457 = vmatpush.bf16.msra.mxu0 %v1707
        %2458 = vmatpush.bf16.msra.mxu0 %v1699
        %2459 = vmatmul.bf16.gmra.mxu0 %v449
        %v2460 = vpop.f32.mrf.mxu0
        %v2461 = vadd.f32 %v2432, %v2460
        %v2462 = vpop.f32.mrf.mxu0
        %v2463 = vadd.f32 %v2434, %v2462
        %2464 = vmatmul.bf16.gmra.mxu0 %v453
        %v2465 = vpop.f32.mrf.mxu0
        %v2466 = vadd.f32 %v2437, %v2465
        %v2467 = vpop.f32.mrf.mxu0
        %v2468 = vadd.f32 %v2439, %v2467
        %2469 = vmatmul.bf16.gmra.mxu0 %v457
        %v2470 = vpop.f32.mrf.mxu0
        %v2471 = vadd.f32 %v2442, %v2470
        %v2472 = vpop.f32.mrf.mxu0
        %v2473 = vadd.f32 %v2444, %v2472
        %2474 = vmatmul.bf16.gmra.mxu0 %v461
        %v2475 = vpop.f32.mrf.mxu0
        %v2476 = vadd.f32 %v2447, %v2475
        %v2477 = vpop.f32.mrf.mxu0
        %v2478 = vadd.f32 %v2449, %v2477
        %2479 = vdwg.mxu0
        %2480 = vmatpush.bf16.msra.mxu0 %v1564
        %2481 = vmatpush.bf16.msra.mxu0 %v1556
        %2482 = vmatpush.bf16.msra.mxu0 %v1548
        %2483 = vmatpush.bf16.msra.mxu0 %v1540
        %2484 = vmatpush.bf16.msra.mxu0 %v1532
        %2485 = vmatpush.bf16.msra.mxu0 %v1524
        %2486 = vmatpush.bf16.msra.mxu0 %v1516
        %2487 = vmatpush.bf16.msra.mxu0 %v1508
        %2488 = vmatmul.bf16.gmra.mxu0 %v446
        %v2489 = vpop.f32.mrf.mxu0
        %v2490 = vadd.f32 %v724, %v2489
        %v2491 = vpop.f32.mrf.mxu0
        %v2492 = vadd.f32 %v724, %v2491
        %2493 = vmatmul.bf16.gmra.mxu0 %v450
        %v2494 = vpop.f32.mrf.mxu0
        %v2495 = vadd.f32 %v724, %v2494
        %v2496 = vpop.f32.mrf.mxu0
        %v2497 = vadd.f32 %v724, %v2496
        %2498 = vmatmul.bf16.gmra.mxu0 %v454
        %v2499 = vpop.f32.mrf.mxu0
        %v2500 = vadd.f32 %v724, %v2499
        %v2501 = vpop.f32.mrf.mxu0
        %v2502 = vadd.f32 %v724, %v2501
        %2503 = vmatmul.bf16.gmra.mxu0 %v458
        %v2504 = vpop.f32.mrf.mxu0
        %v2505 = vadd.f32 %v724, %v2504
        %v2506 = vpop.f32.mrf.mxu0
        %v2507 = vadd.f32 %v724, %v2506
        %2508 = vdwg.mxu0
        %2509 = vmatpush.bf16.msra.mxu0 %v1628
        %2510 = vmatpush.bf16.msra.mxu0 %v1620
        %2511 = vmatpush.bf16.msra.mxu0 %v1612
        %2512 = vmatpush.bf16.msra.mxu0 %v1604
        %2513 = vmatpush.bf16.msra.mxu0 %v1596
        %2514 = vmatpush.bf16.msra.mxu0 %v1588
        %2515 = vmatpush.bf16.msra.mxu0 %v1580
        %2516 = vmatpush.bf16.msra.mxu0 %v1572
        %2517 = vmatmul.bf16.gmra.mxu0 %v447
        %v2518 = vpop.f32.mrf.mxu0
        %v2519 = vadd.f32 %v2490, %v2518
        %v2520 = vpop.f32.mrf.mxu0
        %v2521 = vadd.f32 %v2492, %v2520
        %2522 = vmatmul.bf16.gmra.mxu0 %v451
        %v2523 = vpop.f32.mrf.mxu0
        %v2524 = vadd.f32 %v2495, %v2523
        %v2525 = vpop.f32.mrf.mxu0
        %v2526 = vadd.f32 %v2497, %v2525
        %2527 = vmatmul.bf16.gmra.mxu0 %v455
        %v2528 = vpop.f32.mrf.mxu0
        %v2529 = vadd.f32 %v2500, %v2528
        %v2530 = vpop.f32.mrf.mxu0
        %v2531 = vadd.f32 %v2502, %v2530
        %2532 = vmatmul.bf16.gmra.mxu0 %v459
        %v2533 = vpop.f32.mrf.mxu0
        %v2534 = vadd.f32 %v2505, %v2533
        %v2535 = vpop.f32.mrf.mxu0
        %v2536 = vadd.f32 %v2507, %v2535
        %2537 = vdwg.mxu0
        %2538 = vmatpush.bf16.msra.mxu0 %v1692
        %2539 = vmatpush.bf16.msra.mxu0 %v1684
        %2540 = vmatpush.bf16.msra.mxu0 %v1676
        %2541 = vmatpush.bf16.msra.mxu0 %v1668
        %2542 = vmatpush.bf16.msra.mxu0 %v1660
        %2543 = vmatpush.bf16.msra.mxu0 %v1652
        %2544 = vmatpush.bf16.msra.mxu0 %v1644
        %2545 = vmatpush.bf16.msra.mxu0 %v1636
        %2546 = vmatmul.bf16.gmra.mxu0 %v448
        %v2547 = vpop.f32.mrf.mxu0
        %v2548 = vadd.f32 %v2519, %v2547
        %v2549 = vpop.f32.mrf.mxu0
        %v2550 = vadd.f32 %v2521, %v2549
        %2551 = vmatmul.bf16.gmra.mxu0 %v452
        %v2552 = vpop.f32.mrf.mxu0
        %v2553 = vadd.f32 %v2524, %v2552
        %v2554 = vpop.f32.mrf.mxu0
        %v2555 = vadd.f32 %v2526, %v2554
        %2556 = vmatmul.bf16.gmra.mxu0 %v456
        %v2557 = vpop.f32.mrf.mxu0
        %v2558 = vadd.f32 %v2529, %v2557
        %v2559 = vpop.f32.mrf.mxu0
        %v2560 = vadd.f32 %v2531, %v2559
        %2561 = vmatmul.bf16.gmra.mxu0 %v460
        %v2562 = vpop.f32.mrf.mxu0
        %v2563 = vadd.f32 %v2534, %v2562
        %v2564 = vpop.f32.mrf.mxu0
        %v2565 = vadd.f32 %v2536, %v2564
        %2566 = vdwg.mxu0
        %2567 = vmatpush.bf16.msra.mxu0 %v1756
        %2568 = vmatpush.bf16.msra.mxu0 %v1748
        %2569 = vmatpush.bf16.msra.mxu0 %v1740
        %2570 = vmatpush.bf16.msra.mxu0 %v1732
        %2571 = vmatpush.bf16.msra.mxu0 %v1724
        %2572 = vmatpush.bf16.msra.mxu0 %v1716
        %2573 = vmatpush.bf16.msra.mxu0 %v1708
        %2574 = vmatpush.bf16.msra.mxu0 %v1700
        %2575 = vmatmul.bf16.gmra.mxu0 %v449
        %v2576 = vpop.f32.mrf.mxu0
        %v2577 = vadd.f32 %v2548, %v2576
        %v2578 = vpop.f32.mrf.mxu0
        %v2579 = vadd.f32 %v2550, %v2578
        %2580 = vmatmul.bf16.gmra.mxu0 %v453
        %v2581 = vpop.f32.mrf.mxu0
        %v2582 = vadd.f32 %v2553, %v2581
        %v2583 = vpop.f32.mrf.mxu0
        %v2584 = vadd.f32 %v2555, %v2583
        %2585 = vmatmul.bf16.gmra.mxu0 %v457
        %v2586 = vpop.f32.mrf.mxu0
        %v2587 = vadd.f32 %v2558, %v2586
        %v2588 = vpop.f32.mrf.mxu0
        %v2589 = vadd.f32 %v2560, %v2588
        %2590 = vmatmul.bf16.gmra.mxu0 %v461
        %v2591 = vpop.f32.mrf.mxu0
        %v2592 = vadd.f32 %v2563, %v2591
        %v2593 = vpop.f32.mrf.mxu0
        %v2594 = vadd.f32 %v2565, %v2593
        %2595 = vdwg.mxu0
        %2596 = vmatpush.bf16.msra.mxu0 %v1565
        %2597 = vmatpush.bf16.msra.mxu0 %v1557
        %2598 = vmatpush.bf16.msra.mxu0 %v1549
        %2599 = vmatpush.bf16.msra.mxu0 %v1541
        %2600 = vmatpush.bf16.msra.mxu0 %v1533
        %2601 = vmatpush.bf16.msra.mxu0 %v1525
        %2602 = vmatpush.bf16.msra.mxu0 %v1517
        %2603 = vmatpush.bf16.msra.mxu0 %v1509
        %2604 = vmatmul.bf16.gmra.mxu0 %v446
        %v2605 = vpop.f32.mrf.mxu0
        %v2606 = vadd.f32 %v725, %v2605
        %v2607 = vpop.f32.mrf.mxu0
        %v2608 = vadd.f32 %v725, %v2607
        %2609 = vmatmul.bf16.gmra.mxu0 %v450
        %v2610 = vpop.f32.mrf.mxu0
        %v2611 = vadd.f32 %v725, %v2610
        %v2612 = vpop.f32.mrf.mxu0
        %v2613 = vadd.f32 %v725, %v2612
        %2614 = vmatmul.bf16.gmra.mxu0 %v454
        %v2615 = vpop.f32.mrf.mxu0
        %v2616 = vadd.f32 %v725, %v2615
        %v2617 = vpop.f32.mrf.mxu0
        %v2618 = vadd.f32 %v725, %v2617
        %2619 = vmatmul.bf16.gmra.mxu0 %v458
        %v2620 = vpop.f32.mrf.mxu0
        %v2621 = vadd.f32 %v725, %v2620
        %v2622 = vpop.f32.mrf.mxu0
        %v2623 = vadd.f32 %v725, %v2622
        %2624 = vdwg.mxu0
        %2625 = vmatpush.bf16.msra.mxu0 %v1629
        %2626 = vmatpush.bf16.msra.mxu0 %v1621
        %2627 = vmatpush.bf16.msra.mxu0 %v1613
        %2628 = vmatpush.bf16.msra.mxu0 %v1605
        %2629 = vmatpush.bf16.msra.mxu0 %v1597
        %2630 = vmatpush.bf16.msra.mxu0 %v1589
        %2631 = vmatpush.bf16.msra.mxu0 %v1581
        %2632 = vmatpush.bf16.msra.mxu0 %v1573
        %2633 = vmatmul.bf16.gmra.mxu0 %v447
        %v2634 = vpop.f32.mrf.mxu0
        %v2635 = vadd.f32 %v2606, %v2634
        %v2636 = vpop.f32.mrf.mxu0
        %v2637 = vadd.f32 %v2608, %v2636
        %2638 = vmatmul.bf16.gmra.mxu0 %v451
        %v2639 = vpop.f32.mrf.mxu0
        %v2640 = vadd.f32 %v2611, %v2639
        %v2641 = vpop.f32.mrf.mxu0
        %v2642 = vadd.f32 %v2613, %v2641
        %2643 = vmatmul.bf16.gmra.mxu0 %v455
        %v2644 = vpop.f32.mrf.mxu0
        %v2645 = vadd.f32 %v2616, %v2644
        %v2646 = vpop.f32.mrf.mxu0
        %v2647 = vadd.f32 %v2618, %v2646
        %2648 = vmatmul.bf16.gmra.mxu0 %v459
        %v2649 = vpop.f32.mrf.mxu0
        %v2650 = vadd.f32 %v2621, %v2649
        %v2651 = vpop.f32.mrf.mxu0
        %v2652 = vadd.f32 %v2623, %v2651
        %2653 = vdwg.mxu0
        %2654 = vmatpush.bf16.msra.mxu0 %v1693
        %2655 = vmatpush.bf16.msra.mxu0 %v1685
        %2656 = vmatpush.bf16.msra.mxu0 %v1677
        %2657 = vmatpush.bf16.msra.mxu0 %v1669
        %2658 = vmatpush.bf16.msra.mxu0 %v1661
        %2659 = vmatpush.bf16.msra.mxu0 %v1653
        %2660 = vmatpush.bf16.msra.mxu0 %v1645
        %2661 = vmatpush.bf16.msra.mxu0 %v1637
        %2662 = vmatmul.bf16.gmra.mxu0 %v448
        %v2663 = vpop.f32.mrf.mxu0
        %v2664 = vadd.f32 %v2635, %v2663
        %v2665 = vpop.f32.mrf.mxu0
        %v2666 = vadd.f32 %v2637, %v2665
        %2667 = vmatmul.bf16.gmra.mxu0 %v452
        %v2668 = vpop.f32.mrf.mxu0
        %v2669 = vadd.f32 %v2640, %v2668
        %v2670 = vpop.f32.mrf.mxu0
        %v2671 = vadd.f32 %v2642, %v2670
        %2672 = vmatmul.bf16.gmra.mxu0 %v456
        %v2673 = vpop.f32.mrf.mxu0
        %v2674 = vadd.f32 %v2645, %v2673
        %v2675 = vpop.f32.mrf.mxu0
        %v2676 = vadd.f32 %v2647, %v2675
        %2677 = vmatmul.bf16.gmra.mxu0 %v460
        %v2678 = vpop.f32.mrf.mxu0
        %v2679 = vadd.f32 %v2650, %v2678
        %v2680 = vpop.f32.mrf.mxu0
        %v2681 = vadd.f32 %v2652, %v2680
        %2682 = vdwg.mxu0
        %2683 = vmatpush.bf16.msra.mxu0 %v1757
        %2684 = vmatpush.bf16.msra.mxu0 %v1749
        %2685 = vmatpush.bf16.msra.mxu0 %v1741
        %2686 = vmatpush.bf16.msra.mxu0 %v1733
        %2687 = vmatpush.bf16.msra.mxu0 %v1725
        %2688 = vmatpush.bf16.msra.mxu0 %v1717
        %2689 = vmatpush.bf16.msra.mxu0 %v1709
        %2690 = vmatpush.bf16.msra.mxu0 %v1701
        %2691 = vmatmul.bf16.gmra.mxu0 %v449
        %v2692 = vpop.f32.mrf.mxu0
        %v2693 = vadd.f32 %v2664, %v2692
        %v2694 = vpop.f32.mrf.mxu0
        %v2695 = vadd.f32 %v2666, %v2694
        %2696 = vmatmul.bf16.gmra.mxu0 %v453
        %v2697 = vpop.f32.mrf.mxu0
        %v2698 = vadd.f32 %v2669, %v2697
        %v2699 = vpop.f32.mrf.mxu0
        %v2700 = vadd.f32 %v2671, %v2699
        %2701 = vmatmul.bf16.gmra.mxu0 %v457
        %v2702 = vpop.f32.mrf.mxu0
        %v2703 = vadd.f32 %v2674, %v2702
        %v2704 = vpop.f32.mrf.mxu0
        %v2705 = vadd.f32 %v2676, %v2704
        %2706 = vmatmul.bf16.gmra.mxu0 %v461
        %v2707 = vpop.f32.mrf.mxu0
        %v2708 = vadd.f32 %v2679, %v2707
        %v2709 = vpop.f32.mrf.mxu0
        %v2710 = vadd.f32 %v2681, %v2709
        %2711 = vdwg.mxu0
        %2712 = vmatpush.bf16.msra.mxu0 %v1566
        %2713 = vmatpush.bf16.msra.mxu0 %v1558
        %2714 = vmatpush.bf16.msra.mxu0 %v1550
        %2715 = vmatpush.bf16.msra.mxu0 %v1542
        %2716 = vmatpush.bf16.msra.mxu0 %v1534
        %2717 = vmatpush.bf16.msra.mxu0 %v1526
        %2718 = vmatpush.bf16.msra.mxu0 %v1518
        %2719 = vmatpush.bf16.msra.mxu0 %v1510
        %2720 = vmatmul.bf16.gmra.mxu0 %v446
        %v2721 = vpop.f32.mrf.mxu0
        %v2722 = vadd.f32 %v726, %v2721
        %v2723 = vpop.f32.mrf.mxu0
        %v2724 = vadd.f32 %v726, %v2723
        %2725 = vmatmul.bf16.gmra.mxu0 %v450
        %v2726 = vpop.f32.mrf.mxu0
        %v2727 = vadd.f32 %v726, %v2726
        %v2728 = vpop.f32.mrf.mxu0
        %v2729 = vadd.f32 %v726, %v2728
        %2730 = vmatmul.bf16.gmra.mxu0 %v454
        %v2731 = vpop.f32.mrf.mxu0
        %v2732 = vadd.f32 %v726, %v2731
        %v2733 = vpop.f32.mrf.mxu0
        %v2734 = vadd.f32 %v726, %v2733
        %2735 = vmatmul.bf16.gmra.mxu0 %v458
        %v2736 = vpop.f32.mrf.mxu0
        %v2737 = vadd.f32 %v726, %v2736
        %v2738 = vpop.f32.mrf.mxu0
        %v2739 = vadd.f32 %v726, %v2738
        %2740 = vdwg.mxu0
        %2741 = vmatpush.bf16.msra.mxu0 %v1630
        %2742 = vmatpush.bf16.msra.mxu0 %v1622
        %2743 = vmatpush.bf16.msra.mxu0 %v1614
        %2744 = vmatpush.bf16.msra.mxu0 %v1606
        %2745 = vmatpush.bf16.msra.mxu0 %v1598
        %2746 = vmatpush.bf16.msra.mxu0 %v1590
        %2747 = vmatpush.bf16.msra.mxu0 %v1582
        %2748 = vmatpush.bf16.msra.mxu0 %v1574
        %2749 = vmatmul.bf16.gmra.mxu0 %v447
        %v2750 = vpop.f32.mrf.mxu0
        %v2751 = vadd.f32 %v2722, %v2750
        %v2752 = vpop.f32.mrf.mxu0
        %v2753 = vadd.f32 %v2724, %v2752
        %2754 = vmatmul.bf16.gmra.mxu0 %v451
        %v2755 = vpop.f32.mrf.mxu0
        %v2756 = vadd.f32 %v2727, %v2755
        %v2757 = vpop.f32.mrf.mxu0
        %v2758 = vadd.f32 %v2729, %v2757
        %2759 = vmatmul.bf16.gmra.mxu0 %v455
        %v2760 = vpop.f32.mrf.mxu0
        %v2761 = vadd.f32 %v2732, %v2760
        %v2762 = vpop.f32.mrf.mxu0
        %v2763 = vadd.f32 %v2734, %v2762
        %2764 = vmatmul.bf16.gmra.mxu0 %v459
        %v2765 = vpop.f32.mrf.mxu0
        %v2766 = vadd.f32 %v2737, %v2765
        %v2767 = vpop.f32.mrf.mxu0
        %v2768 = vadd.f32 %v2739, %v2767
        %2769 = vdwg.mxu0
        %2770 = vmatpush.bf16.msra.mxu0 %v1694
        %2771 = vmatpush.bf16.msra.mxu0 %v1686
        %2772 = vmatpush.bf16.msra.mxu0 %v1678
        %2773 = vmatpush.bf16.msra.mxu0 %v1670
        %2774 = vmatpush.bf16.msra.mxu0 %v1662
        %2775 = vmatpush.bf16.msra.mxu0 %v1654
        %2776 = vmatpush.bf16.msra.mxu0 %v1646
        %2777 = vmatpush.bf16.msra.mxu0 %v1638
        %2778 = vmatmul.bf16.gmra.mxu0 %v448
        %v2779 = vpop.f32.mrf.mxu0
        %v2780 = vadd.f32 %v2751, %v2779
        %v2781 = vpop.f32.mrf.mxu0
        %v2782 = vadd.f32 %v2753, %v2781
        %2783 = vmatmul.bf16.gmra.mxu0 %v452
        %v2784 = vpop.f32.mrf.mxu0
        %v2785 = vadd.f32 %v2756, %v2784
        %v2786 = vpop.f32.mrf.mxu0
        %v2787 = vadd.f32 %v2758, %v2786
        %2788 = vmatmul.bf16.gmra.mxu0 %v456
        %v2789 = vpop.f32.mrf.mxu0
        %v2790 = vadd.f32 %v2761, %v2789
        %v2791 = vpop.f32.mrf.mxu0
        %v2792 = vadd.f32 %v2763, %v2791
        %2793 = vmatmul.bf16.gmra.mxu0 %v460
        %v2794 = vpop.f32.mrf.mxu0
        %v2795 = vadd.f32 %v2766, %v2794
        %v2796 = vpop.f32.mrf.mxu0
        %v2797 = vadd.f32 %v2768, %v2796
        %2798 = vdwg.mxu0
        %2799 = vmatpush.bf16.msra.mxu0 %v1758
        %2800 = vmatpush.bf16.msra.mxu0 %v1750
        %2801 = vmatpush.bf16.msra.mxu0 %v1742
        %2802 = vmatpush.bf16.msra.mxu0 %v1734
        %2803 = vmatpush.bf16.msra.mxu0 %v1726
        %2804 = vmatpush.bf16.msra.mxu0 %v1718
        %2805 = vmatpush.bf16.msra.mxu0 %v1710
        %2806 = vmatpush.bf16.msra.mxu0 %v1702
        %2807 = vmatmul.bf16.gmra.mxu0 %v449
        %v2808 = vpop.f32.mrf.mxu0
        %v2809 = vadd.f32 %v2780, %v2808
        %v2810 = vpop.f32.mrf.mxu0
        %v2811 = vadd.f32 %v2782, %v2810
        %2812 = vmatmul.bf16.gmra.mxu0 %v453
        %v2813 = vpop.f32.mrf.mxu0
        %v2814 = vadd.f32 %v2785, %v2813
        %v2815 = vpop.f32.mrf.mxu0
        %v2816 = vadd.f32 %v2787, %v2815
        %2817 = vmatmul.bf16.gmra.mxu0 %v457
        %v2818 = vpop.f32.mrf.mxu0
        %v2819 = vadd.f32 %v2790, %v2818
        %v2820 = vpop.f32.mrf.mxu0
        %v2821 = vadd.f32 %v2792, %v2820
        %2822 = vmatmul.bf16.gmra.mxu0 %v461
        %v2823 = vpop.f32.mrf.mxu0
        %v2824 = vadd.f32 %v2795, %v2823
        %v2825 = vpop.f32.mrf.mxu0
        %v2826 = vadd.f32 %v2797, %v2825
        %2827 = vdwg.mxu0
        %2828 = vmatpush.bf16.msra.mxu0 %v1567
        %2829 = vmatpush.bf16.msra.mxu0 %v1559
        %2830 = vmatpush.bf16.msra.mxu0 %v1551
        %2831 = vmatpush.bf16.msra.mxu0 %v1543
        %2832 = vmatpush.bf16.msra.mxu0 %v1535
        %2833 = vmatpush.bf16.msra.mxu0 %v1527
        %2834 = vmatpush.bf16.msra.mxu0 %v1519
        %2835 = vmatpush.bf16.msra.mxu0 %v1511
        %2836 = vmatmul.bf16.gmra.mxu0 %v446
        %v2837 = vpop.f32.mrf.mxu0
        %v2838 = vadd.f32 %v727, %v2837
        %v2839 = vpop.f32.mrf.mxu0
        %v2840 = vadd.f32 %v727, %v2839
        %2841 = vmatmul.bf16.gmra.mxu0 %v450
        %v2842 = vpop.f32.mrf.mxu0
        %v2843 = vadd.f32 %v727, %v2842
        %v2844 = vpop.f32.mrf.mxu0
        %v2845 = vadd.f32 %v727, %v2844
        %2846 = vmatmul.bf16.gmra.mxu0 %v454
        %v2847 = vpop.f32.mrf.mxu0
        %v2848 = vadd.f32 %v727, %v2847
        %v2849 = vpop.f32.mrf.mxu0
        %v2850 = vadd.f32 %v727, %v2849
        %2851 = vmatmul.bf16.gmra.mxu0 %v458
        %v2852 = vpop.f32.mrf.mxu0
        %v2853 = vadd.f32 %v727, %v2852
        %v2854 = vpop.f32.mrf.mxu0
        %v2855 = vadd.f32 %v727, %v2854
        %2856 = vdwg.mxu0
        %2857 = vmatpush.bf16.msra.mxu0 %v1631
        %2858 = vmatpush.bf16.msra.mxu0 %v1623
        %2859 = vmatpush.bf16.msra.mxu0 %v1615
        %2860 = vmatpush.bf16.msra.mxu0 %v1607
        %2861 = vmatpush.bf16.msra.mxu0 %v1599
        %2862 = vmatpush.bf16.msra.mxu0 %v1591
        %2863 = vmatpush.bf16.msra.mxu0 %v1583
        %2864 = vmatpush.bf16.msra.mxu0 %v1575
        %2865 = vmatmul.bf16.gmra.mxu0 %v447
        %v2866 = vpop.f32.mrf.mxu0
        %v2867 = vadd.f32 %v2838, %v2866
        %v2868 = vpop.f32.mrf.mxu0
        %v2869 = vadd.f32 %v2840, %v2868
        %2870 = vmatmul.bf16.gmra.mxu0 %v451
        %v2871 = vpop.f32.mrf.mxu0
        %v2872 = vadd.f32 %v2843, %v2871
        %v2873 = vpop.f32.mrf.mxu0
        %v2874 = vadd.f32 %v2845, %v2873
        %2875 = vmatmul.bf16.gmra.mxu0 %v455
        %v2876 = vpop.f32.mrf.mxu0
        %v2877 = vadd.f32 %v2848, %v2876
        %v2878 = vpop.f32.mrf.mxu0
        %v2879 = vadd.f32 %v2850, %v2878
        %2880 = vmatmul.bf16.gmra.mxu0 %v459
        %v2881 = vpop.f32.mrf.mxu0
        %v2882 = vadd.f32 %v2853, %v2881
        %v2883 = vpop.f32.mrf.mxu0
        %v2884 = vadd.f32 %v2855, %v2883
        %2885 = vdwg.mxu0
        %2886 = vmatpush.bf16.msra.mxu0 %v1695
        %2887 = vmatpush.bf16.msra.mxu0 %v1687
        %2888 = vmatpush.bf16.msra.mxu0 %v1679
        %2889 = vmatpush.bf16.msra.mxu0 %v1671
        %2890 = vmatpush.bf16.msra.mxu0 %v1663
        %2891 = vmatpush.bf16.msra.mxu0 %v1655
        %2892 = vmatpush.bf16.msra.mxu0 %v1647
        %2893 = vmatpush.bf16.msra.mxu0 %v1639
        %2894 = vmatmul.bf16.gmra.mxu0 %v448
        %v2895 = vpop.f32.mrf.mxu0
        %v2896 = vadd.f32 %v2867, %v2895
        %v2897 = vpop.f32.mrf.mxu0
        %v2898 = vadd.f32 %v2869, %v2897
        %2899 = vmatmul.bf16.gmra.mxu0 %v452
        %v2900 = vpop.f32.mrf.mxu0
        %v2901 = vadd.f32 %v2872, %v2900
        %v2902 = vpop.f32.mrf.mxu0
        %v2903 = vadd.f32 %v2874, %v2902
        %2904 = vmatmul.bf16.gmra.mxu0 %v456
        %v2905 = vpop.f32.mrf.mxu0
        %v2906 = vadd.f32 %v2877, %v2905
        %v2907 = vpop.f32.mrf.mxu0
        %v2908 = vadd.f32 %v2879, %v2907
        %2909 = vmatmul.bf16.gmra.mxu0 %v460
        %v2910 = vpop.f32.mrf.mxu0
        %v2911 = vadd.f32 %v2882, %v2910
        %v2912 = vpop.f32.mrf.mxu0
        %v2913 = vadd.f32 %v2884, %v2912
        %2914 = vdwg.mxu0
        %2915 = vmatpush.bf16.msra.mxu0 %v1759
        %2916 = vmatpush.bf16.msra.mxu0 %v1751
        %2917 = vmatpush.bf16.msra.mxu0 %v1743
        %2918 = vmatpush.bf16.msra.mxu0 %v1735
        %2919 = vmatpush.bf16.msra.mxu0 %v1727
        %2920 = vmatpush.bf16.msra.mxu0 %v1719
        %2921 = vmatpush.bf16.msra.mxu0 %v1711
        %2922 = vmatpush.bf16.msra.mxu0 %v1703
        %2923 = vmatmul.bf16.gmra.mxu0 %v449
        %v2924 = vpop.f32.mrf.mxu0
        %v2925 = vadd.f32 %v2896, %v2924
        %v2926 = vpop.f32.mrf.mxu0
        %v2927 = vadd.f32 %v2898, %v2926
        %2928 = vmatmul.bf16.gmra.mxu0 %v453
        %v2929 = vpop.f32.mrf.mxu0
        %v2930 = vadd.f32 %v2901, %v2929
        %v2931 = vpop.f32.mrf.mxu0
        %v2932 = vadd.f32 %v2903, %v2931
        %2933 = vmatmul.bf16.gmra.mxu0 %v457
        %v2934 = vpop.f32.mrf.mxu0
        %v2935 = vadd.f32 %v2906, %v2934
        %v2936 = vpop.f32.mrf.mxu0
        %v2937 = vadd.f32 %v2908, %v2936
        %2938 = vmatmul.bf16.gmra.mxu0 %v461
        %v2939 = vpop.f32.mrf.mxu0
        %v2940 = vadd.f32 %v2911, %v2939
        %v2941 = vpop.f32.mrf.mxu0
        %v2942 = vadd.f32 %v2913, %v2941
        %2943 = vdwg.mxu0
        %v2944 = vtanh.pop %v2113
        %v2945 = vtanh.pop %v2229
        %v2946 = vtanh.pop %v2345
        %v2947 = vtanh.pop %v2461
        %v2948 = vtanh.pop %v2115
        %v2949 = vtanh.pop %v2231
        %v2950 = vtanh.pop %v2347
        %v2951 = vtanh.pop %v2463
        %v2952 = vtanh.pop %v2118
        %v2953 = vtanh.pop %v2234
        %v2954 = vtanh.pop %v2350
        %v2955 = vtanh.pop %v2466
        %v2956 = vtanh.pop %v2120
        %v2957 = vtanh.pop %v2236
        %v2958 = vtanh.pop %v2352
        %v2959 = vtanh.pop %v2468
        %v2960 = vtanh.pop %v2123
        %v2961 = vtanh.pop %v2239
        %v2962 = vtanh.pop %v2355
        %v2963 = vtanh.pop %v2471
        %v2964 = vtanh.pop %v2125
        %v2965 = vtanh.pop %v2241
        %v2966 = vtanh.pop %v2357
        %v2967 = vtanh.pop %v2473
        %v2968 = vtanh.pop %v2128
        %v2969 = vtanh.pop %v2244
        %v2970 = vtanh.pop %v2360
        %v2971 = vtanh.pop %v2476
        %v2972 = vtanh.pop %v2130
        %v2973 = vtanh.pop %v2246
        %v2974 = vtanh.pop %v2362
        %v2975 = vtanh.pop %v2478
        %v2976 = vxor.u32 %v2577, 2147483648
        %v2977 = vxor.u32 %v2693, 2147483648
        %v2978 = vxor.u32 %v2809, 2147483648
        %v2979 = vxor.u32 %v2925, 2147483648
        %v2980 = vxor.u32 %v2579, 2147483648
        %v2981 = vxor.u32 %v2695, 2147483648
        %v2982 = vxor.u32 %v2811, 2147483648
        %v2983 = vxor.u32 %v2927, 2147483648
        %v2984 = vxor.u32 %v2582, 2147483648
        %v2985 = vxor.u32 %v2698, 2147483648
        %v2986 = vxor.u32 %v2814, 2147483648
        %v2987 = vxor.u32 %v2930, 2147483648
        %v2988 = vxor.u32 %v2584, 2147483648
        %v2989 = vxor.u32 %v2700, 2147483648
        %v2990 = vxor.u32 %v2816, 2147483648
        %v2991 = vxor.u32 %v2932, 2147483648
        %v2992 = vxor.u32 %v2587, 2147483648
        %v2993 = vxor.u32 %v2703, 2147483648
        %v2994 = vxor.u32 %v2819, 2147483648
        %v2995 = vxor.u32 %v2935, 2147483648
        %v2996 = vxor.u32 %v2589, 2147483648
        %v2997 = vxor.u32 %v2705, 2147483648
        %v2998 = vxor.u32 %v2821, 2147483648
        %v2999 = vxor.u32 %v2937, 2147483648
        %v3000 = vxor.u32 %v2592, 2147483648
        %v3001 = vxor.u32 %v2708, 2147483648
        %v3002 = vxor.u32 %v2824, 2147483648
        %v3003 = vxor.u32 %v2940, 2147483648
        %v3004 = vxor.u32 %v2594, 2147483648
        %v3005 = vxor.u32 %v2710, 2147483648
        %v3006 = vxor.u32 %v2826, 2147483648
        %v3007 = vxor.u32 %v2942, 2147483648
        %v3008 = vmul.f32 %v2976, 1.442695
        %v3009 = vpow.pop %v3008
        %v3010 = vmul.f32 %v2977, 1.442695
        %v3011 = vpow.pop %v3010
        %v3012 = vmul.f32 %v2978, 1.442695
        %v3013 = vpow.pop %v3012
        %v3014 = vmul.f32 %v2979, 1.442695
        %v3015 = vpow.pop %v3014
        %v3016 = vmul.f32 %v2980, 1.442695
        %v3017 = vpow.pop %v3016
        %v3018 = vmul.f32 %v2981, 1.442695
        %v3019 = vpow.pop %v3018
        %v3020 = vmul.f32 %v2982, 1.442695
        %v3021 = vpow.pop %v3020
        %v3022 = vmul.f32 %v2983, 1.442695
        %v3023 = vpow.pop %v3022
        %v3024 = vmul.f32 %v2984, 1.442695
        %v3025 = vpow.pop %v3024
        %v3026 = vmul.f32 %v2985, 1.442695
        %v3027 = vpow.pop %v3026
        %v3028 = vmul.f32 %v2986, 1.442695
        %v3029 = vpow.pop %v3028
        %v3030 = vmul.f32 %v2987, 1.442695
        %v3031 = vpow.pop %v3030
        %v3032 = vmul.f32 %v2988, 1.442695
        %v3033 = vpow.pop %v3032
        %v3034 = vmul.f32 %v2989, 1.442695
        %v3035 = vpow.pop %v3034
        %v3036 = vmul.f32 %v2990, 1.442695
        %v3037 = vpow.pop %v3036
        %v3038 = vmul.f32 %v2991, 1.442695
        %v3039 = vpow.pop %v3038
        %v3040 = vmul.f32 %v2992, 1.442695
        %v3041 = vpow.pop %v3040
        %v3042 = vmul.f32 %v2993, 1.442695
        %v3043 = vpow.pop %v3042
        %v3044 = vmul.f32 %v2994, 1.442695
        %v3045 = vpow.pop %v3044
        %v3046 = vmul.f32 %v2995, 1.442695
        %v3047 = vpow.pop %v3046
        %v3048 = vmul.f32 %v2996, 1.442695
        %v3049 = vpow.pop %v3048
        %v3050 = vmul.f32 %v2997, 1.442695
        %v3051 = vpow.pop %v3050
        %v3052 = vmul.f32 %v2998, 1.442695
        %v3053 = vpow.pop %v3052
        %v3054 = vmul.f32 %v2999, 1.442695
        %v3055 = vpow.pop %v3054
        %v3056 = vmul.f32 %v3000, 1.442695
        %v3057 = vpow.pop %v3056
        %v3058 = vmul.f32 %v3001, 1.442695
        %v3059 = vpow.pop %v3058
        %v3060 = vmul.f32 %v3002, 1.442695
        %v3061 = vpow.pop %v3060
        %v3062 = vmul.f32 %v3003, 1.442695
        %v3063 = vpow.pop %v3062
        %v3064 = vmul.f32 %v3004, 1.442695
        %v3065 = vpow.pop %v3064
        %v3066 = vmul.f32 %v3005, 1.442695
        %v3067 = vpow.pop %v3066
        %v3068 = vmul.f32 %v3006, 1.442695
        %v3069 = vpow.pop %v3068
        %v3070 = vmul.f32 %v3007, 1.442695
        %v3071 = vpow.pop %v3070
        %v3072 = vadd.f32 %v3009, 1.0
        %v3073 = vadd.f32 %v3011, 1.0
        %v3074 = vadd.f32 %v3013, 1.0
        %v3075 = vadd.f32 %v3015, 1.0
        %v3076 = vadd.f32 %v3017, 1.0
        %v3077 = vadd.f32 %v3019, 1.0
        %v3078 = vadd.f32 %v3021, 1.0
        %v3079 = vadd.f32 %v3023, 1.0
        %v3080 = vadd.f32 %v3025, 1.0
        %v3081 = vadd.f32 %v3027, 1.0
        %v3082 = vadd.f32 %v3029, 1.0
        %v3083 = vadd.f32 %v3031, 1.0
        %v3084 = vadd.f32 %v3033, 1.0
        %v3085 = vadd.f32 %v3035, 1.0
        %v3086 = vadd.f32 %v3037, 1.0
        %v3087 = vadd.f32 %v3039, 1.0
        %v3088 = vadd.f32 %v3041, 1.0
        %v3089 = vadd.f32 %v3043, 1.0
        %v3090 = vadd.f32 %v3045, 1.0
        %v3091 = vadd.f32 %v3047, 1.0
        %v3092 = vadd.f32 %v3049, 1.0
        %v3093 = vadd.f32 %v3051, 1.0
        %v3094 = vadd.f32 %v3053, 1.0
        %v3095 = vadd.f32 %v3055, 1.0
        %v3096 = vadd.f32 %v3057, 1.0
        %v3097 = vadd.f32 %v3059, 1.0
        %v3098 = vadd.f32 %v3061, 1.0
        %v3099 = vadd.f32 %v3063, 1.0
        %v3100 = vadd.f32 %v3065, 1.0
        %v3101 = vadd.f32 %v3067, 1.0
        %v3102 = vadd.f32 %v3069, 1.0
        %v3103 = vadd.f32 %v3071, 1.0
        %v3104 = vrcp.pop %v3072
        %v3105 = vmul.f32 %v3072, %v3104
        %v3106 = vsub.f32 1.0, %v3105
        %v3107 = vmul.f32 %v3104, %v3106
        %v3108 = vadd.f32 %v3104, %v3107
        %vm3109 = vweird.f32 %v3072
        %vm3110 = vweird.f32 %v3104
        %vm3111 = vmor %vm3109, %vm3110
        %v3112 = vsel %vm3111, %v3104, %v3108
        %v3113 = vand.u32 2147483647, %v3072
        %vm3114 = vcmp.eq.f32.partialorder %v3113, 8.507059e+37
        %v3115 = vand.u32 %v3072, 2147483648
        %v3116 = vor.u32 1.1754944e-38, %v3115
        %v3117 = vsel %vm3114, %v3116, %v3112
        %v3118 = vmul.f32 1.0, %v3117
        %v3119 = vrcp.pop %v3073
        %v3120 = vmul.f32 %v3073, %v3119
        %v3121 = vsub.f32 1.0, %v3120
        %v3122 = vmul.f32 %v3119, %v3121
        %v3123 = vadd.f32 %v3119, %v3122
        %vm3124 = vweird.f32 %v3073
        %vm3125 = vweird.f32 %v3119
        %vm3126 = vmor %vm3124, %vm3125
        %v3127 = vsel %vm3126, %v3119, %v3123
        %v3128 = vand.u32 2147483647, %v3073
        %vm3129 = vcmp.eq.f32.partialorder %v3128, 8.507059e+37
        %v3130 = vand.u32 %v3073, 2147483648
        %v3131 = vor.u32 1.1754944e-38, %v3130
        %v3132 = vsel %vm3129, %v3131, %v3127
        %v3133 = vmul.f32 1.0, %v3132
        %v3134 = vrcp.pop %v3074
        %v3135 = vmul.f32 %v3074, %v3134
        %v3136 = vsub.f32 1.0, %v3135
        %v3137 = vmul.f32 %v3134, %v3136
        %v3138 = vadd.f32 %v3134, %v3137
        %vm3139 = vweird.f32 %v3074
        %vm3140 = vweird.f32 %v3134
        %vm3141 = vmor %vm3139, %vm3140
        %v3142 = vsel %vm3141, %v3134, %v3138
        %v3143 = vand.u32 2147483647, %v3074
        %vm3144 = vcmp.eq.f32.partialorder %v3143, 8.507059e+37
        %v3145 = vand.u32 %v3074, 2147483648
        %v3146 = vor.u32 1.1754944e-38, %v3145
        %v3147 = vsel %vm3144, %v3146, %v3142
        %v3148 = vmul.f32 1.0, %v3147
        %v3149 = vrcp.pop %v3075
        %v3150 = vmul.f32 %v3075, %v3149
        %v3151 = vsub.f32 1.0, %v3150
        %v3152 = vmul.f32 %v3149, %v3151
        %v3153 = vadd.f32 %v3149, %v3152
        %vm3154 = vweird.f32 %v3075
        %vm3155 = vweird.f32 %v3149
        %vm3156 = vmor %vm3154, %vm3155
        %v3157 = vsel %vm3156, %v3149, %v3153
        %v3158 = vand.u32 2147483647, %v3075
        %vm3159 = vcmp.eq.f32.partialorder %v3158, 8.507059e+37
        %v3160 = vand.u32 %v3075, 2147483648
        %v3161 = vor.u32 1.1754944e-38, %v3160
        %v3162 = vsel %vm3159, %v3161, %v3157
        %v3163 = vmul.f32 1.0, %v3162
        %v3164 = vrcp.pop %v3076
        %v3165 = vmul.f32 %v3076, %v3164
        %v3166 = vsub.f32 1.0, %v3165
        %v3167 = vmul.f32 %v3164, %v3166
        %v3168 = vadd.f32 %v3164, %v3167
        %vm3169 = vweird.f32 %v3076
        %vm3170 = vweird.f32 %v3164
        %vm3171 = vmor %vm3169, %vm3170
        %v3172 = vsel %vm3171, %v3164, %v3168
        %v3173 = vand.u32 2147483647, %v3076
        %vm3174 = vcmp.eq.f32.partialorder %v3173, 8.507059e+37
        %v3175 = vand.u32 %v3076, 2147483648
        %v3176 = vor.u32 1.1754944e-38, %v3175
        %v3177 = vsel %vm3174, %v3176, %v3172
        %v3178 = vmul.f32 1.0, %v3177
        %v3179 = vrcp.pop %v3077
        %v3180 = vmul.f32 %v3077, %v3179
        %v3181 = vsub.f32 1.0, %v3180
        %v3182 = vmul.f32 %v3179, %v3181
        %v3183 = vadd.f32 %v3179, %v3182
        %vm3184 = vweird.f32 %v3077
        %vm3185 = vweird.f32 %v3179
        %vm3186 = vmor %vm3184, %vm3185
        %v3187 = vsel %vm3186, %v3179, %v3183
        %v3188 = vand.u32 2147483647, %v3077
        %vm3189 = vcmp.eq.f32.partialorder %v3188, 8.507059e+37
        %v3190 = vand.u32 %v3077, 2147483648
        %v3191 = vor.u32 1.1754944e-38, %v3190
        %v3192 = vsel %vm3189, %v3191, %v3187
        %v3193 = vmul.f32 1.0, %v3192
        %v3194 = vrcp.pop %v3078
        %v3195 = vmul.f32 %v3078, %v3194
        %v3196 = vsub.f32 1.0, %v3195
        %v3197 = vmul.f32 %v3194, %v3196
        %v3198 = vadd.f32 %v3194, %v3197
        %vm3199 = vweird.f32 %v3078
        %vm3200 = vweird.f32 %v3194
        %vm3201 = vmor %vm3199, %vm3200
        %v3202 = vsel %vm3201, %v3194, %v3198
        %v3203 = vand.u32 2147483647, %v3078
        %vm3204 = vcmp.eq.f32.partialorder %v3203, 8.507059e+37
        %v3205 = vand.u32 %v3078, 2147483648
        %v3206 = vor.u32 1.1754944e-38, %v3205
        %v3207 = vsel %vm3204, %v3206, %v3202
        %v3208 = vmul.f32 1.0, %v3207
        %v3209 = vrcp.pop %v3079
        %v3210 = vmul.f32 %v3079, %v3209
        %v3211 = vsub.f32 1.0, %v3210
        %v3212 = vmul.f32 %v3209, %v3211
        %v3213 = vadd.f32 %v3209, %v3212
        %vm3214 = vweird.f32 %v3079
        %vm3215 = vweird.f32 %v3209
        %vm3216 = vmor %vm3214, %vm3215
        %v3217 = vsel %vm3216, %v3209, %v3213
        %v3218 = vand.u32 2147483647, %v3079
        %vm3219 = vcmp.eq.f32.partialorder %v3218, 8.507059e+37
        %v3220 = vand.u32 %v3079, 2147483648
        %v3221 = vor.u32 1.1754944e-38, %v3220
        %v3222 = vsel %vm3219, %v3221, %v3217
        %v3223 = vmul.f32 1.0, %v3222
        %v3224 = vrcp.pop %v3080
        %v3225 = vmul.f32 %v3080, %v3224
        %v3226 = vsub.f32 1.0, %v3225
        %v3227 = vmul.f32 %v3224, %v3226
        %v3228 = vadd.f32 %v3224, %v3227
        %vm3229 = vweird.f32 %v3080
        %vm3230 = vweird.f32 %v3224
        %vm3231 = vmor %vm3229, %vm3230
        %v3232 = vsel %vm3231, %v3224, %v3228
        %v3233 = vand.u32 2147483647, %v3080
        %vm3234 = vcmp.eq.f32.partialorder %v3233, 8.507059e+37
        %v3235 = vand.u32 %v3080, 2147483648
        %v3236 = vor.u32 1.1754944e-38, %v3235
        %v3237 = vsel %vm3234, %v3236, %v3232
        %v3238 = vmul.f32 1.0, %v3237
        %v3239 = vrcp.pop %v3081
        %v3240 = vmul.f32 %v3081, %v3239
        %v3241 = vsub.f32 1.0, %v3240
        %v3242 = vmul.f32 %v3239, %v3241
        %v3243 = vadd.f32 %v3239, %v3242
        %vm3244 = vweird.f32 %v3081
        %vm3245 = vweird.f32 %v3239
        %vm3246 = vmor %vm3244, %vm3245
        %v3247 = vsel %vm3246, %v3239, %v3243
        %v3248 = vand.u32 2147483647, %v3081
        %vm3249 = vcmp.eq.f32.partialorder %v3248, 8.507059e+37
        %v3250 = vand.u32 %v3081, 2147483648
        %v3251 = vor.u32 1.1754944e-38, %v3250
        %v3252 = vsel %vm3249, %v3251, %v3247
        %v3253 = vmul.f32 1.0, %v3252
        %v3254 = vrcp.pop %v3082
        %v3255 = vmul.f32 %v3082, %v3254
        %v3256 = vsub.f32 1.0, %v3255
        %v3257 = vmul.f32 %v3254, %v3256
        %v3258 = vadd.f32 %v3254, %v3257
        %vm3259 = vweird.f32 %v3082
        %vm3260 = vweird.f32 %v3254
        %vm3261 = vmor %vm3259, %vm3260
        %v3262 = vsel %vm3261, %v3254, %v3258
        %v3263 = vand.u32 2147483647, %v3082
        %vm3264 = vcmp.eq.f32.partialorder %v3263, 8.507059e+37
        %v3265 = vand.u32 %v3082, 2147483648
        %v3266 = vor.u32 1.1754944e-38, %v3265
        %v3267 = vsel %vm3264, %v3266, %v3262
        %v3268 = vmul.f32 1.0, %v3267
        %v3269 = vrcp.pop %v3083
        %v3270 = vmul.f32 %v3083, %v3269
        %v3271 = vsub.f32 1.0, %v3270
        %v3272 = vmul.f32 %v3269, %v3271
        %v3273 = vadd.f32 %v3269, %v3272
        %vm3274 = vweird.f32 %v3083
        %vm3275 = vweird.f32 %v3269
        %vm3276 = vmor %vm3274, %vm3275
        %v3277 = vsel %vm3276, %v3269, %v3273
        %v3278 = vand.u32 2147483647, %v3083
        %vm3279 = vcmp.eq.f32.partialorder %v3278, 8.507059e+37
        %v3280 = vand.u32 %v3083, 2147483648
        %v3281 = vor.u32 1.1754944e-38, %v3280
        %v3282 = vsel %vm3279, %v3281, %v3277
        %v3283 = vmul.f32 1.0, %v3282
        %v3284 = vrcp.pop %v3084
        %v3285 = vmul.f32 %v3084, %v3284
        %v3286 = vsub.f32 1.0, %v3285
        %v3287 = vmul.f32 %v3284, %v3286
        %v3288 = vadd.f32 %v3284, %v3287
        %vm3289 = vweird.f32 %v3084
        %vm3290 = vweird.f32 %v3284
        %vm3291 = vmor %vm3289, %vm3290
        %v3292 = vsel %vm3291, %v3284, %v3288
        %v3293 = vand.u32 2147483647, %v3084
        %vm3294 = vcmp.eq.f32.partialorder %v3293, 8.507059e+37
        %v3295 = vand.u32 %v3084, 2147483648
        %v3296 = vor.u32 1.1754944e-38, %v3295
        %v3297 = vsel %vm3294, %v3296, %v3292
        %v3298 = vmul.f32 1.0, %v3297
        %v3299 = vrcp.pop %v3085
        %v3300 = vmul.f32 %v3085, %v3299
        %v3301 = vsub.f32 1.0, %v3300
        %v3302 = vmul.f32 %v3299, %v3301
        %v3303 = vadd.f32 %v3299, %v3302
        %vm3304 = vweird.f32 %v3085
        %vm3305 = vweird.f32 %v3299
        %vm3306 = vmor %vm3304, %vm3305
        %v3307 = vsel %vm3306, %v3299, %v3303
        %v3308 = vand.u32 2147483647, %v3085
        %vm3309 = vcmp.eq.f32.partialorder %v3308, 8.507059e+37
        %v3310 = vand.u32 %v3085, 2147483648
        %v3311 = vor.u32 1.1754944e-38, %v3310
        %v3312 = vsel %vm3309, %v3311, %v3307
        %v3313 = vmul.f32 1.0, %v3312
        %v3314 = vrcp.pop %v3086
        %v3315 = vmul.f32 %v3086, %v3314
        %v3316 = vsub.f32 1.0, %v3315
        %v3317 = vmul.f32 %v3314, %v3316
        %v3318 = vadd.f32 %v3314, %v3317
        %vm3319 = vweird.f32 %v3086
        %vm3320 = vweird.f32 %v3314
        %vm3321 = vmor %vm3319, %vm3320
        %v3322 = vsel %vm3321, %v3314, %v3318
        %v3323 = vand.u32 2147483647, %v3086
        %vm3324 = vcmp.eq.f32.partialorder %v3323, 8.507059e+37
        %v3325 = vand.u32 %v3086, 2147483648
        %v3326 = vor.u32 1.1754944e-38, %v3325
        %v3327 = vsel %vm3324, %v3326, %v3322
        %v3328 = vmul.f32 1.0, %v3327
        %v3329 = vrcp.pop %v3087
        %v3330 = vmul.f32 %v3087, %v3329
        %v3331 = vsub.f32 1.0, %v3330
        %v3332 = vmul.f32 %v3329, %v3331
        %v3333 = vadd.f32 %v3329, %v3332
        %vm3334 = vweird.f32 %v3087
        %vm3335 = vweird.f32 %v3329
        %vm3336 = vmor %vm3334, %vm3335
        %v3337 = vsel %vm3336, %v3329, %v3333
        %v3338 = vand.u32 2147483647, %v3087
        %vm3339 = vcmp.eq.f32.partialorder %v3338, 8.507059e+37
        %v3340 = vand.u32 %v3087, 2147483648
        %v3341 = vor.u32 1.1754944e-38, %v3340
        %v3342 = vsel %vm3339, %v3341, %v3337
        %v3343 = vmul.f32 1.0, %v3342
        %v3344 = vrcp.pop %v3088
        %v3345 = vmul.f32 %v3088, %v3344
        %v3346 = vsub.f32 1.0, %v3345
        %v3347 = vmul.f32 %v3344, %v3346
        %v3348 = vadd.f32 %v3344, %v3347
        %vm3349 = vweird.f32 %v3088
        %vm3350 = vweird.f32 %v3344
        %vm3351 = vmor %vm3349, %vm3350
        %v3352 = vsel %vm3351, %v3344, %v3348
        %v3353 = vand.u32 2147483647, %v3088
        %vm3354 = vcmp.eq.f32.partialorder %v3353, 8.507059e+37
        %v3355 = vand.u32 %v3088, 2147483648
        %v3356 = vor.u32 1.1754944e-38, %v3355
        %v3357 = vsel %vm3354, %v3356, %v3352
        %v3358 = vmul.f32 1.0, %v3357
        %v3359 = vrcp.pop %v3089
        %v3360 = vmul.f32 %v3089, %v3359
        %v3361 = vsub.f32 1.0, %v3360
        %v3362 = vmul.f32 %v3359, %v3361
        %v3363 = vadd.f32 %v3359, %v3362
        %vm3364 = vweird.f32 %v3089
        %vm3365 = vweird.f32 %v3359
        %vm3366 = vmor %vm3364, %vm3365
        %v3367 = vsel %vm3366, %v3359, %v3363
        %v3368 = vand.u32 2147483647, %v3089
        %vm3369 = vcmp.eq.f32.partialorder %v3368, 8.507059e+37
        %v3370 = vand.u32 %v3089, 2147483648
        %v3371 = vor.u32 1.1754944e-38, %v3370
        %v3372 = vsel %vm3369, %v3371, %v3367
        %v3373 = vmul.f32 1.0, %v3372
        %v3374 = vrcp.pop %v3090
        %v3375 = vmul.f32 %v3090, %v3374
        %v3376 = vsub.f32 1.0, %v3375
        %v3377 = vmul.f32 %v3374, %v3376
        %v3378 = vadd.f32 %v3374, %v3377
        %vm3379 = vweird.f32 %v3090
        %vm3380 = vweird.f32 %v3374
        %vm3381 = vmor %vm3379, %vm3380
        %v3382 = vsel %vm3381, %v3374, %v3378
        %v3383 = vand.u32 2147483647, %v3090
        %vm3384 = vcmp.eq.f32.partialorder %v3383, 8.507059e+37
        %v3385 = vand.u32 %v3090, 2147483648
        %v3386 = vor.u32 1.1754944e-38, %v3385
        %v3387 = vsel %vm3384, %v3386, %v3382
        %v3388 = vmul.f32 1.0, %v3387
        %v3389 = vrcp.pop %v3091
        %v3390 = vmul.f32 %v3091, %v3389
        %v3391 = vsub.f32 1.0, %v3390
        %v3392 = vmul.f32 %v3389, %v3391
        %v3393 = vadd.f32 %v3389, %v3392
        %vm3394 = vweird.f32 %v3091
        %vm3395 = vweird.f32 %v3389
        %vm3396 = vmor %vm3394, %vm3395
        %v3397 = vsel %vm3396, %v3389, %v3393
        %v3398 = vand.u32 2147483647, %v3091
        %vm3399 = vcmp.eq.f32.partialorder %v3398, 8.507059e+37
        %v3400 = vand.u32 %v3091, 2147483648
        %v3401 = vor.u32 1.1754944e-38, %v3400
        %v3402 = vsel %vm3399, %v3401, %v3397
        %v3403 = vmul.f32 1.0, %v3402
        %v3404 = vrcp.pop %v3092
        %v3405 = vmul.f32 %v3092, %v3404
        %v3406 = vsub.f32 1.0, %v3405
        %v3407 = vmul.f32 %v3404, %v3406
        %v3408 = vadd.f32 %v3404, %v3407
        %vm3409 = vweird.f32 %v3092
        %vm3410 = vweird.f32 %v3404
        %vm3411 = vmor %vm3409, %vm3410
        %v3412 = vsel %vm3411, %v3404, %v3408
        %v3413 = vand.u32 2147483647, %v3092
        %vm3414 = vcmp.eq.f32.partialorder %v3413, 8.507059e+37
        %v3415 = vand.u32 %v3092, 2147483648
        %v3416 = vor.u32 1.1754944e-38, %v3415
        %v3417 = vsel %vm3414, %v3416, %v3412
        %v3418 = vmul.f32 1.0, %v3417
        %v3419 = vrcp.pop %v3093
        %v3420 = vmul.f32 %v3093, %v3419
        %v3421 = vsub.f32 1.0, %v3420
        %v3422 = vmul.f32 %v3419, %v3421
        %v3423 = vadd.f32 %v3419, %v3422
        %vm3424 = vweird.f32 %v3093
        %vm3425 = vweird.f32 %v3419
        %vm3426 = vmor %vm3424, %vm3425
        %v3427 = vsel %vm3426, %v3419, %v3423
        %v3428 = vand.u32 2147483647, %v3093
        %vm3429 = vcmp.eq.f32.partialorder %v3428, 8.507059e+37
        %v3430 = vand.u32 %v3093, 2147483648
        %v3431 = vor.u32 1.1754944e-38, %v3430
        %v3432 = vsel %vm3429, %v3431, %v3427
        %v3433 = vmul.f32 1.0, %v3432
        %v3434 = vrcp.pop %v3094
        %v3435 = vmul.f32 %v3094, %v3434
        %v3436 = vsub.f32 1.0, %v3435
        %v3437 = vmul.f32 %v3434, %v3436
        %v3438 = vadd.f32 %v3434, %v3437
        %vm3439 = vweird.f32 %v3094
        %vm3440 = vweird.f32 %v3434
        %vm3441 = vmor %vm3439, %vm3440
        %v3442 = vsel %vm3441, %v3434, %v3438
        %v3443 = vand.u32 2147483647, %v3094
        %vm3444 = vcmp.eq.f32.partialorder %v3443, 8.507059e+37
        %v3445 = vand.u32 %v3094, 2147483648
        %v3446 = vor.u32 1.1754944e-38, %v3445
        %v3447 = vsel %vm3444, %v3446, %v3442
        %v3448 = vmul.f32 1.0, %v3447
        %v3449 = vrcp.pop %v3095
        %v3450 = vmul.f32 %v3095, %v3449
        %v3451 = vsub.f32 1.0, %v3450
        %v3452 = vmul.f32 %v3449, %v3451
        %v3453 = vadd.f32 %v3449, %v3452
        %vm3454 = vweird.f32 %v3095
        %vm3455 = vweird.f32 %v3449
        %vm3456 = vmor %vm3454, %vm3455
        %v3457 = vsel %vm3456, %v3449, %v3453
        %v3458 = vand.u32 2147483647, %v3095
        %vm3459 = vcmp.eq.f32.partialorder %v3458, 8.507059e+37
        %v3460 = vand.u32 %v3095, 2147483648
        %v3461 = vor.u32 1.1754944e-38, %v3460
        %v3462 = vsel %vm3459, %v3461, %v3457
        %v3463 = vmul.f32 1.0, %v3462
        %v3464 = vrcp.pop %v3096
        %v3465 = vmul.f32 %v3096, %v3464
        %v3466 = vsub.f32 1.0, %v3465
        %v3467 = vmul.f32 %v3464, %v3466
        %v3468 = vadd.f32 %v3464, %v3467
        %vm3469 = vweird.f32 %v3096
        %vm3470 = vweird.f32 %v3464
        %vm3471 = vmor %vm3469, %vm3470
        %v3472 = vsel %vm3471, %v3464, %v3468
        %v3473 = vand.u32 2147483647, %v3096
        %vm3474 = vcmp.eq.f32.partialorder %v3473, 8.507059e+37
        %v3475 = vand.u32 %v3096, 2147483648
        %v3476 = vor.u32 1.1754944e-38, %v3475
        %v3477 = vsel %vm3474, %v3476, %v3472
        %v3478 = vmul.f32 1.0, %v3477
        %v3479 = vrcp.pop %v3097
        %v3480 = vmul.f32 %v3097, %v3479
        %v3481 = vsub.f32 1.0, %v3480
        %v3482 = vmul.f32 %v3479, %v3481
        %v3483 = vadd.f32 %v3479, %v3482
        %vm3484 = vweird.f32 %v3097
        %vm3485 = vweird.f32 %v3479
        %vm3486 = vmor %vm3484, %vm3485
        %v3487 = vsel %vm3486, %v3479, %v3483
        %v3488 = vand.u32 2147483647, %v3097
        %vm3489 = vcmp.eq.f32.partialorder %v3488, 8.507059e+37
        %v3490 = vand.u32 %v3097, 2147483648
        %v3491 = vor.u32 1.1754944e-38, %v3490
        %v3492 = vsel %vm3489, %v3491, %v3487
        %v3493 = vmul.f32 1.0, %v3492
        %v3494 = vrcp.pop %v3098
        %v3495 = vmul.f32 %v3098, %v3494
        %v3496 = vsub.f32 1.0, %v3495
        %v3497 = vmul.f32 %v3494, %v3496
        %v3498 = vadd.f32 %v3494, %v3497
        %vm3499 = vweird.f32 %v3098
        %vm3500 = vweird.f32 %v3494
        %vm3501 = vmor %vm3499, %vm3500
        %v3502 = vsel %vm3501, %v3494, %v3498
        %v3503 = vand.u32 2147483647, %v3098
        %vm3504 = vcmp.eq.f32.partialorder %v3503, 8.507059e+37
        %v3505 = vand.u32 %v3098, 2147483648
        %v3506 = vor.u32 1.1754944e-38, %v3505
        %v3507 = vsel %vm3504, %v3506, %v3502
        %v3508 = vmul.f32 1.0, %v3507
        %v3509 = vrcp.pop %v3099
        %v3510 = vmul.f32 %v3099, %v3509
        %v3511 = vsub.f32 1.0, %v3510
        %v3512 = vmul.f32 %v3509, %v3511
        %v3513 = vadd.f32 %v3509, %v3512
        %vm3514 = vweird.f32 %v3099
        %vm3515 = vweird.f32 %v3509
        %vm3516 = vmor %vm3514, %vm3515
        %v3517 = vsel %vm3516, %v3509, %v3513
        %v3518 = vand.u32 2147483647, %v3099
        %vm3519 = vcmp.eq.f32.partialorder %v3518, 8.507059e+37
        %v3520 = vand.u32 %v3099, 2147483648
        %v3521 = vor.u32 1.1754944e-38, %v3520
        %v3522 = vsel %vm3519, %v3521, %v3517
        %v3523 = vmul.f32 1.0, %v3522
        %v3524 = vrcp.pop %v3100
        %v3525 = vmul.f32 %v3100, %v3524
        %v3526 = vsub.f32 1.0, %v3525
        %v3527 = vmul.f32 %v3524, %v3526
        %v3528 = vadd.f32 %v3524, %v3527
        %vm3529 = vweird.f32 %v3100
        %vm3530 = vweird.f32 %v3524
        %vm3531 = vmor %vm3529, %vm3530
        %v3532 = vsel %vm3531, %v3524, %v3528
        %v3533 = vand.u32 2147483647, %v3100
        %vm3534 = vcmp.eq.f32.partialorder %v3533, 8.507059e+37
        %v3535 = vand.u32 %v3100, 2147483648
        %v3536 = vor.u32 1.1754944e-38, %v3535
        %v3537 = vsel %vm3534, %v3536, %v3532
        %v3538 = vmul.f32 1.0, %v3537
        %v3539 = vrcp.pop %v3101
        %v3540 = vmul.f32 %v3101, %v3539
        %v3541 = vsub.f32 1.0, %v3540
        %v3542 = vmul.f32 %v3539, %v3541
        %v3543 = vadd.f32 %v3539, %v3542
        %vm3544 = vweird.f32 %v3101
        %vm3545 = vweird.f32 %v3539
        %vm3546 = vmor %vm3544, %vm3545
        %v3547 = vsel %vm3546, %v3539, %v3543
        %v3548 = vand.u32 2147483647, %v3101
        %vm3549 = vcmp.eq.f32.partialorder %v3548, 8.507059e+37
        %v3550 = vand.u32 %v3101, 2147483648
        %v3551 = vor.u32 1.1754944e-38, %v3550
        %v3552 = vsel %vm3549, %v3551, %v3547
        %v3553 = vmul.f32 1.0, %v3552
        %v3554 = vrcp.pop %v3102
        %v3555 = vmul.f32 %v3102, %v3554
        %v3556 = vsub.f32 1.0, %v3555
        %v3557 = vmul.f32 %v3554, %v3556
        %v3558 = vadd.f32 %v3554, %v3557
        %vm3559 = vweird.f32 %v3102
        %vm3560 = vweird.f32 %v3554
        %vm3561 = vmor %vm3559, %vm3560
        %v3562 = vsel %vm3561, %v3554, %v3558
        %v3563 = vand.u32 2147483647, %v3102
        %vm3564 = vcmp.eq.f32.partialorder %v3563, 8.507059e+37
        %v3565 = vand.u32 %v3102, 2147483648
        %v3566 = vor.u32 1.1754944e-38, %v3565
        %v3567 = vsel %vm3564, %v3566, %v3562
        %v3568 = vmul.f32 1.0, %v3567
        %v3569 = vrcp.pop %v3103
        %v3570 = vmul.f32 %v3103, %v3569
        %v3571 = vsub.f32 1.0, %v3570
        %v3572 = vmul.f32 %v3569, %v3571
        %v3573 = vadd.f32 %v3569, %v3572
        %vm3574 = vweird.f32 %v3103
        %vm3575 = vweird.f32 %v3569
        %vm3576 = vmor %vm3574, %vm3575
        %v3577 = vsel %vm3576, %v3569, %v3573
        %v3578 = vand.u32 2147483647, %v3103
        %vm3579 = vcmp.eq.f32.partialorder %v3578, 8.507059e+37
        %v3580 = vand.u32 %v3103, 2147483648
        %v3581 = vor.u32 1.1754944e-38, %v3580
        %v3582 = vsel %vm3579, %v3581, %v3577
        %v3583 = vmul.f32 1.0, %v3582
        %v3584 = vmul.f32 %v2944, %v3118
        %v3585 = vmul.f32 %v2945, %v3133
        %v3586 = vmul.f32 %v2946, %v3148
        %v3587 = vmul.f32 %v2947, %v3163
        %v3588 = vmul.f32 %v2948, %v3178
        %v3589 = vmul.f32 %v2949, %v3193
        %v3590 = vmul.f32 %v2950, %v3208
        %v3591 = vmul.f32 %v2951, %v3223
        %v3592 = vmul.f32 %v2952, %v3238
        %v3593 = vmul.f32 %v2953, %v3253
        %v3594 = vmul.f32 %v2954, %v3268
        %v3595 = vmul.f32 %v2955, %v3283
        %v3596 = vmul.f32 %v2956, %v3298
        %v3597 = vmul.f32 %v2957, %v3313
        %v3598 = vmul.f32 %v2958, %v3328
        %v3599 = vmul.f32 %v2959, %v3343
        %v3600 = vmul.f32 %v2960, %v3358
        %v3601 = vmul.f32 %v2961, %v3373
        %v3602 = vmul.f32 %v2962, %v3388
        %v3603 = vmul.f32 %v2963, %v3403
        %v3604 = vmul.f32 %v2964, %v3418
        %v3605 = vmul.f32 %v2965, %v3433
        %v3606 = vmul.f32 %v2966, %v3448
        %v3607 = vmul.f32 %v2967, %v3463
        %v3608 = vmul.f32 %v2968, %v3478
        %v3609 = vmul.f32 %v2969, %v3493
        %v3610 = vmul.f32 %v2970, %v3508
        %v3611 = vmul.f32 %v2971, %v3523
        %v3612 = vmul.f32 %v2972, %v3538
        %v3613 = vmul.f32 %v2973, %v3553
        %v3614 = vmul.f32 %v2974, %v3568
        %v3615 = vmul.f32 %v2975, %v3583
        %v3616 = vpack.c.bf16 %v3588, %v3584
        %v3617 = vpack.c.bf16 %v3589, %v3585
        %v3618 = vpack.c.bf16 %v3590, %v3586
        %v3619 = vpack.c.bf16 %v3591, %v3587
        %v3620 = vpack.c.bf16 %v3596, %v3592
        %v3621 = vpack.c.bf16 %v3597, %v3593
        %v3622 = vpack.c.bf16 %v3598, %v3594
        %v3623 = vpack.c.bf16 %v3599, %v3595
        %v3624 = vpack.c.bf16 %v3604, %v3600
        %v3625 = vpack.c.bf16 %v3605, %v3601
        %v3626 = vpack.c.bf16 %v3606, %v3602
        %v3627 = vpack.c.bf16 %v3607, %v3603
        %v3628 = vpack.c.bf16 %v3612, %v3608
        %v3629 = vpack.c.bf16 %v3613, %v3609
        %v3630 = vpack.c.bf16 %v3614, %v3610
        %v3631 = vpack.c.bf16 %v3615, %v3611
        %v3632 = vld [vmem:[#allocation5] sm:$0xff]
        %v3633 = vld [vmem:[#allocation5 + $0x8] sm:$0xff]
        %v3634 = vld [vmem:[#allocation5 + $0x10] sm:$0xff]
        %v3635 = vld [vmem:[#allocation5 + $0x18] sm:$0xff]
        %v3636 = vld [vmem:[#allocation5 + $0x20] sm:$0xff]
        %v3637 = vld [vmem:[#allocation5 + $0x28] sm:$0xff]
        %v3638 = vld [vmem:[#allocation5 + $0x30] sm:$0xff]
        %v3639 = vld [vmem:[#allocation5 + $0x38] sm:$0xff]
        %v3640 = vld [vmem:[#allocation5 + $0x40] sm:$0xff]
        %v3641 = vld [vmem:[#allocation5 + $0x48] sm:$0xff]
        %v3642 = vld [vmem:[#allocation5 + $0x50] sm:$0xff]
        %v3643 = vld [vmem:[#allocation5 + $0x58] sm:$0xff]
        %v3644 = vld [vmem:[#allocation5 + $0x60] sm:$0xff]
        %v3645 = vld [vmem:[#allocation5 + $0x68] sm:$0xff]
        %v3646 = vld [vmem:[#allocation5 + $0x70] sm:$0xff]
        %v3647 = vld [vmem:[#allocation5 + $0x78] sm:$0xff]
        %v3648 = vld [vmem:[#allocation5 + $0x80] sm:$0xff]
        %v3649 = vld [vmem:[#allocation5 + $0x88] sm:$0xff]
        %v3650 = vld [vmem:[#allocation5 + $0x90] sm:$0xff]
        %v3651 = vld [vmem:[#allocation5 + $0x98] sm:$0xff]
        %v3652 = vld [vmem:[#allocation5 + $0xa0] sm:$0xff]
        %v3653 = vld [vmem:[#allocation5 + $0xa8] sm:$0xff]
        %v3654 = vld [vmem:[#allocation5 + $0xb0] sm:$0xff]
        %v3655 = vld [vmem:[#allocation5 + $0xb8] sm:$0xff]
        %v3656 = vld [vmem:[#allocation5 + $0xc0] sm:$0xff]
        %v3657 = vld [vmem:[#allocation5 + $0xc8] sm:$0xff]
        %v3658 = vld [vmem:[#allocation5 + $0xd0] sm:$0xff]
        %v3659 = vld [vmem:[#allocation5 + $0xd8] sm:$0xff]
        %v3660 = vld [vmem:[#allocation5 + $0xe0] sm:$0xff]
        %v3661 = vld [vmem:[#allocation5 + $0xe8] sm:$0xff]
        %v3662 = vld [vmem:[#allocation5 + $0xf0] sm:$0xff]
        %v3663 = vld [vmem:[#allocation5 + $0xf8] sm:$0xff]
        %v3664 = vld [vmem:[#allocation5 + $0x100] sm:$0xff]
        %v3665 = vld [vmem:[#allocation5 + $0x108] sm:$0xff]
        %v3666 = vld [vmem:[#allocation5 + $0x110] sm:$0xff]
        %v3667 = vld [vmem:[#allocation5 + $0x118] sm:$0xff]
        %v3668 = vld [vmem:[#allocation5 + $0x120] sm:$0xff]
        %v3669 = vld [vmem:[#allocation5 + $0x128] sm:$0xff]
        %v3670 = vld [vmem:[#allocation5 + $0x130] sm:$0xff]
        %v3671 = vld [vmem:[#allocation5 + $0x138] sm:$0xff]
        %v3672 = vld [vmem:[#allocation5 + $0x140] sm:$0xff]
        %v3673 = vld [vmem:[#allocation5 + $0x148] sm:$0xff]
        %v3674 = vld [vmem:[#allocation5 + $0x150] sm:$0xff]
        %v3675 = vld [vmem:[#allocation5 + $0x158] sm:$0xff]
        %v3676 = vld [vmem:[#allocation5 + $0x160] sm:$0xff]
        %v3677 = vld [vmem:[#allocation5 + $0x168] sm:$0xff]
        %v3678 = vld [vmem:[#allocation5 + $0x170] sm:$0xff]
        %v3679 = vld [vmem:[#allocation5 + $0x178] sm:$0xff]
        %v3680 = vld [vmem:[#allocation5 + $0x180] sm:$0xff]
        %v3681 = vld [vmem:[#allocation5 + $0x188] sm:$0xff]
        %v3682 = vld [vmem:[#allocation5 + $0x190] sm:$0xff]
        %v3683 = vld [vmem:[#allocation5 + $0x198] sm:$0xff]
        %v3684 = vld [vmem:[#allocation5 + $0x1a0] sm:$0xff]
        %v3685 = vld [vmem:[#allocation5 + $0x1a8] sm:$0xff]
        %v3686 = vld [vmem:[#allocation5 + $0x1b0] sm:$0xff]
        %v3687 = vld [vmem:[#allocation5 + $0x1b8] sm:$0xff]
        %v3688 = vld [vmem:[#allocation5 + $0x1c0] sm:$0xff]
        %v3689 = vld [vmem:[#allocation5 + $0x1c8] sm:$0xff]
        %v3690 = vld [vmem:[#allocation5 + $0x1d0] sm:$0xff]
        %v3691 = vld [vmem:[#allocation5 + $0x1d8] sm:$0xff]
        %v3692 = vld [vmem:[#allocation5 + $0x1e0] sm:$0xff]
        %v3693 = vld [vmem:[#allocation5 + $0x1e8] sm:$0xff]
        %v3694 = vld [vmem:[#allocation5 + $0x1f0] sm:$0xff]
        %v3695 = vld [vmem:[#allocation5 + $0x1f8] sm:$0xff]
        %v3696 = vld [vmem:[#allocation5 + $0x200] sm:$0xff]
        %v3697 = vld [vmem:[#allocation5 + $0x208] sm:$0xff]
        %v3698 = vld [vmem:[#allocation5 + $0x210] sm:$0xff]
        %v3699 = vld [vmem:[#allocation5 + $0x218] sm:$0xff]
        %v3700 = vld [vmem:[#allocation5 + $0x220] sm:$0xff]
        %v3701 = vld [vmem:[#allocation5 + $0x228] sm:$0xff]
        %v3702 = vld [vmem:[#allocation5 + $0x230] sm:$0xff]
        %v3703 = vld [vmem:[#allocation5 + $0x238] sm:$0xff]
        %v3704 = vld [vmem:[#allocation5 + $0x240] sm:$0xff]
        %v3705 = vld [vmem:[#allocation5 + $0x248] sm:$0xff]
        %v3706 = vld [vmem:[#allocation5 + $0x250] sm:$0xff]
        %v3707 = vld [vmem:[#allocation5 + $0x258] sm:$0xff]
        %v3708 = vld [vmem:[#allocation5 + $0x260] sm:$0xff]
        %v3709 = vld [vmem:[#allocation5 + $0x268] sm:$0xff]
        %v3710 = vld [vmem:[#allocation5 + $0x270] sm:$0xff]
        %v3711 = vld [vmem:[#allocation5 + $0x278] sm:$0xff]
        %v3712 = vld [vmem:[#allocation5 + $0x280] sm:$0xff]
        %v3713 = vld [vmem:[#allocation5 + $0x288] sm:$0xff]
        %v3714 = vld [vmem:[#allocation5 + $0x290] sm:$0xff]
        %v3715 = vld [vmem:[#allocation5 + $0x298] sm:$0xff]
        %v3716 = vld [vmem:[#allocation5 + $0x2a0] sm:$0xff]
        %v3717 = vld [vmem:[#allocation5 + $0x2a8] sm:$0xff]
        %v3718 = vld [vmem:[#allocation5 + $0x2b0] sm:$0xff]
        %v3719 = vld [vmem:[#allocation5 + $0x2b8] sm:$0xff]
        %v3720 = vld [vmem:[#allocation5 + $0x2c0] sm:$0xff]
        %v3721 = vld [vmem:[#allocation5 + $0x2c8] sm:$0xff]
        %v3722 = vld [vmem:[#allocation5 + $0x2d0] sm:$0xff]
        %v3723 = vld [vmem:[#allocation5 + $0x2d8] sm:$0xff]
        %v3724 = vld [vmem:[#allocation5 + $0x2e0] sm:$0xff]
        %v3725 = vld [vmem:[#allocation5 + $0x2e8] sm:$0xff]
        %v3726 = vld [vmem:[#allocation5 + $0x2f0] sm:$0xff]
        %v3727 = vld [vmem:[#allocation5 + $0x2f8] sm:$0xff]
        %v3728 = vld [vmem:[#allocation5 + $0x300] sm:$0xff]
        %v3729 = vld [vmem:[#allocation5 + $0x308] sm:$0xff]
        %v3730 = vld [vmem:[#allocation5 + $0x310] sm:$0xff]
        %v3731 = vld [vmem:[#allocation5 + $0x318] sm:$0xff]
        %v3732 = vld [vmem:[#allocation5 + $0x320] sm:$0xff]
        %v3733 = vld [vmem:[#allocation5 + $0x328] sm:$0xff]
        %v3734 = vld [vmem:[#allocation5 + $0x330] sm:$0xff]
        %v3735 = vld [vmem:[#allocation5 + $0x338] sm:$0xff]
        %v3736 = vld [vmem:[#allocation5 + $0x340] sm:$0xff]
        %v3737 = vld [vmem:[#allocation5 + $0x348] sm:$0xff]
        %v3738 = vld [vmem:[#allocation5 + $0x350] sm:$0xff]
        %v3739 = vld [vmem:[#allocation5 + $0x358] sm:$0xff]
        %v3740 = vld [vmem:[#allocation5 + $0x360] sm:$0xff]
        %v3741 = vld [vmem:[#allocation5 + $0x368] sm:$0xff]
        %v3742 = vld [vmem:[#allocation5 + $0x370] sm:$0xff]
        %v3743 = vld [vmem:[#allocation5 + $0x378] sm:$0xff]
        %v3744 = vld [vmem:[#allocation5 + $0x380] sm:$0xff]
        %v3745 = vld [vmem:[#allocation5 + $0x388] sm:$0xff]
        %v3746 = vld [vmem:[#allocation5 + $0x390] sm:$0xff]
        %v3747 = vld [vmem:[#allocation5 + $0x398] sm:$0xff]
        %v3748 = vld [vmem:[#allocation5 + $0x3a0] sm:$0xff]
        %v3749 = vld [vmem:[#allocation5 + $0x3a8] sm:$0xff]
        %v3750 = vld [vmem:[#allocation5 + $0x3b0] sm:$0xff]
        %v3751 = vld [vmem:[#allocation5 + $0x3b8] sm:$0xff]
        %v3752 = vld [vmem:[#allocation5 + $0x3c0] sm:$0xff]
        %v3753 = vld [vmem:[#allocation5 + $0x3c8] sm:$0xff]
        %v3754 = vld [vmem:[#allocation5 + $0x3d0] sm:$0xff]
        %v3755 = vld [vmem:[#allocation5 + $0x3d8] sm:$0xff]
        %v3756 = vld [vmem:[#allocation5 + $0x3e0] sm:$0xff]
        %v3757 = vld [vmem:[#allocation5 + $0x3e8] sm:$0xff]
        %v3758 = vld [vmem:[#allocation5 + $0x3f0] sm:$0xff]
        %v3759 = vld [vmem:[#allocation5 + $0x3f8] sm:$0xff]
        %v3760 = vld [vmem:[#allocation5 + $0x400] sm:$0xff]
        %v3761 = vld [vmem:[#allocation5 + $0x408] sm:$0xff]
        %v3762 = vld [vmem:[#allocation5 + $0x410] sm:$0xff]
        %v3763 = vld [vmem:[#allocation5 + $0x418] sm:$0xff]
        %v3764 = vld [vmem:[#allocation5 + $0x420] sm:$0xff]
        %v3765 = vld [vmem:[#allocation5 + $0x428] sm:$0xff]
        %v3766 = vld [vmem:[#allocation5 + $0x430] sm:$0xff]
        %v3767 = vld [vmem:[#allocation5 + $0x438] sm:$0xff]
        %v3768 = vld [vmem:[#allocation5 + $0x440] sm:$0xff]
        %v3769 = vld [vmem:[#allocation5 + $0x448] sm:$0xff]
        %v3770 = vld [vmem:[#allocation5 + $0x450] sm:$0xff]
        %v3771 = vld [vmem:[#allocation5 + $0x458] sm:$0xff]
        %v3772 = vld [vmem:[#allocation5 + $0x460] sm:$0xff]
        %v3773 = vld [vmem:[#allocation5 + $0x468] sm:$0xff]
        %v3774 = vld [vmem:[#allocation5 + $0x470] sm:$0xff]
        %v3775 = vld [vmem:[#allocation5 + $0x478] sm:$0xff]
        %v3776 = vld [vmem:[#allocation5 + $0x480] sm:$0xff]
        %v3777 = vld [vmem:[#allocation5 + $0x488] sm:$0xff]
        %v3778 = vld [vmem:[#allocation5 + $0x490] sm:$0xff]
        %v3779 = vld [vmem:[#allocation5 + $0x498] sm:$0xff]
        %v3780 = vld [vmem:[#allocation5 + $0x4a0] sm:$0xff]
        %v3781 = vld [vmem:[#allocation5 + $0x4a8] sm:$0xff]
        %v3782 = vld [vmem:[#allocation5 + $0x4b0] sm:$0xff]
        %v3783 = vld [vmem:[#allocation5 + $0x4b8] sm:$0xff]
        %v3784 = vld [vmem:[#allocation5 + $0x4c0] sm:$0xff]
        %v3785 = vld [vmem:[#allocation5 + $0x4c8] sm:$0xff]
        %v3786 = vld [vmem:[#allocation5 + $0x4d0] sm:$0xff]
        %v3787 = vld [vmem:[#allocation5 + $0x4d8] sm:$0xff]
        %v3788 = vld [vmem:[#allocation5 + $0x4e0] sm:$0xff]
        %v3789 = vld [vmem:[#allocation5 + $0x4e8] sm:$0xff]
        %v3790 = vld [vmem:[#allocation5 + $0x4f0] sm:$0xff]
        %v3791 = vld [vmem:[#allocation5 + $0x4f8] sm:$0xff]
        %v3792 = vld [vmem:[#allocation5 + $0x500] sm:$0xff]
        %v3793 = vld [vmem:[#allocation5 + $0x508] sm:$0xff]
        %v3794 = vld [vmem:[#allocation5 + $0x510] sm:$0xff]
        %v3795 = vld [vmem:[#allocation5 + $0x518] sm:$0xff]
        %v3796 = vld [vmem:[#allocation5 + $0x520] sm:$0xff]
        %v3797 = vld [vmem:[#allocation5 + $0x528] sm:$0xff]
        %v3798 = vld [vmem:[#allocation5 + $0x530] sm:$0xff]
        %v3799 = vld [vmem:[#allocation5 + $0x538] sm:$0xff]
        %v3800 = vld [vmem:[#allocation5 + $0x540] sm:$0xff]
        %v3801 = vld [vmem:[#allocation5 + $0x548] sm:$0xff]
        %v3802 = vld [vmem:[#allocation5 + $0x550] sm:$0xff]
        %v3803 = vld [vmem:[#allocation5 + $0x558] sm:$0xff]
        %v3804 = vld [vmem:[#allocation5 + $0x560] sm:$0xff]
        %v3805 = vld [vmem:[#allocation5 + $0x568] sm:$0xff]
        %v3806 = vld [vmem:[#allocation5 + $0x570] sm:$0xff]
        %v3807 = vld [vmem:[#allocation5 + $0x578] sm:$0xff]
        %v3808 = vld [vmem:[#allocation5 + $0x580] sm:$0xff]
        %v3809 = vld [vmem:[#allocation5 + $0x588] sm:$0xff]
        %v3810 = vld [vmem:[#allocation5 + $0x590] sm:$0xff]
        %v3811 = vld [vmem:[#allocation5 + $0x598] sm:$0xff]
        %v3812 = vld [vmem:[#allocation5 + $0x5a0] sm:$0xff]
        %v3813 = vld [vmem:[#allocation5 + $0x5a8] sm:$0xff]
        %v3814 = vld [vmem:[#allocation5 + $0x5b0] sm:$0xff]
        %v3815 = vld [vmem:[#allocation5 + $0x5b8] sm:$0xff]
        %v3816 = vld [vmem:[#allocation5 + $0x5c0] sm:$0xff]
        %v3817 = vld [vmem:[#allocation5 + $0x5c8] sm:$0xff]
        %v3818 = vld [vmem:[#allocation5 + $0x5d0] sm:$0xff]
        %v3819 = vld [vmem:[#allocation5 + $0x5d8] sm:$0xff]
        %v3820 = vld [vmem:[#allocation5 + $0x5e0] sm:$0xff]
        %v3821 = vld [vmem:[#allocation5 + $0x5e8] sm:$0xff]
        %v3822 = vld [vmem:[#allocation5 + $0x5f0] sm:$0xff]
        %v3823 = vld [vmem:[#allocation5 + $0x5f8] sm:$0xff]
        %v3824 = vld [vmem:[#allocation5 + $0x600] sm:$0xff]
        %v3825 = vld [vmem:[#allocation5 + $0x608] sm:$0xff]
        %v3826 = vld [vmem:[#allocation5 + $0x610] sm:$0xff]
        %v3827 = vld [vmem:[#allocation5 + $0x618] sm:$0xff]
        %v3828 = vld [vmem:[#allocation5 + $0x620] sm:$0xff]
        %v3829 = vld [vmem:[#allocation5 + $0x628] sm:$0xff]
        %v3830 = vld [vmem:[#allocation5 + $0x630] sm:$0xff]
        %v3831 = vld [vmem:[#allocation5 + $0x638] sm:$0xff]
        %v3832 = vld [vmem:[#allocation5 + $0x640] sm:$0xff]
        %v3833 = vld [vmem:[#allocation5 + $0x648] sm:$0xff]
        %v3834 = vld [vmem:[#allocation5 + $0x650] sm:$0xff]
        %v3835 = vld [vmem:[#allocation5 + $0x658] sm:$0xff]
        %v3836 = vld [vmem:[#allocation5 + $0x660] sm:$0xff]
        %v3837 = vld [vmem:[#allocation5 + $0x668] sm:$0xff]
        %v3838 = vld [vmem:[#allocation5 + $0x670] sm:$0xff]
        %v3839 = vld [vmem:[#allocation5 + $0x678] sm:$0xff]
        %v3840 = vld [vmem:[#allocation5 + $0x680] sm:$0xff]
        %v3841 = vld [vmem:[#allocation5 + $0x688] sm:$0xff]
        %v3842 = vld [vmem:[#allocation5 + $0x690] sm:$0xff]
        %v3843 = vld [vmem:[#allocation5 + $0x698] sm:$0xff]
        %v3844 = vld [vmem:[#allocation5 + $0x6a0] sm:$0xff]
        %v3845 = vld [vmem:[#allocation5 + $0x6a8] sm:$0xff]
        %v3846 = vld [vmem:[#allocation5 + $0x6b0] sm:$0xff]
        %v3847 = vld [vmem:[#allocation5 + $0x6b8] sm:$0xff]
        %v3848 = vld [vmem:[#allocation5 + $0x6c0] sm:$0xff]
        %v3849 = vld [vmem:[#allocation5 + $0x6c8] sm:$0xff]
        %v3850 = vld [vmem:[#allocation5 + $0x6d0] sm:$0xff]
        %v3851 = vld [vmem:[#allocation5 + $0x6d8] sm:$0xff]
        %v3852 = vld [vmem:[#allocation5 + $0x6e0] sm:$0xff]
        %v3853 = vld [vmem:[#allocation5 + $0x6e8] sm:$0xff]
        %v3854 = vld [vmem:[#allocation5 + $0x6f0] sm:$0xff]
        %v3855 = vld [vmem:[#allocation5 + $0x6f8] sm:$0xff]
        %v3856 = vld [vmem:[#allocation5 + $0x700] sm:$0xff]
        %v3857 = vld [vmem:[#allocation5 + $0x708] sm:$0xff]
        %v3858 = vld [vmem:[#allocation5 + $0x710] sm:$0xff]
        %v3859 = vld [vmem:[#allocation5 + $0x718] sm:$0xff]
        %v3860 = vld [vmem:[#allocation5 + $0x720] sm:$0xff]
        %v3861 = vld [vmem:[#allocation5 + $0x728] sm:$0xff]
        %v3862 = vld [vmem:[#allocation5 + $0x730] sm:$0xff]
        %v3863 = vld [vmem:[#allocation5 + $0x738] sm:$0xff]
        %v3864 = vld [vmem:[#allocation5 + $0x740] sm:$0xff]
        %v3865 = vld [vmem:[#allocation5 + $0x748] sm:$0xff]
        %v3866 = vld [vmem:[#allocation5 + $0x750] sm:$0xff]
        %v3867 = vld [vmem:[#allocation5 + $0x758] sm:$0xff]
        %v3868 = vld [vmem:[#allocation5 + $0x760] sm:$0xff]
        %v3869 = vld [vmem:[#allocation5 + $0x768] sm:$0xff]
        %v3870 = vld [vmem:[#allocation5 + $0x770] sm:$0xff]
        %v3871 = vld [vmem:[#allocation5 + $0x778] sm:$0xff]
        %v3872 = vld [vmem:[#allocation5 + $0x780] sm:$0xff]
        %v3873 = vld [vmem:[#allocation5 + $0x788] sm:$0xff]
        %v3874 = vld [vmem:[#allocation5 + $0x790] sm:$0xff]
        %v3875 = vld [vmem:[#allocation5 + $0x798] sm:$0xff]
        %v3876 = vld [vmem:[#allocation5 + $0x7a0] sm:$0xff]
        %v3877 = vld [vmem:[#allocation5 + $0x7a8] sm:$0xff]
        %v3878 = vld [vmem:[#allocation5 + $0x7b0] sm:$0xff]
        %v3879 = vld [vmem:[#allocation5 + $0x7b8] sm:$0xff]
        %v3880 = vld [vmem:[#allocation5 + $0x7c0] sm:$0xff]
        %v3881 = vld [vmem:[#allocation5 + $0x7c8] sm:$0xff]
        %v3882 = vld [vmem:[#allocation5 + $0x7d0] sm:$0xff]
        %v3883 = vld [vmem:[#allocation5 + $0x7d8] sm:$0xff]
        %v3884 = vld [vmem:[#allocation5 + $0x7e0] sm:$0xff]
        %v3885 = vld [vmem:[#allocation5 + $0x7e8] sm:$0xff]
        %v3886 = vld [vmem:[#allocation5 + $0x7f0] sm:$0xff]
        %v3887 = vld [vmem:[#allocation5 + $0x7f8] sm:$0xff]
        %v4144 = vunpack.c.l.b16 %v3632
        %v4145 = vunpack.c.h.b16 %v3632
        %v4146 = vunpack.c.l.b16 %v3633
        %v4147 = vunpack.c.h.b16 %v3633
        %v4148 = vunpack.c.l.b16 %v3634
        %v4149 = vunpack.c.h.b16 %v3634
        %v4150 = vunpack.c.l.b16 %v3635
        %v4151 = vunpack.c.h.b16 %v3635
        %v4152 = vunpack.c.l.b16 %v3636
        %v4153 = vunpack.c.h.b16 %v3636
        %v4154 = vunpack.c.l.b16 %v3637
        %v4155 = vunpack.c.h.b16 %v3637
        %v4156 = vunpack.c.l.b16 %v3638
        %v4157 = vunpack.c.h.b16 %v3638
        %v4158 = vunpack.c.l.b16 %v3639
        %v4159 = vunpack.c.h.b16 %v3639
        %v4160 = vunpack.c.l.b16 %v3640
        %v4161 = vunpack.c.h.b16 %v3640
        %v4162 = vunpack.c.l.b16 %v3641
        %v4163 = vunpack.c.h.b16 %v3641
        %v4164 = vunpack.c.l.b16 %v3642
        %v4165 = vunpack.c.h.b16 %v3642
        %v4166 = vunpack.c.l.b16 %v3643
        %v4167 = vunpack.c.h.b16 %v3643
        %v4168 = vunpack.c.l.b16 %v3644
        %v4169 = vunpack.c.h.b16 %v3644
        %v4170 = vunpack.c.l.b16 %v3645
        %v4171 = vunpack.c.h.b16 %v3645
        %v4172 = vunpack.c.l.b16 %v3646
        %v4173 = vunpack.c.h.b16 %v3646
        %v4174 = vunpack.c.l.b16 %v3647
        %v4175 = vunpack.c.h.b16 %v3647
        %v4176 = vunpack.c.l.b16 %v3648
        %v4177 = vunpack.c.h.b16 %v3648
        %v4178 = vunpack.c.l.b16 %v3649
        %v4179 = vunpack.c.h.b16 %v3649
        %v4180 = vunpack.c.l.b16 %v3650
        %v4181 = vunpack.c.h.b16 %v3650
        %v4182 = vunpack.c.l.b16 %v3651
        %v4183 = vunpack.c.h.b16 %v3651
        %v4184 = vunpack.c.l.b16 %v3652
        %v4185 = vunpack.c.h.b16 %v3652
        %v4186 = vunpack.c.l.b16 %v3653
        %v4187 = vunpack.c.h.b16 %v3653
        %v4188 = vunpack.c.l.b16 %v3654
        %v4189 = vunpack.c.h.b16 %v3654
        %v4190 = vunpack.c.l.b16 %v3655
        %v4191 = vunpack.c.h.b16 %v3655
        %v4192 = vunpack.c.l.b16 %v3656
        %v4193 = vunpack.c.h.b16 %v3656
        %v4194 = vunpack.c.l.b16 %v3657
        %v4195 = vunpack.c.h.b16 %v3657
        %v4196 = vunpack.c.l.b16 %v3658
        %v4197 = vunpack.c.h.b16 %v3658
        %v4198 = vunpack.c.l.b16 %v3659
        %v4199 = vunpack.c.h.b16 %v3659
        %v4200 = vunpack.c.l.b16 %v3660
        %v4201 = vunpack.c.h.b16 %v3660
        %v4202 = vunpack.c.l.b16 %v3661
        %v4203 = vunpack.c.h.b16 %v3661
        %v4204 = vunpack.c.l.b16 %v3662
        %v4205 = vunpack.c.h.b16 %v3662
        %v4206 = vunpack.c.l.b16 %v3663
        %v4207 = vunpack.c.h.b16 %v3663
        %v4208 = vunpack.c.l.b16 %v3664
        %v4209 = vunpack.c.h.b16 %v3664
        %v4210 = vunpack.c.l.b16 %v3665
        %v4211 = vunpack.c.h.b16 %v3665
        %v4212 = vunpack.c.l.b16 %v3666
        %v4213 = vunpack.c.h.b16 %v3666
        %v4214 = vunpack.c.l.b16 %v3667
        %v4215 = vunpack.c.h.b16 %v3667
        %v4216 = vunpack.c.l.b16 %v3668
        %v4217 = vunpack.c.h.b16 %v3668
        %v4218 = vunpack.c.l.b16 %v3669
        %v4219 = vunpack.c.h.b16 %v3669
        %v4220 = vunpack.c.l.b16 %v3670
        %v4221 = vunpack.c.h.b16 %v3670
        %v4222 = vunpack.c.l.b16 %v3671
        %v4223 = vunpack.c.h.b16 %v3671
        %v4224 = vunpack.c.l.b16 %v3672
        %v4225 = vunpack.c.h.b16 %v3672
        %v4226 = vunpack.c.l.b16 %v3673
        %v4227 = vunpack.c.h.b16 %v3673
        %v4228 = vunpack.c.l.b16 %v3674
        %v4229 = vunpack.c.h.b16 %v3674
        %v4230 = vunpack.c.l.b16 %v3675
        %v4231 = vunpack.c.h.b16 %v3675
        %v4232 = vunpack.c.l.b16 %v3676
        %v4233 = vunpack.c.h.b16 %v3676
        %v4234 = vunpack.c.l.b16 %v3677
        %v4235 = vunpack.c.h.b16 %v3677
        %v4236 = vunpack.c.l.b16 %v3678
        %v4237 = vunpack.c.h.b16 %v3678
        %v4238 = vunpack.c.l.b16 %v3679
        %v4239 = vunpack.c.h.b16 %v3679
        %v4240 = vunpack.c.l.b16 %v3680
        %v4241 = vunpack.c.h.b16 %v3680
        %v4242 = vunpack.c.l.b16 %v3681
        %v4243 = vunpack.c.h.b16 %v3681
        %v4244 = vunpack.c.l.b16 %v3682
        %v4245 = vunpack.c.h.b16 %v3682
        %v4246 = vunpack.c.l.b16 %v3683
        %v4247 = vunpack.c.h.b16 %v3683
        %v4248 = vunpack.c.l.b16 %v3684
        %v4249 = vunpack.c.h.b16 %v3684
        %v4250 = vunpack.c.l.b16 %v3685
        %v4251 = vunpack.c.h.b16 %v3685
        %v4252 = vunpack.c.l.b16 %v3686
        %v4253 = vunpack.c.h.b16 %v3686
        %v4254 = vunpack.c.l.b16 %v3687
        %v4255 = vunpack.c.h.b16 %v3687
        %v4256 = vunpack.c.l.b16 %v3688
        %v4257 = vunpack.c.h.b16 %v3688
        %v4258 = vunpack.c.l.b16 %v3689
        %v4259 = vunpack.c.h.b16 %v3689
        %v4260 = vunpack.c.l.b16 %v3690
        %v4261 = vunpack.c.h.b16 %v3690
        %v4262 = vunpack.c.l.b16 %v3691
        %v4263 = vunpack.c.h.b16 %v3691
        %v4264 = vunpack.c.l.b16 %v3692
        %v4265 = vunpack.c.h.b16 %v3692
        %v4266 = vunpack.c.l.b16 %v3693
        %v4267 = vunpack.c.h.b16 %v3693
        %v4268 = vunpack.c.l.b16 %v3694
        %v4269 = vunpack.c.h.b16 %v3694
        %v4270 = vunpack.c.l.b16 %v3695
        %v4271 = vunpack.c.h.b16 %v3695
        %v4272 = vunpack.c.l.b16 %v3696
        %v4273 = vunpack.c.h.b16 %v3696
        %v4274 = vunpack.c.l.b16 %v3697
        %v4275 = vunpack.c.h.b16 %v3697
        %v4276 = vunpack.c.l.b16 %v3698
        %v4277 = vunpack.c.h.b16 %v3698
        %v4278 = vunpack.c.l.b16 %v3699
        %v4279 = vunpack.c.h.b16 %v3699
        %v4280 = vunpack.c.l.b16 %v3700
        %v4281 = vunpack.c.h.b16 %v3700
        %v4282 = vunpack.c.l.b16 %v3701
        %v4283 = vunpack.c.h.b16 %v3701
        %v4284 = vunpack.c.l.b16 %v3702
        %v4285 = vunpack.c.h.b16 %v3702
        %v4286 = vunpack.c.l.b16 %v3703
        %v4287 = vunpack.c.h.b16 %v3703
        %v4288 = vunpack.c.l.b16 %v3704
        %v4289 = vunpack.c.h.b16 %v3704
        %v4290 = vunpack.c.l.b16 %v3705
        %v4291 = vunpack.c.h.b16 %v3705
        %v4292 = vunpack.c.l.b16 %v3706
        %v4293 = vunpack.c.h.b16 %v3706
        %v4294 = vunpack.c.l.b16 %v3707
        %v4295 = vunpack.c.h.b16 %v3707
        %v4296 = vunpack.c.l.b16 %v3708
        %v4297 = vunpack.c.h.b16 %v3708
        %v4298 = vunpack.c.l.b16 %v3709
        %v4299 = vunpack.c.h.b16 %v3709
        %v4300 = vunpack.c.l.b16 %v3710
        %v4301 = vunpack.c.h.b16 %v3710
        %v4302 = vunpack.c.l.b16 %v3711
        %v4303 = vunpack.c.h.b16 %v3711
        %v4304 = vunpack.c.l.b16 %v3712
        %v4305 = vunpack.c.h.b16 %v3712
        %v4306 = vunpack.c.l.b16 %v3713
        %v4307 = vunpack.c.h.b16 %v3713
        %v4308 = vunpack.c.l.b16 %v3714
        %v4309 = vunpack.c.h.b16 %v3714
        %v4310 = vunpack.c.l.b16 %v3715
        %v4311 = vunpack.c.h.b16 %v3715
        %v4312 = vunpack.c.l.b16 %v3716
        %v4313 = vunpack.c.h.b16 %v3716
        %v4314 = vunpack.c.l.b16 %v3717
        %v4315 = vunpack.c.h.b16 %v3717
        %v4316 = vunpack.c.l.b16 %v3718
        %v4317 = vunpack.c.h.b16 %v3718
        %v4318 = vunpack.c.l.b16 %v3719
        %v4319 = vunpack.c.h.b16 %v3719
        %v4320 = vunpack.c.l.b16 %v3720
        %v4321 = vunpack.c.h.b16 %v3720
        %v4322 = vunpack.c.l.b16 %v3721
        %v4323 = vunpack.c.h.b16 %v3721
        %v4324 = vunpack.c.l.b16 %v3722
        %v4325 = vunpack.c.h.b16 %v3722
        %v4326 = vunpack.c.l.b16 %v3723
        %v4327 = vunpack.c.h.b16 %v3723
        %v4328 = vunpack.c.l.b16 %v3724
        %v4329 = vunpack.c.h.b16 %v3724
        %v4330 = vunpack.c.l.b16 %v3725
        %v4331 = vunpack.c.h.b16 %v3725
        %v4332 = vunpack.c.l.b16 %v3726
        %v4333 = vunpack.c.h.b16 %v3726
        %v4334 = vunpack.c.l.b16 %v3727
        %v4335 = vunpack.c.h.b16 %v3727
        %v4336 = vunpack.c.l.b16 %v3728
        %v4337 = vunpack.c.h.b16 %v3728
        %v4338 = vunpack.c.l.b16 %v3729
        %v4339 = vunpack.c.h.b16 %v3729
        %v4340 = vunpack.c.l.b16 %v3730
        %v4341 = vunpack.c.h.b16 %v3730
        %v4342 = vunpack.c.l.b16 %v3731
        %v4343 = vunpack.c.h.b16 %v3731
        %v4344 = vunpack.c.l.b16 %v3732
        %v4345 = vunpack.c.h.b16 %v3732
        %v4346 = vunpack.c.l.b16 %v3733
        %v4347 = vunpack.c.h.b16 %v3733
        %v4348 = vunpack.c.l.b16 %v3734
        %v4349 = vunpack.c.h.b16 %v3734
        %v4350 = vunpack.c.l.b16 %v3735
        %v4351 = vunpack.c.h.b16 %v3735
        %v4352 = vunpack.c.l.b16 %v3736
        %v4353 = vunpack.c.h.b16 %v3736
        %v4354 = vunpack.c.l.b16 %v3737
        %v4355 = vunpack.c.h.b16 %v3737
        %v4356 = vunpack.c.l.b16 %v3738
        %v4357 = vunpack.c.h.b16 %v3738
        %v4358 = vunpack.c.l.b16 %v3739
        %v4359 = vunpack.c.h.b16 %v3739
        %v4360 = vunpack.c.l.b16 %v3740
        %v4361 = vunpack.c.h.b16 %v3740
        %v4362 = vunpack.c.l.b16 %v3741
        %v4363 = vunpack.c.h.b16 %v3741
        %v4364 = vunpack.c.l.b16 %v3742
        %v4365 = vunpack.c.h.b16 %v3742
        %v4366 = vunpack.c.l.b16 %v3743
        %v4367 = vunpack.c.h.b16 %v3743
        %v4368 = vunpack.c.l.b16 %v3744
        %v4369 = vunpack.c.h.b16 %v3744
        %v4370 = vunpack.c.l.b16 %v3745
        %v4371 = vunpack.c.h.b16 %v3745
        %v4372 = vunpack.c.l.b16 %v3746
        %v4373 = vunpack.c.h.b16 %v3746
        %v4374 = vunpack.c.l.b16 %v3747
        %v4375 = vunpack.c.h.b16 %v3747
        %v4376 = vunpack.c.l.b16 %v3748
        %v4377 = vunpack.c.h.b16 %v3748
        %v4378 = vunpack.c.l.b16 %v3749
        %v4379 = vunpack.c.h.b16 %v3749
        %v4380 = vunpack.c.l.b16 %v3750
        %v4381 = vunpack.c.h.b16 %v3750
        %v4382 = vunpack.c.l.b16 %v3751
        %v4383 = vunpack.c.h.b16 %v3751
        %v4384 = vunpack.c.l.b16 %v3752
        %v4385 = vunpack.c.h.b16 %v3752
        %v4386 = vunpack.c.l.b16 %v3753
        %v4387 = vunpack.c.h.b16 %v3753
        %v4388 = vunpack.c.l.b16 %v3754
        %v4389 = vunpack.c.h.b16 %v3754
        %v4390 = vunpack.c.l.b16 %v3755
        %v4391 = vunpack.c.h.b16 %v3755
        %v4392 = vunpack.c.l.b16 %v3756
        %v4393 = vunpack.c.h.b16 %v3756
        %v4394 = vunpack.c.l.b16 %v3757
        %v4395 = vunpack.c.h.b16 %v3757
        %v4396 = vunpack.c.l.b16 %v3758
        %v4397 = vunpack.c.h.b16 %v3758
        %v4398 = vunpack.c.l.b16 %v3759
        %v4399 = vunpack.c.h.b16 %v3759
        %v4400 = vunpack.c.l.b16 %v3760
        %v4401 = vunpack.c.h.b16 %v3760
        %v4402 = vunpack.c.l.b16 %v3761
        %v4403 = vunpack.c.h.b16 %v3761
        %v4404 = vunpack.c.l.b16 %v3762
        %v4405 = vunpack.c.h.b16 %v3762
        %v4406 = vunpack.c.l.b16 %v3763
        %v4407 = vunpack.c.h.b16 %v3763
        %v4408 = vunpack.c.l.b16 %v3764
        %v4409 = vunpack.c.h.b16 %v3764
        %v4410 = vunpack.c.l.b16 %v3765
        %v4411 = vunpack.c.h.b16 %v3765
        %v4412 = vunpack.c.l.b16 %v3766
        %v4413 = vunpack.c.h.b16 %v3766
        %v4414 = vunpack.c.l.b16 %v3767
        %v4415 = vunpack.c.h.b16 %v3767
        %v4416 = vunpack.c.l.b16 %v3768
        %v4417 = vunpack.c.h.b16 %v3768
        %v4418 = vunpack.c.l.b16 %v3769
        %v4419 = vunpack.c.h.b16 %v3769
        %v4420 = vunpack.c.l.b16 %v3770
        %v4421 = vunpack.c.h.b16 %v3770
        %v4422 = vunpack.c.l.b16 %v3771
        %v4423 = vunpack.c.h.b16 %v3771
        %v4424 = vunpack.c.l.b16 %v3772
        %v4425 = vunpack.c.h.b16 %v3772
        %v4426 = vunpack.c.l.b16 %v3773
        %v4427 = vunpack.c.h.b16 %v3773
        %v4428 = vunpack.c.l.b16 %v3774
        %v4429 = vunpack.c.h.b16 %v3774
        %v4430 = vunpack.c.l.b16 %v3775
        %v4431 = vunpack.c.h.b16 %v3775
        %v4432 = vunpack.c.l.b16 %v3776
        %v4433 = vunpack.c.h.b16 %v3776
        %v4434 = vunpack.c.l.b16 %v3777
        %v4435 = vunpack.c.h.b16 %v3777
        %v4436 = vunpack.c.l.b16 %v3778
        %v4437 = vunpack.c.h.b16 %v3778
        %v4438 = vunpack.c.l.b16 %v3779
        %v4439 = vunpack.c.h.b16 %v3779
        %v4440 = vunpack.c.l.b16 %v3780
        %v4441 = vunpack.c.h.b16 %v3780
        %v4442 = vunpack.c.l.b16 %v3781
        %v4443 = vunpack.c.h.b16 %v3781
        %v4444 = vunpack.c.l.b16 %v3782
        %v4445 = vunpack.c.h.b16 %v3782
        %v4446 = vunpack.c.l.b16 %v3783
        %v4447 = vunpack.c.h.b16 %v3783
        %v4448 = vunpack.c.l.b16 %v3784
        %v4449 = vunpack.c.h.b16 %v3784
        %v4450 = vunpack.c.l.b16 %v3785
        %v4451 = vunpack.c.h.b16 %v3785
        %v4452 = vunpack.c.l.b16 %v3786
        %v4453 = vunpack.c.h.b16 %v3786
        %v4454 = vunpack.c.l.b16 %v3787
        %v4455 = vunpack.c.h.b16 %v3787
        %v4456 = vunpack.c.l.b16 %v3788
        %v4457 = vunpack.c.h.b16 %v3788
        %v4458 = vunpack.c.l.b16 %v3789
        %v4459 = vunpack.c.h.b16 %v3789
        %v4460 = vunpack.c.l.b16 %v3790
        %v4461 = vunpack.c.h.b16 %v3790
        %v4462 = vunpack.c.l.b16 %v3791
        %v4463 = vunpack.c.h.b16 %v3791
        %v4464 = vunpack.c.l.b16 %v3792
        %v4465 = vunpack.c.h.b16 %v3792
        %v4466 = vunpack.c.l.b16 %v3793
        %v4467 = vunpack.c.h.b16 %v3793
        %v4468 = vunpack.c.l.b16 %v3794
        %v4469 = vunpack.c.h.b16 %v3794
        %v4470 = vunpack.c.l.b16 %v3795
        %v4471 = vunpack.c.h.b16 %v3795
        %v4472 = vunpack.c.l.b16 %v3796
        %v4473 = vunpack.c.h.b16 %v3796
        %v4474 = vunpack.c.l.b16 %v3797
        %v4475 = vunpack.c.h.b16 %v3797
        %v4476 = vunpack.c.l.b16 %v3798
        %v4477 = vunpack.c.h.b16 %v3798
        %v4478 = vunpack.c.l.b16 %v3799
        %v4479 = vunpack.c.h.b16 %v3799
        %v4480 = vunpack.c.l.b16 %v3800
        %v4481 = vunpack.c.h.b16 %v3800
        %v4482 = vunpack.c.l.b16 %v3801
        %v4483 = vunpack.c.h.b16 %v3801
        %v4484 = vunpack.c.l.b16 %v3802
        %v4485 = vunpack.c.h.b16 %v3802
        %v4486 = vunpack.c.l.b16 %v3803
        %v4487 = vunpack.c.h.b16 %v3803
        %v4488 = vunpack.c.l.b16 %v3804
        %v4489 = vunpack.c.h.b16 %v3804
        %v4490 = vunpack.c.l.b16 %v3805
        %v4491 = vunpack.c.h.b16 %v3805
        %v4492 = vunpack.c.l.b16 %v3806
        %v4493 = vunpack.c.h.b16 %v3806
        %v4494 = vunpack.c.l.b16 %v3807
        %v4495 = vunpack.c.h.b16 %v3807
        %v4496 = vunpack.c.l.b16 %v3808
        %v4497 = vunpack.c.h.b16 %v3808
        %v4498 = vunpack.c.l.b16 %v3809
        %v4499 = vunpack.c.h.b16 %v3809
        %v4500 = vunpack.c.l.b16 %v3810
        %v4501 = vunpack.c.h.b16 %v3810
        %v4502 = vunpack.c.l.b16 %v3811
        %v4503 = vunpack.c.h.b16 %v3811
        %v4504 = vunpack.c.l.b16 %v3812
        %v4505 = vunpack.c.h.b16 %v3812
        %v4506 = vunpack.c.l.b16 %v3813
        %v4507 = vunpack.c.h.b16 %v3813
        %v4508 = vunpack.c.l.b16 %v3814
        %v4509 = vunpack.c.h.b16 %v3814
        %v4510 = vunpack.c.l.b16 %v3815
        %v4511 = vunpack.c.h.b16 %v3815
        %v4512 = vunpack.c.l.b16 %v3816
        %v4513 = vunpack.c.h.b16 %v3816
        %v4514 = vunpack.c.l.b16 %v3817
        %v4515 = vunpack.c.h.b16 %v3817
        %v4516 = vunpack.c.l.b16 %v3818
        %v4517 = vunpack.c.h.b16 %v3818
        %v4518 = vunpack.c.l.b16 %v3819
        %v4519 = vunpack.c.h.b16 %v3819
        %v4520 = vunpack.c.l.b16 %v3820
        %v4521 = vunpack.c.h.b16 %v3820
        %v4522 = vunpack.c.l.b16 %v3821
        %v4523 = vunpack.c.h.b16 %v3821
        %v4524 = vunpack.c.l.b16 %v3822
        %v4525 = vunpack.c.h.b16 %v3822
        %v4526 = vunpack.c.l.b16 %v3823
        %v4527 = vunpack.c.h.b16 %v3823
        %v4528 = vunpack.c.l.b16 %v3824
        %v4529 = vunpack.c.h.b16 %v3824
        %v4530 = vunpack.c.l.b16 %v3825
        %v4531 = vunpack.c.h.b16 %v3825
        %v4532 = vunpack.c.l.b16 %v3826
        %v4533 = vunpack.c.h.b16 %v3826
        %v4534 = vunpack.c.l.b16 %v3827
        %v4535 = vunpack.c.h.b16 %v3827
        %v4536 = vunpack.c.l.b16 %v3828
        %v4537 = vunpack.c.h.b16 %v3828
        %v4538 = vunpack.c.l.b16 %v3829
        %v4539 = vunpack.c.h.b16 %v3829
        %v4540 = vunpack.c.l.b16 %v3830
        %v4541 = vunpack.c.h.b16 %v3830
        %v4542 = vunpack.c.l.b16 %v3831
        %v4543 = vunpack.c.h.b16 %v3831
        %v4544 = vunpack.c.l.b16 %v3832
        %v4545 = vunpack.c.h.b16 %v3832
        %v4546 = vunpack.c.l.b16 %v3833
        %v4547 = vunpack.c.h.b16 %v3833
        %v4548 = vunpack.c.l.b16 %v3834
        %v4549 = vunpack.c.h.b16 %v3834
        %v4550 = vunpack.c.l.b16 %v3835
        %v4551 = vunpack.c.h.b16 %v3835
        %v4552 = vunpack.c.l.b16 %v3836
        %v4553 = vunpack.c.h.b16 %v3836
        %v4554 = vunpack.c.l.b16 %v3837
        %v4555 = vunpack.c.h.b16 %v3837
        %v4556 = vunpack.c.l.b16 %v3838
        %v4557 = vunpack.c.h.b16 %v3838
        %v4558 = vunpack.c.l.b16 %v3839
        %v4559 = vunpack.c.h.b16 %v3839
        %v4560 = vunpack.c.l.b16 %v3840
        %v4561 = vunpack.c.h.b16 %v3840
        %v4562 = vunpack.c.l.b16 %v3841
        %v4563 = vunpack.c.h.b16 %v3841
        %v4564 = vunpack.c.l.b16 %v3842
        %v4565 = vunpack.c.h.b16 %v3842
        %v4566 = vunpack.c.l.b16 %v3843
        %v4567 = vunpack.c.h.b16 %v3843
        %v4568 = vunpack.c.l.b16 %v3844
        %v4569 = vunpack.c.h.b16 %v3844
        %v4570 = vunpack.c.l.b16 %v3845
        %v4571 = vunpack.c.h.b16 %v3845
        %v4572 = vunpack.c.l.b16 %v3846
        %v4573 = vunpack.c.h.b16 %v3846
        %v4574 = vunpack.c.l.b16 %v3847
        %v4575 = vunpack.c.h.b16 %v3847
        %v4576 = vunpack.c.l.b16 %v3848
        %v4577 = vunpack.c.h.b16 %v3848
        %v4578 = vunpack.c.l.b16 %v3849
        %v4579 = vunpack.c.h.b16 %v3849
        %v4580 = vunpack.c.l.b16 %v3850
        %v4581 = vunpack.c.h.b16 %v3850
        %v4582 = vunpack.c.l.b16 %v3851
        %v4583 = vunpack.c.h.b16 %v3851
        %v4584 = vunpack.c.l.b16 %v3852
        %v4585 = vunpack.c.h.b16 %v3852
        %v4586 = vunpack.c.l.b16 %v3853
        %v4587 = vunpack.c.h.b16 %v3853
        %v4588 = vunpack.c.l.b16 %v3854
        %v4589 = vunpack.c.h.b16 %v3854
        %v4590 = vunpack.c.l.b16 %v3855
        %v4591 = vunpack.c.h.b16 %v3855
        %v4592 = vunpack.c.l.b16 %v3856
        %v4593 = vunpack.c.h.b16 %v3856
        %v4594 = vunpack.c.l.b16 %v3857
        %v4595 = vunpack.c.h.b16 %v3857
        %v4596 = vunpack.c.l.b16 %v3858
        %v4597 = vunpack.c.h.b16 %v3858
        %v4598 = vunpack.c.l.b16 %v3859
        %v4599 = vunpack.c.h.b16 %v3859
        %v4600 = vunpack.c.l.b16 %v3860
        %v4601 = vunpack.c.h.b16 %v3860
        %v4602 = vunpack.c.l.b16 %v3861
        %v4603 = vunpack.c.h.b16 %v3861
        %v4604 = vunpack.c.l.b16 %v3862
        %v4605 = vunpack.c.h.b16 %v3862
        %v4606 = vunpack.c.l.b16 %v3863
        %v4607 = vunpack.c.h.b16 %v3863
        %v4608 = vunpack.c.l.b16 %v3864
        %v4609 = vunpack.c.h.b16 %v3864
        %v4610 = vunpack.c.l.b16 %v3865
        %v4611 = vunpack.c.h.b16 %v3865
        %v4612 = vunpack.c.l.b16 %v3866
        %v4613 = vunpack.c.h.b16 %v3866
        %v4614 = vunpack.c.l.b16 %v3867
        %v4615 = vunpack.c.h.b16 %v3867
        %v4616 = vunpack.c.l.b16 %v3868
        %v4617 = vunpack.c.h.b16 %v3868
        %v4618 = vunpack.c.l.b16 %v3869
        %v4619 = vunpack.c.h.b16 %v3869
        %v4620 = vunpack.c.l.b16 %v3870
        %v4621 = vunpack.c.h.b16 %v3870
        %v4622 = vunpack.c.l.b16 %v3871
        %v4623 = vunpack.c.h.b16 %v3871
        %v4624 = vunpack.c.l.b16 %v3872
        %v4625 = vunpack.c.h.b16 %v3872
        %v4626 = vunpack.c.l.b16 %v3873
        %v4627 = vunpack.c.h.b16 %v3873
        %v4628 = vunpack.c.l.b16 %v3874
        %v4629 = vunpack.c.h.b16 %v3874
        %v4630 = vunpack.c.l.b16 %v3875
        %v4631 = vunpack.c.h.b16 %v3875
        %v4632 = vunpack.c.l.b16 %v3876
        %v4633 = vunpack.c.h.b16 %v3876
        %v4634 = vunpack.c.l.b16 %v3877
        %v4635 = vunpack.c.h.b16 %v3877
        %v4636 = vunpack.c.l.b16 %v3878
        %v4637 = vunpack.c.h.b16 %v3878
        %v4638 = vunpack.c.l.b16 %v3879
        %v4639 = vunpack.c.h.b16 %v3879
        %v4640 = vunpack.c.l.b16 %v3880
        %v4641 = vunpack.c.h.b16 %v3880
        %v4642 = vunpack.c.l.b16 %v3881
        %v4643 = vunpack.c.h.b16 %v3881
        %v4644 = vunpack.c.l.b16 %v3882
        %v4645 = vunpack.c.h.b16 %v3882
        %v4646 = vunpack.c.l.b16 %v3883
        %v4647 = vunpack.c.h.b16 %v3883
        %v4648 = vunpack.c.l.b16 %v3884
        %v4649 = vunpack.c.h.b16 %v3884
        %v4650 = vunpack.c.l.b16 %v3885
        %v4651 = vunpack.c.h.b16 %v3885
        %v4652 = vunpack.c.l.b16 %v3886
        %v4653 = vunpack.c.h.b16 %v3886
        %v4654 = vunpack.c.l.b16 %v3887
        %v4655 = vunpack.c.h.b16 %v3887
        %v4656 = vpack.c.b16 %v4148, %v4144
        %v4657 = vpack.c.b16 %v4149, %v4145
        %v4658 = vpack.c.b16 %v4150, %v4146
        %v4659 = vpack.c.b16 %v4151, %v4147
        %v4660 = vpack.c.b16 %v4156, %v4152
        %v4661 = vpack.c.b16 %v4157, %v4153
        %v4662 = vpack.c.b16 %v4158, %v4154
        %v4663 = vpack.c.b16 %v4159, %v4155
        %v4664 = vpack.c.b16 %v4164, %v4160
        %v4665 = vpack.c.b16 %v4165, %v4161
        %v4666 = vpack.c.b16 %v4166, %v4162
        %v4667 = vpack.c.b16 %v4167, %v4163
        %v4668 = vpack.c.b16 %v4172, %v4168
        %v4669 = vpack.c.b16 %v4173, %v4169
        %v4670 = vpack.c.b16 %v4174, %v4170
        %v4671 = vpack.c.b16 %v4175, %v4171
        %v4672 = vpack.c.b16 %v4180, %v4176
        %v4673 = vpack.c.b16 %v4181, %v4177
        %v4674 = vpack.c.b16 %v4182, %v4178
        %v4675 = vpack.c.b16 %v4183, %v4179
        %v4676 = vpack.c.b16 %v4188, %v4184
        %v4677 = vpack.c.b16 %v4189, %v4185
        %v4678 = vpack.c.b16 %v4190, %v4186
        %v4679 = vpack.c.b16 %v4191, %v4187
        %v4680 = vpack.c.b16 %v4196, %v4192
        %v4681 = vpack.c.b16 %v4197, %v4193
        %v4682 = vpack.c.b16 %v4198, %v4194
        %v4683 = vpack.c.b16 %v4199, %v4195
        %v4684 = vpack.c.b16 %v4204, %v4200
        %v4685 = vpack.c.b16 %v4205, %v4201
        %v4686 = vpack.c.b16 %v4206, %v4202
        %v4687 = vpack.c.b16 %v4207, %v4203
        %v4688 = vpack.c.b16 %v4212, %v4208
        %v4689 = vpack.c.b16 %v4213, %v4209
        %v4690 = vpack.c.b16 %v4214, %v4210
        %v4691 = vpack.c.b16 %v4215, %v4211
        %v4692 = vpack.c.b16 %v4220, %v4216
        %v4693 = vpack.c.b16 %v4221, %v4217
        %v4694 = vpack.c.b16 %v4222, %v4218
        %v4695 = vpack.c.b16 %v4223, %v4219
        %v4696 = vpack.c.b16 %v4228, %v4224
        %v4697 = vpack.c.b16 %v4229, %v4225
        %v4698 = vpack.c.b16 %v4230, %v4226
        %v4699 = vpack.c.b16 %v4231, %v4227
        %v4700 = vpack.c.b16 %v4236, %v4232
        %v4701 = vpack.c.b16 %v4237, %v4233
        %v4702 = vpack.c.b16 %v4238, %v4234
        %v4703 = vpack.c.b16 %v4239, %v4235
        %v4704 = vpack.c.b16 %v4244, %v4240
        %v4705 = vpack.c.b16 %v4245, %v4241
        %v4706 = vpack.c.b16 %v4246, %v4242
        %v4707 = vpack.c.b16 %v4247, %v4243
        %v4708 = vpack.c.b16 %v4252, %v4248
        %v4709 = vpack.c.b16 %v4253, %v4249
        %v4710 = vpack.c.b16 %v4254, %v4250
        %v4711 = vpack.c.b16 %v4255, %v4251
        %v4712 = vpack.c.b16 %v4260, %v4256
        %v4713 = vpack.c.b16 %v4261, %v4257
        %v4714 = vpack.c.b16 %v4262, %v4258
        %v4715 = vpack.c.b16 %v4263, %v4259
        %v4716 = vpack.c.b16 %v4268, %v4264
        %v4717 = vpack.c.b16 %v4269, %v4265
        %v4718 = vpack.c.b16 %v4270, %v4266
        %v4719 = vpack.c.b16 %v4271, %v4267
        %v4720 = vpack.c.b16 %v4276, %v4272
        %v4721 = vpack.c.b16 %v4277, %v4273
        %v4722 = vpack.c.b16 %v4278, %v4274
        %v4723 = vpack.c.b16 %v4279, %v4275
        %v4724 = vpack.c.b16 %v4284, %v4280
        %v4725 = vpack.c.b16 %v4285, %v4281
        %v4726 = vpack.c.b16 %v4286, %v4282
        %v4727 = vpack.c.b16 %v4287, %v4283
        %v4728 = vpack.c.b16 %v4292, %v4288
        %v4729 = vpack.c.b16 %v4293, %v4289
        %v4730 = vpack.c.b16 %v4294, %v4290
        %v4731 = vpack.c.b16 %v4295, %v4291
        %v4732 = vpack.c.b16 %v4300, %v4296
        %v4733 = vpack.c.b16 %v4301, %v4297
        %v4734 = vpack.c.b16 %v4302, %v4298
        %v4735 = vpack.c.b16 %v4303, %v4299
        %v4736 = vpack.c.b16 %v4308, %v4304
        %v4737 = vpack.c.b16 %v4309, %v4305
        %v4738 = vpack.c.b16 %v4310, %v4306
        %v4739 = vpack.c.b16 %v4311, %v4307
        %v4740 = vpack.c.b16 %v4316, %v4312
        %v4741 = vpack.c.b16 %v4317, %v4313
        %v4742 = vpack.c.b16 %v4318, %v4314
        %v4743 = vpack.c.b16 %v4319, %v4315
        %v4744 = vpack.c.b16 %v4324, %v4320
        %v4745 = vpack.c.b16 %v4325, %v4321
        %v4746 = vpack.c.b16 %v4326, %v4322
        %v4747 = vpack.c.b16 %v4327, %v4323
        %v4748 = vpack.c.b16 %v4332, %v4328
        %v4749 = vpack.c.b16 %v4333, %v4329
        %v4750 = vpack.c.b16 %v4334, %v4330
        %v4751 = vpack.c.b16 %v4335, %v4331
        %v4752 = vpack.c.b16 %v4340, %v4336
        %v4753 = vpack.c.b16 %v4341, %v4337
        %v4754 = vpack.c.b16 %v4342, %v4338
        %v4755 = vpack.c.b16 %v4343, %v4339
        %v4756 = vpack.c.b16 %v4348, %v4344
        %v4757 = vpack.c.b16 %v4349, %v4345
        %v4758 = vpack.c.b16 %v4350, %v4346
        %v4759 = vpack.c.b16 %v4351, %v4347
        %v4760 = vpack.c.b16 %v4356, %v4352
        %v4761 = vpack.c.b16 %v4357, %v4353
        %v4762 = vpack.c.b16 %v4358, %v4354
        %v4763 = vpack.c.b16 %v4359, %v4355
        %v4764 = vpack.c.b16 %v4364, %v4360
        %v4765 = vpack.c.b16 %v4365, %v4361
        %v4766 = vpack.c.b16 %v4366, %v4362
        %v4767 = vpack.c.b16 %v4367, %v4363
        %v4768 = vpack.c.b16 %v4372, %v4368
        %v4769 = vpack.c.b16 %v4373, %v4369
        %v4770 = vpack.c.b16 %v4374, %v4370
        %v4771 = vpack.c.b16 %v4375, %v4371
        %v4772 = vpack.c.b16 %v4380, %v4376
        %v4773 = vpack.c.b16 %v4381, %v4377
        %v4774 = vpack.c.b16 %v4382, %v4378
        %v4775 = vpack.c.b16 %v4383, %v4379
        %v4776 = vpack.c.b16 %v4388, %v4384
        %v4777 = vpack.c.b16 %v4389, %v4385
        %v4778 = vpack.c.b16 %v4390, %v4386
        %v4779 = vpack.c.b16 %v4391, %v4387
        %v4780 = vpack.c.b16 %v4396, %v4392
        %v4781 = vpack.c.b16 %v4397, %v4393
        %v4782 = vpack.c.b16 %v4398, %v4394
        %v4783 = vpack.c.b16 %v4399, %v4395
        %v4784 = vpack.c.b16 %v4404, %v4400
        %v4785 = vpack.c.b16 %v4405, %v4401
        %v4786 = vpack.c.b16 %v4406, %v4402
        %v4787 = vpack.c.b16 %v4407, %v4403
        %v4788 = vpack.c.b16 %v4412, %v4408
        %v4789 = vpack.c.b16 %v4413, %v4409
        %v4790 = vpack.c.b16 %v4414, %v4410
        %v4791 = vpack.c.b16 %v4415, %v4411
        %v4792 = vpack.c.b16 %v4420, %v4416
        %v4793 = vpack.c.b16 %v4421, %v4417
        %v4794 = vpack.c.b16 %v4422, %v4418
        %v4795 = vpack.c.b16 %v4423, %v4419
        %v4796 = vpack.c.b16 %v4428, %v4424
        %v4797 = vpack.c.b16 %v4429, %v4425
        %v4798 = vpack.c.b16 %v4430, %v4426
        %v4799 = vpack.c.b16 %v4431, %v4427
        %v4800 = vpack.c.b16 %v4436, %v4432
        %v4801 = vpack.c.b16 %v4437, %v4433
        %v4802 = vpack.c.b16 %v4438, %v4434
        %v4803 = vpack.c.b16 %v4439, %v4435
        %v4804 = vpack.c.b16 %v4444, %v4440
        %v4805 = vpack.c.b16 %v4445, %v4441
        %v4806 = vpack.c.b16 %v4446, %v4442
        %v4807 = vpack.c.b16 %v4447, %v4443
        %v4808 = vpack.c.b16 %v4452, %v4448
        %v4809 = vpack.c.b16 %v4453, %v4449
        %v4810 = vpack.c.b16 %v4454, %v4450
        %v4811 = vpack.c.b16 %v4455, %v4451
        %v4812 = vpack.c.b16 %v4460, %v4456
        %v4813 = vpack.c.b16 %v4461, %v4457
        %v4814 = vpack.c.b16 %v4462, %v4458
        %v4815 = vpack.c.b16 %v4463, %v4459
        %v4816 = vpack.c.b16 %v4468, %v4464
        %v4817 = vpack.c.b16 %v4469, %v4465
        %v4818 = vpack.c.b16 %v4470, %v4466
        %v4819 = vpack.c.b16 %v4471, %v4467
        %v4820 = vpack.c.b16 %v4476, %v4472
        %v4821 = vpack.c.b16 %v4477, %v4473
        %v4822 = vpack.c.b16 %v4478, %v4474
        %v4823 = vpack.c.b16 %v4479, %v4475
        %v4824 = vpack.c.b16 %v4484, %v4480
        %v4825 = vpack.c.b16 %v4485, %v4481
        %v4826 = vpack.c.b16 %v4486, %v4482
        %v4827 = vpack.c.b16 %v4487, %v4483
        %v4828 = vpack.c.b16 %v4492, %v4488
        %v4829 = vpack.c.b16 %v4493, %v4489
        %v4830 = vpack.c.b16 %v4494, %v4490
        %v4831 = vpack.c.b16 %v4495, %v4491
        %v4832 = vpack.c.b16 %v4500, %v4496
        %v4833 = vpack.c.b16 %v4501, %v4497
        %v4834 = vpack.c.b16 %v4502, %v4498
        %v4835 = vpack.c.b16 %v4503, %v4499
        %v4836 = vpack.c.b16 %v4508, %v4504
        %v4837 = vpack.c.b16 %v4509, %v4505
        %v4838 = vpack.c.b16 %v4510, %v4506
        %v4839 = vpack.c.b16 %v4511, %v4507
        %v4840 = vpack.c.b16 %v4516, %v4512
        %v4841 = vpack.c.b16 %v4517, %v4513
        %v4842 = vpack.c.b16 %v4518, %v4514
        %v4843 = vpack.c.b16 %v4519, %v4515
        %v4844 = vpack.c.b16 %v4524, %v4520
        %v4845 = vpack.c.b16 %v4525, %v4521
        %v4846 = vpack.c.b16 %v4526, %v4522
        %v4847 = vpack.c.b16 %v4527, %v4523
        %v4848 = vpack.c.b16 %v4532, %v4528
        %v4849 = vpack.c.b16 %v4533, %v4529
        %v4850 = vpack.c.b16 %v4534, %v4530
        %v4851 = vpack.c.b16 %v4535, %v4531
        %v4852 = vpack.c.b16 %v4540, %v4536
        %v4853 = vpack.c.b16 %v4541, %v4537
        %v4854 = vpack.c.b16 %v4542, %v4538
        %v4855 = vpack.c.b16 %v4543, %v4539
        %v4856 = vpack.c.b16 %v4548, %v4544
        %v4857 = vpack.c.b16 %v4549, %v4545
        %v4858 = vpack.c.b16 %v4550, %v4546
        %v4859 = vpack.c.b16 %v4551, %v4547
        %v4860 = vpack.c.b16 %v4556, %v4552
        %v4861 = vpack.c.b16 %v4557, %v4553
        %v4862 = vpack.c.b16 %v4558, %v4554
        %v4863 = vpack.c.b16 %v4559, %v4555
        %v4864 = vpack.c.b16 %v4564, %v4560
        %v4865 = vpack.c.b16 %v4565, %v4561
        %v4866 = vpack.c.b16 %v4566, %v4562
        %v4867 = vpack.c.b16 %v4567, %v4563
        %v4868 = vpack.c.b16 %v4572, %v4568
        %v4869 = vpack.c.b16 %v4573, %v4569
        %v4870 = vpack.c.b16 %v4574, %v4570
        %v4871 = vpack.c.b16 %v4575, %v4571
        %v4872 = vpack.c.b16 %v4580, %v4576
        %v4873 = vpack.c.b16 %v4581, %v4577
        %v4874 = vpack.c.b16 %v4582, %v4578
        %v4875 = vpack.c.b16 %v4583, %v4579
        %v4876 = vpack.c.b16 %v4588, %v4584
        %v4877 = vpack.c.b16 %v4589, %v4585
        %v4878 = vpack.c.b16 %v4590, %v4586
        %v4879 = vpack.c.b16 %v4591, %v4587
        %v4880 = vpack.c.b16 %v4596, %v4592
        %v4881 = vpack.c.b16 %v4597, %v4593
        %v4882 = vpack.c.b16 %v4598, %v4594
        %v4883 = vpack.c.b16 %v4599, %v4595
        %v4884 = vpack.c.b16 %v4604, %v4600
        %v4885 = vpack.c.b16 %v4605, %v4601
        %v4886 = vpack.c.b16 %v4606, %v4602
        %v4887 = vpack.c.b16 %v4607, %v4603
        %v4888 = vpack.c.b16 %v4612, %v4608
        %v4889 = vpack.c.b16 %v4613, %v4609
        %v4890 = vpack.c.b16 %v4614, %v4610
        %v4891 = vpack.c.b16 %v4615, %v4611
        %v4892 = vpack.c.b16 %v4620, %v4616
        %v4893 = vpack.c.b16 %v4621, %v4617
        %v4894 = vpack.c.b16 %v4622, %v4618
        %v4895 = vpack.c.b16 %v4623, %v4619
        %v4896 = vpack.c.b16 %v4628, %v4624
        %v4897 = vpack.c.b16 %v4629, %v4625
        %v4898 = vpack.c.b16 %v4630, %v4626
        %v4899 = vpack.c.b16 %v4631, %v4627
        %v4900 = vpack.c.b16 %v4636, %v4632
        %v4901 = vpack.c.b16 %v4637, %v4633
        %v4902 = vpack.c.b16 %v4638, %v4634
        %v4903 = vpack.c.b16 %v4639, %v4635
        %v4904 = vpack.c.b16 %v4644, %v4640
        %v4905 = vpack.c.b16 %v4645, %v4641
        %v4906 = vpack.c.b16 %v4646, %v4642
        %v4907 = vpack.c.b16 %v4647, %v4643
        %v4908 = vpack.c.b16 %v4652, %v4648
        %v4909 = vpack.c.b16 %v4653, %v4649
        %v4910 = vpack.c.b16 %v4654, %v4650
        %v4911 = vpack.c.b16 %v4655, %v4651
        %5168 = vmatpush.bf16.xpose.msra.mxu0 0
        %5169 = vmatpush.bf16.xpose.msra.mxu0 0
        %5170 = vmatpush.bf16.xpose.msra.mxu0 0
        %5171 = vmatpush.bf16.xpose.msra.mxu0 0
        %5172 = vmatpush.bf16.xpose.msra.mxu0 %v3628
        %5173 = vmatpush.bf16.xpose.msra.mxu0 %v3624
        %5174 = vmatpush.bf16.xpose.msra.mxu0 %v3620
        %5175 = vmatpush.bf16.xpose.msra.mxu0 %v3616
        %5176 = vmatmul.bf16.gmra.mxu0 %v4656
        %v5177 = vpop.f32.mrf.mxu0
        %v5178 = vadd.f32 0.0, %v5177
        %v5179 = vpop.f32.mrf.mxu0
        %v5180 = vadd.f32 0.0, %v5179
        %5181 = vmatmul.bf16.gmra.mxu0 %v4660
        %v5182 = vpop.f32.mrf.mxu0
        %v5183 = vadd.f32 0.0, %v5182
        %v5184 = vpop.f32.mrf.mxu0
        %v5185 = vadd.f32 0.0, %v5184
        %5186 = vmatmul.bf16.gmra.mxu0 %v4664
        %v5187 = vpop.f32.mrf.mxu0
        %v5188 = vadd.f32 0.0, %v5187
        %v5189 = vpop.f32.mrf.mxu0
        %v5190 = vadd.f32 0.0, %v5189
        %5191 = vmatmul.bf16.gmra.mxu0 %v4668
        %v5192 = vpop.f32.mrf.mxu0
        %v5193 = vadd.f32 0.0, %v5192
        %v5194 = vpop.f32.mrf.mxu0
        %v5195 = vadd.f32 0.0, %v5194
        %5196 = vmatmul.bf16.gmra.mxu0 %v4672
        %v5197 = vpop.f32.mrf.mxu0
        %v5198 = vadd.f32 0.0, %v5197
        %v5199 = vpop.f32.mrf.mxu0
        %v5200 = vadd.f32 0.0, %v5199
        %5201 = vmatmul.bf16.gmra.mxu0 %v4676
        %v5202 = vpop.f32.mrf.mxu0
        %v5203 = vadd.f32 0.0, %v5202
        %v5204 = vpop.f32.mrf.mxu0
        %v5205 = vadd.f32 0.0, %v5204
        %5206 = vmatmul.bf16.gmra.mxu0 %v4680
        %v5207 = vpop.f32.mrf.mxu0
        %v5208 = vadd.f32 0.0, %v5207
        %v5209 = vpop.f32.mrf.mxu0
        %v5210 = vadd.f32 0.0, %v5209
        %5211 = vmatmul.bf16.gmra.mxu0 %v4684
        %v5212 = vpop.f32.mrf.mxu0
        %v5213 = vadd.f32 0.0, %v5212
        %v5214 = vpop.f32.mrf.mxu0
        %v5215 = vadd.f32 0.0, %v5214
        %5216 = vmatmul.bf16.gmra.mxu0 %v4688
        %v5217 = vpop.f32.mrf.mxu0
        %v5218 = vadd.f32 0.0, %v5217
        %v5219 = vpop.f32.mrf.mxu0
        %v5220 = vadd.f32 0.0, %v5219
        %5221 = vmatmul.bf16.gmra.mxu0 %v4692
        %v5222 = vpop.f32.mrf.mxu0
        %v5223 = vadd.f32 0.0, %v5222
        %v5224 = vpop.f32.mrf.mxu0
        %v5225 = vadd.f32 0.0, %v5224
        %5226 = vmatmul.bf16.gmra.mxu0 %v4696
        %v5227 = vpop.f32.mrf.mxu0
        %v5228 = vadd.f32 0.0, %v5227
        %v5229 = vpop.f32.mrf.mxu0
        %v5230 = vadd.f32 0.0, %v5229
        %5231 = vmatmul.bf16.gmra.mxu0 %v4700
        %v5232 = vpop.f32.mrf.mxu0
        %v5233 = vadd.f32 0.0, %v5232
        %v5234 = vpop.f32.mrf.mxu0
        %v5235 = vadd.f32 0.0, %v5234
        %5236 = vmatmul.bf16.gmra.mxu0 %v4704
        %v5237 = vpop.f32.mrf.mxu0
        %v5238 = vadd.f32 0.0, %v5237
        %v5239 = vpop.f32.mrf.mxu0
        %v5240 = vadd.f32 0.0, %v5239
        %5241 = vmatmul.bf16.gmra.mxu0 %v4708
        %v5242 = vpop.f32.mrf.mxu0
        %v5243 = vadd.f32 0.0, %v5242
        %v5244 = vpop.f32.mrf.mxu0
        %v5245 = vadd.f32 0.0, %v5244
        %5246 = vmatmul.bf16.gmra.mxu0 %v4712
        %v5247 = vpop.f32.mrf.mxu0
        %v5248 = vadd.f32 0.0, %v5247
        %v5249 = vpop.f32.mrf.mxu0
        %v5250 = vadd.f32 0.0, %v5249
        %5251 = vmatmul.bf16.gmra.mxu0 %v4716
        %v5252 = vpop.f32.mrf.mxu0
        %v5253 = vadd.f32 0.0, %v5252
        %v5254 = vpop.f32.mrf.mxu0
        %v5255 = vadd.f32 0.0, %v5254
        %5256 = vmatmul.bf16.gmra.mxu0 %v4720
        %v5257 = vpop.f32.mrf.mxu0
        %v5258 = vadd.f32 0.0, %v5257
        %v5259 = vpop.f32.mrf.mxu0
        %v5260 = vadd.f32 0.0, %v5259
        %5261 = vmatmul.bf16.gmra.mxu0 %v4724
        %v5262 = vpop.f32.mrf.mxu0
        %v5263 = vadd.f32 0.0, %v5262
        %v5264 = vpop.f32.mrf.mxu0
        %v5265 = vadd.f32 0.0, %v5264
        %5266 = vmatmul.bf16.gmra.mxu0 %v4728
        %v5267 = vpop.f32.mrf.mxu0
        %v5268 = vadd.f32 0.0, %v5267
        %v5269 = vpop.f32.mrf.mxu0
        %v5270 = vadd.f32 0.0, %v5269
        %5271 = vmatmul.bf16.gmra.mxu0 %v4732
        %v5272 = vpop.f32.mrf.mxu0
        %v5273 = vadd.f32 0.0, %v5272
        %v5274 = vpop.f32.mrf.mxu0
        %v5275 = vadd.f32 0.0, %v5274
        %5276 = vmatmul.bf16.gmra.mxu0 %v4736
        %v5277 = vpop.f32.mrf.mxu0
        %v5278 = vadd.f32 0.0, %v5277
        %v5279 = vpop.f32.mrf.mxu0
        %v5280 = vadd.f32 0.0, %v5279
        %5281 = vmatmul.bf16.gmra.mxu0 %v4740
        %v5282 = vpop.f32.mrf.mxu0
        %v5283 = vadd.f32 0.0, %v5282
        %v5284 = vpop.f32.mrf.mxu0
        %v5285 = vadd.f32 0.0, %v5284
        %5286 = vmatmul.bf16.gmra.mxu0 %v4744
        %v5287 = vpop.f32.mrf.mxu0
        %v5288 = vadd.f32 0.0, %v5287
        %v5289 = vpop.f32.mrf.mxu0
        %v5290 = vadd.f32 0.0, %v5289
        %5291 = vmatmul.bf16.gmra.mxu0 %v4748
        %v5292 = vpop.f32.mrf.mxu0
        %v5293 = vadd.f32 0.0, %v5292
        %v5294 = vpop.f32.mrf.mxu0
        %v5295 = vadd.f32 0.0, %v5294
        %5296 = vmatmul.bf16.gmra.mxu0 %v4752
        %v5297 = vpop.f32.mrf.mxu0
        %v5298 = vadd.f32 0.0, %v5297
        %v5299 = vpop.f32.mrf.mxu0
        %v5300 = vadd.f32 0.0, %v5299
        %5301 = vmatmul.bf16.gmra.mxu0 %v4756
        %v5302 = vpop.f32.mrf.mxu0
        %v5303 = vadd.f32 0.0, %v5302
        %v5304 = vpop.f32.mrf.mxu0
        %v5305 = vadd.f32 0.0, %v5304
        %5306 = vmatmul.bf16.gmra.mxu0 %v4760
        %v5307 = vpop.f32.mrf.mxu0
        %v5308 = vadd.f32 0.0, %v5307
        %v5309 = vpop.f32.mrf.mxu0
        %v5310 = vadd.f32 0.0, %v5309
        %5311 = vmatmul.bf16.gmra.mxu0 %v4764
        %v5312 = vpop.f32.mrf.mxu0
        %v5313 = vadd.f32 0.0, %v5312
        %v5314 = vpop.f32.mrf.mxu0
        %v5315 = vadd.f32 0.0, %v5314
        %5316 = vmatmul.bf16.gmra.mxu0 %v4768
        %v5317 = vpop.f32.mrf.mxu0
        %v5318 = vadd.f32 0.0, %v5317
        %v5319 = vpop.f32.mrf.mxu0
        %v5320 = vadd.f32 0.0, %v5319
        %5321 = vmatmul.bf16.gmra.mxu0 %v4772
        %v5322 = vpop.f32.mrf.mxu0
        %v5323 = vadd.f32 0.0, %v5322
        %v5324 = vpop.f32.mrf.mxu0
        %v5325 = vadd.f32 0.0, %v5324
        %5326 = vmatmul.bf16.gmra.mxu0 %v4776
        %v5327 = vpop.f32.mrf.mxu0
        %v5328 = vadd.f32 0.0, %v5327
        %v5329 = vpop.f32.mrf.mxu0
        %v5330 = vadd.f32 0.0, %v5329
        %5331 = vmatmul.bf16.gmra.mxu0 %v4780
        %v5332 = vpop.f32.mrf.mxu0
        %v5333 = vadd.f32 0.0, %v5332
        %v5334 = vpop.f32.mrf.mxu0
        %v5335 = vadd.f32 0.0, %v5334
        %5336 = vmatmul.bf16.gmra.mxu0 %v4784
        %v5337 = vpop.f32.mrf.mxu0
        %v5338 = vadd.f32 0.0, %v5337
        %v5339 = vpop.f32.mrf.mxu0
        %v5340 = vadd.f32 0.0, %v5339
        %5341 = vmatmul.bf16.gmra.mxu0 %v4788
        %v5342 = vpop.f32.mrf.mxu0
        %v5343 = vadd.f32 0.0, %v5342
        %v5344 = vpop.f32.mrf.mxu0
        %v5345 = vadd.f32 0.0, %v5344
        %5346 = vmatmul.bf16.gmra.mxu0 %v4792
        %v5347 = vpop.f32.mrf.mxu0
        %v5348 = vadd.f32 0.0, %v5347
        %v5349 = vpop.f32.mrf.mxu0
        %v5350 = vadd.f32 0.0, %v5349
        %5351 = vmatmul.bf16.gmra.mxu0 %v4796
        %v5352 = vpop.f32.mrf.mxu0
        %v5353 = vadd.f32 0.0, %v5352
        %v5354 = vpop.f32.mrf.mxu0
        %v5355 = vadd.f32 0.0, %v5354
        %5356 = vmatmul.bf16.gmra.mxu0 %v4800
        %v5357 = vpop.f32.mrf.mxu0
        %v5358 = vadd.f32 0.0, %v5357
        %v5359 = vpop.f32.mrf.mxu0
        %v5360 = vadd.f32 0.0, %v5359
        %5361 = vmatmul.bf16.gmra.mxu0 %v4804
        %v5362 = vpop.f32.mrf.mxu0
        %v5363 = vadd.f32 0.0, %v5362
        %v5364 = vpop.f32.mrf.mxu0
        %v5365 = vadd.f32 0.0, %v5364
        %5366 = vmatmul.bf16.gmra.mxu0 %v4808
        %v5367 = vpop.f32.mrf.mxu0
        %v5368 = vadd.f32 0.0, %v5367
        %v5369 = vpop.f32.mrf.mxu0
        %v5370 = vadd.f32 0.0, %v5369
        %5371 = vmatmul.bf16.gmra.mxu0 %v4812
        %v5372 = vpop.f32.mrf.mxu0
        %v5373 = vadd.f32 0.0, %v5372
        %v5374 = vpop.f32.mrf.mxu0
        %v5375 = vadd.f32 0.0, %v5374
        %5376 = vmatmul.bf16.gmra.mxu0 %v4816
        %v5377 = vpop.f32.mrf.mxu0
        %v5378 = vadd.f32 0.0, %v5377
        %v5379 = vpop.f32.mrf.mxu0
        %v5380 = vadd.f32 0.0, %v5379
        %5381 = vmatmul.bf16.gmra.mxu0 %v4820
        %v5382 = vpop.f32.mrf.mxu0
        %v5383 = vadd.f32 0.0, %v5382
        %v5384 = vpop.f32.mrf.mxu0
        %v5385 = vadd.f32 0.0, %v5384
        %5386 = vmatmul.bf16.gmra.mxu0 %v4824
        %v5387 = vpop.f32.mrf.mxu0
        %v5388 = vadd.f32 0.0, %v5387
        %v5389 = vpop.f32.mrf.mxu0
        %v5390 = vadd.f32 0.0, %v5389
        %5391 = vmatmul.bf16.gmra.mxu0 %v4828
        %v5392 = vpop.f32.mrf.mxu0
        %v5393 = vadd.f32 0.0, %v5392
        %v5394 = vpop.f32.mrf.mxu0
        %v5395 = vadd.f32 0.0, %v5394
        %5396 = vmatmul.bf16.gmra.mxu0 %v4832
        %v5397 = vpop.f32.mrf.mxu0
        %v5398 = vadd.f32 0.0, %v5397
        %v5399 = vpop.f32.mrf.mxu0
        %v5400 = vadd.f32 0.0, %v5399
        %5401 = vmatmul.bf16.gmra.mxu0 %v4836
        %v5402 = vpop.f32.mrf.mxu0
        %v5403 = vadd.f32 0.0, %v5402
        %v5404 = vpop.f32.mrf.mxu0
        %v5405 = vadd.f32 0.0, %v5404
        %5406 = vmatmul.bf16.gmra.mxu0 %v4840
        %v5407 = vpop.f32.mrf.mxu0
        %v5408 = vadd.f32 0.0, %v5407
        %v5409 = vpop.f32.mrf.mxu0
        %v5410 = vadd.f32 0.0, %v5409
        %5411 = vmatmul.bf16.gmra.mxu0 %v4844
        %v5412 = vpop.f32.mrf.mxu0
        %v5413 = vadd.f32 0.0, %v5412
        %v5414 = vpop.f32.mrf.mxu0
        %v5415 = vadd.f32 0.0, %v5414
        %5416 = vmatmul.bf16.gmra.mxu0 %v4848
        %v5417 = vpop.f32.mrf.mxu0
        %v5418 = vadd.f32 0.0, %v5417
        %v5419 = vpop.f32.mrf.mxu0
        %v5420 = vadd.f32 0.0, %v5419
        %5421 = vmatmul.bf16.gmra.mxu0 %v4852
        %v5422 = vpop.f32.mrf.mxu0
        %v5423 = vadd.f32 0.0, %v5422
        %v5424 = vpop.f32.mrf.mxu0
        %v5425 = vadd.f32 0.0, %v5424
        %5426 = vmatmul.bf16.gmra.mxu0 %v4856
        %v5427 = vpop.f32.mrf.mxu0
        %v5428 = vadd.f32 0.0, %v5427
        %v5429 = vpop.f32.mrf.mxu0
        %v5430 = vadd.f32 0.0, %v5429
        %5431 = vmatmul.bf16.gmra.mxu0 %v4860
        %v5432 = vpop.f32.mrf.mxu0
        %v5433 = vadd.f32 0.0, %v5432
        %v5434 = vpop.f32.mrf.mxu0
        %v5435 = vadd.f32 0.0, %v5434
        %5436 = vmatmul.bf16.gmra.mxu0 %v4864
        %v5437 = vpop.f32.mrf.mxu0
        %v5438 = vadd.f32 0.0, %v5437
        %v5439 = vpop.f32.mrf.mxu0
        %v5440 = vadd.f32 0.0, %v5439
        %5441 = vmatmul.bf16.gmra.mxu0 %v4868
        %v5442 = vpop.f32.mrf.mxu0
        %v5443 = vadd.f32 0.0, %v5442
        %v5444 = vpop.f32.mrf.mxu0
        %v5445 = vadd.f32 0.0, %v5444
        %5446 = vmatmul.bf16.gmra.mxu0 %v4872
        %v5447 = vpop.f32.mrf.mxu0
        %v5448 = vadd.f32 0.0, %v5447
        %v5449 = vpop.f32.mrf.mxu0
        %v5450 = vadd.f32 0.0, %v5449
        %5451 = vmatmul.bf16.gmra.mxu0 %v4876
        %v5452 = vpop.f32.mrf.mxu0
        %v5453 = vadd.f32 0.0, %v5452
        %v5454 = vpop.f32.mrf.mxu0
        %v5455 = vadd.f32 0.0, %v5454
        %5456 = vmatmul.bf16.gmra.mxu0 %v4880
        %v5457 = vpop.f32.mrf.mxu0
        %v5458 = vadd.f32 0.0, %v5457
        %v5459 = vpop.f32.mrf.mxu0
        %v5460 = vadd.f32 0.0, %v5459
        %5461 = vmatmul.bf16.gmra.mxu0 %v4884
        %v5462 = vpop.f32.mrf.mxu0
        %v5463 = vadd.f32 0.0, %v5462
        %v5464 = vpop.f32.mrf.mxu0
        %v5465 = vadd.f32 0.0, %v5464
        %5466 = vmatmul.bf16.gmra.mxu0 %v4888
        %v5467 = vpop.f32.mrf.mxu0
        %v5468 = vadd.f32 0.0, %v5467
        %v5469 = vpop.f32.mrf.mxu0
        %v5470 = vadd.f32 0.0, %v5469
        %5471 = vmatmul.bf16.gmra.mxu0 %v4892
        %v5472 = vpop.f32.mrf.mxu0
        %v5473 = vadd.f32 0.0, %v5472
        %v5474 = vpop.f32.mrf.mxu0
        %v5475 = vadd.f32 0.0, %v5474
        %5476 = vmatmul.bf16.gmra.mxu0 %v4896
        %v5477 = vpop.f32.mrf.mxu0
        %v5478 = vadd.f32 0.0, %v5477
        %v5479 = vpop.f32.mrf.mxu0
        %5480 = vmatmul.bf16.gmra.mxu0 %v4900
        %v5481 = vpop.f32.mrf.mxu0
        %v5482 = vpop.f32.mrf.mxu0
        %5483 = vmatmul.bf16.gmra.mxu0 %v4904
        %v5484 = vpop.f32.mrf.mxu0
        %v5485 = vpop.f32.mrf.mxu0
        %5486 = vmatmul.bf16.gmra.mxu0 %v4908
        %v5487 = vpop.f32.mrf.mxu0
        %v5488 = vpop.f32.mrf.mxu0
        %5489 = vdwg.mxu0
        %5490 = vmatpush.bf16.xpose.msra.mxu0 0
        %5491 = vmatpush.bf16.xpose.msra.mxu0 0
        %5492 = vmatpush.bf16.xpose.msra.mxu0 0
        %5493 = vmatpush.bf16.xpose.msra.mxu0 0
        %5494 = vmatpush.bf16.xpose.msra.mxu0 %v3629
        %5495 = vmatpush.bf16.xpose.msra.mxu0 %v3625
        %5496 = vmatpush.bf16.xpose.msra.mxu0 %v3621
        %5497 = vmatpush.bf16.xpose.msra.mxu0 %v3617
        %5498 = vmatmul.bf16.gmra.mxu0 %v4657
        %v5499 = vpop.f32.mrf.mxu0
        %v5500 = vadd.f32 %v5178, %v5499
        %v5501 = vpop.f32.mrf.mxu0
        %v5502 = vadd.f32 %v5180, %v5501
        %5503 = vmatmul.bf16.gmra.mxu0 %v4661
        %v5504 = vpop.f32.mrf.mxu0
        %v5505 = vadd.f32 %v5183, %v5504
        %v5506 = vpop.f32.mrf.mxu0
        %v5507 = vadd.f32 %v5185, %v5506
        %5508 = vmatmul.bf16.gmra.mxu0 %v4665
        %v5509 = vpop.f32.mrf.mxu0
        %v5510 = vadd.f32 %v5188, %v5509
        %v5511 = vpop.f32.mrf.mxu0
        %v5512 = vadd.f32 %v5190, %v5511
        %5513 = vmatmul.bf16.gmra.mxu0 %v4669
        %v5514 = vpop.f32.mrf.mxu0
        %v5515 = vadd.f32 %v5193, %v5514
        %v5516 = vpop.f32.mrf.mxu0
        %v5517 = vadd.f32 %v5195, %v5516
        %5518 = vmatmul.bf16.gmra.mxu0 %v4673
        %v5519 = vpop.f32.mrf.mxu0
        %v5520 = vadd.f32 %v5198, %v5519
        %v5521 = vpop.f32.mrf.mxu0
        %v5522 = vadd.f32 %v5200, %v5521
        %5523 = vmatmul.bf16.gmra.mxu0 %v4677
        %v5524 = vpop.f32.mrf.mxu0
        %v5525 = vadd.f32 %v5203, %v5524
        %v5526 = vpop.f32.mrf.mxu0
        %v5527 = vadd.f32 %v5205, %v5526
        %5528 = vmatmul.bf16.gmra.mxu0 %v4681
        %v5529 = vpop.f32.mrf.mxu0
        %v5530 = vadd.f32 %v5208, %v5529
        %v5531 = vpop.f32.mrf.mxu0
        %v5532 = vadd.f32 %v5210, %v5531
        %5533 = vmatmul.bf16.gmra.mxu0 %v4685
        %v5534 = vpop.f32.mrf.mxu0
        %v5535 = vadd.f32 %v5213, %v5534
        %v5536 = vpop.f32.mrf.mxu0
        %v5537 = vadd.f32 %v5215, %v5536
        %5538 = vmatmul.bf16.gmra.mxu0 %v4689
        %v5539 = vpop.f32.mrf.mxu0
        %v5540 = vadd.f32 %v5218, %v5539
        %v5541 = vpop.f32.mrf.mxu0
        %v5542 = vadd.f32 %v5220, %v5541
        %5543 = vmatmul.bf16.gmra.mxu0 %v4693
        %v5544 = vpop.f32.mrf.mxu0
        %v5545 = vadd.f32 %v5223, %v5544
        %v5546 = vpop.f32.mrf.mxu0
        %v5547 = vadd.f32 %v5225, %v5546
        %5548 = vmatmul.bf16.gmra.mxu0 %v4697
        %v5549 = vpop.f32.mrf.mxu0
        %v5550 = vadd.f32 %v5228, %v5549
        %v5551 = vpop.f32.mrf.mxu0
        %v5552 = vadd.f32 %v5230, %v5551
        %5553 = vmatmul.bf16.gmra.mxu0 %v4701
        %v5554 = vpop.f32.mrf.mxu0
        %v5555 = vadd.f32 %v5233, %v5554
        %v5556 = vpop.f32.mrf.mxu0
        %v5557 = vadd.f32 %v5235, %v5556
        %5558 = vmatmul.bf16.gmra.mxu0 %v4705
        %v5559 = vpop.f32.mrf.mxu0
        %v5560 = vadd.f32 %v5238, %v5559
        %v5561 = vpop.f32.mrf.mxu0
        %v5562 = vadd.f32 %v5240, %v5561
        %5563 = vmatmul.bf16.gmra.mxu0 %v4709
        %v5564 = vpop.f32.mrf.mxu0
        %v5565 = vadd.f32 %v5243, %v5564
        %v5566 = vpop.f32.mrf.mxu0
        %v5567 = vadd.f32 %v5245, %v5566
        %5568 = vmatmul.bf16.gmra.mxu0 %v4713
        %v5569 = vpop.f32.mrf.mxu0
        %v5570 = vadd.f32 %v5248, %v5569
        %v5571 = vpop.f32.mrf.mxu0
        %v5572 = vadd.f32 %v5250, %v5571
        %5573 = vmatmul.bf16.gmra.mxu0 %v4717
        %v5574 = vpop.f32.mrf.mxu0
        %v5575 = vadd.f32 %v5253, %v5574
        %v5576 = vpop.f32.mrf.mxu0
        %v5577 = vadd.f32 %v5255, %v5576
        %5578 = vmatmul.bf16.gmra.mxu0 %v4721
        %v5579 = vpop.f32.mrf.mxu0
        %v5580 = vadd.f32 %v5258, %v5579
        %v5581 = vpop.f32.mrf.mxu0
        %v5582 = vadd.f32 %v5260, %v5581
        %5583 = vmatmul.bf16.gmra.mxu0 %v4725
        %v5584 = vpop.f32.mrf.mxu0
        %v5585 = vadd.f32 %v5263, %v5584
        %v5586 = vpop.f32.mrf.mxu0
        %v5587 = vadd.f32 %v5265, %v5586
        %5588 = vmatmul.bf16.gmra.mxu0 %v4729
        %v5589 = vpop.f32.mrf.mxu0
        %v5590 = vadd.f32 %v5268, %v5589
        %v5591 = vpop.f32.mrf.mxu0
        %v5592 = vadd.f32 %v5270, %v5591
        %5593 = vmatmul.bf16.gmra.mxu0 %v4733
        %v5594 = vpop.f32.mrf.mxu0
        %v5595 = vadd.f32 %v5273, %v5594
        %v5596 = vpop.f32.mrf.mxu0
        %v5597 = vadd.f32 %v5275, %v5596
        %5598 = vmatmul.bf16.gmra.mxu0 %v4737
        %v5599 = vpop.f32.mrf.mxu0
        %v5600 = vadd.f32 %v5278, %v5599
        %v5601 = vpop.f32.mrf.mxu0
        %v5602 = vadd.f32 %v5280, %v5601
        %5603 = vmatmul.bf16.gmra.mxu0 %v4741
        %v5604 = vpop.f32.mrf.mxu0
        %v5605 = vadd.f32 %v5283, %v5604
        %v5606 = vpop.f32.mrf.mxu0
        %v5607 = vadd.f32 %v5285, %v5606
        %5608 = vmatmul.bf16.gmra.mxu0 %v4745
        %v5609 = vpop.f32.mrf.mxu0
        %v5610 = vadd.f32 %v5288, %v5609
        %v5611 = vpop.f32.mrf.mxu0
        %v5612 = vadd.f32 %v5290, %v5611
        %5613 = vmatmul.bf16.gmra.mxu0 %v4749
        %v5614 = vpop.f32.mrf.mxu0
        %v5615 = vadd.f32 %v5293, %v5614
        %v5616 = vpop.f32.mrf.mxu0
        %v5617 = vadd.f32 %v5295, %v5616
        %5618 = vmatmul.bf16.gmra.mxu0 %v4753
        %v5619 = vpop.f32.mrf.mxu0
        %v5620 = vadd.f32 %v5298, %v5619
        %v5621 = vpop.f32.mrf.mxu0
        %v5622 = vadd.f32 %v5300, %v5621
        %5623 = vmatmul.bf16.gmra.mxu0 %v4757
        %v5624 = vpop.f32.mrf.mxu0
        %v5625 = vadd.f32 %v5303, %v5624
        %v5626 = vpop.f32.mrf.mxu0
        %v5627 = vadd.f32 %v5305, %v5626
        %5628 = vmatmul.bf16.gmra.mxu0 %v4761
        %v5629 = vpop.f32.mrf.mxu0
        %v5630 = vadd.f32 %v5308, %v5629
        %v5631 = vpop.f32.mrf.mxu0
        %v5632 = vadd.f32 %v5310, %v5631
        %5633 = vmatmul.bf16.gmra.mxu0 %v4765
        %v5634 = vpop.f32.mrf.mxu0
        %v5635 = vadd.f32 %v5313, %v5634
        %v5636 = vpop.f32.mrf.mxu0
        %v5637 = vadd.f32 %v5315, %v5636
        %5638 = vmatmul.bf16.gmra.mxu0 %v4769
        %v5639 = vpop.f32.mrf.mxu0
        %v5640 = vadd.f32 %v5318, %v5639
        %v5641 = vpop.f32.mrf.mxu0
        %v5642 = vadd.f32 %v5320, %v5641
        %5643 = vmatmul.bf16.gmra.mxu0 %v4773
        %v5644 = vpop.f32.mrf.mxu0
        %v5645 = vadd.f32 %v5323, %v5644
        %v5646 = vpop.f32.mrf.mxu0
        %v5647 = vadd.f32 %v5325, %v5646
        %5648 = vmatmul.bf16.gmra.mxu0 %v4777
        %v5649 = vpop.f32.mrf.mxu0
        %v5650 = vadd.f32 %v5328, %v5649
        %v5651 = vpop.f32.mrf.mxu0
        %v5652 = vadd.f32 %v5330, %v5651
        %5653 = vmatmul.bf16.gmra.mxu0 %v4781
        %v5654 = vpop.f32.mrf.mxu0
        %v5655 = vadd.f32 %v5333, %v5654
        %v5656 = vpop.f32.mrf.mxu0
        %v5657 = vadd.f32 %v5335, %v5656
        %5658 = vmatmul.bf16.gmra.mxu0 %v4785
        %v5659 = vpop.f32.mrf.mxu0
        %v5660 = vadd.f32 %v5338, %v5659
        %v5661 = vpop.f32.mrf.mxu0
        %v5662 = vadd.f32 %v5340, %v5661
        %5663 = vmatmul.bf16.gmra.mxu0 %v4789
        %v5664 = vpop.f32.mrf.mxu0
        %v5665 = vadd.f32 %v5343, %v5664
        %v5666 = vpop.f32.mrf.mxu0
        %v5667 = vadd.f32 %v5345, %v5666
        %5668 = vmatmul.bf16.gmra.mxu0 %v4793
        %v5669 = vpop.f32.mrf.mxu0
        %v5670 = vadd.f32 %v5348, %v5669
        %v5671 = vpop.f32.mrf.mxu0
        %v5672 = vadd.f32 %v5350, %v5671
        %5673 = vmatmul.bf16.gmra.mxu0 %v4797
        %v5674 = vpop.f32.mrf.mxu0
        %v5675 = vadd.f32 %v5353, %v5674
        %v5676 = vpop.f32.mrf.mxu0
        %v5677 = vadd.f32 %v5355, %v5676
        %5678 = vmatmul.bf16.gmra.mxu0 %v4801
        %v5679 = vpop.f32.mrf.mxu0
        %v5680 = vadd.f32 %v5358, %v5679
        %v5681 = vpop.f32.mrf.mxu0
        %v5682 = vadd.f32 %v5360, %v5681
        %5683 = vmatmul.bf16.gmra.mxu0 %v4805
        %v5684 = vpop.f32.mrf.mxu0
        %v5685 = vadd.f32 %v5363, %v5684
        %v5686 = vpop.f32.mrf.mxu0
        %v5687 = vadd.f32 %v5365, %v5686
        %5688 = vmatmul.bf16.gmra.mxu0 %v4809
        %v5689 = vpop.f32.mrf.mxu0
        %v5690 = vadd.f32 %v5368, %v5689
        %v5691 = vpop.f32.mrf.mxu0
        %v5692 = vadd.f32 %v5370, %v5691
        %5693 = vmatmul.bf16.gmra.mxu0 %v4813
        %v5694 = vpop.f32.mrf.mxu0
        %v5695 = vadd.f32 %v5373, %v5694
        %v5696 = vpop.f32.mrf.mxu0
        %v5697 = vadd.f32 %v5375, %v5696
        %5698 = vmatmul.bf16.gmra.mxu0 %v4817
        %v5699 = vpop.f32.mrf.mxu0
        %v5700 = vadd.f32 %v5378, %v5699
        %v5701 = vpop.f32.mrf.mxu0
        %v5702 = vadd.f32 %v5380, %v5701
        %5703 = vmatmul.bf16.gmra.mxu0 %v4821
        %v5704 = vpop.f32.mrf.mxu0
        %v5705 = vadd.f32 %v5383, %v5704
        %v5706 = vpop.f32.mrf.mxu0
        %v5707 = vadd.f32 %v5385, %v5706
        %5708 = vmatmul.bf16.gmra.mxu0 %v4825
        %v5709 = vpop.f32.mrf.mxu0
        %v5710 = vadd.f32 %v5388, %v5709
        %v5711 = vpop.f32.mrf.mxu0
        %v5712 = vadd.f32 %v5390, %v5711
        %5713 = vmatmul.bf16.gmra.mxu0 %v4829
        %v5714 = vpop.f32.mrf.mxu0
        %v5715 = vadd.f32 %v5393, %v5714
        %v5716 = vpop.f32.mrf.mxu0
        %v5717 = vadd.f32 %v5395, %v5716
        %5718 = vmatmul.bf16.gmra.mxu0 %v4833
        %v5719 = vpop.f32.mrf.mxu0
        %v5720 = vadd.f32 %v5398, %v5719
        %v5721 = vpop.f32.mrf.mxu0
        %v5722 = vadd.f32 %v5400, %v5721
        %5723 = vmatmul.bf16.gmra.mxu0 %v4837
        %v5724 = vpop.f32.mrf.mxu0
        %v5725 = vadd.f32 %v5403, %v5724
        %v5726 = vpop.f32.mrf.mxu0
        %v5727 = vadd.f32 %v5405, %v5726
        %5728 = vmatmul.bf16.gmra.mxu0 %v4841
        %v5729 = vpop.f32.mrf.mxu0
        %v5730 = vadd.f32 %v5408, %v5729
        %v5731 = vpop.f32.mrf.mxu0
        %v5732 = vadd.f32 %v5410, %v5731
        %5733 = vmatmul.bf16.gmra.mxu0 %v4845
        %v5734 = vpop.f32.mrf.mxu0
        %v5735 = vadd.f32 %v5413, %v5734
        %v5736 = vpop.f32.mrf.mxu0
        %v5737 = vadd.f32 %v5415, %v5736
        %5738 = vmatmul.bf16.gmra.mxu0 %v4849
        %v5739 = vpop.f32.mrf.mxu0
        %v5740 = vadd.f32 %v5418, %v5739
        %v5741 = vpop.f32.mrf.mxu0
        %v5742 = vadd.f32 %v5420, %v5741
        %5743 = vmatmul.bf16.gmra.mxu0 %v4853
        %v5744 = vpop.f32.mrf.mxu0
        %v5745 = vadd.f32 %v5423, %v5744
        %v5746 = vpop.f32.mrf.mxu0
        %v5747 = vadd.f32 %v5425, %v5746
        %5748 = vmatmul.bf16.gmra.mxu0 %v4857
        %v5749 = vpop.f32.mrf.mxu0
        %v5750 = vadd.f32 %v5428, %v5749
        %v5751 = vpop.f32.mrf.mxu0
        %v5752 = vadd.f32 %v5430, %v5751
        %5753 = vmatmul.bf16.gmra.mxu0 %v4861
        %v5754 = vpop.f32.mrf.mxu0
        %v5755 = vadd.f32 %v5433, %v5754
        %v5756 = vpop.f32.mrf.mxu0
        %v5757 = vadd.f32 %v5435, %v5756
        %5758 = vmatmul.bf16.gmra.mxu0 %v4865
        %v5759 = vpop.f32.mrf.mxu0
        %v5760 = vadd.f32 %v5438, %v5759
        %v5761 = vpop.f32.mrf.mxu0
        %v5762 = vadd.f32 %v5440, %v5761
        %5763 = vmatmul.bf16.gmra.mxu0 %v4869
        %v5764 = vpop.f32.mrf.mxu0
        %v5765 = vadd.f32 %v5443, %v5764
        %v5766 = vpop.f32.mrf.mxu0
        %v5767 = vadd.f32 %v5445, %v5766
        %5768 = vmatmul.bf16.gmra.mxu0 %v4873
        %v5769 = vpop.f32.mrf.mxu0
        %v5770 = vadd.f32 %v5448, %v5769
        %v5771 = vpop.f32.mrf.mxu0
        %v5772 = vadd.f32 %v5450, %v5771
        %5773 = vmatmul.bf16.gmra.mxu0 %v4877
        %v5774 = vpop.f32.mrf.mxu0
        %v5775 = vadd.f32 %v5453, %v5774
        %v5776 = vpop.f32.mrf.mxu0
        %v5777 = vadd.f32 %v5455, %v5776
        %5778 = vmatmul.bf16.gmra.mxu0 %v4881
        %v5779 = vpop.f32.mrf.mxu0
        %v5780 = vadd.f32 %v5458, %v5779
        %v5781 = vpop.f32.mrf.mxu0
        %v5782 = vadd.f32 %v5460, %v5781
        %5783 = vmatmul.bf16.gmra.mxu0 %v4885
        %v5784 = vpop.f32.mrf.mxu0
        %v5785 = vadd.f32 %v5463, %v5784
        %v5786 = vpop.f32.mrf.mxu0
        %v5787 = vadd.f32 %v5465, %v5786
        %5788 = vmatmul.bf16.gmra.mxu0 %v4889
        %v5789 = vpop.f32.mrf.mxu0
        %v5790 = vadd.f32 %v5468, %v5789
        %v5791 = vpop.f32.mrf.mxu0
        %v5792 = vadd.f32 %v5470, %v5791
        %5793 = vmatmul.bf16.gmra.mxu0 %v4893
        %v5794 = vpop.f32.mrf.mxu0
        %v5795 = vadd.f32 %v5473, %v5794
        %v5796 = vpop.f32.mrf.mxu0
        %v5797 = vadd.f32 %v5475, %v5796
        %5798 = vmatmul.bf16.gmra.mxu0 %v4897
        %v5799 = vpop.f32.mrf.mxu0
        %v5800 = vadd.f32 %v5478, %v5799
        %v5801 = vpop.f32.mrf.mxu0
        %5802 = vmatmul.bf16.gmra.mxu0 %v4901
        %v5803 = vpop.f32.mrf.mxu0
        %v5804 = vpop.f32.mrf.mxu0
        %5805 = vmatmul.bf16.gmra.mxu0 %v4905
        %v5806 = vpop.f32.mrf.mxu0
        %v5807 = vpop.f32.mrf.mxu0
        %5808 = vmatmul.bf16.gmra.mxu0 %v4909
        %v5809 = vpop.f32.mrf.mxu0
        %v5810 = vpop.f32.mrf.mxu0
        %5811 = vdwg.mxu0
        %5812 = vmatpush.bf16.xpose.msra.mxu0 0
        %5813 = vmatpush.bf16.xpose.msra.mxu0 0
        %5814 = vmatpush.bf16.xpose.msra.mxu0 0
        %5815 = vmatpush.bf16.xpose.msra.mxu0 0
        %5816 = vmatpush.bf16.xpose.msra.mxu0 %v3630
        %5817 = vmatpush.bf16.xpose.msra.mxu0 %v3626
        %5818 = vmatpush.bf16.xpose.msra.mxu0 %v3622
        %5819 = vmatpush.bf16.xpose.msra.mxu0 %v3618
        %5820 = vmatmul.bf16.gmra.mxu0 %v4658
        %v5821 = vpop.f32.mrf.mxu0
        %v5822 = vadd.f32 %v5500, %v5821
        %v5823 = vpop.f32.mrf.mxu0
        %v5824 = vadd.f32 %v5502, %v5823
        %5825 = vmatmul.bf16.gmra.mxu0 %v4662
        %v5826 = vpop.f32.mrf.mxu0
        %v5827 = vadd.f32 %v5505, %v5826
        %v5828 = vpop.f32.mrf.mxu0
        %v5829 = vadd.f32 %v5507, %v5828
        %5830 = vmatmul.bf16.gmra.mxu0 %v4666
        %v5831 = vpop.f32.mrf.mxu0
        %v5832 = vadd.f32 %v5510, %v5831
        %v5833 = vpop.f32.mrf.mxu0
        %v5834 = vadd.f32 %v5512, %v5833
        %5835 = vmatmul.bf16.gmra.mxu0 %v4670
        %v5836 = vpop.f32.mrf.mxu0
        %v5837 = vadd.f32 %v5515, %v5836
        %v5838 = vpop.f32.mrf.mxu0
        %v5839 = vadd.f32 %v5517, %v5838
        %5840 = vmatmul.bf16.gmra.mxu0 %v4674
        %v5841 = vpop.f32.mrf.mxu0
        %v5842 = vadd.f32 %v5520, %v5841
        %v5843 = vpop.f32.mrf.mxu0
        %v5844 = vadd.f32 %v5522, %v5843
        %5845 = vmatmul.bf16.gmra.mxu0 %v4678
        %v5846 = vpop.f32.mrf.mxu0
        %v5847 = vadd.f32 %v5525, %v5846
        %v5848 = vpop.f32.mrf.mxu0
        %v5849 = vadd.f32 %v5527, %v5848
        %5850 = vmatmul.bf16.gmra.mxu0 %v4682
        %v5851 = vpop.f32.mrf.mxu0
        %v5852 = vadd.f32 %v5530, %v5851
        %v5853 = vpop.f32.mrf.mxu0
        %v5854 = vadd.f32 %v5532, %v5853
        %5855 = vmatmul.bf16.gmra.mxu0 %v4686
        %v5856 = vpop.f32.mrf.mxu0
        %v5857 = vadd.f32 %v5535, %v5856
        %v5858 = vpop.f32.mrf.mxu0
        %v5859 = vadd.f32 %v5537, %v5858
        %5860 = vmatmul.bf16.gmra.mxu0 %v4690
        %v5861 = vpop.f32.mrf.mxu0
        %v5862 = vadd.f32 %v5540, %v5861
        %v5863 = vpop.f32.mrf.mxu0
        %v5864 = vadd.f32 %v5542, %v5863
        %5865 = vmatmul.bf16.gmra.mxu0 %v4694
        %v5866 = vpop.f32.mrf.mxu0
        %v5867 = vadd.f32 %v5545, %v5866
        %v5868 = vpop.f32.mrf.mxu0
        %v5869 = vadd.f32 %v5547, %v5868
        %5870 = vmatmul.bf16.gmra.mxu0 %v4698
        %v5871 = vpop.f32.mrf.mxu0
        %v5872 = vadd.f32 %v5550, %v5871
        %v5873 = vpop.f32.mrf.mxu0
        %v5874 = vadd.f32 %v5552, %v5873
        %5875 = vmatmul.bf16.gmra.mxu0 %v4702
        %v5876 = vpop.f32.mrf.mxu0
        %v5877 = vadd.f32 %v5555, %v5876
        %v5878 = vpop.f32.mrf.mxu0
        %v5879 = vadd.f32 %v5557, %v5878
        %5880 = vmatmul.bf16.gmra.mxu0 %v4706
        %v5881 = vpop.f32.mrf.mxu0
        %v5882 = vadd.f32 %v5560, %v5881
        %v5883 = vpop.f32.mrf.mxu0
        %v5884 = vadd.f32 %v5562, %v5883
        %5885 = vmatmul.bf16.gmra.mxu0 %v4710
        %v5886 = vpop.f32.mrf.mxu0
        %v5887 = vadd.f32 %v5565, %v5886
        %v5888 = vpop.f32.mrf.mxu0
        %v5889 = vadd.f32 %v5567, %v5888
        %5890 = vmatmul.bf16.gmra.mxu0 %v4714
        %v5891 = vpop.f32.mrf.mxu0
        %v5892 = vadd.f32 %v5570, %v5891
        %v5893 = vpop.f32.mrf.mxu0
        %v5894 = vadd.f32 %v5572, %v5893
        %5895 = vmatmul.bf16.gmra.mxu0 %v4718
        %v5896 = vpop.f32.mrf.mxu0
        %v5897 = vadd.f32 %v5575, %v5896
        %v5898 = vpop.f32.mrf.mxu0
        %v5899 = vadd.f32 %v5577, %v5898
        %5900 = vmatmul.bf16.gmra.mxu0 %v4722
        %v5901 = vpop.f32.mrf.mxu0
        %v5902 = vadd.f32 %v5580, %v5901
        %v5903 = vpop.f32.mrf.mxu0
        %v5904 = vadd.f32 %v5582, %v5903
        %5905 = vmatmul.bf16.gmra.mxu0 %v4726
        %v5906 = vpop.f32.mrf.mxu0
        %v5907 = vadd.f32 %v5585, %v5906
        %v5908 = vpop.f32.mrf.mxu0
        %v5909 = vadd.f32 %v5587, %v5908
        %5910 = vmatmul.bf16.gmra.mxu0 %v4730
        %v5911 = vpop.f32.mrf.mxu0
        %v5912 = vadd.f32 %v5590, %v5911
        %v5913 = vpop.f32.mrf.mxu0
        %v5914 = vadd.f32 %v5592, %v5913
        %5915 = vmatmul.bf16.gmra.mxu0 %v4734
        %v5916 = vpop.f32.mrf.mxu0
        %v5917 = vadd.f32 %v5595, %v5916
        %v5918 = vpop.f32.mrf.mxu0
        %v5919 = vadd.f32 %v5597, %v5918
        %5920 = vmatmul.bf16.gmra.mxu0 %v4738
        %v5921 = vpop.f32.mrf.mxu0
        %v5922 = vadd.f32 %v5600, %v5921
        %v5923 = vpop.f32.mrf.mxu0
        %v5924 = vadd.f32 %v5602, %v5923
        %5925 = vmatmul.bf16.gmra.mxu0 %v4742
        %v5926 = vpop.f32.mrf.mxu0
        %v5927 = vadd.f32 %v5605, %v5926
        %v5928 = vpop.f32.mrf.mxu0
        %v5929 = vadd.f32 %v5607, %v5928
        %5930 = vmatmul.bf16.gmra.mxu0 %v4746
        %v5931 = vpop.f32.mrf.mxu0
        %v5932 = vadd.f32 %v5610, %v5931
        %v5933 = vpop.f32.mrf.mxu0
        %v5934 = vadd.f32 %v5612, %v5933
        %5935 = vmatmul.bf16.gmra.mxu0 %v4750
        %v5936 = vpop.f32.mrf.mxu0
        %v5937 = vadd.f32 %v5615, %v5936
        %v5938 = vpop.f32.mrf.mxu0
        %v5939 = vadd.f32 %v5617, %v5938
        %5940 = vmatmul.bf16.gmra.mxu0 %v4754
        %v5941 = vpop.f32.mrf.mxu0
        %v5942 = vadd.f32 %v5620, %v5941
        %v5943 = vpop.f32.mrf.mxu0
        %v5944 = vadd.f32 %v5622, %v5943
        %5945 = vmatmul.bf16.gmra.mxu0 %v4758
        %v5946 = vpop.f32.mrf.mxu0
        %v5947 = vadd.f32 %v5625, %v5946
        %v5948 = vpop.f32.mrf.mxu0
        %v5949 = vadd.f32 %v5627, %v5948
        %5950 = vmatmul.bf16.gmra.mxu0 %v4762
        %v5951 = vpop.f32.mrf.mxu0
        %v5952 = vadd.f32 %v5630, %v5951
        %v5953 = vpop.f32.mrf.mxu0
        %v5954 = vadd.f32 %v5632, %v5953
        %5955 = vmatmul.bf16.gmra.mxu0 %v4766
        %v5956 = vpop.f32.mrf.mxu0
        %v5957 = vadd.f32 %v5635, %v5956
        %v5958 = vpop.f32.mrf.mxu0
        %v5959 = vadd.f32 %v5637, %v5958
        %5960 = vmatmul.bf16.gmra.mxu0 %v4770
        %v5961 = vpop.f32.mrf.mxu0
        %v5962 = vadd.f32 %v5640, %v5961
        %v5963 = vpop.f32.mrf.mxu0
        %v5964 = vadd.f32 %v5642, %v5963
        %5965 = vmatmul.bf16.gmra.mxu0 %v4774
        %v5966 = vpop.f32.mrf.mxu0
        %v5967 = vadd.f32 %v5645, %v5966
        %v5968 = vpop.f32.mrf.mxu0
        %v5969 = vadd.f32 %v5647, %v5968
        %5970 = vmatmul.bf16.gmra.mxu0 %v4778
        %v5971 = vpop.f32.mrf.mxu0
        %v5972 = vadd.f32 %v5650, %v5971
        %v5973 = vpop.f32.mrf.mxu0
        %v5974 = vadd.f32 %v5652, %v5973
        %5975 = vmatmul.bf16.gmra.mxu0 %v4782
        %v5976 = vpop.f32.mrf.mxu0
        %v5977 = vadd.f32 %v5655, %v5976
        %v5978 = vpop.f32.mrf.mxu0
        %v5979 = vadd.f32 %v5657, %v5978
        %5980 = vmatmul.bf16.gmra.mxu0 %v4786
        %v5981 = vpop.f32.mrf.mxu0
        %v5982 = vadd.f32 %v5660, %v5981
        %v5983 = vpop.f32.mrf.mxu0
        %v5984 = vadd.f32 %v5662, %v5983
        %5985 = vmatmul.bf16.gmra.mxu0 %v4790
        %v5986 = vpop.f32.mrf.mxu0
        %v5987 = vadd.f32 %v5665, %v5986
        %v5988 = vpop.f32.mrf.mxu0
        %v5989 = vadd.f32 %v5667, %v5988
        %5990 = vmatmul.bf16.gmra.mxu0 %v4794
        %v5991 = vpop.f32.mrf.mxu0
        %v5992 = vadd.f32 %v5670, %v5991
        %v5993 = vpop.f32.mrf.mxu0
        %v5994 = vadd.f32 %v5672, %v5993
        %5995 = vmatmul.bf16.gmra.mxu0 %v4798
        %v5996 = vpop.f32.mrf.mxu0
        %v5997 = vadd.f32 %v5675, %v5996
        %v5998 = vpop.f32.mrf.mxu0
        %v5999 = vadd.f32 %v5677, %v5998
        %6000 = vmatmul.bf16.gmra.mxu0 %v4802
        %v6001 = vpop.f32.mrf.mxu0
        %v6002 = vadd.f32 %v5680, %v6001
        %v6003 = vpop.f32.mrf.mxu0
        %v6004 = vadd.f32 %v5682, %v6003
        %6005 = vmatmul.bf16.gmra.mxu0 %v4806
        %v6006 = vpop.f32.mrf.mxu0
        %v6007 = vadd.f32 %v5685, %v6006
        %v6008 = vpop.f32.mrf.mxu0
        %v6009 = vadd.f32 %v5687, %v6008
        %6010 = vmatmul.bf16.gmra.mxu0 %v4810
        %v6011 = vpop.f32.mrf.mxu0
        %v6012 = vadd.f32 %v5690, %v6011
        %v6013 = vpop.f32.mrf.mxu0
        %v6014 = vadd.f32 %v5692, %v6013
        %6015 = vmatmul.bf16.gmra.mxu0 %v4814
        %v6016 = vpop.f32.mrf.mxu0
        %v6017 = vadd.f32 %v5695, %v6016
        %v6018 = vpop.f32.mrf.mxu0
        %v6019 = vadd.f32 %v5697, %v6018
        %6020 = vmatmul.bf16.gmra.mxu0 %v4818
        %v6021 = vpop.f32.mrf.mxu0
        %v6022 = vadd.f32 %v5700, %v6021
        %v6023 = vpop.f32.mrf.mxu0
        %v6024 = vadd.f32 %v5702, %v6023
        %6025 = vmatmul.bf16.gmra.mxu0 %v4822
        %v6026 = vpop.f32.mrf.mxu0
        %v6027 = vadd.f32 %v5705, %v6026
        %v6028 = vpop.f32.mrf.mxu0
        %v6029 = vadd.f32 %v5707, %v6028
        %6030 = vmatmul.bf16.gmra.mxu0 %v4826
        %v6031 = vpop.f32.mrf.mxu0
        %v6032 = vadd.f32 %v5710, %v6031
        %v6033 = vpop.f32.mrf.mxu0
        %v6034 = vadd.f32 %v5712, %v6033
        %6035 = vmatmul.bf16.gmra.mxu0 %v4830
        %v6036 = vpop.f32.mrf.mxu0
        %v6037 = vadd.f32 %v5715, %v6036
        %v6038 = vpop.f32.mrf.mxu0
        %v6039 = vadd.f32 %v5717, %v6038
        %6040 = vmatmul.bf16.gmra.mxu0 %v4834
        %v6041 = vpop.f32.mrf.mxu0
        %v6042 = vadd.f32 %v5720, %v6041
        %v6043 = vpop.f32.mrf.mxu0
        %v6044 = vadd.f32 %v5722, %v6043
        %6045 = vmatmul.bf16.gmra.mxu0 %v4838
        %v6046 = vpop.f32.mrf.mxu0
        %v6047 = vadd.f32 %v5725, %v6046
        %v6048 = vpop.f32.mrf.mxu0
        %v6049 = vadd.f32 %v5727, %v6048
        %6050 = vmatmul.bf16.gmra.mxu0 %v4842
        %v6051 = vpop.f32.mrf.mxu0
        %v6052 = vadd.f32 %v5730, %v6051
        %v6053 = vpop.f32.mrf.mxu0
        %v6054 = vadd.f32 %v5732, %v6053
        %6055 = vmatmul.bf16.gmra.mxu0 %v4846
        %v6056 = vpop.f32.mrf.mxu0
        %v6057 = vadd.f32 %v5735, %v6056
        %v6058 = vpop.f32.mrf.mxu0
        %v6059 = vadd.f32 %v5737, %v6058
        %6060 = vmatmul.bf16.gmra.mxu0 %v4850
        %v6061 = vpop.f32.mrf.mxu0
        %v6062 = vadd.f32 %v5740, %v6061
        %v6063 = vpop.f32.mrf.mxu0
        %v6064 = vadd.f32 %v5742, %v6063
        %6065 = vmatmul.bf16.gmra.mxu0 %v4854
        %v6066 = vpop.f32.mrf.mxu0
        %v6067 = vadd.f32 %v5745, %v6066
        %v6068 = vpop.f32.mrf.mxu0
        %v6069 = vadd.f32 %v5747, %v6068
        %6070 = vmatmul.bf16.gmra.mxu0 %v4858
        %v6071 = vpop.f32.mrf.mxu0
        %v6072 = vadd.f32 %v5750, %v6071
        %v6073 = vpop.f32.mrf.mxu0
        %v6074 = vadd.f32 %v5752, %v6073
        %6075 = vmatmul.bf16.gmra.mxu0 %v4862
        %v6076 = vpop.f32.mrf.mxu0
        %v6077 = vadd.f32 %v5755, %v6076
        %v6078 = vpop.f32.mrf.mxu0
        %v6079 = vadd.f32 %v5757, %v6078
        %6080 = vmatmul.bf16.gmra.mxu0 %v4866
        %v6081 = vpop.f32.mrf.mxu0
        %v6082 = vadd.f32 %v5760, %v6081
        %v6083 = vpop.f32.mrf.mxu0
        %v6084 = vadd.f32 %v5762, %v6083
        %6085 = vmatmul.bf16.gmra.mxu0 %v4870
        %v6086 = vpop.f32.mrf.mxu0
        %v6087 = vadd.f32 %v5765, %v6086
        %v6088 = vpop.f32.mrf.mxu0
        %v6089 = vadd.f32 %v5767, %v6088
        %6090 = vmatmul.bf16.gmra.mxu0 %v4874
        %v6091 = vpop.f32.mrf.mxu0
        %v6092 = vadd.f32 %v5770, %v6091
        %v6093 = vpop.f32.mrf.mxu0
        %v6094 = vadd.f32 %v5772, %v6093
        %6095 = vmatmul.bf16.gmra.mxu0 %v4878
        %v6096 = vpop.f32.mrf.mxu0
        %v6097 = vadd.f32 %v5775, %v6096
        %v6098 = vpop.f32.mrf.mxu0
        %v6099 = vadd.f32 %v5777, %v6098
        %6100 = vmatmul.bf16.gmra.mxu0 %v4882
        %v6101 = vpop.f32.mrf.mxu0
        %v6102 = vadd.f32 %v5780, %v6101
        %v6103 = vpop.f32.mrf.mxu0
        %v6104 = vadd.f32 %v5782, %v6103
        %6105 = vmatmul.bf16.gmra.mxu0 %v4886
        %v6106 = vpop.f32.mrf.mxu0
        %v6107 = vadd.f32 %v5785, %v6106
        %v6108 = vpop.f32.mrf.mxu0
        %v6109 = vadd.f32 %v5787, %v6108
        %6110 = vmatmul.bf16.gmra.mxu0 %v4890
        %v6111 = vpop.f32.mrf.mxu0
        %v6112 = vadd.f32 %v5790, %v6111
        %v6113 = vpop.f32.mrf.mxu0
        %v6114 = vadd.f32 %v5792, %v6113
        %6115 = vmatmul.bf16.gmra.mxu0 %v4894
        %v6116 = vpop.f32.mrf.mxu0
        %v6117 = vadd.f32 %v5795, %v6116
        %v6118 = vpop.f32.mrf.mxu0
        %v6119 = vadd.f32 %v5797, %v6118
        %6120 = vmatmul.bf16.gmra.mxu0 %v4898
        %v6121 = vpop.f32.mrf.mxu0
        %v6122 = vadd.f32 %v5800, %v6121
        %v6123 = vpop.f32.mrf.mxu0
        %6124 = vmatmul.bf16.gmra.mxu0 %v4902
        %v6125 = vpop.f32.mrf.mxu0
        %v6126 = vpop.f32.mrf.mxu0
        %6127 = vmatmul.bf16.gmra.mxu0 %v4906
        %v6128 = vpop.f32.mrf.mxu0
        %v6129 = vpop.f32.mrf.mxu0
        %6130 = vmatmul.bf16.gmra.mxu0 %v4910
        %v6131 = vpop.f32.mrf.mxu0
        %v6132 = vpop.f32.mrf.mxu0
        %6133 = vdwg.mxu0
        %6134 = vmatpush.bf16.xpose.msra.mxu0 0
        %6135 = vmatpush.bf16.xpose.msra.mxu0 0
        %6136 = vmatpush.bf16.xpose.msra.mxu0 0
        %6137 = vmatpush.bf16.xpose.msra.mxu0 0
        %6138 = vmatpush.bf16.xpose.msra.mxu0 %v3631
        %6139 = vmatpush.bf16.xpose.msra.mxu0 %v3627
        %6140 = vmatpush.bf16.xpose.msra.mxu0 %v3623
        %6141 = vmatpush.bf16.xpose.msra.mxu0 %v3619
        %6142 = vmatmul.bf16.gmra.mxu0 %v4659
        %v6143 = vpop.f32.mrf.mxu0
        %v6144 = vadd.f32 %v5822, %v6143
        %v6145 = vpop.f32.mrf.mxu0
        %v6146 = vadd.f32 %v5824, %v6145
        %6147 = vmatmul.bf16.gmra.mxu0 %v4663
        %v6148 = vpop.f32.mrf.mxu0
        %v6149 = vadd.f32 %v5827, %v6148
        %v6150 = vpop.f32.mrf.mxu0
        %v6151 = vadd.f32 %v5829, %v6150
        %6152 = vmatmul.bf16.gmra.mxu0 %v4667
        %v6153 = vpop.f32.mrf.mxu0
        %v6154 = vadd.f32 %v5832, %v6153
        %v6155 = vpop.f32.mrf.mxu0
        %v6156 = vadd.f32 %v5834, %v6155
        %6157 = vmatmul.bf16.gmra.mxu0 %v4671
        %v6158 = vpop.f32.mrf.mxu0
        %v6159 = vadd.f32 %v5837, %v6158
        %v6160 = vpop.f32.mrf.mxu0
        %v6161 = vadd.f32 %v5839, %v6160
        %6162 = vmatmul.bf16.gmra.mxu0 %v4675
        %v6163 = vpop.f32.mrf.mxu0
        %v6164 = vadd.f32 %v5842, %v6163
        %v6165 = vpop.f32.mrf.mxu0
        %v6166 = vadd.f32 %v5844, %v6165
        %6167 = vmatmul.bf16.gmra.mxu0 %v4679
        %v6168 = vpop.f32.mrf.mxu0
        %v6169 = vadd.f32 %v5847, %v6168
        %v6170 = vpop.f32.mrf.mxu0
        %v6171 = vadd.f32 %v5849, %v6170
        %6172 = vmatmul.bf16.gmra.mxu0 %v4683
        %v6173 = vpop.f32.mrf.mxu0
        %v6174 = vadd.f32 %v5852, %v6173
        %v6175 = vpop.f32.mrf.mxu0
        %v6176 = vadd.f32 %v5854, %v6175
        %6177 = vmatmul.bf16.gmra.mxu0 %v4687
        %v6178 = vpop.f32.mrf.mxu0
        %v6179 = vadd.f32 %v5857, %v6178
        %v6180 = vpop.f32.mrf.mxu0
        %v6181 = vadd.f32 %v5859, %v6180
        %6182 = vmatmul.bf16.gmra.mxu0 %v4691
        %v6183 = vpop.f32.mrf.mxu0
        %v6184 = vadd.f32 %v5862, %v6183
        %v6185 = vpop.f32.mrf.mxu0
        %v6186 = vadd.f32 %v5864, %v6185
        %6187 = vmatmul.bf16.gmra.mxu0 %v4695
        %v6188 = vpop.f32.mrf.mxu0
        %v6189 = vadd.f32 %v5867, %v6188
        %v6190 = vpop.f32.mrf.mxu0
        %v6191 = vadd.f32 %v5869, %v6190
        %6192 = vmatmul.bf16.gmra.mxu0 %v4699
        %v6193 = vpop.f32.mrf.mxu0
        %v6194 = vadd.f32 %v5872, %v6193
        %v6195 = vpop.f32.mrf.mxu0
        %v6196 = vadd.f32 %v5874, %v6195
        %6197 = vmatmul.bf16.gmra.mxu0 %v4703
        %v6198 = vpop.f32.mrf.mxu0
        %v6199 = vadd.f32 %v5877, %v6198
        %v6200 = vpop.f32.mrf.mxu0
        %v6201 = vadd.f32 %v5879, %v6200
        %6202 = vmatmul.bf16.gmra.mxu0 %v4707
        %v6203 = vpop.f32.mrf.mxu0
        %v6204 = vadd.f32 %v5882, %v6203
        %v6205 = vpop.f32.mrf.mxu0
        %v6206 = vadd.f32 %v5884, %v6205
        %6207 = vmatmul.bf16.gmra.mxu0 %v4711
        %v6208 = vpop.f32.mrf.mxu0
        %v6209 = vadd.f32 %v5887, %v6208
        %v6210 = vpop.f32.mrf.mxu0
        %v6211 = vadd.f32 %v5889, %v6210
        %6212 = vmatmul.bf16.gmra.mxu0 %v4715
        %v6213 = vpop.f32.mrf.mxu0
        %v6214 = vadd.f32 %v5892, %v6213
        %v6215 = vpop.f32.mrf.mxu0
        %v6216 = vadd.f32 %v5894, %v6215
        %6217 = vmatmul.bf16.gmra.mxu0 %v4719
        %v6218 = vpop.f32.mrf.mxu0
        %v6219 = vadd.f32 %v5897, %v6218
        %v6220 = vpop.f32.mrf.mxu0
        %v6221 = vadd.f32 %v5899, %v6220
        %6222 = vmatmul.bf16.gmra.mxu0 %v4723
        %v6223 = vpop.f32.mrf.mxu0
        %v6224 = vadd.f32 %v5902, %v6223
        %v6225 = vpop.f32.mrf.mxu0
        %v6226 = vadd.f32 %v5904, %v6225
        %6227 = vmatmul.bf16.gmra.mxu0 %v4727
        %v6228 = vpop.f32.mrf.mxu0
        %v6229 = vadd.f32 %v5907, %v6228
        %v6230 = vpop.f32.mrf.mxu0
        %v6231 = vadd.f32 %v5909, %v6230
        %6232 = vmatmul.bf16.gmra.mxu0 %v4731
        %v6233 = vpop.f32.mrf.mxu0
        %v6234 = vadd.f32 %v5912, %v6233
        %v6235 = vpop.f32.mrf.mxu0
        %v6236 = vadd.f32 %v5914, %v6235
        %6237 = vmatmul.bf16.gmra.mxu0 %v4735
        %v6238 = vpop.f32.mrf.mxu0
        %v6239 = vadd.f32 %v5917, %v6238
        %v6240 = vpop.f32.mrf.mxu0
        %v6241 = vadd.f32 %v5919, %v6240
        %6242 = vmatmul.bf16.gmra.mxu0 %v4739
        %v6243 = vpop.f32.mrf.mxu0
        %v6244 = vadd.f32 %v5922, %v6243
        %v6245 = vpop.f32.mrf.mxu0
        %v6246 = vadd.f32 %v5924, %v6245
        %6247 = vmatmul.bf16.gmra.mxu0 %v4743
        %v6248 = vpop.f32.mrf.mxu0
        %v6249 = vadd.f32 %v5927, %v6248
        %v6250 = vpop.f32.mrf.mxu0
        %v6251 = vadd.f32 %v5929, %v6250
        %6252 = vmatmul.bf16.gmra.mxu0 %v4747
        %v6253 = vpop.f32.mrf.mxu0
        %v6254 = vadd.f32 %v5932, %v6253
        %v6255 = vpop.f32.mrf.mxu0
        %v6256 = vadd.f32 %v5934, %v6255
        %6257 = vmatmul.bf16.gmra.mxu0 %v4751
        %v6258 = vpop.f32.mrf.mxu0
        %v6259 = vadd.f32 %v5937, %v6258
        %v6260 = vpop.f32.mrf.mxu0
        %v6261 = vadd.f32 %v5939, %v6260
        %6262 = vmatmul.bf16.gmra.mxu0 %v4755
        %v6263 = vpop.f32.mrf.mxu0
        %v6264 = vadd.f32 %v5942, %v6263
        %v6265 = vpop.f32.mrf.mxu0
        %v6266 = vadd.f32 %v5944, %v6265
        %6267 = vmatmul.bf16.gmra.mxu0 %v4759
        %v6268 = vpop.f32.mrf.mxu0
        %v6269 = vadd.f32 %v5947, %v6268
        %v6270 = vpop.f32.mrf.mxu0
        %v6271 = vadd.f32 %v5949, %v6270
        %6272 = vmatmul.bf16.gmra.mxu0 %v4763
        %v6273 = vpop.f32.mrf.mxu0
        %v6274 = vadd.f32 %v5952, %v6273
        %v6275 = vpop.f32.mrf.mxu0
        %v6276 = vadd.f32 %v5954, %v6275
        %6277 = vmatmul.bf16.gmra.mxu0 %v4767
        %v6278 = vpop.f32.mrf.mxu0
        %v6279 = vadd.f32 %v5957, %v6278
        %v6280 = vpop.f32.mrf.mxu0
        %v6281 = vadd.f32 %v5959, %v6280
        %6282 = vmatmul.bf16.gmra.mxu0 %v4771
        %v6283 = vpop.f32.mrf.mxu0
        %v6284 = vadd.f32 %v5962, %v6283
        %v6285 = vpop.f32.mrf.mxu0
        %v6286 = vadd.f32 %v5964, %v6285
        %6287 = vmatmul.bf16.gmra.mxu0 %v4775
        %v6288 = vpop.f32.mrf.mxu0
        %v6289 = vadd.f32 %v5967, %v6288
        %v6290 = vpop.f32.mrf.mxu0
        %v6291 = vadd.f32 %v5969, %v6290
        %6292 = vmatmul.bf16.gmra.mxu0 %v4779
        %v6293 = vpop.f32.mrf.mxu0
        %v6294 = vadd.f32 %v5972, %v6293
        %v6295 = vpop.f32.mrf.mxu0
        %v6296 = vadd.f32 %v5974, %v6295
        %6297 = vmatmul.bf16.gmra.mxu0 %v4783
        %v6298 = vpop.f32.mrf.mxu0
        %v6299 = vadd.f32 %v5977, %v6298
        %v6300 = vpop.f32.mrf.mxu0
        %v6301 = vadd.f32 %v5979, %v6300
        %6302 = vmatmul.bf16.gmra.mxu0 %v4787
        %v6303 = vpop.f32.mrf.mxu0
        %v6304 = vadd.f32 %v5982, %v6303
        %v6305 = vpop.f32.mrf.mxu0
        %v6306 = vadd.f32 %v5984, %v6305
        %6307 = vmatmul.bf16.gmra.mxu0 %v4791
        %v6308 = vpop.f32.mrf.mxu0
        %v6309 = vadd.f32 %v5987, %v6308
        %v6310 = vpop.f32.mrf.mxu0
        %v6311 = vadd.f32 %v5989, %v6310
        %6312 = vmatmul.bf16.gmra.mxu0 %v4795
        %v6313 = vpop.f32.mrf.mxu0
        %v6314 = vadd.f32 %v5992, %v6313
        %v6315 = vpop.f32.mrf.mxu0
        %v6316 = vadd.f32 %v5994, %v6315
        %6317 = vmatmul.bf16.gmra.mxu0 %v4799
        %v6318 = vpop.f32.mrf.mxu0
        %v6319 = vadd.f32 %v5997, %v6318
        %v6320 = vpop.f32.mrf.mxu0
        %v6321 = vadd.f32 %v5999, %v6320
        %6322 = vmatmul.bf16.gmra.mxu0 %v4803
        %v6323 = vpop.f32.mrf.mxu0
        %v6324 = vadd.f32 %v6002, %v6323
        %v6325 = vpop.f32.mrf.mxu0
        %v6326 = vadd.f32 %v6004, %v6325
        %6327 = vmatmul.bf16.gmra.mxu0 %v4807
        %v6328 = vpop.f32.mrf.mxu0
        %v6329 = vadd.f32 %v6007, %v6328
        %v6330 = vpop.f32.mrf.mxu0
        %v6331 = vadd.f32 %v6009, %v6330
        %6332 = vmatmul.bf16.gmra.mxu0 %v4811
        %v6333 = vpop.f32.mrf.mxu0
        %v6334 = vadd.f32 %v6012, %v6333
        %v6335 = vpop.f32.mrf.mxu0
        %v6336 = vadd.f32 %v6014, %v6335
        %6337 = vmatmul.bf16.gmra.mxu0 %v4815
        %v6338 = vpop.f32.mrf.mxu0
        %v6339 = vadd.f32 %v6017, %v6338
        %v6340 = vpop.f32.mrf.mxu0
        %v6341 = vadd.f32 %v6019, %v6340
        %6342 = vmatmul.bf16.gmra.mxu0 %v4819
        %v6343 = vpop.f32.mrf.mxu0
        %v6344 = vadd.f32 %v6022, %v6343
        %v6345 = vpop.f32.mrf.mxu0
        %v6346 = vadd.f32 %v6024, %v6345
        %6347 = vmatmul.bf16.gmra.mxu0 %v4823
        %v6348 = vpop.f32.mrf.mxu0
        %v6349 = vadd.f32 %v6027, %v6348
        %v6350 = vpop.f32.mrf.mxu0
        %v6351 = vadd.f32 %v6029, %v6350
        %6352 = vmatmul.bf16.gmra.mxu0 %v4827
        %v6353 = vpop.f32.mrf.mxu0
        %v6354 = vadd.f32 %v6032, %v6353
        %v6355 = vpop.f32.mrf.mxu0
        %v6356 = vadd.f32 %v6034, %v6355
        %6357 = vmatmul.bf16.gmra.mxu0 %v4831
        %v6358 = vpop.f32.mrf.mxu0
        %v6359 = vadd.f32 %v6037, %v6358
        %v6360 = vpop.f32.mrf.mxu0
        %v6361 = vadd.f32 %v6039, %v6360
        %6362 = vmatmul.bf16.gmra.mxu0 %v4835
        %v6363 = vpop.f32.mrf.mxu0
        %v6364 = vadd.f32 %v6042, %v6363
        %v6365 = vpop.f32.mrf.mxu0
        %v6366 = vadd.f32 %v6044, %v6365
        %6367 = vmatmul.bf16.gmra.mxu0 %v4839
        %v6368 = vpop.f32.mrf.mxu0
        %v6369 = vadd.f32 %v6047, %v6368
        %v6370 = vpop.f32.mrf.mxu0
        %v6371 = vadd.f32 %v6049, %v6370
        %6372 = vmatmul.bf16.gmra.mxu0 %v4843
        %v6373 = vpop.f32.mrf.mxu0
        %v6374 = vadd.f32 %v6052, %v6373
        %v6375 = vpop.f32.mrf.mxu0
        %v6376 = vadd.f32 %v6054, %v6375
        %6377 = vmatmul.bf16.gmra.mxu0 %v4847
        %v6378 = vpop.f32.mrf.mxu0
        %v6379 = vadd.f32 %v6057, %v6378
        %v6380 = vpop.f32.mrf.mxu0
        %v6381 = vadd.f32 %v6059, %v6380
        %6382 = vmatmul.bf16.gmra.mxu0 %v4851
        %v6383 = vpop.f32.mrf.mxu0
        %v6384 = vadd.f32 %v6062, %v6383
        %v6385 = vpop.f32.mrf.mxu0
        %v6386 = vadd.f32 %v6064, %v6385
        %6387 = vmatmul.bf16.gmra.mxu0 %v4855
        %v6388 = vpop.f32.mrf.mxu0
        %v6389 = vadd.f32 %v6067, %v6388
        %v6390 = vpop.f32.mrf.mxu0
        %v6391 = vadd.f32 %v6069, %v6390
        %6392 = vmatmul.bf16.gmra.mxu0 %v4859
        %v6393 = vpop.f32.mrf.mxu0
        %v6394 = vadd.f32 %v6072, %v6393
        %v6395 = vpop.f32.mrf.mxu0
        %v6396 = vadd.f32 %v6074, %v6395
        %6397 = vmatmul.bf16.gmra.mxu0 %v4863
        %v6398 = vpop.f32.mrf.mxu0
        %v6399 = vadd.f32 %v6077, %v6398
        %v6400 = vpop.f32.mrf.mxu0
        %v6401 = vadd.f32 %v6079, %v6400
        %6402 = vmatmul.bf16.gmra.mxu0 %v4867
        %v6403 = vpop.f32.mrf.mxu0
        %v6404 = vadd.f32 %v6082, %v6403
        %v6405 = vpop.f32.mrf.mxu0
        %v6406 = vadd.f32 %v6084, %v6405
        %6407 = vmatmul.bf16.gmra.mxu0 %v4871
        %v6408 = vpop.f32.mrf.mxu0
        %v6409 = vadd.f32 %v6087, %v6408
        %v6410 = vpop.f32.mrf.mxu0
        %v6411 = vadd.f32 %v6089, %v6410
        %6412 = vmatmul.bf16.gmra.mxu0 %v4875
        %v6413 = vpop.f32.mrf.mxu0
        %v6414 = vadd.f32 %v6092, %v6413
        %v6415 = vpop.f32.mrf.mxu0
        %v6416 = vadd.f32 %v6094, %v6415
        %6417 = vmatmul.bf16.gmra.mxu0 %v4879
        %v6418 = vpop.f32.mrf.mxu0
        %v6419 = vadd.f32 %v6097, %v6418
        %v6420 = vpop.f32.mrf.mxu0
        %v6421 = vadd.f32 %v6099, %v6420
        %6422 = vmatmul.bf16.gmra.mxu0 %v4883
        %v6423 = vpop.f32.mrf.mxu0
        %v6424 = vadd.f32 %v6102, %v6423
        %v6425 = vpop.f32.mrf.mxu0
        %v6426 = vadd.f32 %v6104, %v6425
        %6427 = vmatmul.bf16.gmra.mxu0 %v4887
        %v6428 = vpop.f32.mrf.mxu0
        %v6429 = vadd.f32 %v6107, %v6428
        %v6430 = vpop.f32.mrf.mxu0
        %v6431 = vadd.f32 %v6109, %v6430
        %6432 = vmatmul.bf16.gmra.mxu0 %v4891
        %v6433 = vpop.f32.mrf.mxu0
        %v6434 = vadd.f32 %v6112, %v6433
        %v6435 = vpop.f32.mrf.mxu0
        %v6436 = vadd.f32 %v6114, %v6435
        %6437 = vmatmul.bf16.gmra.mxu0 %v4895
        %v6438 = vpop.f32.mrf.mxu0
        %v6439 = vadd.f32 %v6117, %v6438
        %v6440 = vpop.f32.mrf.mxu0
        %v6441 = vadd.f32 %v6119, %v6440
        %6442 = vmatmul.bf16.gmra.mxu0 %v4899
        %v6443 = vpop.f32.mrf.mxu0
        %v6444 = vadd.f32 %v6122, %v6443
        %v6445 = vpop.f32.mrf.mxu0
        %6446 = vmatmul.bf16.gmra.mxu0 %v4903
        %v6447 = vpop.f32.mrf.mxu0
        %v6448 = vpop.f32.mrf.mxu0
        %6449 = vmatmul.bf16.gmra.mxu0 %v4907
        %v6450 = vpop.f32.mrf.mxu0
        %v6451 = vpop.f32.mrf.mxu0
        %6452 = vmatmul.bf16.gmra.mxu0 %v4911
        %v6453 = vpop.f32.mrf.mxu0
        %v6454 = vpop.f32.mrf.mxu0
        %6455 = vdwg.mxu0
        %v6456 = vmax.f32 %v6144, 0.0
        %v6457 = vmax.f32 %v6146, 0.0
        %v6458 = vmax.f32 %v6149, 0.0
        %v6459 = vmax.f32 %v6151, 0.0
        %v6460 = vmax.f32 %v6154, 0.0
        %v6461 = vmax.f32 %v6156, 0.0
        %v6462 = vmax.f32 %v6159, 0.0
        %v6463 = vmax.f32 %v6161, 0.0
        %v6464 = vmax.f32 %v6164, 0.0
        %v6465 = vmax.f32 %v6166, 0.0
        %v6466 = vmax.f32 %v6169, 0.0
        %v6467 = vmax.f32 %v6171, 0.0
        %v6468 = vmax.f32 %v6174, 0.0
        %v6469 = vmax.f32 %v6176, 0.0
        %v6470 = vmax.f32 %v6179, 0.0
        %v6471 = vmax.f32 %v6181, 0.0
        %v6472 = vmax.f32 %v6184, 0.0
        %v6473 = vmax.f32 %v6186, 0.0
        %v6474 = vmax.f32 %v6189, 0.0
        %v6475 = vmax.f32 %v6191, 0.0
        %v6476 = vmax.f32 %v6194, 0.0
        %v6477 = vmax.f32 %v6196, 0.0
        %v6478 = vmax.f32 %v6199, 0.0
        %v6479 = vmax.f32 %v6201, 0.0
        %v6480 = vmax.f32 %v6204, 0.0
        %v6481 = vmax.f32 %v6206, 0.0
        %v6482 = vmax.f32 %v6209, 0.0
        %v6483 = vmax.f32 %v6211, 0.0
        %v6484 = vmax.f32 %v6214, 0.0
        %v6485 = vmax.f32 %v6216, 0.0
        %v6486 = vmax.f32 %v6219, 0.0
        %v6487 = vmax.f32 %v6221, 0.0
        %v6488 = vmax.f32 %v6224, 0.0
        %v6489 = vmax.f32 %v6226, 0.0
        %v6490 = vmax.f32 %v6229, 0.0
        %v6491 = vmax.f32 %v6231, 0.0
        %v6492 = vmax.f32 %v6234, 0.0
        %v6493 = vmax.f32 %v6236, 0.0
        %v6494 = vmax.f32 %v6239, 0.0
        %v6495 = vmax.f32 %v6241, 0.0
        %v6496 = vmax.f32 %v6244, 0.0
        %v6497 = vmax.f32 %v6246, 0.0
        %v6498 = vmax.f32 %v6249, 0.0
        %v6499 = vmax.f32 %v6251, 0.0
        %v6500 = vmax.f32 %v6254, 0.0
        %v6501 = vmax.f32 %v6256, 0.0
        %v6502 = vmax.f32 %v6259, 0.0
        %v6503 = vmax.f32 %v6261, 0.0
        %v6504 = vmax.f32 %v6264, 0.0
        %v6505 = vmax.f32 %v6266, 0.0
        %v6506 = vmax.f32 %v6269, 0.0
        %v6507 = vmax.f32 %v6271, 0.0
        %v6508 = vmax.f32 %v6274, 0.0
        %v6509 = vmax.f32 %v6276, 0.0
        %v6510 = vmax.f32 %v6279, 0.0
        %v6511 = vmax.f32 %v6281, 0.0
        %v6512 = vmax.f32 %v6284, 0.0
        %v6513 = vmax.f32 %v6286, 0.0
        %v6514 = vmax.f32 %v6289, 0.0
        %v6515 = vmax.f32 %v6291, 0.0
        %v6516 = vmax.f32 %v6294, 0.0
        %v6517 = vmax.f32 %v6296, 0.0
        %v6518 = vmax.f32 %v6299, 0.0
        %v6519 = vmax.f32 %v6301, 0.0
        %v6520 = vmax.f32 %v6304, 0.0
        %v6521 = vmax.f32 %v6306, 0.0
        %v6522 = vmax.f32 %v6309, 0.0
        %v6523 = vmax.f32 %v6311, 0.0
        %v6524 = vmax.f32 %v6314, 0.0
        %v6525 = vmax.f32 %v6316, 0.0
        %v6526 = vmax.f32 %v6319, 0.0
        %v6527 = vmax.f32 %v6321, 0.0
        %v6528 = vmax.f32 %v6324, 0.0
        %v6529 = vmax.f32 %v6326, 0.0
        %v6530 = vmax.f32 %v6329, 0.0
        %v6531 = vmax.f32 %v6331, 0.0
        %v6532 = vmax.f32 %v6334, 0.0
        %v6533 = vmax.f32 %v6336, 0.0
        %v6534 = vmax.f32 %v6339, 0.0
        %v6535 = vmax.f32 %v6341, 0.0
        %v6536 = vmax.f32 %v6344, 0.0
        %v6537 = vmax.f32 %v6346, 0.0
        %v6538 = vmax.f32 %v6349, 0.0
        %v6539 = vmax.f32 %v6351, 0.0
        %v6540 = vmax.f32 %v6354, 0.0
        %v6541 = vmax.f32 %v6356, 0.0
        %v6542 = vmax.f32 %v6359, 0.0
        %v6543 = vmax.f32 %v6361, 0.0
        %v6544 = vmax.f32 %v6364, 0.0
        %v6545 = vmax.f32 %v6366, 0.0
        %v6546 = vmax.f32 %v6369, 0.0
        %v6547 = vmax.f32 %v6371, 0.0
        %v6548 = vmax.f32 %v6374, 0.0
        %v6549 = vmax.f32 %v6376, 0.0
        %v6550 = vmax.f32 %v6379, 0.0
        %v6551 = vmax.f32 %v6381, 0.0
        %v6552 = vmax.f32 %v6384, 0.0
        %v6553 = vmax.f32 %v6386, 0.0
        %v6554 = vmax.f32 %v6389, 0.0
        %v6555 = vmax.f32 %v6391, 0.0
        %v6556 = vmax.f32 %v6394, 0.0
        %v6557 = vmax.f32 %v6396, 0.0
        %v6558 = vmax.f32 %v6399, 0.0
        %v6559 = vmax.f32 %v6401, 0.0
        %v6560 = vmax.f32 %v6404, 0.0
        %v6561 = vmax.f32 %v6406, 0.0
        %v6562 = vmax.f32 %v6409, 0.0
        %v6563 = vmax.f32 %v6411, 0.0
        %v6564 = vmax.f32 %v6414, 0.0
        %v6565 = vmax.f32 %v6416, 0.0
        %v6566 = vmax.f32 %v6419, 0.0
        %v6567 = vmax.f32 %v6421, 0.0
        %v6568 = vmax.f32 %v6424, 0.0
        %v6569 = vmax.f32 %v6426, 0.0
        %v6570 = vmax.f32 %v6429, 0.0
        %v6571 = vmax.f32 %v6431, 0.0
        %v6572 = vmax.f32 %v6434, 0.0
        %v6573 = vmax.f32 %v6436, 0.0
        %v6574 = vmax.f32 %v6439, 0.0
        %v6575 = vmax.f32 %v6441, 0.0
        %v6576 = vmax.f32 %v6444, 0.0
        %vm6577 = vcmask 523264
        %6578 = vst.msk [vmem:[%s298] sm:$0xff] %vm6577, %v6456
        %6579 = vst.msk [vmem:[%s298 + $0x8] sm:$0xff] %vm6577, %v6457
        %6580 = vst.msk [vmem:[%s298 + $0x10] sm:$0xff] %vm6577, %v6458
        %6581 = vst.msk [vmem:[%s298 + $0x18] sm:$0xff] %vm6577, %v6459
        %6582 = vst.msk [vmem:[%s298 + $0x20] sm:$0xff] %vm6577, %v6460
        %6583 = vst.msk [vmem:[%s298 + $0x28] sm:$0xff] %vm6577, %v6461
        %6584 = vst.msk [vmem:[%s298 + $0x30] sm:$0xff] %vm6577, %v6462
        %6585 = vst.msk [vmem:[%s298 + $0x38] sm:$0xff] %vm6577, %v6463
        %6586 = vst.msk [vmem:[%s298 + $0x40] sm:$0xff] %vm6577, %v6464
        %6587 = vst.msk [vmem:[%s298 + $0x48] sm:$0xff] %vm6577, %v6465
        %6588 = vst.msk [vmem:[%s298 + $0x50] sm:$0xff] %vm6577, %v6466
        %6589 = vst.msk [vmem:[%s298 + $0x58] sm:$0xff] %vm6577, %v6467
        %6590 = vst.msk [vmem:[%s298 + $0x60] sm:$0xff] %vm6577, %v6468
        %6591 = vst.msk [vmem:[%s298 + $0x68] sm:$0xff] %vm6577, %v6469
        %6592 = vst.msk [vmem:[%s298 + $0x70] sm:$0xff] %vm6577, %v6470
        %6593 = vst.msk [vmem:[%s298 + $0x78] sm:$0xff] %vm6577, %v6471
        %6594 = vst.msk [vmem:[%s298 + $0x80] sm:$0xff] %vm6577, %v6472
        %6595 = vst.msk [vmem:[%s298 + $0x88] sm:$0xff] %vm6577, %v6473
        %6596 = vst.msk [vmem:[%s298 + $0x90] sm:$0xff] %vm6577, %v6474
        %6597 = vst.msk [vmem:[%s298 + $0x98] sm:$0xff] %vm6577, %v6475
        %6598 = vst.msk [vmem:[%s298 + $0xa0] sm:$0xff] %vm6577, %v6476
        %6599 = vst.msk [vmem:[%s298 + $0xa8] sm:$0xff] %vm6577, %v6477
        %6600 = vst.msk [vmem:[%s298 + $0xb0] sm:$0xff] %vm6577, %v6478
        %6601 = vst.msk [vmem:[%s298 + $0xb8] sm:$0xff] %vm6577, %v6479
        %6602 = vst.msk [vmem:[%s298 + $0xc0] sm:$0xff] %vm6577, %v6480
        %6603 = vst.msk [vmem:[%s298 + $0xc8] sm:$0xff] %vm6577, %v6481
        %6604 = vst.msk [vmem:[%s298 + $0xd0] sm:$0xff] %vm6577, %v6482
        %6605 = vst.msk [vmem:[%s298 + $0xd8] sm:$0xff] %vm6577, %v6483
        %6606 = vst.msk [vmem:[%s298 + $0xe0] sm:$0xff] %vm6577, %v6484
        %6607 = vst.msk [vmem:[%s298 + $0xe8] sm:$0xff] %vm6577, %v6485
        %6608 = vst.msk [vmem:[%s298 + $0xf0] sm:$0xff] %vm6577, %v6486
        %6609 = vst.msk [vmem:[%s298 + $0xf8] sm:$0xff] %vm6577, %v6487
        %6610 = vst.msk [vmem:[%s298 + $0x100] sm:$0xff] %vm6577, %v6488
        %6611 = vst.msk [vmem:[%s298 + $0x108] sm:$0xff] %vm6577, %v6489
        %6612 = vst.msk [vmem:[%s298 + $0x110] sm:$0xff] %vm6577, %v6490
        %6613 = vst.msk [vmem:[%s298 + $0x118] sm:$0xff] %vm6577, %v6491
        %6614 = vst.msk [vmem:[%s298 + $0x120] sm:$0xff] %vm6577, %v6492
        %6615 = vst.msk [vmem:[%s298 + $0x128] sm:$0xff] %vm6577, %v6493
        %6616 = vst.msk [vmem:[%s298 + $0x130] sm:$0xff] %vm6577, %v6494
        %6617 = vst.msk [vmem:[%s298 + $0x138] sm:$0xff] %vm6577, %v6495
        %6618 = vst.msk [vmem:[%s298 + $0x140] sm:$0xff] %vm6577, %v6496
        %6619 = vst.msk [vmem:[%s298 + $0x148] sm:$0xff] %vm6577, %v6497
        %6620 = vst.msk [vmem:[%s298 + $0x150] sm:$0xff] %vm6577, %v6498
        %6621 = vst.msk [vmem:[%s298 + $0x158] sm:$0xff] %vm6577, %v6499
        %6622 = vst.msk [vmem:[%s298 + $0x160] sm:$0xff] %vm6577, %v6500
        %6623 = vst.msk [vmem:[%s298 + $0x168] sm:$0xff] %vm6577, %v6501
        %6624 = vst.msk [vmem:[%s298 + $0x170] sm:$0xff] %vm6577, %v6502
        %6625 = vst.msk [vmem:[%s298 + $0x178] sm:$0xff] %vm6577, %v6503
        %6626 = vst.msk [vmem:[%s298 + $0x180] sm:$0xff] %vm6577, %v6504
        %6627 = vst.msk [vmem:[%s298 + $0x188] sm:$0xff] %vm6577, %v6505
        %6628 = vst.msk [vmem:[%s298 + $0x190] sm:$0xff] %vm6577, %v6506
        %6629 = vst.msk [vmem:[%s298 + $0x198] sm:$0xff] %vm6577, %v6507
        %6630 = vst.msk [vmem:[%s298 + $0x1a0] sm:$0xff] %vm6577, %v6508
        %6631 = vst.msk [vmem:[%s298 + $0x1a8] sm:$0xff] %vm6577, %v6509
        %6632 = vst.msk [vmem:[%s298 + $0x1b0] sm:$0xff] %vm6577, %v6510
        %6633 = vst.msk [vmem:[%s298 + $0x1b8] sm:$0xff] %vm6577, %v6511
        %6634 = vst.msk [vmem:[%s298 + $0x1c0] sm:$0xff] %vm6577, %v6512
        %6635 = vst.msk [vmem:[%s298 + $0x1c8] sm:$0xff] %vm6577, %v6513
        %6636 = vst.msk [vmem:[%s298 + $0x1d0] sm:$0xff] %vm6577, %v6514
        %6637 = vst.msk [vmem:[%s298 + $0x1d8] sm:$0xff] %vm6577, %v6515
        %6638 = vst.msk [vmem:[%s298 + $0x1e0] sm:$0xff] %vm6577, %v6516
        %6639 = vst.msk [vmem:[%s298 + $0x1e8] sm:$0xff] %vm6577, %v6517
        %6640 = vst.msk [vmem:[%s298 + $0x1f0] sm:$0xff] %vm6577, %v6518
        %6641 = vst.msk [vmem:[%s298 + $0x1f8] sm:$0xff] %vm6577, %v6519
        %6642 = vst.msk [vmem:[%s298 + $0x200] sm:$0xff] %vm6577, %v6520
        %6643 = vst.msk [vmem:[%s298 + $0x208] sm:$0xff] %vm6577, %v6521
        %6644 = vst.msk [vmem:[%s298 + $0x210] sm:$0xff] %vm6577, %v6522
        %6645 = vst.msk [vmem:[%s298 + $0x218] sm:$0xff] %vm6577, %v6523
        %6646 = vst.msk [vmem:[%s298 + $0x220] sm:$0xff] %vm6577, %v6524
        %6647 = vst.msk [vmem:[%s298 + $0x228] sm:$0xff] %vm6577, %v6525
        %6648 = vst.msk [vmem:[%s298 + $0x230] sm:$0xff] %vm6577, %v6526
        %6649 = vst.msk [vmem:[%s298 + $0x238] sm:$0xff] %vm6577, %v6527
        %6650 = vst.msk [vmem:[%s298 + $0x240] sm:$0xff] %vm6577, %v6528
        %6651 = vst.msk [vmem:[%s298 + $0x248] sm:$0xff] %vm6577, %v6529
        %6652 = vst.msk [vmem:[%s298 + $0x250] sm:$0xff] %vm6577, %v6530
        %6653 = vst.msk [vmem:[%s298 + $0x258] sm:$0xff] %vm6577, %v6531
        %6654 = vst.msk [vmem:[%s298 + $0x260] sm:$0xff] %vm6577, %v6532
        %6655 = vst.msk [vmem:[%s298 + $0x268] sm:$0xff] %vm6577, %v6533
        %6656 = vst.msk [vmem:[%s298 + $0x270] sm:$0xff] %vm6577, %v6534
        %6657 = vst.msk [vmem:[%s298 + $0x278] sm:$0xff] %vm6577, %v6535
        %6658 = vst.msk [vmem:[%s298 + $0x280] sm:$0xff] %vm6577, %v6536
        %6659 = vst.msk [vmem:[%s298 + $0x288] sm:$0xff] %vm6577, %v6537
        %6660 = vst.msk [vmem:[%s298 + $0x290] sm:$0xff] %vm6577, %v6538
        %6661 = vst.msk [vmem:[%s298 + $0x298] sm:$0xff] %vm6577, %v6539
        %6662 = vst.msk [vmem:[%s298 + $0x2a0] sm:$0xff] %vm6577, %v6540
        %6663 = vst.msk [vmem:[%s298 + $0x2a8] sm:$0xff] %vm6577, %v6541
        %6664 = vst.msk [vmem:[%s298 + $0x2b0] sm:$0xff] %vm6577, %v6542
        %6665 = vst.msk [vmem:[%s298 + $0x2b8] sm:$0xff] %vm6577, %v6543
        %6666 = vst.msk [vmem:[%s298 + $0x2c0] sm:$0xff] %vm6577, %v6544
        %6667 = vst.msk [vmem:[%s298 + $0x2c8] sm:$0xff] %vm6577, %v6545
        %6668 = vst.msk [vmem:[%s298 + $0x2d0] sm:$0xff] %vm6577, %v6546
        %6669 = vst.msk [vmem:[%s298 + $0x2d8] sm:$0xff] %vm6577, %v6547
        %6670 = vst.msk [vmem:[%s298 + $0x2e0] sm:$0xff] %vm6577, %v6548
        %6671 = vst.msk [vmem:[%s298 + $0x2e8] sm:$0xff] %vm6577, %v6549
        %6672 = vst.msk [vmem:[%s298 + $0x2f0] sm:$0xff] %vm6577, %v6550
        %6673 = vst.msk [vmem:[%s298 + $0x2f8] sm:$0xff] %vm6577, %v6551
        %6674 = vst.msk [vmem:[%s298 + $0x300] sm:$0xff] %vm6577, %v6552
        %6675 = vst.msk [vmem:[%s298 + $0x308] sm:$0xff] %vm6577, %v6553
        %6676 = vst.msk [vmem:[%s298 + $0x310] sm:$0xff] %vm6577, %v6554
        %6677 = vst.msk [vmem:[%s298 + $0x318] sm:$0xff] %vm6577, %v6555
        %6678 = vst.msk [vmem:[%s298 + $0x320] sm:$0xff] %vm6577, %v6556
        %6679 = vst.msk [vmem:[%s298 + $0x328] sm:$0xff] %vm6577, %v6557
        %6680 = vst.msk [vmem:[%s298 + $0x330] sm:$0xff] %vm6577, %v6558
        %6681 = vst.msk [vmem:[%s298 + $0x338] sm:$0xff] %vm6577, %v6559
        %6682 = vst.msk [vmem:[%s298 + $0x340] sm:$0xff] %vm6577, %v6560
        %6683 = vst.msk [vmem:[%s298 + $0x348] sm:$0xff] %vm6577, %v6561
        %6684 = vst.msk [vmem:[%s298 + $0x350] sm:$0xff] %vm6577, %v6562
        %6685 = vst.msk [vmem:[%s298 + $0x358] sm:$0xff] %vm6577, %v6563
        %6686 = vst.msk [vmem:[%s298 + $0x360] sm:$0xff] %vm6577, %v6564
        %6687 = vst.msk [vmem:[%s298 + $0x368] sm:$0xff] %vm6577, %v6565
        %6688 = vst.msk [vmem:[%s298 + $0x370] sm:$0xff] %vm6577, %v6566
        %6689 = vst.msk [vmem:[%s298 + $0x378] sm:$0xff] %vm6577, %v6567
        %6690 = vst.msk [vmem:[%s298 + $0x380] sm:$0xff] %vm6577, %v6568
        %6691 = vst.msk [vmem:[%s298 + $0x388] sm:$0xff] %vm6577, %v6569
        %6692 = vst.msk [vmem:[%s298 + $0x390] sm:$0xff] %vm6577, %v6570
        %6693 = vst.msk [vmem:[%s298 + $0x398] sm:$0xff] %vm6577, %v6571
        %6694 = vst.msk [vmem:[%s298 + $0x3a0] sm:$0xff] %vm6577, %v6572
        %6695 = vst.msk [vmem:[%s298 + $0x3a8] sm:$0xff] %vm6577, %v6573
        %6696 = vst.msk [vmem:[%s298 + $0x3b0] sm:$0xff] %vm6577, %v6574
        %6697 = vst.msk [vmem:[%s298 + $0x3b8] sm:$0xff] %vm6577, %v6575
        %vm6698 = vcmask 516096
        %6699 = vst.msk [vmem:[%s298 + $0x3c0] sm:$0x1] %vm6698, %v6576
        %p6700 = scmp.lt.s32.totalorder %s23, 1
        %s6701 = scalar_select %p6700, %s23, 1
        %p6702 = scmp.lt.s32.totalorder %s24, 0
        %s6703 = scalar_select %p6702, %s24, 0
        %s6704 = smul.addr %s6701, 121
        %s6705 = sadd.s32 %s6703, %s6704
        %s6706 = smul.addr %s6705, 8
        %s6707 = scalar_lea.vmem %s5, %s6706
        // Predicated region
        $region49: #{_lambda_.3} parent=39 // pred_check
          %p6708 = pneg %p163
        $region50: #{_lambda_.3} parent=39 // pred_check_branch
          %6710 = sbr.rel (%p6708) target = $region52
        $region51: #{_lambda_.3} parent=39 // pred_region
          _
        $region52: #{_lambda_.3} parent=39 // pred_fallthru
          _
      $region40: #{_lambda_.3} parent=5 // pred_fallthru
        _
      %p6711 = scmp.le.s32.totalorder 2, %s14
      // Predicated region
      $region53: #{_lambda_.3} parent=5 // pred_check
        %p6712 = pneg %p6711
      $region54: #{_lambda_.3} parent=5 // pred_check_branch
        %6714 = sbr.rel (%p6712) target = $region56
      $region55: #{_lambda_.3} parent=5 // pred_region
        %s6715 = ssub.s32 %s14, 2
        // Predicated region
        $region57: #{_lambda_.3} parent=55 // pred_check
          %p6716 = pneg %p169
        $region58: #{_lambda_.3} parent=55 // pred_check_branch
          %6718 = sbr.rel (%p6716) target = $region60
        $region59: #{_lambda_.3} parent=55 // pred_region
          %p6719 = scmp.lt.s32.totalorder %s25, 1
          %s6720 = scalar_select %p6719, %s25, 1
          %p6721 = scmp.lt.s32.totalorder %s26, 0
          %s6722 = scalar_select %p6721, %s26, 0
          %s6723 = smul.addr %s6720, 121
          %s6724 = sadd.s32 %s6722, %s6723
          %s6725 = smul.addr %s6724, 8
          %s6726 = scalar_lea.vmem %s5, %s6725
        $region60: #{_lambda_.3} parent=55 // pred_fallthru
          _
      $region56: #{_lambda_.3} parent=5 // pred_fallthru
        _
    $region6: #{_lambda_.3} parent=1 // loop_footer
      %s18 = sadd.s32 1, %s14
    $region7: #{_lambda_.3} parent=1 // loop_footer_branch
      %13 = sbr.rel target = $region3
    $region8: #{_lambda_.3} parent=1 // loop_exit
      _
    %6727 = vsyncpa [#allocation4], 1
    %s6728 = scalar_lea.sflag [#allocation4], 1
    %6729 = vsyncpa %s6728, 1
    %6730 = vsyncpa [#allocation6], 1

</llo_original>
